<compile_context>
chip_gen: v5e
topology: v5e:2x2
jax: 0.10.0
libtpu: 0.0.40
codegen_flags: <defaults>
</compile_context>

<pallas_src>
import numpy as np
import jax
import jax.numpy as jnp
from jax.experimental import pallas as pl
from jax.experimental.pallas import tpu as pltpu

BN_EPS = 1e-5


# ---------------------------------------------------------------------------
# align_corners=True bilinear helpers (static, numpy)
# ---------------------------------------------------------------------------
def _interp_taps(n_in: int, n_out: int):
    """Per-output-position (lo index, frac weight) for align_corners=True resize."""
    if n_in == 1:
        return np.zeros((n_out,), np.int64), np.zeros((n_out,), np.float64)
    src = np.arange(n_out, dtype=np.float64) * (n_in - 1) / (n_out - 1)
    lo = np.clip(np.floor(src).astype(np.int64), 0, n_in - 2)
    frac = src - lo
    return lo, frac


def _bilinear_matrix(n_in: int, n_out: int) -> np.ndarray:
    lo, frac = _interp_taps(n_in, n_out)
    m = np.zeros((n_out, n_in), np.float64)
    m[np.arange(n_out), lo] += 1.0 - frac
    if n_in > 1:
        m[np.arange(n_out), lo + 1] += frac
    return m.astype(np.float32)


def _nbytes(shape, dtype):
    return int(np.prod(shape)) * jnp.dtype(dtype).itemsize


def _vmem_limit_bytes(block_list, scratch_list):
    """blocks are double-buffered by the pipeline; clamp to 85% of physical VMEM."""
    blk = sum(_nbytes(s, d) for s, d in block_list)
    scr = sum(_nbytes(s, d) for s, d in scratch_list)
    need = 2 * blk + scr + (8 << 20)          # headroom for accumulators / temps
    try:
        cap = int(pltpu.get_tpu_info().vmem_capacity_bytes)
    except Exception:
        cap = 64 << 20                        # conservative (v7x per-core) fallback
    cap = int(0.85 * cap)
    return int(min(max(need, 16 << 20), cap))


# ---------------------------------------------------------------------------
# Kernel A: H-axis upsample (fused) + conv1 on [x2 | x1u] + BN1 partial stats
# ---------------------------------------------------------------------------
def _make_up_conv1_kernel(H1, Wu, C1, H2, W2, C2, Cin, Cmid, pads):
    top, bot, left, right = pads              # border widths inside (H2+2, W2+2)
    Hp, Wp = H2 + 2, W2 + 2
    Hu = 2 * H1
    h_lo, h_fr = _interp_taps(H1, Hu)

    def kernel(x1w_ref, x2_ref, w1r_ref, z1_ref, st_ref, x2s_ref, us_ref):
        bf = jnp.bfloat16
        # ---- zero ONLY the border strips of both padded slabs ---------------
        # (every grid step: scratch is per-core under megacore partitioning,
        #  so a pl.program_id(0)==0 guard would leave one core uninitialized)
        x2s_ref[0:1, :, :] = jnp.zeros((1, Wp, C2), bf)
        x2s_ref[H2 + 1:, :, :] = jnp.zeros((1, Wp, C2), bf)
        x2s_ref[:, 0:1, :] = jnp.zeros((Hp, 1, C2), bf)
        x2s_ref[:, W2 + 1:, :] = jnp.zeros((Hp, 1, C2), bf)
        us_ref[0:top, :, :] = jnp.zeros((top, Wp, C1), bf)
        us_ref[top + Hu:, :, :] = jnp.zeros((bot, Wp, C1), bf)
        us_ref[:, 0:left, :] = jnp.zeros((Hp, left, C1), bf)
        us_ref[:, left + Wu:, :] = jnp.zeros((Hp, right, C1), bf)

        # ---- x2 goes straight into its padded slab (no wrapper-side pad) ----
        x2s_ref[1:H2 + 1, 1:W2 + 1, :] = x2_ref[0].astype(bf)

        # ---- H-axis 2-tap blend of the wrapper-W-interpolated x1 ------------
        # x1u never touches HBM; each output row is one dense (Wu, C1) store.
        x1wv = x1w_ref[0].astype(jnp.float32)          # (H1, Wu, C1)
        for o in range(Hu):
            lo = int(h_lo[o])
            g = float(h_fr[o])
            row = x1wv[lo]
            if H1 > 1 and g > 0.0:
                row = row + g * (x1wv[lo + 1] - row)
            us_ref[top + o:top + o + 1, left:left + Wu, :] = (
                row.astype(bf).reshape(1, Wu, C1))

        # ---- conv1 = 9 shift-and-accumulate bf16 matmuls (no im2col buffer) -
        # channel order of the concat matches w1 = (3,3,[C2|C1],Cmid).
        acc = jnp.zeros((H2 * W2, Cmid), jnp.float32)
        for dy in range(3):
            for dx in range(3):
                a = jnp.concatenate(
                    [x2s_ref[dy:dy + H2, dx:dx + W2, :].reshape(H2 * W2, C2),
                     us_ref[dy:dy + H2, dx:dx + W2, :].reshape(H2 * W2, C1)],
                    axis=1)
                acc = acc + jnp.dot(a, w1r_ref[dy * 3 + dx],
                                    preferred_element_type=jnp.float32)

        # conv bias omitted: a per-channel constant cancels in training-mode BN
        z1_ref[0] = acc.astype(bf)                     # bf16 inter-pass activation
        # BN statistics from the f32 accumulator (BEFORE the bf16 cast)
        st_ref[0] = jnp.concatenate(
            [jnp.sum(acc, axis=0, keepdims=True),
             jnp.sum(acc * acc, axis=0, keepdims=True)], axis=0)

    return kernel


# ---------------------------------------------------------------------------
# Kernel B: BN1 (folded scale/shift) + ReLU + conv2 + BN2 partial stats
# ---------------------------------------------------------------------------
def _make_bn_conv2_kernel(H, W, Cmid, Cout):
    Hp, Wp = H + 2, W + 2

    def kernel(z1_ref, a1_ref, c1_ref, w2r_ref, z2_ref, st_ref, hs_ref):
        bf = jnp.bfloat16
        hs_ref[0:1, :, :] = jnp.zeros((1, Wp, Cmid), bf)
        hs_ref[H + 1:, :, :] = jnp.zeros((1, Wp, Cmid), bf)
        hs_ref[:, 0:1, :] = jnp.zeros((Hp, 1, Cmid), bf)
        hs_ref[:, W + 1:, :] = jnp.zeros((Hp, 1, Cmid), bf)

        # BN1 + ReLU (scale/shift precomputed from the f32 batch statistics)
        h1 = jnp.maximum(
            z1_ref[0].astype(jnp.float32) * a1_ref[...] + c1_ref[...], 0.0)
        hs_ref[1:H + 1, 1:W + 1, :] = h1.astype(bf).reshape(H, W, Cmid)

        # conv2 = 9 shift-and-accumulate bf16 matmuls
        acc = jnp.zeros((H * W, Cout), jnp.float32)
        for dy in range(3):
            for dx in range(3):
                acc = acc + jnp.dot(
                    hs_ref[dy:dy + H, dx:dx + W, :].reshape(H * W, Cmid),
                    w2r_ref[dy * 3 + dx], preferred_element_type=jnp.float32)

        z2_ref[0] = acc.astype(bf)
        st_ref[0] = jnp.concatenate(
            [jnp.sum(acc, axis=0, keepdims=True),
             jnp.sum(acc * acc, axis=0, keepdims=True)], axis=0)

    return kernel


# ---------------------------------------------------------------------------
# Kernel C: final BN2 + ReLU (elementwise; reads the bf16 intermediate)
# ---------------------------------------------------------------------------
def _bn_relu_kernel(z_ref, a_ref, c_ref, y_ref):
    y_ref[0] = jnp.maximum(
        z_ref[0].astype(jnp.float32) * a_ref[...] + c_ref[...], 0.0)


# ---------------------------------------------------------------------------
# Up.forward
# ---------------------------------------------------------------------------
def up_forward(x1_nchw, x2_nchw, params):
    x1 = jnp.transpose(x1_nchw, (0, 2, 3, 1)).astype(jnp.float32)   # NHWC (small)
    x2 = jnp.transpose(x2_nchw, (0, 2, 3, 1)).astype(jnp.float32)   # NHWC
    N, H1, W1, C1 = x1.shape
    _, H2, W2, C2 = x2.shape
    Hu, Wu = 2 * H1, 2 * W1
    diff_y, diff_x = H2 - Hu, W2 - Wu
    assert diff_y >= 0 and diff_x >= 0
    pads = (1 + diff_y // 2, 1 + (diff_y - diff_y // 2),
            1 + diff_x // 2, 1 + (diff_x - diff_x // 2))

    Cin = C2 + C1
    Cmid = params["w1"].shape[3]
    Cout = params["w2"].shape[3]
    assert params["w1"].shape[2] == Cin
    Hp, Wp = H2 + 2, W2 + 2
    HW = H2 * W2
    cnt = float(N * HW)
    bf = jnp.bfloat16

    # W-axis bilinear interp done once on the SMALL x1 tensor at the XLA level
    # (x1 is ~4x smaller than x2/x1u); shipped as bf16.  The H-axis interp is
    # fused in kernel A so the upsampled tensor never round-trips HBM.
    w_lo, w_fr = _interp_taps(W1, Wu)
    w_hi = np.minimum(w_lo + 1, W1 - 1)
    fr = jnp.asarray(w_fr.astype(np.float32))[None, None, :, None]
    x1w = (x1[:, :, w_lo, :] * (1.0 - fr)
           + x1[:, :, w_hi, :] * fr).astype(bf)               # (N, H1, Wu, C1)

    # bf16 conv weights, one (Cin, Cmid) / (Cmid, Cout) slice per 3x3 tap
    w1r = params["w1"].reshape(9, Cin, Cmid).astype(bf)
    w2r = params["w2"].reshape(9, Cmid, Cout).astype(bf)

    # ---- pass 1: H-upsample + conv1 + per-image BN1 partials -----------------
    blocks1 = [((1, H1, Wu, C1), bf), ((1, H2, W2, C2), jnp.float32),
               ((9, Cin, Cmid), bf), ((1, HW, Cmid), bf), ((1, 2, Cmid), jnp.float32)]
    scratch1 = [((Hp, Wp, C2), bf), ((Hp, Wp, C1), bf)]
    z1, st1 = pl.pallas_call(
        _make_up_conv1_kernel(H1, Wu, C1, H2, W2, C2, Cin, Cmid, pads),
        grid=(N,),
        in_specs=[
            pl.BlockSpec((1, H1, Wu, C1), lambda n: (n, 0, 0, 0)),
            pl.BlockSpec((1, H2, W2, C2), lambda n: (n, 0, 0, 0)),
            pl.BlockSpec((9, Cin, Cmid), lambda n: (0, 0, 0)),
        ],
        out_specs=(
            pl.BlockSpec((1, HW, Cmid), lambda n: (n, 0, 0)),
            pl.BlockSpec((1, 2, Cmid), lambda n: (n, 0, 0)),
        ),
        out_shape=(
            jax.ShapeDtypeStruct((N, HW, Cmid), bf),
            jax.ShapeDtypeStruct((N, 2, Cmid), jnp.float32),
        ),
        scratch_shapes=[
            pltpu.VMEM((Hp, Wp, C2), bf),
            pltpu.VMEM((Hp, Wp, C1), bf),
        ],
        compiler_params=pltpu.CompilerParams(
            dimension_semantics=("parallel",),
            vmem_limit_bytes=_vmem_limit_bytes(blocks1, scratch1)),
    )(x1w, x2, w1r)

    # BN1 finalize (tiny per-channel math): biased variance, fold gamma/beta
    tot1 = jnp.sum(st1, axis=0)                     # (2, Cmid)
    mu1 = tot1[0] / cnt
    var1 = tot1[1] / cnt - mu1 * mu1
    scale1 = params["g1"][0] * jax.lax.rsqrt(var1 + BN_EPS)
    a1 = scale1.reshape(1, Cmid).astype(jnp.float32)
    c1 = (params["be1"][0] - mu1 * scale1).reshape(1, Cmid).astype(jnp.float32)

    # ---- pass 2: BN1+ReLU + conv2 + per-image BN2 partials --------------------
    blocks2 = [((1, HW, Cmid), bf), ((1, Cmid), jnp.float32), ((1, Cmid), jnp.float32),
               ((9, Cmid, Cout), bf), ((1, HW, Cout), bf), ((1, 2, Cout), jnp.float32)]
    scratch2 = [((Hp, Wp, Cmid), bf)]
    z2, st2 = pl.pallas_call(
        _make_bn_conv2_kernel(H2, W2, Cmid, Cout),
        grid=(N,),
        in_specs=[
            pl.BlockSpec((1, HW, Cmid), lambda n: (n, 0, 0)),
            pl.BlockSpec((1, Cmid), lambda n: (0, 0)),
            pl.BlockSpec((1, Cmid), lambda n: (0, 0)),
            pl.BlockSpec((9, Cmid, Cout), lambda n: (0, 0, 0)),
        ],
        out_specs=(
            pl.BlockSpec((1, HW, Cout), lambda n: (n, 0, 0)),
            pl.BlockSpec((1, 2, Cout), lambda n: (n, 0, 0)),
        ),
        out_shape=(
            jax.ShapeDtypeStruct((N, HW, Cout), bf),
            jax.ShapeDtypeStruct((N, 2, Cout), jnp.float32),
        ),
        scratch_shapes=[
            pltpu.VMEM((Hp, Wp, Cmid), bf),
        ],
        compiler_params=pltpu.CompilerParams(
            dimension_semantics=("parallel",),
            vmem_limit_bytes=_vmem_limit_bytes(blocks2, scratch2)),
    )(z1, a1, c1, w2r)

    # BN2 finalize
    tot2 = jnp.sum(st2, axis=0)
    mu2 = tot2[0] / cnt
    var2 = tot2[1] / cnt - mu2 * mu2
    scale2 = params["g2"][0] * jax.lax.rsqrt(var2 + BN_EPS)
    a2 = scale2.reshape(1, Cout).astype(jnp.float32)
    c2 = (params["be2"][0] - mu2 * scale2).reshape(1, Cout).astype(jnp.float32)

    # ---- pass 3: BN2 + ReLU (reads bf16 z2 -> half the HBM traffic) ----------
    blocks3 = [((1, HW, Cout), bf), ((1, Cout), jnp.float32), ((1, Cout), jnp.float32),
               ((1, HW, Cout), jnp.float32)]
    y = pl.pallas_call(
        _bn_relu_kernel,
        grid=(N,),
        in_specs=[
            pl.BlockSpec((1, HW, Cout), lambda n: (n, 0, 0)),
            pl.BlockSpec((1, Cout), lambda n: (0, 0)),
            pl.BlockSpec((1, Cout), lambda n: (0, 0)),
        ],
        out_specs=pl.BlockSpec((1, HW, Cout), lambda n: (n, 0, 0)),
        out_shape=jax.ShapeDtypeStruct((N, HW, Cout), jnp.float32),
        compiler_params=pltpu.CompilerParams(
            dimension_semantics=("parallel",),
            vmem_limit_bytes=_vmem_limit_bytes(blocks3, [])),
    )(z2, a2, c2)

    y = y.reshape(N, H2, W2, Cout)
    return jnp.transpose(y, (0, 3, 1, 2))           # NCHW module boundary


def init_params(key, in_channels, out_channels):
    mid = in_channels // 2                      # DoubleConv(in, out, in // 2)
    k1, k2, k3, k4 = jax.random.split(key, 4)
    return dict(
        w1=0.1 * jax.random.normal(k1, (3, 3, in_channels, mid), jnp.float32),   # HWIO
        # conv biases kept for interface parity with nn.Conv2d; they are a no-op
        # before training-mode BatchNorm and are not used by the kernels.
        b1=0.1 * jax.random.normal(k2, (1, mid), jnp.float32),
        g1=jnp.ones((1, mid), jnp.float32),
        be1=jnp.zeros((1, mid), jnp.float32),
        w2=0.1 * jax.random.normal(k3, (3, 3, mid, out_channels), jnp.float32),
        b2=0.1 * jax.random.normal(k4, (1, out_channels), jnp.float32),
        g2=jnp.ones((1, out_channels), jnp.float32),
        be2=jnp.zeros((1, out_channels), jnp.float32),
    )


# ---------------------------------------------------------------------------
# Pure-JAX reference (same math as the PyTorch module, incl. the conv biases)
# ---------------------------------------------------------------------------
def up_forward_reference(x1_nchw, x2_nchw, params):
    hp = jax.lax.Precision.HIGHEST
    x1 = jnp.transpose(x1_nchw, (0, 2, 3, 1)).astype(jnp.float32)
    x2 = jnp.transpose(x2_nchw, (0, 2, 3, 1)).astype(jnp.float32)
    n, h1, w1, c = x1.shape
    wh = jnp.asarray(_bilinear_matrix(h1, 2 * h1))
    ww = jnp.asarray(_bilinear_matrix(w1, 2 * w1))
    x1u = jnp.einsum('oh,nhwc->nowc', wh, x1, precision=hp)
    x1u = jnp.einsum('pw,nowc->nopc', ww, x1u, precision=hp)
    diff_y = x2.shape[1] - x1u.shape[1]
    diff_x = x2.shape[2] - x1u.shape[2]
    x1u = jnp.pad(x1u, ((0, 0),
                        (diff_y // 2, diff_y - diff_y // 2),
                        (diff_x // 2, diff_x - diff_x // 2),
                        (0, 0)))
    x = jnp.concatenate([x2, x1u], axis=-1)

    def conv_bn_relu(z, w, b, g, beta):
        y = jax.lax.conv_general_dilated(
            z, w, (1, 1), 'SAME',
            dimension_numbers=('NHWC', 'HWIO', 'NHWC'), precision=hp)
        y = y + b.reshape(1, 1, 1, -1)
        mu = jnp.mean(y, axis=(0, 1, 2), keepdims=True)
        var = jnp.mean((y - mu) ** 2, axis=(0, 1, 2), keepdims=True)
        yn = (y - mu) * jax.lax.rsqrt(var + BN_EPS)
        return jnp.maximum(yn * g.reshape(1, 1, 1, -1) + beta.reshape(1, 1, 1, -1), 0.0)

    y = conv_bn_relu(x, params["w1"], params["b1"], params["g1"], params["be1"])
    y = conv_bn_relu(y, params["w2"], params["b2"], params["g2"], params["be2"])
    return jnp.transpose(y, (0, 3, 1, 2))


if __name__ == "__main__":
    key = jax.random.PRNGKey(0)
    k_x1, k_x2, k_p = jax.random.split(key, 3)

    in_channels, out_channels = 8, 4            # Up(8, 4, bilinear=True)
    N, H, W = 2, 8, 8                           # x1 spatial; x2 is 2x (16x16)
    x1 = jax.random.normal(k_x1, (N, in_channels // 2, H, W), jnp.float32)
    x2 = jax.random.normal(k_x2, (N, in_channels // 2, 2 * H, 2 * W), jnp.float32)
    params = init_params(k_p, in_channels, out_channels)

    y = jax.block_until_ready(up_forward(x1, x2, params))
    assert y.shape == (N, out_channels, 2 * H, 2 * W), y.shape

    y_ref = jax.block_until_ready(up_forward_reference(x1, x2, params))
    # bf16 MXU operands + bf16 inter-pass activations -> bf16-level tolerance.
    if not jnp.allclose(y, y_ref, atol=5e-2, rtol=5e-2):
        raise AssertionError(
            f"mismatch: max abs diff = {float(jnp.max(jnp.abs(y - y_ref)))}")
    print("KERNEL_OK")
</pallas_src>

<mosaic_0001>
module attributes {stable_mosaic.version = 11 : i64} {
  func.func @kernel(%arg0: i32, %arg1: memref<1x8x16x4xbf16, #tpu.memory_space<vmem>>, %arg2: memref<1x16x16x4xf32, #tpu.memory_space<vmem>>, %arg3: memref<9x8x4xbf16, #tpu.memory_space<vmem>>, %arg4: memref<1x256x4xbf16, #tpu.memory_space<vmem>>, %arg5: memref<1x2x4xf32, #tpu.memory_space<vmem>>, %arg6: memref<18x18x4xbf16, #tpu.memory_space<vmem>>, %arg7: memref<18x18x4xbf16, #tpu.memory_space<vmem>>) attributes {dimension_semantics = [#tpu.dimension_semantics<parallel>], iteration_bounds = array<i64: 2>, scalar_prefetch = 0 : i64, scratch_operands = 2 : i64, tpu.core_type = #tpu.core_type<tc>, window_params = [{transform_indices = @transform_0, window_bounds = array<i64: 1, 8, 16, 4>}, {transform_indices = @transform_1, window_bounds = array<i64: 1, 16, 16, 4>}, {pipeline_mode = #tpu.pipeline_mode<synchronous>, transform_indices = @transform_2, window_bounds = array<i64: 9, 8, 4>}, {transform_indices = @transform_3, window_bounds = array<i64: 1, 256, 4>}, {transform_indices = @transform_4, window_bounds = array<i64: 1, 2, 4>}]} {
    %cst = arith.constant 0.000000e+00 : bf16
    %0 = vector.broadcast %cst : bf16 to vector<1x18x4xbf16>
    %c0 = arith.constant 0 : index
    %c0_0 = arith.constant 0 : index
    %c0_1 = arith.constant 0 : index
    %1 = vector.load %arg6[%c0, %c0_0, %c0_1] : memref<18x18x4xbf16, #tpu.memory_space<vmem>>, vector<1x18x4xbf16>
    tpu.vector_store %arg6[%c0, %c0_0, %c0_1], %0 {strides = array<i32>} : memref<18x18x4xbf16, #tpu.memory_space<vmem>>, vector<1x18x4xbf16>,
    %cst_2 = arith.constant 0.000000e+00 : bf16
    %2 = vector.broadcast %cst_2 : bf16 to vector<1x18x4xbf16>
    %c17 = arith.constant 17 : index
    %c0_3 = arith.constant 0 : index
    %c0_4 = arith.constant 0 : index
    %3 = vector.load %arg6[%c17, %c0_3, %c0_4] : memref<18x18x4xbf16, #tpu.memory_space<vmem>>, vector<1x18x4xbf16>
    tpu.vector_store %arg6[%c17, %c0_3, %c0_4], %2 {strides = array<i32>} : memref<18x18x4xbf16, #tpu.memory_space<vmem>>, vector<1x18x4xbf16>,
    %cst_5 = arith.constant 0.000000e+00 : bf16
    %4 = vector.broadcast %cst_5 : bf16 to vector<18x1x4xbf16>
    %c0_6 = arith.constant 0 : index
    %c0_7 = arith.constant 0 : index
    %c0_8 = arith.constant 0 : index
    %5 = vector.load %arg6[%c0_6, %c0_7, %c0_8] : memref<18x18x4xbf16, #tpu.memory_space<vmem>>, vector<18x1x4xbf16>
    tpu.vector_store %arg6[%c0_6, %c0_7, %c0_8], %4 {strides = array<i32>} : memref<18x18x4xbf16, #tpu.memory_space<vmem>>, vector<18x1x4xbf16>,
    %cst_9 = arith.constant 0.000000e+00 : bf16
    %6 = vector.broadcast %cst_9 : bf16 to vector<18x1x4xbf16>
    %c0_10 = arith.constant 0 : index
    %c17_11 = arith.constant 17 : index
    %c0_12 = arith.constant 0 : index
    %7 = vector.load %arg6[%c0_10, %c17_11, %c0_12] : memref<18x18x4xbf16, #tpu.memory_space<vmem>>, vector<18x1x4xbf16>
    tpu.vector_store %arg6[%c0_10, %c17_11, %c0_12], %6 {strides = array<i32>} : memref<18x18x4xbf16, #tpu.memory_space<vmem>>, vector<18x1x4xbf16>,
    %cst_13 = arith.constant 0.000000e+00 : bf16
    %8 = vector.broadcast %cst_13 : bf16 to vector<1x18x4xbf16>
    %c0_14 = arith.constant 0 : index
    %c0_15 = arith.constant 0 : index
    %c0_16 = arith.constant 0 : index
    %9 = vector.load %arg7[%c0_14, %c0_15, %c0_16] : memref<18x18x4xbf16, #tpu.memory_space<vmem>>, vector<1x18x4xbf16>
    tpu.vector_store %arg7[%c0_14, %c0_15, %c0_16], %8 {strides = array<i32>} : memref<18x18x4xbf16, #tpu.memory_space<vmem>>, vector<1x18x4xbf16>,
    %cst_17 = arith.constant 0.000000e+00 : bf16
    %10 = vector.broadcast %cst_17 : bf16 to vector<1x18x4xbf16>
    %c17_18 = arith.constant 17 : index
    %c0_19 = arith.constant 0 : index
    %c0_20 = arith.constant 0 : index
    %11 = vector.load %arg7[%c17_18, %c0_19, %c0_20] : memref<18x18x4xbf16, #tpu.memory_space<vmem>>, vector<1x18x4xbf16>
    tpu.vector_store %arg7[%c17_18, %c0_19, %c0_20], %10 {strides = array<i32>} : memref<18x18x4xbf16, #tpu.memory_space<vmem>>, vector<1x18x4xbf16>,
    %cst_21 = arith.constant 0.000000e+00 : bf16
    %12 = vector.broadcast %cst_21 : bf16 to vector<18x1x4xbf16>
    %c0_22 = arith.constant 0 : index
    %c0_23 = arith.constant 0 : index
    %c0_24 = arith.constant 0 : index
    %13 = vector.load %arg7[%c0_22, %c0_23, %c0_24] : memref<18x18x4xbf16, #tpu.memory_space<vmem>>, vector<18x1x4xbf16>
    tpu.vector_store %arg7[%c0_22, %c0_23, %c0_24], %12 {strides = array<i32>} : memref<18x18x4xbf16, #tpu.memory_space<vmem>>, vector<18x1x4xbf16>,
    %cst_25 = arith.constant 0.000000e+00 : bf16
    %14 = vector.broadcast %cst_25 : bf16 to vector<18x1x4xbf16>
    %c0_26 = arith.constant 0 : index
    %c17_27 = arith.constant 17 : index
    %c0_28 = arith.constant 0 : index
    %15 = vector.load %arg7[%c0_26, %c17_27, %c0_28] : memref<18x18x4xbf16, #tpu.memory_space<vmem>>, vector<18x1x4xbf16>
    tpu.vector_store %arg7[%c0_26, %c17_27, %c0_28], %14 {strides = array<i32>} : memref<18x18x4xbf16, #tpu.memory_space<vmem>>, vector<18x1x4xbf16>,
    %c0_29 = arith.constant 0 : index
    %c0_30 = arith.constant 0 : index
    %c0_31 = arith.constant 0 : index
    %c0_32 = arith.constant 0 : index
    %16 = vector.load %arg2[%c0_29, %c0_30, %c0_31, %c0_32] : memref<1x16x16x4xf32, #tpu.memory_space<vmem>>, vector<1x16x16x4xf32>
    %17 = vector.shape_cast %16 : vector<1x16x16x4xf32> to vector<16x16x4xf32>
    %18 = arith.truncf %17 : vector<16x16x4xf32> to vector<16x16x4xbf16>
    %c1 = arith.constant 1 : index
    %c1_33 = arith.constant 1 : index
    %c0_34 = arith.constant 0 : index
    %19 = vector.load %arg6[%c1, %c1_33, %c0_34] : memref<18x18x4xbf16, #tpu.memory_space<vmem>>, vector<16x16x4xbf16>
    tpu.vector_store %arg6[%c1, %c1_33, %c0_34], %18 {strides = array<i32>} : memref<18x18x4xbf16, #tpu.memory_space<vmem>>, vector<16x16x4xbf16>,
    %c0_35 = arith.constant 0 : index
    %c0_36 = arith.constant 0 : index
    %c0_37 = arith.constant 0 : index
    %c0_38 = arith.constant 0 : index
    %20 = vector.load %arg1[%c0_35, %c0_36, %c0_37, %c0_38] : memref<1x8x16x4xbf16, #tpu.memory_space<vmem>>, vector<1x8x16x4xbf16>
    %21 = vector.shape_cast %20 : vector<1x8x16x4xbf16> to vector<8x16x4xbf16>
    %22 = arith.extf %21 : vector<8x16x4xbf16> to vector<8x16x4xf32>
    %23 = vector.extract_strided_slice %22 {offsets = [0, 0, 0], sizes = [1, 16, 4], strides = [1, 1, 1]} : vector<8x16x4xf32> to vector<1x16x4xf32>
    %24 = vector.shape_cast %23 : vector<1x16x4xf32> to vector<16x4xf32>
    %25 = arith.truncf %24 : vector<16x4xf32> to vector<16x4xbf16>
    %26 = vector.shape_cast %25 : vector<16x4xbf16> to vector<1x16x4xbf16>
    %c1_39 = arith.constant 1 : index
    %c1_40 = arith.constant 1 : index
    %c0_41 = arith.constant 0 : index
    %27 = vector.load %arg7[%c1_39, %c1_40, %c0_41] : memref<18x18x4xbf16, #tpu.memory_space<vmem>>, vector<1x16x4xbf16>
    tpu.vector_store %arg7[%c1_39, %c1_40, %c0_41], %26 {strides = array<i32>} : memref<18x18x4xbf16, #tpu.memory_space<vmem>>, vector<1x16x4xbf16>,
    %28 = vector.extract_strided_slice %22 {offsets = [0, 0, 0], sizes = [1, 16, 4], strides = [1, 1, 1]} : vector<8x16x4xf32> to vector<1x16x4xf32>
    %29 = vector.shape_cast %28 : vector<1x16x4xf32> to vector<16x4xf32>
    %30 = vector.extract_strided_slice %22 {offsets = [1, 0, 0], sizes = [1, 16, 4], strides = [1, 1, 1]} : vector<8x16x4xf32> to vector<1x16x4xf32>
    %31 = vector.shape_cast %30 : vector<1x16x4xf32> to vector<16x4xf32>
    %32 = arith.subf %31, %29 : vector<16x4xf32>
    %cst_42 = arith.constant 0.466666669 : f32
    %33 = vector.broadcast %cst_42 : f32 to vector<16x4xf32>
    %34 = arith.mulf %33, %32 : vector<16x4xf32>
    %35 = arith.addf %29, %34 : vector<16x4xf32>
    %36 = arith.truncf %35 : vector<16x4xf32> to vector<16x4xbf16>
    %37 = vector.shape_cast %36 : vector<16x4xbf16> to vector<1x16x4xbf16>
    %c2 = arith.constant 2 : index
    %c1_43 = arith.constant 1 : index
    %c0_44 = arith.constant 0 : index
    %38 = vector.load %arg7[%c2, %c1_43, %c0_44] : memref<18x18x4xbf16, #tpu.memory_space<vmem>>, vector<1x16x4xbf16>
    tpu.vector_store %arg7[%c2, %c1_43, %c0_44], %37 {strides = array<i32>} : memref<18x18x4xbf16, #tpu.memory_space<vmem>>, vector<1x16x4xbf16>,
    %39 = vector.extract_strided_slice %22 {offsets = [0, 0, 0], sizes = [1, 16, 4], strides = [1, 1, 1]} : vector<8x16x4xf32> to vector<1x16x4xf32>
    %40 = vector.shape_cast %39 : vector<1x16x4xf32> to vector<16x4xf32>
    %41 = vector.extract_strided_slice %22 {offsets = [1, 0, 0], sizes = [1, 16, 4], strides = [1, 1, 1]} : vector<8x16x4xf32> to vector<1x16x4xf32>
    %42 = vector.shape_cast %41 : vector<1x16x4xf32> to vector<16x4xf32>
    %43 = arith.subf %42, %40 : vector<16x4xf32>
    %cst_45 = arith.constant 0.933333337 : f32
    %44 = vector.broadcast %cst_45 : f32 to vector<16x4xf32>
    %45 = arith.mulf %44, %43 : vector<16x4xf32>
    %46 = arith.addf %40, %45 : vector<16x4xf32>
    %47 = arith.truncf %46 : vector<16x4xf32> to vector<16x4xbf16>
    %48 = vector.shape_cast %47 : vector<16x4xbf16> to vector<1x16x4xbf16>
    %c3 = arith.constant 3 : index
    %c1_46 = arith.constant 1 : index
    %c0_47 = arith.constant 0 : index
    %49 = vector.load %arg7[%c3, %c1_46, %c0_47] : memref<18x18x4xbf16, #tpu.memory_space<vmem>>, vector<1x16x4xbf16>
    tpu.vector_store %arg7[%c3, %c1_46, %c0_47], %48 {strides = array<i32>} : memref<18x18x4xbf16, #tpu.memory_space<vmem>>, vector<1x16x4xbf16>,
    %50 = vector.extract_strided_slice %22 {offsets = [1, 0, 0], sizes = [1, 16, 4], strides = [1, 1, 1]} : vector<8x16x4xf32> to vector<1x16x4xf32>
    %51 = vector.shape_cast %50 : vector<1x16x4xf32> to vector<16x4xf32>
    %52 = vector.extract_strided_slice %22 {offsets = [2, 0, 0], sizes = [1, 16, 4], strides = [1, 1, 1]} : vector<8x16x4xf32> to vector<1x16x4xf32>
    %53 = vector.shape_cast %52 : vector<1x16x4xf32> to vector<16x4xf32>
    %54 = arith.subf %53, %51 : vector<16x4xf32>
    %cst_48 = arith.constant 4.000000e-01 : f32
    %55 = vector.broadcast %cst_48 : f32 to vector<16x4xf32>
    %56 = arith.mulf %55, %54 : vector<16x4xf32>
    %57 = arith.addf %51, %56 : vector<16x4xf32>
    %58 = arith.truncf %57 : vector<16x4xf32> to vector<16x4xbf16>
    %59 = vector.shape_cast %58 : vector<16x4xbf16> to vector<1x16x4xbf16>
    %c4 = arith.constant 4 : index
    %c1_49 = arith.constant 1 : index
    %c0_50 = arith.constant 0 : index
    %60 = vector.load %arg7[%c4, %c1_49, %c0_50] : memref<18x18x4xbf16, #tpu.memory_space<vmem>>, vector<1x16x4xbf16>
    tpu.vector_store %arg7[%c4, %c1_49, %c0_50], %59 {strides = array<i32>} : memref<18x18x4xbf16, #tpu.memory_space<vmem>>, vector<1x16x4xbf16>,
    %61 = vector.extract_strided_slice %22 {offsets = [1, 0, 0], sizes = [1, 16, 4], strides = [1, 1, 1]} : vector<8x16x4xf32> to vector<1x16x4xf32>
    %62 = vector.shape_cast %61 : vector<1x16x4xf32> to vector<16x4xf32>
    %63 = vector.extract_strided_slice %22 {offsets = [2, 0, 0], sizes = [1, 16, 4], strides = [1, 1, 1]} : vector<8x16x4xf32> to vector<1x16x4xf32>
    %64 = vector.shape_cast %63 : vector<1x16x4xf32> to vector<16x4xf32>
    %65 = arith.subf %64, %62 : vector<16x4xf32>
    %cst_51 = arith.constant 0.866666674 : f32
    %66 = vector.broadcast %cst_51 : f32 to vector<16x4xf32>
    %67 = arith.mulf %66, %65 : vector<16x4xf32>
    %68 = arith.addf %62, %67 : vector<16x4xf32>
    %69 = arith.truncf %68 : vector<16x4xf32> to vector<16x4xbf16>
    %70 = vector.shape_cast %69 : vector<16x4xbf16> to vector<1x16x4xbf16>
    %c5 = arith.constant 5 : index
    %c1_52 = arith.constant 1 : index
    %c0_53 = arith.constant 0 : index
    %71 = vector.load %arg7[%c5, %c1_52, %c0_53] : memref<18x18x4xbf16, #tpu.memory_space<vmem>>, vector<1x16x4xbf16>
    tpu.vector_store %arg7[%c5, %c1_52, %c0_53], %70 {strides = array<i32>} : memref<18x18x4xbf16, #tpu.memory_space<vmem>>, vector<1x16x4xbf16>,
    %72 = vector.extract_strided_slice %22 {offsets = [2, 0, 0], sizes = [1, 16, 4], strides = [1, 1, 1]} : vector<8x16x4xf32> to vector<1x16x4xf32>
    %73 = vector.shape_cast %72 : vector<1x16x4xf32> to vector<16x4xf32>
    %74 = vector.extract_strided_slice %22 {offsets = [3, 0, 0], sizes = [1, 16, 4], strides = [1, 1, 1]} : vector<8x16x4xf32> to vector<1x16x4xf32>
    %75 = vector.shape_cast %74 : vector<1x16x4xf32> to vector<16x4xf32>
    %76 = arith.subf %75, %73 : vector<16x4xf32>
    %cst_54 = arith.constant 0.333333343 : f32
    %77 = vector.broadcast %cst_54 : f32 to vector<16x4xf32>
    %78 = arith.mulf %77, %76 : vector<16x4xf32>
    %79 = arith.addf %73, %78 : vector<16x4xf32>
    %80 = arith.truncf %79 : vector<16x4xf32> to vector<16x4xbf16>
    %81 = vector.shape_cast %80 : vector<16x4xbf16> to vector<1x16x4xbf16>
    %c6 = arith.constant 6 : index
    %c1_55 = arith.constant 1 : index
    %c0_56 = arith.constant 0 : index
    %82 = vector.load %arg7[%c6, %c1_55, %c0_56] : memref<18x18x4xbf16, #tpu.memory_space<vmem>>, vector<1x16x4xbf16>
    tpu.vector_store %arg7[%c6, %c1_55, %c0_56], %81 {strides = array<i32>} : memref<18x18x4xbf16, #tpu.memory_space<vmem>>, vector<1x16x4xbf16>,
    %83 = vector.extract_strided_slice %22 {offsets = [2, 0, 0], sizes = [1, 16, 4], strides = [1, 1, 1]} : vector<8x16x4xf32> to vector<1x16x4xf32>
    %84 = vector.shape_cast %83 : vector<1x16x4xf32> to vector<16x4xf32>
    %85 = vector.extract_strided_slice %22 {offsets = [3, 0, 0], sizes = [1, 16, 4], strides = [1, 1, 1]} : vector<8x16x4xf32> to vector<1x16x4xf32>
    %86 = vector.shape_cast %85 : vector<1x16x4xf32> to vector<16x4xf32>
    %87 = arith.subf %86, %84 : vector<16x4xf32>
    %cst_57 = arith.constant 8.000000e-01 : f32
    %88 = vector.broadcast %cst_57 : f32 to vector<16x4xf32>
    %89 = arith.mulf %88, %87 : vector<16x4xf32>
    %90 = arith.addf %84, %89 : vector<16x4xf32>
    %91 = arith.truncf %90 : vector<16x4xf32> to vector<16x4xbf16>
    %92 = vector.shape_cast %91 : vector<16x4xbf16> to vector<1x16x4xbf16>
    %c7 = arith.constant 7 : index
    %c1_58 = arith.constant 1 : index
    %c0_59 = arith.constant 0 : index
    %93 = vector.load %arg7[%c7, %c1_58, %c0_59] : memref<18x18x4xbf16, #tpu.memory_space<vmem>>, vector<1x16x4xbf16>
    tpu.vector_store %arg7[%c7, %c1_58, %c0_59], %92 {strides = array<i32>} : memref<18x18x4xbf16, #tpu.memory_space<vmem>>, vector<1x16x4xbf16>,
    %94 = vector.extract_strided_slice %22 {offsets = [3, 0, 0], sizes = [1, 16, 4], strides = [1, 1, 1]} : vector<8x16x4xf32> to vector<1x16x4xf32>
    %95 = vector.shape_cast %94 : vector<1x16x4xf32> to vector<16x4xf32>
    %96 = vector.extract_strided_slice %22 {offsets = [4, 0, 0], sizes = [1, 16, 4], strides = [1, 1, 1]} : vector<8x16x4xf32> to vector<1x16x4xf32>
    %97 = vector.shape_cast %96 : vector<1x16x4xf32> to vector<16x4xf32>
    %98 = arith.subf %97, %95 : vector<16x4xf32>
    %cst_60 = arith.constant 0.266666681 : f32
    %99 = vector.broadcast %cst_60 : f32 to vector<16x4xf32>
    %100 = arith.mulf %99, %98 : vector<16x4xf32>
    %101 = arith.addf %95, %100 : vector<16x4xf32>
    %102 = arith.truncf %101 : vector<16x4xf32> to vector<16x4xbf16>
    %103 = vector.shape_cast %102 : vector<16x4xbf16> to vector<1x16x4xbf16>
    %c8 = arith.constant 8 : index
    %c1_61 = arith.constant 1 : index
    %c0_62 = arith.constant 0 : index
    %104 = vector.load %arg7[%c8, %c1_61, %c0_62] : memref<18x18x4xbf16, #tpu.memory_space<vmem>>, vector<1x16x4xbf16>
    tpu.vector_store %arg7[%c8, %c1_61, %c0_62], %103 {strides = array<i32>} : memref<18x18x4xbf16, #tpu.memory_space<vmem>>, vector<1x16x4xbf16>,
    %105 = vector.extract_strided_slice %22 {offsets = [3, 0, 0], sizes = [1, 16, 4], strides = [1, 1, 1]} : vector<8x16x4xf32> to vector<1x16x4xf32>
    %106 = vector.shape_cast %105 : vector<1x16x4xf32> to vector<16x4xf32>
    %107 = vector.extract_strided_slice %22 {offsets = [4, 0, 0], sizes = [1, 16, 4], strides = [1, 1, 1]} : vector<8x16x4xf32> to vector<1x16x4xf32>
    %108 = vector.shape_cast %107 : vector<1x16x4xf32> to vector<16x4xf32>
    %109 = arith.subf %108, %106 : vector<16x4xf32>
    %cst_63 = arith.constant 0.733333349 : f32
    %110 = vector.broadcast %cst_63 : f32 to vector<16x4xf32>
    %111 = arith.mulf %110, %109 : vector<16x4xf32>
    %112 = arith.addf %106, %111 : vector<16x4xf32>
    %113 = arith.truncf %112 : vector<16x4xf32> to vector<16x4xbf16>
    %114 = vector.shape_cast %113 : vector<16x4xbf16> to vector<1x16x4xbf16>
    %c9 = arith.constant 9 : index
    %c1_64 = arith.constant 1 : index
    %c0_65 = arith.constant 0 : index
    %115 = vector.load %arg7[%c9, %c1_64, %c0_65] : memref<18x18x4xbf16, #tpu.memory_space<vmem>>, vector<1x16x4xbf16>
    tpu.vector_store %arg7[%c9, %c1_64, %c0_65], %114 {strides = array<i32>} : memref<18x18x4xbf16, #tpu.memory_space<vmem>>, vector<1x16x4xbf16>,
    %116 = vector.extract_strided_slice %22 {offsets = [4, 0, 0], sizes = [1, 16, 4], strides = [1, 1, 1]} : vector<8x16x4xf32> to vector<1x16x4xf32>
    %117 = vector.shape_cast %116 : vector<1x16x4xf32> to vector<16x4xf32>
    %118 = vector.extract_strided_slice %22 {offsets = [5, 0, 0], sizes = [1, 16, 4], strides = [1, 1, 1]} : vector<8x16x4xf32> to vector<1x16x4xf32>
    %119 = vector.shape_cast %118 : vector<1x16x4xf32> to vector<16x4xf32>
    %120 = arith.subf %119, %117 : vector<16x4xf32>
    %cst_66 = arith.constant 2.000000e-01 : f32
    %121 = vector.broadcast %cst_66 : f32 to vector<16x4xf32>
    %122 = arith.mulf %121, %120 : vector<16x4xf32>
    %123 = arith.addf %117, %122 : vector<16x4xf32>
    %124 = arith.truncf %123 : vector<16x4xf32> to vector<16x4xbf16>
    %125 = vector.shape_cast %124 : vector<16x4xbf16> to vector<1x16x4xbf16>
    %c10 = arith.constant 10 : index
    %c1_67 = arith.constant 1 : index
    %c0_68 = arith.constant 0 : index
    %126 = vector.load %arg7[%c10, %c1_67, %c0_68] : memref<18x18x4xbf16, #tpu.memory_space<vmem>>, vector<1x16x4xbf16>
    tpu.vector_store %arg7[%c10, %c1_67, %c0_68], %125 {strides = array<i32>} : memref<18x18x4xbf16, #tpu.memory_space<vmem>>, vector<1x16x4xbf16>,
    %127 = vector.extract_strided_slice %22 {offsets = [4, 0, 0], sizes = [1, 16, 4], strides = [1, 1, 1]} : vector<8x16x4xf32> to vector<1x16x4xf32>
    %128 = vector.shape_cast %127 : vector<1x16x4xf32> to vector<16x4xf32>
    %129 = vector.extract_strided_slice %22 {offsets = [5, 0, 0], sizes = [1, 16, 4], strides = [1, 1, 1]} : vector<8x16x4xf32> to vector<1x16x4xf32>
    %130 = vector.shape_cast %129 : vector<1x16x4xf32> to vector<16x4xf32>
    %131 = arith.subf %130, %128 : vector<16x4xf32>
    %cst_69 = arith.constant 0.666666686 : f32
    %132 = vector.broadcast %cst_69 : f32 to vector<16x4xf32>
    %133 = arith.mulf %132, %131 : vector<16x4xf32>
    %134 = arith.addf %128, %133 : vector<16x4xf32>
    %135 = arith.truncf %134 : vector<16x4xf32> to vector<16x4xbf16>
    %136 = vector.shape_cast %135 : vector<16x4xbf16> to vector<1x16x4xbf16>
    %c11 = arith.constant 11 : index
    %c1_70 = arith.constant 1 : index
    %c0_71 = arith.constant 0 : index
    %137 = vector.load %arg7[%c11, %c1_70, %c0_71] : memref<18x18x4xbf16, #tpu.memory_space<vmem>>, vector<1x16x4xbf16>
    tpu.vector_store %arg7[%c11, %c1_70, %c0_71], %136 {strides = array<i32>} : memref<18x18x4xbf16, #tpu.memory_space<vmem>>, vector<1x16x4xbf16>,
    %138 = vector.extract_strided_slice %22 {offsets = [5, 0, 0], sizes = [1, 16, 4], strides = [1, 1, 1]} : vector<8x16x4xf32> to vector<1x16x4xf32>
    %139 = vector.shape_cast %138 : vector<1x16x4xf32> to vector<16x4xf32>
    %140 = vector.extract_strided_slice %22 {offsets = [6, 0, 0], sizes = [1, 16, 4], strides = [1, 1, 1]} : vector<8x16x4xf32> to vector<1x16x4xf32>
    %141 = vector.shape_cast %140 : vector<1x16x4xf32> to vector<16x4xf32>
    %142 = arith.subf %141, %139 : vector<16x4xf32>
    %cst_72 = arith.constant 0.13333334 : f32
    %143 = vector.broadcast %cst_72 : f32 to vector<16x4xf32>
    %144 = arith.mulf %143, %142 : vector<16x4xf32>
    %145 = arith.addf %139, %144 : vector<16x4xf32>
    %146 = arith.truncf %145 : vector<16x4xf32> to vector<16x4xbf16>
    %147 = vector.shape_cast %146 : vector<16x4xbf16> to vector<1x16x4xbf16>
    %c12 = arith.constant 12 : index
    %c1_73 = arith.constant 1 : index
    %c0_74 = arith.constant 0 : index
    %148 = vector.load %arg7[%c12, %c1_73, %c0_74] : memref<18x18x4xbf16, #tpu.memory_space<vmem>>, vector<1x16x4xbf16>
    tpu.vector_store %arg7[%c12, %c1_73, %c0_74], %147 {strides = array<i32>} : memref<18x18x4xbf16, #tpu.memory_space<vmem>>, vector<1x16x4xbf16>,
    %149 = vector.extract_strided_slice %22 {offsets = [5, 0, 0], sizes = [1, 16, 4], strides = [1, 1, 1]} : vector<8x16x4xf32> to vector<1x16x4xf32>
    %150 = vector.shape_cast %149 : vector<1x16x4xf32> to vector<16x4xf32>
    %151 = vector.extract_strided_slice %22 {offsets = [6, 0, 0], sizes = [1, 16, 4], strides = [1, 1, 1]} : vector<8x16x4xf32> to vector<1x16x4xf32>
    %152 = vector.shape_cast %151 : vector<1x16x4xf32> to vector<16x4xf32>
    %153 = arith.subf %152, %150 : vector<16x4xf32>
    %cst_75 = arith.constant 6.000000e-01 : f32
    %154 = vector.broadcast %cst_75 : f32 to vector<16x4xf32>
    %155 = arith.mulf %154, %153 : vector<16x4xf32>
    %156 = arith.addf %150, %155 : vector<16x4xf32>
    %157 = arith.truncf %156 : vector<16x4xf32> to vector<16x4xbf16>
    %158 = vector.shape_cast %157 : vector<16x4xbf16> to vector<1x16x4xbf16>
    %c13 = arith.constant 13 : index
    %c1_76 = arith.constant 1 : index
    %c0_77 = arith.constant 0 : index
    %159 = vector.load %arg7[%c13, %c1_76, %c0_77] : memref<18x18x4xbf16, #tpu.memory_space<vmem>>, vector<1x16x4xbf16>
    tpu.vector_store %arg7[%c13, %c1_76, %c0_77], %158 {strides = array<i32>} : memref<18x18x4xbf16, #tpu.memory_space<vmem>>, vector<1x16x4xbf16>,
    %160 = vector.extract_strided_slice %22 {offsets = [6, 0, 0], sizes = [1, 16, 4], strides = [1, 1, 1]} : vector<8x16x4xf32> to vector<1x16x4xf32>
    %161 = vector.shape_cast %160 : vector<1x16x4xf32> to vector<16x4xf32>
    %162 = vector.extract_strided_slice %22 {offsets = [7, 0, 0], sizes = [1, 16, 4], strides = [1, 1, 1]} : vector<8x16x4xf32> to vector<1x16x4xf32>
    %163 = vector.shape_cast %162 : vector<1x16x4xf32> to vector<16x4xf32>
    %164 = arith.subf %163, %161 : vector<16x4xf32>
    %cst_78 = arith.constant 0.0666666701 : f32
    %165 = vector.broadcast %cst_78 : f32 to vector<16x4xf32>
    %166 = arith.mulf %165, %164 : vector<16x4xf32>
    %167 = arith.addf %161, %166 : vector<16x4xf32>
    %168 = arith.truncf %167 : vector<16x4xf32> to vector<16x4xbf16>
    %169 = vector.shape_cast %168 : vector<16x4xbf16> to vector<1x16x4xbf16>
    %c14 = arith.constant 14 : index
    %c1_79 = arith.constant 1 : index
    %c0_80 = arith.constant 0 : index
    %170 = vector.load %arg7[%c14, %c1_79, %c0_80] : memref<18x18x4xbf16, #tpu.memory_space<vmem>>, vector<1x16x4xbf16>
    tpu.vector_store %arg7[%c14, %c1_79, %c0_80], %169 {strides = array<i32>} : memref<18x18x4xbf16, #tpu.memory_space<vmem>>, vector<1x16x4xbf16>,
    %171 = vector.extract_strided_slice %22 {offsets = [6, 0, 0], sizes = [1, 16, 4], strides = [1, 1, 1]} : vector<8x16x4xf32> to vector<1x16x4xf32>
    %172 = vector.shape_cast %171 : vector<1x16x4xf32> to vector<16x4xf32>
    %173 = vector.extract_strided_slice %22 {offsets = [7, 0, 0], sizes = [1, 16, 4], strides = [1, 1, 1]} : vector<8x16x4xf32> to vector<1x16x4xf32>
    %174 = vector.shape_cast %173 : vector<1x16x4xf32> to vector<16x4xf32>
    %175 = arith.subf %174, %172 : vector<16x4xf32>
    %cst_81 = arith.constant 0.533333361 : f32
    %176 = vector.broadcast %cst_81 : f32 to vector<16x4xf32>
    %177 = arith.mulf %176, %175 : vector<16x4xf32>
    %178 = arith.addf %172, %177 : vector<16x4xf32>
    %179 = arith.truncf %178 : vector<16x4xf32> to vector<16x4xbf16>
    %180 = vector.shape_cast %179 : vector<16x4xbf16> to vector<1x16x4xbf16>
    %c15 = arith.constant 15 : index
    %c1_82 = arith.constant 1 : index
    %c0_83 = arith.constant 0 : index
    %181 = vector.load %arg7[%c15, %c1_82, %c0_83] : memref<18x18x4xbf16, #tpu.memory_space<vmem>>, vector<1x16x4xbf16>
    tpu.vector_store %arg7[%c15, %c1_82, %c0_83], %180 {strides = array<i32>} : memref<18x18x4xbf16, #tpu.memory_space<vmem>>, vector<1x16x4xbf16>,
    %182 = vector.extract_strided_slice %22 {offsets = [6, 0, 0], sizes = [1, 16, 4], strides = [1, 1, 1]} : vector<8x16x4xf32> to vector<1x16x4xf32>
    %183 = vector.shape_cast %182 : vector<1x16x4xf32> to vector<16x4xf32>
    %184 = vector.extract_strided_slice %22 {offsets = [7, 0, 0], sizes = [1, 16, 4], strides = [1, 1, 1]} : vector<8x16x4xf32> to vector<1x16x4xf32>
    %185 = vector.shape_cast %184 : vector<1x16x4xf32> to vector<16x4xf32>
    %186 = arith.subf %185, %183 : vector<16x4xf32>
    %cst_84 = arith.constant 1.000000e+00 : f32
    %187 = vector.broadcast %cst_84 : f32 to vector<16x4xf32>
    %188 = arith.mulf %187, %186 : vector<16x4xf32>
    %189 = arith.addf %183, %188 : vector<16x4xf32>
    %190 = arith.truncf %189 : vector<16x4xf32> to vector<16x4xbf16>
    %191 = vector.shape_cast %190 : vector<16x4xbf16> to vector<1x16x4xbf16>
    %c16 = arith.constant 16 : index
    %c1_85 = arith.constant 1 : index
    %c0_86 = arith.constant 0 : index
    %192 = vector.load %arg7[%c16, %c1_85, %c0_86] : memref<18x18x4xbf16, #tpu.memory_space<vmem>>, vector<1x16x4xbf16>
    tpu.vector_store %arg7[%c16, %c1_85, %c0_86], %191 {strides = array<i32>} : memref<18x18x4xbf16, #tpu.memory_space<vmem>>, vector<1x16x4xbf16>,
    %cst_87 = arith.constant 0.000000e+00 : f32
    %193 = vector.broadcast %cst_87 : f32 to vector<256x4xf32>
    %c0_88 = arith.constant 0 : index
    %c0_89 = arith.constant 0 : index
    %c0_90 = arith.constant 0 : index
    %194 = vector.load %arg6[%c0_88, %c0_89, %c0_90] : memref<18x18x4xbf16, #tpu.memory_space<vmem>>, vector<16x16x4xbf16>
    %195 = vector.shape_cast %194 : vector<16x16x4xbf16> to vector<256x4xbf16>
    %c0_91 = arith.constant 0 : index
    %c0_92 = arith.constant 0 : index
    %c0_93 = arith.constant 0 : index
    %196 = vector.load %arg7[%c0_91, %c0_92, %c0_93] : memref<18x18x4xbf16, #tpu.memory_space<vmem>>, vector<16x16x4xbf16>
    %197 = vector.shape_cast %196 : vector<16x16x4xbf16> to vector<256x4xbf16>
    %198 = tpu.concatenate %195, %197 in 1 : vector<256x4xbf16>, vector<256x4xbf16> -> vector<256x8xbf16>
    %c0_94 = arith.constant 0 : index
    %c0_95 = arith.constant 0 : index
    %c0_96 = arith.constant 0 : index
    %199 = vector.load %arg3[%c0_94, %c0_95, %c0_96] : memref<9x8x4xbf16, #tpu.memory_space<vmem>>, vector<1x8x4xbf16>
    %200 = vector.shape_cast %199 : vector<1x8x4xbf16> to vector<8x4xbf16>
    %cst_97 = arith.constant dense<0.000000e+00> : vector<256x4xf32>
    %201 = tpu.matmul %198, %200, %cst_97 {dimension_numbers = #tpu.dot_dimension_numbers<[1], [0], [0], [1], [0, 0, 1, 1], [], []>} : vector<256x8xbf16>, vector<8x4xbf16>, vector<256x4xf32> -> vector<256x4xf32>
    %202 = arith.addf %193, %201 : vector<256x4xf32>
    %c0_98 = arith.constant 0 : index
    %c1_99 = arith.constant 1 : index
    %c0_100 = arith.constant 0 : index
    %203 = vector.load %arg6[%c0_98, %c1_99, %c0_100] : memref<18x18x4xbf16, #tpu.memory_space<vmem>>, vector<16x16x4xbf16>
    %204 = vector.shape_cast %203 : vector<16x16x4xbf16> to vector<256x4xbf16>
    %c0_101 = arith.constant 0 : index
    %c1_102 = arith.constant 1 : index
    %c0_103 = arith.constant 0 : index
    %205 = vector.load %arg7[%c0_101, %c1_102, %c0_103] : memref<18x18x4xbf16, #tpu.memory_space<vmem>>, vector<16x16x4xbf16>
    %206 = vector.shape_cast %205 : vector<16x16x4xbf16> to vector<256x4xbf16>
    %207 = tpu.concatenate %204, %206 in 1 : vector<256x4xbf16>, vector<256x4xbf16> -> vector<256x8xbf16>
    %c1_104 = arith.constant 1 : index
    %c0_105 = arith.constant 0 : index
    %c0_106 = arith.constant 0 : index
    %208 = vector.load %arg3[%c1_104, %c0_105, %c0_106] : memref<9x8x4xbf16, #tpu.memory_space<vmem>>, vector<1x8x4xbf16>
    %209 = vector.shape_cast %208 : vector<1x8x4xbf16> to vector<8x4xbf16>
    %cst_107 = arith.constant dense<0.000000e+00> : vector<256x4xf32>
    %210 = tpu.matmul %207, %209, %cst_107 {dimension_numbers = #tpu.dot_dimension_numbers<[1], [0], [0], [1], [0, 0, 1, 1], [], []>} : vector<256x8xbf16>, vector<8x4xbf16>, vector<256x4xf32> -> vector<256x4xf32>
    %211 = arith.addf %202, %210 : vector<256x4xf32>
    %c0_108 = arith.constant 0 : index
    %c2_109 = arith.constant 2 : index
    %c0_110 = arith.constant 0 : index
    %212 = vector.load %arg6[%c0_108, %c2_109, %c0_110] : memref<18x18x4xbf16, #tpu.memory_space<vmem>>, vector<16x16x4xbf16>
    %213 = vector.shape_cast %212 : vector<16x16x4xbf16> to vector<256x4xbf16>
    %c0_111 = arith.constant 0 : index
    %c2_112 = arith.constant 2 : index
    %c0_113 = arith.constant 0 : index
    %214 = vector.load %arg7[%c0_111, %c2_112, %c0_113] : memref<18x18x4xbf16, #tpu.memory_space<vmem>>, vector<16x16x4xbf16>
    %215 = vector.shape_cast %214 : vector<16x16x4xbf16> to vector<256x4xbf16>
    %216 = tpu.concatenate %213, %215 in 1 : vector<256x4xbf16>, vector<256x4xbf16> -> vector<256x8xbf16>
    %c2_114 = arith.constant 2 : index
    %c0_115 = arith.constant 0 : index
    %c0_116 = arith.constant 0 : index
    %217 = vector.load %arg3[%c2_114, %c0_115, %c0_116] : memref<9x8x4xbf16, #tpu.memory_space<vmem>>, vector<1x8x4xbf16>
    %218 = vector.shape_cast %217 : vector<1x8x4xbf16> to vector<8x4xbf16>
    %cst_117 = arith.constant dense<0.000000e+00> : vector<256x4xf32>
    %219 = tpu.matmul %216, %218, %cst_117 {dimension_numbers = #tpu.dot_dimension_numbers<[1], [0], [0], [1], [0, 0, 1, 1], [], []>} : vector<256x8xbf16>, vector<8x4xbf16>, vector<256x4xf32> -> vector<256x4xf32>
    %220 = arith.addf %211, %219 : vector<256x4xf32>
    %c1_118 = arith.constant 1 : index
    %c0_119 = arith.constant 0 : index
    %c0_120 = arith.constant 0 : index
    %221 = vector.load %arg6[%c1_118, %c0_119, %c0_120] : memref<18x18x4xbf16, #tpu.memory_space<vmem>>, vector<16x16x4xbf16>
    %222 = vector.shape_cast %221 : vector<16x16x4xbf16> to vector<256x4xbf16>
    %c1_121 = arith.constant 1 : index
    %c0_122 = arith.constant 0 : index
    %c0_123 = arith.constant 0 : index
    %223 = vector.load %arg7[%c1_121, %c0_122, %c0_123] : memref<18x18x4xbf16, #tpu.memory_space<vmem>>, vector<16x16x4xbf16>
    %224 = vector.shape_cast %223 : vector<16x16x4xbf16> to vector<256x4xbf16>
    %225 = tpu.concatenate %222, %224 in 1 : vector<256x4xbf16>, vector<256x4xbf16> -> vector<256x8xbf16>
    %c3_124 = arith.constant 3 : index
    %c0_125 = arith.constant 0 : index
    %c0_126 = arith.constant 0 : index
    %226 = vector.load %arg3[%c3_124, %c0_125, %c0_126] : memref<9x8x4xbf16, #tpu.memory_space<vmem>>, vector<1x8x4xbf16>
    %227 = vector.shape_cast %226 : vector<1x8x4xbf16> to vector<8x4xbf16>
    %cst_127 = arith.constant dense<0.000000e+00> : vector<256x4xf32>
    %228 = tpu.matmul %225, %227, %cst_127 {dimension_numbers = #tpu.dot_dimension_numbers<[1], [0], [0], [1], [0, 0, 1, 1], [], []>} : vector<256x8xbf16>, vector<8x4xbf16>, vector<256x4xf32> -> vector<256x4xf32>
    %229 = arith.addf %220, %228 : vector<256x4xf32>
    %c1_128 = arith.constant 1 : index
    %c1_129 = arith.constant 1 : index
    %c0_130 = arith.constant 0 : index
    %230 = vector.load %arg6[%c1_128, %c1_129, %c0_130] : memref<18x18x4xbf16, #tpu.memory_space<vmem>>, vector<16x16x4xbf16>
    %231 = vector.shape_cast %230 : vector<16x16x4xbf16> to vector<256x4xbf16>
    %c1_131 = arith.constant 1 : index
    %c1_132 = arith.constant 1 : index
    %c0_133 = arith.constant 0 : index
    %232 = vector.load %arg7[%c1_131, %c1_132, %c0_133] : memref<18x18x4xbf16, #tpu.memory_space<vmem>>, vector<16x16x4xbf16>
    %233 = vector.shape_cast %232 : vector<16x16x4xbf16> to vector<256x4xbf16>
    %234 = tpu.concatenate %231, %233 in 1 : vector<256x4xbf16>, vector<256x4xbf16> -> vector<256x8xbf16>
    %c4_134 = arith.constant 4 : index
    %c0_135 = arith.constant 0 : index
    %c0_136 = arith.constant 0 : index
    %235 = vector.load %arg3[%c4_134, %c0_135, %c0_136] : memref<9x8x4xbf16, #tpu.memory_space<vmem>>, vector<1x8x4xbf16>
    %236 = vector.shape_cast %235 : vector<1x8x4xbf16> to vector<8x4xbf16>
    %cst_137 = arith.constant dense<0.000000e+00> : vector<256x4xf32>
    %237 = tpu.matmul %234, %236, %cst_137 {dimension_numbers = #tpu.dot_dimension_numbers<[1], [0], [0], [1], [0, 0, 1, 1], [], []>} : vector<256x8xbf16>, vector<8x4xbf16>, vector<256x4xf32> -> vector<256x4xf32>
    %238 = arith.addf %229, %237 : vector<256x4xf32>
    %c1_138 = arith.constant 1 : index
    %c2_139 = arith.constant 2 : index
    %c0_140 = arith.constant 0 : index
    %239 = vector.load %arg6[%c1_138, %c2_139, %c0_140] : memref<18x18x4xbf16, #tpu.memory_space<vmem>>, vector<16x16x4xbf16>
    %240 = vector.shape_cast %239 : vector<16x16x4xbf16> to vector<256x4xbf16>
    %c1_141 = arith.constant 1 : index
    %c2_142 = arith.constant 2 : index
    %c0_143 = arith.constant 0 : index
    %241 = vector.load %arg7[%c1_141, %c2_142, %c0_143] : memref<18x18x4xbf16, #tpu.memory_space<vmem>>, vector<16x16x4xbf16>
    %242 = vector.shape_cast %241 : vector<16x16x4xbf16> to vector<256x4xbf16>
    %243 = tpu.concatenate %240, %242 in 1 : vector<256x4xbf16>, vector<256x4xbf16> -> vector<256x8xbf16>
    %c5_144 = arith.constant 5 : index
    %c0_145 = arith.constant 0 : index
    %c0_146 = arith.constant 0 : index
    %244 = vector.load %arg3[%c5_144, %c0_145, %c0_146] : memref<9x8x4xbf16, #tpu.memory_space<vmem>>, vector<1x8x4xbf16>
    %245 = vector.shape_cast %244 : vector<1x8x4xbf16> to vector<8x4xbf16>
    %cst_147 = arith.constant dense<0.000000e+00> : vector<256x4xf32>
    %246 = tpu.matmul %243, %245, %cst_147 {dimension_numbers = #tpu.dot_dimension_numbers<[1], [0], [0], [1], [0, 0, 1, 1], [], []>} : vector<256x8xbf16>, vector<8x4xbf16>, vector<256x4xf32> -> vector<256x4xf32>
    %247 = arith.addf %238, %246 : vector<256x4xf32>
    %c2_148 = arith.constant 2 : index
    %c0_149 = arith.constant 0 : index
    %c0_150 = arith.constant 0 : index
    %248 = vector.load %arg6[%c2_148, %c0_149, %c0_150] : memref<18x18x4xbf16, #tpu.memory_space<vmem>>, vector<16x16x4xbf16>
    %249 = vector.shape_cast %248 : vector<16x16x4xbf16> to vector<256x4xbf16>
    %c2_151 = arith.constant 2 : index
    %c0_152 = arith.constant 0 : index
    %c0_153 = arith.constant 0 : index
    %250 = vector.load %arg7[%c2_151, %c0_152, %c0_153] : memref<18x18x4xbf16, #tpu.memory_space<vmem>>, vector<16x16x4xbf16>
    %251 = vector.shape_cast %250 : vector<16x16x4xbf16> to vector<256x4xbf16>
    %252 = tpu.concatenate %249, %251 in 1 : vector<256x4xbf16>, vector<256x4xbf16> -> vector<256x8xbf16>
    %c6_154 = arith.constant 6 : index
    %c0_155 = arith.constant 0 : index
    %c0_156 = arith.constant 0 : index
    %253 = vector.load %arg3[%c6_154, %c0_155, %c0_156] : memref<9x8x4xbf16, #tpu.memory_space<vmem>>, vector<1x8x4xbf16>
    %254 = vector.shape_cast %253 : vector<1x8x4xbf16> to vector<8x4xbf16>
    %cst_157 = arith.constant dense<0.000000e+00> : vector<256x4xf32>
    %255 = tpu.matmul %252, %254, %cst_157 {dimension_numbers = #tpu.dot_dimension_numbers<[1], [0], [0], [1], [0, 0, 1, 1], [], []>} : vector<256x8xbf16>, vector<8x4xbf16>, vector<256x4xf32> -> vector<256x4xf32>
    %256 = arith.addf %247, %255 : vector<256x4xf32>
    %c2_158 = arith.constant 2 : index
    %c1_159 = arith.constant 1 : index
    %c0_160 = arith.constant 0 : index
    %257 = vector.load %arg6[%c2_158, %c1_159, %c0_160] : memref<18x18x4xbf16, #tpu.memory_space<vmem>>, vector<16x16x4xbf16>
    %258 = vector.shape_cast %257 : vector<16x16x4xbf16> to vector<256x4xbf16>
    %c2_161 = arith.constant 2 : index
    %c1_162 = arith.constant 1 : index
    %c0_163 = arith.constant 0 : index
    %259 = vector.load %arg7[%c2_161, %c1_162, %c0_163] : memref<18x18x4xbf16, #tpu.memory_space<vmem>>, vector<16x16x4xbf16>
    %260 = vector.shape_cast %259 : vector<16x16x4xbf16> to vector<256x4xbf16>
    %261 = tpu.concatenate %258, %260 in 1 : vector<256x4xbf16>, vector<256x4xbf16> -> vector<256x8xbf16>
    %c7_164 = arith.constant 7 : index
    %c0_165 = arith.constant 0 : index
    %c0_166 = arith.constant 0 : index
    %262 = vector.load %arg3[%c7_164, %c0_165, %c0_166] : memref<9x8x4xbf16, #tpu.memory_space<vmem>>, vector<1x8x4xbf16>
    %263 = vector.shape_cast %262 : vector<1x8x4xbf16> to vector<8x4xbf16>
    %cst_167 = arith.constant dense<0.000000e+00> : vector<256x4xf32>
    %264 = tpu.matmul %261, %263, %cst_167 {dimension_numbers = #tpu.dot_dimension_numbers<[1], [0], [0], [1], [0, 0, 1, 1], [], []>} : vector<256x8xbf16>, vector<8x4xbf16>, vector<256x4xf32> -> vector<256x4xf32>
    %265 = arith.addf %256, %264 : vector<256x4xf32>
    %c2_168 = arith.constant 2 : index
    %c2_169 = arith.constant 2 : index
    %c0_170 = arith.constant 0 : index
    %266 = vector.load %arg6[%c2_168, %c2_169, %c0_170] : memref<18x18x4xbf16, #tpu.memory_space<vmem>>, vector<16x16x4xbf16>
    %267 = vector.shape_cast %266 : vector<16x16x4xbf16> to vector<256x4xbf16>
    %c2_171 = arith.constant 2 : index
    %c2_172 = arith.constant 2 : index
    %c0_173 = arith.constant 0 : index
    %268 = vector.load %arg7[%c2_171, %c2_172, %c0_173] : memref<18x18x4xbf16, #tpu.memory_space<vmem>>, vector<16x16x4xbf16>
    %269 = vector.shape_cast %268 : vector<16x16x4xbf16> to vector<256x4xbf16>
    %270 = tpu.concatenate %267, %269 in 1 : vector<256x4xbf16>, vector<256x4xbf16> -> vector<256x8xbf16>
    %c8_174 = arith.constant 8 : index
    %c0_175 = arith.constant 0 : index
    %c0_176 = arith.constant 0 : index
    %271 = vector.load %arg3[%c8_174, %c0_175, %c0_176] : memref<9x8x4xbf16, #tpu.memory_space<vmem>>, vector<1x8x4xbf16>
    %272 = vector.shape_cast %271 : vector<1x8x4xbf16> to vector<8x4xbf16>
    %cst_177 = arith.constant dense<0.000000e+00> : vector<256x4xf32>
    %273 = tpu.matmul %270, %272, %cst_177 {dimension_numbers = #tpu.dot_dimension_numbers<[1], [0], [0], [1], [0, 0, 1, 1], [], []>} : vector<256x8xbf16>, vector<8x4xbf16>, vector<256x4xf32> -> vector<256x4xf32>
    %274 = arith.addf %265, %273 : vector<256x4xf32>
    %275 = arith.truncf %274 : vector<256x4xf32> to vector<256x4xbf16>
    %c0_178 = arith.constant 0 : index
    %c0_179 = arith.constant 0 : index
    %c0_180 = arith.constant 0 : index
    %276 = vector.load %arg4[%c0_178, %c0_179, %c0_180] : memref<1x256x4xbf16, #tpu.memory_space<vmem>>, vector<1x256x4xbf16>
    %277 = vector.shape_cast %276 : vector<1x256x4xbf16> to vector<256x4xbf16>
    %278 = vector.shape_cast %275 : vector<256x4xbf16> to vector<1x256x4xbf16>
    tpu.vector_store %arg4[%c0_178, %c0_179, %c0_180], %278 {strides = array<i32>} : memref<1x256x4xbf16, #tpu.memory_space<vmem>>, vector<1x256x4xbf16>,
    %cst_181 = arith.constant dense<0.000000e+00> : vector<4xf32>
    %279 = vector.multi_reduction <add>, %274, %cst_181 [0] : vector<256x4xf32> to vector<4xf32>
    %280 = vector.shape_cast %279 : vector<4xf32> to vector<1x4xf32>
    %281 = arith.mulf %274, %274 : vector<256x4xf32>
    %cst_182 = arith.constant dense<0.000000e+00> : vector<4xf32>
    %282 = vector.multi_reduction <add>, %281, %cst_182 [0] : vector<256x4xf32> to vector<4xf32>
    %283 = vector.shape_cast %282 : vector<4xf32> to vector<1x4xf32>
    %284 = tpu.concatenate %280, %283 in 0 : vector<1x4xf32>, vector<1x4xf32> -> vector<2x4xf32>
    %c0_183 = arith.constant 0 : index
    %c0_184 = arith.constant 0 : index
    %c0_185 = arith.constant 0 : index
    %285 = vector.load %arg5[%c0_183, %c0_184, %c0_185] : memref<1x2x4xf32, #tpu.memory_space<vmem>>, vector<1x2x4xf32>
    %286 = vector.shape_cast %285 : vector<1x2x4xf32> to vector<2x4xf32>
    %287 = vector.shape_cast %284 : vector<2x4xf32> to vector<1x2x4xf32>
    tpu.vector_store %arg5[%c0_183, %c0_184, %c0_185], %287 {strides = array<i32>} : memref<1x2x4xf32, #tpu.memory_space<vmem>>, vector<1x2x4xf32>,
    return
  }
  func.func @transform_0(%arg0: i32) -> (i32, i32, i32, i32) {
    %c0_i32 = arith.constant 0 : i32
    %c0_i32_0 = arith.constant 0 : i32
    %c0_i32_1 = arith.constant 0 : i32
    %c0_i32_2 = arith.constant 0 : i32
    return %arg0, %c0_i32, %c0_i32_0, %c0_i32_1 : i32, i32, i32, i32
  }
  func.func @transform_1(%arg0: i32) -> (i32, i32, i32, i32) {
    %c0_i32 = arith.constant 0 : i32
    %c0_i32_0 = arith.constant 0 : i32
    %c0_i32_1 = arith.constant 0 : i32
    %c0_i32_2 = arith.constant 0 : i32
    return %arg0, %c0_i32, %c0_i32_0, %c0_i32_1 : i32, i32, i32, i32
  }
  func.func @transform_2(%arg0: i32) -> (i32, i32, i32) {
    %c0_i32 = arith.constant 0 : i32
    %c0_i32_0 = arith.constant 0 : i32
    %c0_i32_1 = arith.constant 0 : i32
    %c0_i32_2 = arith.constant 0 : i32
    return %c0_i32, %c0_i32_0, %c0_i32_1 : i32, i32, i32
  }
  func.func @transform_3(%arg0: i32) -> (i32, i32, i32) {
    %c0_i32 = arith.constant 0 : i32
    %c0_i32_0 = arith.constant 0 : i32
    %c0_i32_1 = arith.constant 0 : i32
    return %arg0, %c0_i32, %c0_i32_0 : i32, i32, i32
  }
  func.func @transform_4(%arg0: i32) -> (i32, i32, i32) {
    %c0_i32 = arith.constant 0 : i32
    %c0_i32_0 = arith.constant 0 : i32
    %c0_i32_1 = arith.constant 0 : i32
    return %arg0, %c0_i32, %c0_i32_0 : i32, i32, i32
  }
}

</mosaic_0001>

<llo_original>
// kernel: tpu_custom_call.1
$region0: #{tpu_custom_call.1}
  #allocation0 [shape = 'u32[]', space=smem, size = 0x4, offset = 0x4, fixed_abs, tag = 'smem constant byte address 0x4 - core index']
  #allocation1 [shape = 'u32[72,128]{1,0:T(1,128)}', space=vmem, size = 0x9000, scoped, tag = 'internal scratch']
  #allocation2 [shape = 'bf16[18,18,4]{2,1,0:T(8,128)(2,1)}', space=vmem, size = 0x1b000, scoped, tag = 'scratch operand']
  #allocation3 [shape = 'bf16[18,18,4]{2,1,0:T(8,128)(2,1)}', space=vmem, size = 0x1b000, scoped, tag = 'scratch operand']
  %s0 = inlined_call_operand.vmem [shape: bf16[2,8,16,4], index: 0, kind: input, shape index: {}]
  %s1 = inlined_call_operand.vmem [shape: f32[2,16,16,4], index: 1, kind: input, shape index: {}]
  %s2 = inlined_call_operand.vmem [shape: bf16[9,8,4], index: 2, kind: input, shape index: {}]
  %s3 = inlined_call_operand.vmem [shape: bf16[2,256,4], index: 3, kind: output, shape index: {0}]
  %s4 = inlined_call_operand.hbm [shape: f32[2,2,4], index: 4, kind: output, shape index: {1}]
  %5 = xla_tuple %s3, %s4
  %s6 = sld [smem:[#allocation0]]
  $region53: #{tpu_custom_call.1} parent=0
    _
  %s8 = ssub.s32 1, %s6
  %s9 = scalar_select 0, %s8, %s6
  $region1: #{tpu_custom_call.1} parent=0
    #allocation4 [shape = 'u8[2048]{0}', space=vmem, size = 0x800, scoped, tag = 'output window, operand 1']
    #allocation5 [shape = 's32[2]{0}', space=sflag, size = 0x8, scoped, tag = 'scoped memory for tpu_custom_call.1']
    %10 = vsyncpa [#allocation5], 0
    %s11 = scalar_lea.sflag [#allocation5], 1
    %12 = vsyncpa %s11, 0
    loop: start=0, step=1, limit=4
    $region2: #{tpu_custom_call.1} parent=1 // loop_pre_header
      _
    $region3: #{tpu_custom_call.1} parent=1 // loop_header
      %s14 = sphi 0, %s18
      %p15 = scmp.ge.s32.totalorder %s14, 4
      %s24 = sphi 0, %s26
      %s27 = sphi 0, %s24
      %s28 = sphi 0, %s27
      %s44 = sphi 0, %s28
      %s50 = sphi 0, %s52
      %s53 = sphi 0, %s50
      %s54 = sphi 0, %s53
      %s70 = sphi 0, %s54
      %s74 = sphi 0, %s74
      %s76 = sphi 0, %s74
      %s77 = sphi 0, %s76
      %s91 = sphi 0, %s77
      %s97 = sphi 0, %s99
      %s100 = sphi 0, %s97
      %s101 = sphi 0, %s100
      %s117 = sphi 0, %s101
      %s123 = sphi 0, %s125
      %s126 = sphi 0, %s123
      %s127 = sphi 0, %s126
      %s143 = sphi 0, %s127
    $region4: #{tpu_custom_call.1} parent=1 // loop_header_branch
      %17 = sbr.rel (%p15) target = $region8
    $region5: #{tpu_custom_call.1} parent=1 // loop_body
      %s19 = ssub.s32 %s14, 1
      %s20 = ssub.s32 %s14, 2
      %s21 = sadd.s32 %s14, 1
      %s22 = ssub.s32 %s14, %s21
      %p23 = scmp.eq.s32.totalorder %s22, 0
      %s25 = sadd.s32 %s24, 1
      %s26 = scalar_select %p23, %s24, %s25
      %p29 = pneg %p23
      %p30 = scmp.eq.s32.totalorder %s14, 1
      %p31 = por %p29, %p30
      %p32 = scmp.ne.s32.totalorder %s24, %s27
      %p33 = scmp.eq.s32.totalorder %s14, 0
      %p34 = por %p32, %p33
      %p35 = scmp.ne.s32.totalorder %s24, %s27
      %p36 = scmp.eq.s32.totalorder %s19, 1
      %p37 = por %p35, %p36
      %p38 = scmp.ne.s32.totalorder %s27, %s28
      %p39 = scmp.eq.s32.totalorder %s19, 0
      %p40 = por %p38, %p39
      %p41 = scmp.ne.s32.totalorder %s27, %s28
      %p42 = scmp.eq.s32.totalorder %s20, 1
      %p43 = por %p41, %p42
      %p45 = scmp.ne.s32.totalorder %s28, %s44
      %p46 = scmp.eq.s32.totalorder %s20, 0
      %p47 = por %p45, %p46
      %s48 = ssub.s32 %s14, %s21
      %p49 = scmp.eq.s32.totalorder %s48, 0
      %s51 = sadd.s32 %s50, 1
      %s52 = scalar_select %p49, %s50, %s51
      %p55 = pneg %p49
      %p56 = scmp.eq.s32.totalorder %s14, 1
      %p57 = por %p55, %p56
      %p58 = scmp.ne.s32.totalorder %s50, %s53
      %p59 = scmp.eq.s32.totalorder %s14, 0
      %p60 = por %p58, %p59
      %p61 = scmp.ne.s32.totalorder %s50, %s53
      %p62 = scmp.eq.s32.totalorder %s19, 1
      %p63 = por %p61, %p62
      %p64 = scmp.ne.s32.totalorder %s53, %s54
      %p65 = scmp.eq.s32.totalorder %s19, 0
      %p66 = por %p64, %p65
      %p67 = scmp.ne.s32.totalorder %s53, %s54
      %p68 = scmp.eq.s32.totalorder %s20, 1
      %p69 = por %p67, %p68
      %p71 = scmp.ne.s32.totalorder %s54, %s70
      %p72 = scmp.eq.s32.totalorder %s20, 0
      %p73 = por %p71, %p72
      %s75 = sadd.s32 %s74, 1
      %p78 = scmp.eq.s32.totalorder %s14, 1
      %p79 = scmp.ne.s32.totalorder %s74, %s76
      %p80 = scmp.eq.s32.totalorder %s14, 0
      %p81 = por %p79, %p80
      %p82 = scmp.ne.s32.totalorder %s74, %s76
      %p83 = scmp.eq.s32.totalorder %s19, 1
      %p84 = por %p82, %p83
      %p85 = scmp.ne.s32.totalorder %s76, %s77
      %p86 = scmp.eq.s32.totalorder %s19, 0
      %p87 = por %p85, %p86
      %p88 = scmp.ne.s32.totalorder %s76, %s77
      %p89 = scmp.eq.s32.totalorder %s20, 1
      %p90 = por %p88, %p89
      %p92 = scmp.ne.s32.totalorder %s77, %s91
      %p93 = scmp.eq.s32.totalorder %s20, 0
      %p94 = por %p92, %p93
      %s95 = ssub.s32 %s14, %s21
      %p96 = scmp.eq.s32.totalorder %s95, 0
      %s98 = sadd.s32 %s97, 1
      %s99 = scalar_select %p96, %s97, %s98
      %p102 = pneg %p96
      %p103 = scmp.eq.s32.totalorder %s14, 1
      %p104 = por %p102, %p103
      %p105 = scmp.ne.s32.totalorder %s97, %s100
      %p106 = scmp.eq.s32.totalorder %s14, 0
      %p107 = por %p105, %p106
      %p108 = scmp.ne.s32.totalorder %s97, %s100
      %p109 = scmp.eq.s32.totalorder %s19, 1
      %p110 = por %p108, %p109
      %p111 = scmp.ne.s32.totalorder %s100, %s101
      %p112 = scmp.eq.s32.totalorder %s19, 0
      %p113 = por %p111, %p112
      %p114 = scmp.ne.s32.totalorder %s100, %s101
      %p115 = scmp.eq.s32.totalorder %s20, 1
      %p116 = por %p114, %p115
      %p118 = scmp.ne.s32.totalorder %s101, %s117
      %p119 = scmp.eq.s32.totalorder %s20, 0
      %p120 = por %p118, %p119
      %s121 = ssub.s32 %s14, %s21
      %p122 = scmp.eq.s32.totalorder %s121, 0
      %s124 = sadd.s32 %s123, 1
      %s125 = scalar_select %p122, %s123, %s124
      %p128 = pneg %p122
      %p129 = scmp.eq.s32.totalorder %s14, 1
      %p130 = por %p128, %p129
      %p131 = scmp.ne.s32.totalorder %s123, %s126
      %p132 = scmp.eq.s32.totalorder %s14, 0
      %p133 = por %p131, %p132
      %p134 = scmp.ne.s32.totalorder %s123, %s126
      %p135 = scmp.eq.s32.totalorder %s19, 1
      %p136 = por %p134, %p135
      %p137 = scmp.ne.s32.totalorder %s126, %s127
      %p138 = scmp.eq.s32.totalorder %s19, 0
      %p139 = por %p137, %p138
      %p140 = scmp.ne.s32.totalorder %s126, %s127
      %p141 = scmp.eq.s32.totalorder %s20, 1
      %p142 = por %p140, %p141
      %p144 = scmp.ne.s32.totalorder %s127, %s143
      %p145 = scmp.eq.s32.totalorder %s20, 0
      %p146 = por %p144, %p145
      %p147 = scmp.le.s32.totalorder 1, %s14
      %p148 = scmp.lt.s32.totalorder %s14, 3
      %p149 = pnand %p147, %p148
      %p150 = pneg %p149
      // Predicated region
      $region9: #{tpu_custom_call.1} parent=5 // pred_check
        _
      $region10: #{tpu_custom_call.1} parent=5 // pred_check_branch
        %152 = sbr.rel (%p149) target = $region12
      $region11: #{tpu_custom_call.1} parent=5 // pred_region
        %s153 = ssub.s32 %s14, 1
        // Predicated region
        $region13: #{tpu_custom_call.1} parent=11 // pred_check
          %p154 = pneg %p87
        $region14: #{tpu_custom_call.1} parent=11 // pred_check_branch
          %156 = sbr.rel (%p154) target = $region16
        $region15: #{tpu_custom_call.1} parent=11 // pred_region
          _
        $region16: #{tpu_custom_call.1} parent=11 // pred_fallthru
          _
      $region12: #{tpu_custom_call.1} parent=5 // pred_fallthru
        _
      %p157 = scmp.lt.s32.totalorder %s14, 2
      // Predicated region
      $region17: #{tpu_custom_call.1} parent=5 // pred_check
        %p158 = pneg %p157
      $region18: #{tpu_custom_call.1} parent=5 // pred_check_branch
        %160 = sbr.rel (%p158) target = $region20
      $region19: #{tpu_custom_call.1} parent=5 // pred_region
        // Predicated region
        $region21: #{tpu_custom_call.1} parent=19 // pred_check
          %p161 = pneg %p34
        $region22: #{tpu_custom_call.1} parent=19 // pred_check_branch
          %163 = sbr.rel (%p161) target = $region24
        $region23: #{tpu_custom_call.1} parent=19 // pred_region
          %p164 = scmp.lt.s32.totalorder %s14, 1
          %s165 = scalar_select %p164, %s14, 1
          %s166 = smul.addr %s165, 16
          %s167 = smul.addr %s166, 4
          %s168 = scalar_lea.vmem %s0, %s167
        $region24: #{tpu_custom_call.1} parent=19 // pred_fallthru
          _
        // Predicated region
        $region25: #{tpu_custom_call.1} parent=19 // pred_check
          %p169 = pneg %p60
        $region26: #{tpu_custom_call.1} parent=19 // pred_check_branch
          %171 = sbr.rel (%p169) target = $region28
        $region27: #{tpu_custom_call.1} parent=19 // pred_region
          %p172 = scmp.lt.s32.totalorder %s14, 1
          %s173 = scalar_select %p172, %s14, 1
          %s174 = smul.addr %s173, 32
          %s175 = smul.addr %s174, 8
          %s176 = scalar_lea.vmem %s1, %s175
        $region28: #{tpu_custom_call.1} parent=19 // pred_fallthru
          _
      $region20: #{tpu_custom_call.1} parent=5 // pred_fallthru
        _
      %p177 = scmp.le.s32.totalorder 1, %s14
      %p178 = scmp.lt.s32.totalorder %s14, 3
      %p179 = pnand %p177, %p178
      %p180 = pneg %p179
      // Predicated region
      $region29: #{tpu_custom_call.1} parent=5 // pred_check
        _
      $region30: #{tpu_custom_call.1} parent=5 // pred_check_branch
        %182 = sbr.rel (%p179) target = $region32
      $region31: #{tpu_custom_call.1} parent=5 // pred_region
        %s183 = ssub.s32 %s14, 1
        %p184 = scmp.lt.s32.totalorder %s19, 1
        %s185 = scalar_select %p184, %s19, 1
        %s186 = smul.addr %s185, 16
        %s187 = smul.addr %s186, 4
        %s188 = scalar_lea.vmem %s0, %s187
        %p189 = pneg %p40
        %p190 = pneg %p37
        %p191 = scmp.lt.s32.totalorder %s19, 1
        %s192 = scalar_select %p191, %s19, 1
        %s193 = smul.addr %s192, 32
        %s194 = smul.addr %s193, 8
        %s195 = scalar_lea.vmem %s1, %s194
        %p196 = pneg %p66
        %p197 = pneg %p63
        %p198 = pneg %p87
        %p199 = pneg %p84
        %p200 = pneg %p113
        %p201 = pneg %p110
        %p202 = scmp.lt.s32.totalorder %s19, 1
        %s203 = scalar_select %p202, %s19, 1
        %s204 = smul.addr %s203, 32
        %s205 = smul.addr %s204, 4
        %s206 = scalar_lea.vmem %s3, %s205
        %p207 = pneg %p139
        %p208 = pneg %p136
        %s209 = sand.u32 %s126, 1
        %s210 = scalar_lea.sflag [#allocation5], %s209
        %s211 = sand.u32 %s126, 1
        %s212 = smul.addr %s211, 2
        %s213 = scalar_lea.vmem [#allocation4], %s212
        %p214 = scmp.lt.s32.totalorder %s19, 1
        %s215 = scalar_select %p214, %s19, 1
        %s216 = smul.addr %s215, 16
        %s217 = smul.addr %s216, 4
        %s218 = scalar_lea.vmem %s0, %s217
        %p219 = scmp.lt.s32.totalorder %s19, 1
        %s220 = scalar_select %p219, %s19, 1
        %s221 = smul.addr %s220, 32
        %s222 = smul.addr %s221, 8
        %s223 = scalar_lea.vmem %s1, %s222
        %p224 = scmp.lt.s32.totalorder %s19, 1
        %s225 = scalar_select %p224, %s19, 1
        %s226 = smul.addr %s225, 32
        %s227 = smul.addr %s226, 4
        %s228 = scalar_lea.vmem %s3, %s227
        %vm230 = vcmask 27648
        %231 = vst.msk [vmem:[#allocation2] sm:$0xf] %vm230, 0
        %232 = vst.msk [vmem:[#allocation2 + $0x4] sm:$0xf] %vm230, 0
        %vm233 = vcmask 24576
        %234 = vst.msk [vmem:[#allocation2 + $0x8] sm:$0x1] %vm233, 0
        %s235 = scalar_lea.vmem [#allocation2], 204
        %236 = vst.msk [vmem:[%s235] sm:$0xf] %vm230, 0
        %237 = vst.msk [vmem:[%s235 + $0x4] sm:$0xf] %vm230, 0
        %238 = vst.msk [vmem:[%s235 + $0x8] sm:$0x1] %vm233, 0
        %vm239 = vcmask 24576
        %vm240 = vsmask.f32 256
        %vm241 = vmand %vm239, %vm240
        %v242 = vld [vmem:[#allocation2] sm:$0x1]
        %v243 = vsel %vm241, 0, %v242
        %244 = vst [vmem:[#allocation2] sm:$0x1] %v243
        %v245 = vld [vmem:[#allocation2 + $0xc] sm:$0x1]
        %v246 = vsel %vm241, 0, %v245
        %247 = vst [vmem:[#allocation2 + $0xc] sm:$0x1] %v246
        %v248 = vld [vmem:[#allocation2 + $0x18] sm:$0x1]
        %v249 = vsel %vm241, 0, %v248
        %250 = vst [vmem:[#allocation2 + $0x18] sm:$0x1] %v249
        %v251 = vld [vmem:[#allocation2 + $0x24] sm:$0x1]
        %v252 = vsel %vm241, 0, %v251
        %253 = vst [vmem:[#allocation2 + $0x24] sm:$0x1] %v252
        %v254 = vld [vmem:[#allocation2 + $0x30] sm:$0x1]
        %v255 = vsel %vm241, 0, %v254
        %256 = vst [vmem:[#allocation2 + $0x30] sm:$0x1] %v255
        %v257 = vld [vmem:[#allocation2 + $0x3c] sm:$0x1]
        %v258 = vsel %vm241, 0, %v257
        %259 = vst [vmem:[#allocation2 + $0x3c] sm:$0x1] %v258
        %v260 = vld [vmem:[#allocation2 + $0x48] sm:$0x1]
        %v261 = vsel %vm241, 0, %v260
        %262 = vst [vmem:[#allocation2 + $0x48] sm:$0x1] %v261
        %v263 = vld [vmem:[#allocation2 + $0x54] sm:$0x1]
        %v264 = vsel %vm241, 0, %v263
        %265 = vst [vmem:[#allocation2 + $0x54] sm:$0x1] %v264
        %v266 = vld [vmem:[#allocation2 + $0x60] sm:$0x1]
        %v267 = vsel %vm241, 0, %v266
        %268 = vst [vmem:[#allocation2 + $0x60] sm:$0x1] %v267
        %v269 = vld [vmem:[#allocation2 + $0x6c] sm:$0x1]
        %v270 = vsel %vm241, 0, %v269
        %271 = vst [vmem:[#allocation2 + $0x6c] sm:$0x1] %v270
        %v272 = vld [vmem:[#allocation2 + $0x78] sm:$0x1]
        %v273 = vsel %vm241, 0, %v272
        %274 = vst [vmem:[#allocation2 + $0x78] sm:$0x1] %v273
        %v275 = vld [vmem:[#allocation2 + $0x84] sm:$0x1]
        %v276 = vsel %vm241, 0, %v275
        %277 = vst [vmem:[#allocation2 + $0x84] sm:$0x1] %v276
        %v278 = vld [vmem:[#allocation2 + $0x90] sm:$0x1]
        %v279 = vsel %vm241, 0, %v278
        %280 = vst [vmem:[#allocation2 + $0x90] sm:$0x1] %v279
        %v281 = vld [vmem:[#allocation2 + $0x9c] sm:$0x1]
        %v282 = vsel %vm241, 0, %v281
        %283 = vst [vmem:[#allocation2 + $0x9c] sm:$0x1] %v282
        %v284 = vld [vmem:[#allocation2 + $0xa8] sm:$0x1]
        %v285 = vsel %vm241, 0, %v284
        %286 = vst [vmem:[#allocation2 + $0xa8] sm:$0x1] %v285
        %v287 = vld [vmem:[#allocation2 + $0xb4] sm:$0x1]
        %v288 = vsel %vm241, 0, %v287
        %289 = vst [vmem:[#allocation2 + $0xb4] sm:$0x1] %v288
        %v290 = vld [vmem:[#allocation2 + $0xc0] sm:$0x1]
        %v291 = vsel %vm241, 0, %v290
        %292 = vst [vmem:[#allocation2 + $0xc0] sm:$0x1] %v291
        %v293 = vld [vmem:[#allocation2 + $0xcc] sm:$0x1]
        %v294 = vsel %vm241, 0, %v293
        %295 = vst [vmem:[#allocation2 + $0xcc] sm:$0x1] %v294
        %vm296 = vsmask.f32 7938
        %vm297 = vmand %vm239, %vm296
        %v298 = vld [vmem:[#allocation2 + $0x8] sm:$0x1]
        %v299 = vsel %vm297, 0, %v298
        %300 = vst [vmem:[#allocation2 + $0x8] sm:$0x1] %v299
        %v301 = vld [vmem:[#allocation2 + $0x14] sm:$0x1]
        %v302 = vsel %vm297, 0, %v301
        %303 = vst [vmem:[#allocation2 + $0x14] sm:$0x1] %v302
        %v304 = vld [vmem:[#allocation2 + $0x20] sm:$0x1]
        %v305 = vsel %vm297, 0, %v304
        %306 = vst [vmem:[#allocation2 + $0x20] sm:$0x1] %v305
        %v307 = vld [vmem:[#allocation2 + $0x2c] sm:$0x1]
        %v308 = vsel %vm297, 0, %v307
        %309 = vst [vmem:[#allocation2 + $0x2c] sm:$0x1] %v308
        %v310 = vld [vmem:[#allocation2 + $0x38] sm:$0x1]
        %v311 = vsel %vm297, 0, %v310
        %312 = vst [vmem:[#allocation2 + $0x38] sm:$0x1] %v311
        %v313 = vld [vmem:[#allocation2 + $0x44] sm:$0x1]
        %v314 = vsel %vm297, 0, %v313
        %315 = vst [vmem:[#allocation2 + $0x44] sm:$0x1] %v314
        %v316 = vld [vmem:[#allocation2 + $0x50] sm:$0x1]
        %v317 = vsel %vm297, 0, %v316
        %318 = vst [vmem:[#allocation2 + $0x50] sm:$0x1] %v317
        %v319 = vld [vmem:[#allocation2 + $0x5c] sm:$0x1]
        %v320 = vsel %vm297, 0, %v319
        %321 = vst [vmem:[#allocation2 + $0x5c] sm:$0x1] %v320
        %v322 = vld [vmem:[#allocation2 + $0x68] sm:$0x1]
        %v323 = vsel %vm297, 0, %v322
        %324 = vst [vmem:[#allocation2 + $0x68] sm:$0x1] %v323
        %v325 = vld [vmem:[#allocation2 + $0x74] sm:$0x1]
        %v326 = vsel %vm297, 0, %v325
        %327 = vst [vmem:[#allocation2 + $0x74] sm:$0x1] %v326
        %v328 = vld [vmem:[#allocation2 + $0x80] sm:$0x1]
        %v329 = vsel %vm297, 0, %v328
        %330 = vst [vmem:[#allocation2 + $0x80] sm:$0x1] %v329
        %v331 = vld [vmem:[#allocation2 + $0x8c] sm:$0x1]
        %v332 = vsel %vm297, 0, %v331
        %333 = vst [vmem:[#allocation2 + $0x8c] sm:$0x1] %v332
        %v334 = vld [vmem:[#allocation2 + $0x98] sm:$0x1]
        %v335 = vsel %vm297, 0, %v334
        %336 = vst [vmem:[#allocation2 + $0x98] sm:$0x1] %v335
        %v337 = vld [vmem:[#allocation2 + $0xa4] sm:$0x1]
        %v338 = vsel %vm297, 0, %v337
        %339 = vst [vmem:[#allocation2 + $0xa4] sm:$0x1] %v338
        %v340 = vld [vmem:[#allocation2 + $0xb0] sm:$0x1]
        %v341 = vsel %vm297, 0, %v340
        %342 = vst [vmem:[#allocation2 + $0xb0] sm:$0x1] %v341
        %v343 = vld [vmem:[#allocation2 + $0xbc] sm:$0x1]
        %v344 = vsel %vm297, 0, %v343
        %345 = vst [vmem:[#allocation2 + $0xbc] sm:$0x1] %v344
        %v346 = vld [vmem:[#allocation2 + $0xc8] sm:$0x1]
        %v347 = vsel %vm297, 0, %v346
        %348 = vst [vmem:[#allocation2 + $0xc8] sm:$0x1] %v347
        %v349 = vld [vmem:[#allocation2 + $0xd4] sm:$0x1]
        %v350 = vsel %vm297, 0, %v349
        %351 = vst [vmem:[#allocation2 + $0xd4] sm:$0x1] %v350
        %352 = vst.msk [vmem:[#allocation3] sm:$0xf] %vm230, 0
        %353 = vst.msk [vmem:[#allocation3 + $0x4] sm:$0xf] %vm230, 0
        %354 = vst.msk [vmem:[#allocation3 + $0x8] sm:$0x1] %vm233, 0
        %s355 = scalar_lea.vmem [#allocation3], 204
        %356 = vst.msk [vmem:[%s355] sm:$0xf] %vm230, 0
        %357 = vst.msk [vmem:[%s355 + $0x4] sm:$0xf] %vm230, 0
        %358 = vst.msk [vmem:[%s355 + $0x8] sm:$0x1] %vm233, 0
        %v359 = vld [vmem:[#allocation3] sm:$0x1]
        %v360 = vsel %vm241, 0, %v359
        %361 = vst [vmem:[#allocation3] sm:$0x1] %v360
        %v362 = vld [vmem:[#allocation3 + $0xc] sm:$0x1]
        %v363 = vsel %vm241, 0, %v362
        %364 = vst [vmem:[#allocation3 + $0xc] sm:$0x1] %v363
        %v365 = vld [vmem:[#allocation3 + $0x18] sm:$0x1]
        %v366 = vsel %vm241, 0, %v365
        %367 = vst [vmem:[#allocation3 + $0x18] sm:$0x1] %v366
        %v368 = vld [vmem:[#allocation3 + $0x24] sm:$0x1]
        %v369 = vsel %vm241, 0, %v368
        %370 = vst [vmem:[#allocation3 + $0x24] sm:$0x1] %v369
        %v371 = vld [vmem:[#allocation3 + $0x30] sm:$0x1]
        %v372 = vsel %vm241, 0, %v371
        %373 = vst [vmem:[#allocation3 + $0x30] sm:$0x1] %v372
        %v374 = vld [vmem:[#allocation3 + $0x3c] sm:$0x1]
        %v375 = vsel %vm241, 0, %v374
        %376 = vst [vmem:[#allocation3 + $0x3c] sm:$0x1] %v375
        %v377 = vld [vmem:[#allocation3 + $0x48] sm:$0x1]
        %v378 = vsel %vm241, 0, %v377
        %379 = vst [vmem:[#allocation3 + $0x48] sm:$0x1] %v378
        %v380 = vld [vmem:[#allocation3 + $0x54] sm:$0x1]
        %v381 = vsel %vm241, 0, %v380
        %382 = vst [vmem:[#allocation3 + $0x54] sm:$0x1] %v381
        %v383 = vld [vmem:[#allocation3 + $0x60] sm:$0x1]
        %v384 = vsel %vm241, 0, %v383
        %385 = vst [vmem:[#allocation3 + $0x60] sm:$0x1] %v384
        %v386 = vld [vmem:[#allocation3 + $0x6c] sm:$0x1]
        %v387 = vsel %vm241, 0, %v386
        %388 = vst [vmem:[#allocation3 + $0x6c] sm:$0x1] %v387
        %v389 = vld [vmem:[#allocation3 + $0x78] sm:$0x1]
        %v390 = vsel %vm241, 0, %v389
        %391 = vst [vmem:[#allocation3 + $0x78] sm:$0x1] %v390
        %v392 = vld [vmem:[#allocation3 + $0x84] sm:$0x1]
        %v393 = vsel %vm241, 0, %v392
        %394 = vst [vmem:[#allocation3 + $0x84] sm:$0x1] %v393
        %v395 = vld [vmem:[#allocation3 + $0x90] sm:$0x1]
        %v396 = vsel %vm241, 0, %v395
        %397 = vst [vmem:[#allocation3 + $0x90] sm:$0x1] %v396
        %v398 = vld [vmem:[#allocation3 + $0x9c] sm:$0x1]
        %v399 = vsel %vm241, 0, %v398
        %400 = vst [vmem:[#allocation3 + $0x9c] sm:$0x1] %v399
        %v401 = vld [vmem:[#allocation3 + $0xa8] sm:$0x1]
        %v402 = vsel %vm241, 0, %v401
        %403 = vst [vmem:[#allocation3 + $0xa8] sm:$0x1] %v402
        %v404 = vld [vmem:[#allocation3 + $0xb4] sm:$0x1]
        %v405 = vsel %vm241, 0, %v404
        %406 = vst [vmem:[#allocation3 + $0xb4] sm:$0x1] %v405
        %v407 = vld [vmem:[#allocation3 + $0xc0] sm:$0x1]
        %v408 = vsel %vm241, 0, %v407
        %409 = vst [vmem:[#allocation3 + $0xc0] sm:$0x1] %v408
        %v410 = vld [vmem:[#allocation3 + $0xcc] sm:$0x1]
        %v411 = vsel %vm241, 0, %v410
        %412 = vst [vmem:[#allocation3 + $0xcc] sm:$0x1] %v411
        %v413 = vld [vmem:[#allocation3 + $0x8] sm:$0x1]
        %v414 = vsel %vm297, 0, %v413
        %415 = vst [vmem:[#allocation3 + $0x8] sm:$0x1] %v414
        %v416 = vld [vmem:[#allocation3 + $0x14] sm:$0x1]
        %v417 = vsel %vm297, 0, %v416
        %418 = vst [vmem:[#allocation3 + $0x14] sm:$0x1] %v417
        %v419 = vld [vmem:[#allocation3 + $0x20] sm:$0x1]
        %v420 = vsel %vm297, 0, %v419
        %421 = vst [vmem:[#allocation3 + $0x20] sm:$0x1] %v420
        %v422 = vld [vmem:[#allocation3 + $0x2c] sm:$0x1]
        %v423 = vsel %vm297, 0, %v422
        %424 = vst [vmem:[#allocation3 + $0x2c] sm:$0x1] %v423
        %v425 = vld [vmem:[#allocation3 + $0x38] sm:$0x1]
        %v426 = vsel %vm297, 0, %v425
        %427 = vst [vmem:[#allocation3 + $0x38] sm:$0x1] %v426
        %v428 = vld [vmem:[#allocation3 + $0x44] sm:$0x1]
        %v429 = vsel %vm297, 0, %v428
        %430 = vst [vmem:[#allocation3 + $0x44] sm:$0x1] %v429
        %v431 = vld [vmem:[#allocation3 + $0x50] sm:$0x1]
        %v432 = vsel %vm297, 0, %v431
        %433 = vst [vmem:[#allocation3 + $0x50] sm:$0x1] %v432
        %v434 = vld [vmem:[#allocation3 + $0x5c] sm:$0x1]
        %v435 = vsel %vm297, 0, %v434
        %436 = vst [vmem:[#allocation3 + $0x5c] sm:$0x1] %v435
        %v437 = vld [vmem:[#allocation3 + $0x68] sm:$0x1]
        %v438 = vsel %vm297, 0, %v437
        %439 = vst [vmem:[#allocation3 + $0x68] sm:$0x1] %v438
        %v440 = vld [vmem:[#allocation3 + $0x74] sm:$0x1]
        %v441 = vsel %vm297, 0, %v440
        %442 = vst [vmem:[#allocation3 + $0x74] sm:$0x1] %v441
        %v443 = vld [vmem:[#allocation3 + $0x80] sm:$0x1]
        %v444 = vsel %vm297, 0, %v443
        %445 = vst [vmem:[#allocation3 + $0x80] sm:$0x1] %v444
        %v446 = vld [vmem:[#allocation3 + $0x8c] sm:$0x1]
        %v447 = vsel %vm297, 0, %v446
        %448 = vst [vmem:[#allocation3 + $0x8c] sm:$0x1] %v447
        %v449 = vld [vmem:[#allocation3 + $0x98] sm:$0x1]
        %v450 = vsel %vm297, 0, %v449
        %451 = vst [vmem:[#allocation3 + $0x98] sm:$0x1] %v450
        %v452 = vld [vmem:[#allocation3 + $0xa4] sm:$0x1]
        %v453 = vsel %vm297, 0, %v452
        %454 = vst [vmem:[#allocation3 + $0xa4] sm:$0x1] %v453
        %v455 = vld [vmem:[#allocation3 + $0xb0] sm:$0x1]
        %v456 = vsel %vm297, 0, %v455
        %457 = vst [vmem:[#allocation3 + $0xb0] sm:$0x1] %v456
        %v458 = vld [vmem:[#allocation3 + $0xbc] sm:$0x1]
        %v459 = vsel %vm297, 0, %v458
        %460 = vst [vmem:[#allocation3 + $0xbc] sm:$0x1] %v459
        %v461 = vld [vmem:[#allocation3 + $0xc8] sm:$0x1]
        %v462 = vsel %vm297, 0, %v461
        %463 = vst [vmem:[#allocation3 + $0xc8] sm:$0x1] %v462
        %v464 = vld [vmem:[#allocation3 + $0xd4] sm:$0x1]
        %v465 = vsel %vm297, 0, %v464
        %466 = vst [vmem:[#allocation3 + $0xd4] sm:$0x1] %v465
        %v467 = vld [vmem:[%s223] sm:$0xff]
        %v468 = vld [vmem:[%s223 + $0x8] sm:$0xff]
        %v469 = vld [vmem:[%s223 + $0x10] sm:$0xff]
        %v470 = vld [vmem:[%s223 + $0x18] sm:$0xff]
        %v471 = vld [vmem:[%s223 + $0x20] sm:$0xff]
        %v472 = vld [vmem:[%s223 + $0x28] sm:$0xff]
        %v473 = vld [vmem:[%s223 + $0x30] sm:$0xff]
        %v474 = vld [vmem:[%s223 + $0x38] sm:$0xff]
        %v475 = vld [vmem:[%s223 + $0x40] sm:$0xff]
        %v476 = vld [vmem:[%s223 + $0x48] sm:$0xff]
        %v477 = vld [vmem:[%s223 + $0x50] sm:$0xff]
        %v478 = vld [vmem:[%s223 + $0x58] sm:$0xff]
        %v479 = vld [vmem:[%s223 + $0x60] sm:$0xff]
        %v480 = vld [vmem:[%s223 + $0x68] sm:$0xff]
        %v481 = vld [vmem:[%s223 + $0x70] sm:$0xff]
        %v482 = vld [vmem:[%s223 + $0x78] sm:$0xff]
        %v483 = vld [vmem:[%s223 + $0x80] sm:$0xff]
        %v484 = vld [vmem:[%s223 + $0x88] sm:$0xff]
        %v485 = vld [vmem:[%s223 + $0x90] sm:$0xff]
        %v486 = vld [vmem:[%s223 + $0x98] sm:$0xff]
        %v487 = vld [vmem:[%s223 + $0xa0] sm:$0xff]
        %v488 = vld [vmem:[%s223 + $0xa8] sm:$0xff]
        %v489 = vld [vmem:[%s223 + $0xb0] sm:$0xff]
        %v490 = vld [vmem:[%s223 + $0xb8] sm:$0xff]
        %v491 = vld [vmem:[%s223 + $0xc0] sm:$0xff]
        %v492 = vld [vmem:[%s223 + $0xc8] sm:$0xff]
        %v493 = vld [vmem:[%s223 + $0xd0] sm:$0xff]
        %v494 = vld [vmem:[%s223 + $0xd8] sm:$0xff]
        %v495 = vld [vmem:[%s223 + $0xe0] sm:$0xff]
        %v496 = vld [vmem:[%s223 + $0xe8] sm:$0xff]
        %v497 = vld [vmem:[%s223 + $0xf0] sm:$0xff]
        %v498 = vld [vmem:[%s223 + $0xf8] sm:$0xff]
        %v499 = vpack.c.bf16 %v467, %v467
        %v500 = vpack.c.bf16 %v468, %v468
        %v501 = vpack.c.bf16 %v469, %v469
        %v502 = vpack.c.bf16 %v470, %v470
        %v503 = vpack.c.bf16 %v471, %v471
        %v504 = vpack.c.bf16 %v472, %v472
        %v505 = vpack.c.bf16 %v473, %v473
        %v506 = vpack.c.bf16 %v474, %v474
        %v507 = vpack.c.bf16 %v475, %v475
        %v508 = vpack.c.bf16 %v476, %v476
        %v509 = vpack.c.bf16 %v477, %v477
        %v510 = vpack.c.bf16 %v478, %v478
        %v511 = vpack.c.bf16 %v479, %v479
        %v512 = vpack.c.bf16 %v480, %v480
        %v513 = vpack.c.bf16 %v481, %v481
        %v514 = vpack.c.bf16 %v482, %v482
        %v515 = vpack.c.bf16 %v483, %v483
        %v516 = vpack.c.bf16 %v484, %v484
        %v517 = vpack.c.bf16 %v485, %v485
        %v518 = vpack.c.bf16 %v486, %v486
        %v519 = vpack.c.bf16 %v487, %v487
        %v520 = vpack.c.bf16 %v488, %v488
        %v521 = vpack.c.bf16 %v489, %v489
        %v522 = vpack.c.bf16 %v490, %v490
        %v523 = vpack.c.bf16 %v491, %v491
        %v524 = vpack.c.bf16 %v492, %v492
        %v525 = vpack.c.bf16 %v493, %v493
        %v526 = vpack.c.bf16 %v494, %v494
        %v527 = vpack.c.bf16 %v495, %v495
        %v528 = vpack.c.bf16 %v496, %v496
        %v529 = vpack.c.bf16 %v497, %v497
        %v530 = vpack.c.bf16 %v498, %v498
        %vm531 = vsmask.f32 4368
        %vm532 = vmor %vm240, %vm531
        %v534 = vshrl.u32 %v499, 16
        %v536 = vrot.slane %v534, 7
        %v537 = vshll.u32 %v499, 16
        %v539 = vor.u32 %v536, %v537
        %v540 = vrot.slane %v536, 4
        %v542 = vshrl.u32 %v500, 16
        %v544 = vrot.slane %v542, 7
        %v545 = vshll.u32 %v500, 16
        %v547 = vor.u32 %v544, %v545
        %v548 = vsel %vm532, %v540, %v547
        %v549 = vrot.slane %v544, 4
        %v551 = vshrl.u32 %v501, 16
        %v553 = vrot.slane %v551, 7
        %v554 = vshll.u32 %v501, 16
        %v556 = vor.u32 %v553, %v554
        %v557 = vrot.slane %v553, 4
        %v559 = vshrl.u32 %v502, 16
        %v561 = vrot.slane %v559, 7
        %v562 = vshll.u32 %v502, 16
        %v564 = vor.u32 %v561, %v562
        %v565 = vsel %vm532, %v557, %v564
        %v566 = vrot.slane %v561, 4
        %v568 = vshrl.u32 %v503, 16
        %v570 = vrot.slane %v568, 7
        %v571 = vshll.u32 %v503, 16
        %v573 = vor.u32 %v570, %v571
        %v574 = vrot.slane %v570, 4
        %v576 = vshrl.u32 %v504, 16
        %v578 = vrot.slane %v576, 7
        %v579 = vshll.u32 %v504, 16
        %v581 = vor.u32 %v578, %v579
        %v582 = vsel %vm532, %v574, %v581
        %v583 = vrot.slane %v578, 4
        %v585 = vshrl.u32 %v505, 16
        %v587 = vrot.slane %v585, 7
        %v588 = vshll.u32 %v505, 16
        %v590 = vor.u32 %v587, %v588
        %v591 = vrot.slane %v587, 4
        %v593 = vshrl.u32 %v506, 16
        %v595 = vrot.slane %v593, 7
        %v596 = vshll.u32 %v506, 16
        %v598 = vor.u32 %v595, %v596
        %v599 = vsel %vm532, %v591, %v598
        %v600 = vrot.slane %v595, 4
        %v602 = vshrl.u32 %v507, 16
        %v604 = vrot.slane %v602, 7
        %v605 = vshll.u32 %v507, 16
        %v607 = vor.u32 %v604, %v605
        %v608 = vrot.slane %v604, 4
        %v610 = vshrl.u32 %v508, 16
        %v612 = vrot.slane %v610, 7
        %v613 = vshll.u32 %v508, 16
        %v615 = vor.u32 %v612, %v613
        %v616 = vsel %vm532, %v608, %v615
        %v617 = vrot.slane %v612, 4
        %v619 = vshrl.u32 %v509, 16
        %v621 = vrot.slane %v619, 7
        %v622 = vshll.u32 %v509, 16
        %v624 = vor.u32 %v621, %v622
        %v625 = vrot.slane %v621, 4
        %v627 = vshrl.u32 %v510, 16
        %v629 = vrot.slane %v627, 7
        %v630 = vshll.u32 %v510, 16
        %v632 = vor.u32 %v629, %v630
        %v633 = vsel %vm532, %v625, %v632
        %v634 = vrot.slane %v629, 4
        %v636 = vshrl.u32 %v511, 16
        %v638 = vrot.slane %v636, 7
        %v639 = vshll.u32 %v511, 16
        %v641 = vor.u32 %v638, %v639
        %v642 = vrot.slane %v638, 4
        %v644 = vshrl.u32 %v512, 16
        %v646 = vrot.slane %v644, 7
        %v647 = vshll.u32 %v512, 16
        %v649 = vor.u32 %v646, %v647
        %v650 = vsel %vm532, %v642, %v649
        %v651 = vrot.slane %v646, 4
        %v653 = vshrl.u32 %v513, 16
        %v655 = vrot.slane %v653, 7
        %v656 = vshll.u32 %v513, 16
        %v658 = vor.u32 %v655, %v656
        %v659 = vrot.slane %v655, 4
        %v661 = vshrl.u32 %v514, 16
        %v663 = vrot.slane %v661, 7
        %v664 = vshll.u32 %v514, 16
        %v666 = vor.u32 %v663, %v664
        %v667 = vsel %vm532, %v659, %v666
        %v668 = vrot.slane %v663, 4
        %v670 = vshrl.u32 %v515, 16
        %v672 = vrot.slane %v670, 7
        %v673 = vshll.u32 %v515, 16
        %v675 = vor.u32 %v672, %v673
        %v676 = vrot.slane %v672, 4
        %v678 = vshrl.u32 %v516, 16
        %v680 = vrot.slane %v678, 7
        %v681 = vshll.u32 %v516, 16
        %v683 = vor.u32 %v680, %v681
        %v684 = vsel %vm532, %v676, %v683
        %v685 = vrot.slane %v680, 4
        %v687 = vshrl.u32 %v517, 16
        %v689 = vrot.slane %v687, 7
        %v690 = vshll.u32 %v517, 16
        %v692 = vor.u32 %v689, %v690
        %v693 = vrot.slane %v689, 4
        %v695 = vshrl.u32 %v518, 16
        %v697 = vrot.slane %v695, 7
        %v698 = vshll.u32 %v518, 16
        %v700 = vor.u32 %v697, %v698
        %v701 = vsel %vm532, %v693, %v700
        %v702 = vrot.slane %v697, 4
        %v704 = vshrl.u32 %v519, 16
        %v706 = vrot.slane %v704, 7
        %v707 = vshll.u32 %v519, 16
        %v709 = vor.u32 %v706, %v707
        %v710 = vrot.slane %v706, 4
        %v712 = vshrl.u32 %v520, 16
        %v714 = vrot.slane %v712, 7
        %v715 = vshll.u32 %v520, 16
        %v717 = vor.u32 %v714, %v715
        %v718 = vsel %vm532, %v710, %v717
        %v719 = vrot.slane %v714, 4
        %v721 = vshrl.u32 %v521, 16
        %v723 = vrot.slane %v721, 7
        %v724 = vshll.u32 %v521, 16
        %v726 = vor.u32 %v723, %v724
        %v727 = vrot.slane %v723, 4
        %v729 = vshrl.u32 %v522, 16
        %v731 = vrot.slane %v729, 7
        %v732 = vshll.u32 %v522, 16
        %v734 = vor.u32 %v731, %v732
        %v735 = vsel %vm532, %v727, %v734
        %v736 = vrot.slane %v731, 4
        %v738 = vshrl.u32 %v523, 16
        %v740 = vrot.slane %v738, 7
        %v741 = vshll.u32 %v523, 16
        %v743 = vor.u32 %v740, %v741
        %v744 = vrot.slane %v740, 4
        %v746 = vshrl.u32 %v524, 16
        %v748 = vrot.slane %v746, 7
        %v749 = vshll.u32 %v524, 16
        %v751 = vor.u32 %v748, %v749
        %v752 = vsel %vm532, %v744, %v751
        %v753 = vrot.slane %v748, 4
        %v755 = vshrl.u32 %v525, 16
        %v757 = vrot.slane %v755, 7
        %v758 = vshll.u32 %v525, 16
        %v760 = vor.u32 %v757, %v758
        %v761 = vrot.slane %v757, 4
        %v763 = vshrl.u32 %v526, 16
        %v765 = vrot.slane %v763, 7
        %v766 = vshll.u32 %v526, 16
        %v768 = vor.u32 %v765, %v766
        %v769 = vsel %vm532, %v761, %v768
        %v770 = vrot.slane %v765, 4
        %v772 = vshrl.u32 %v527, 16
        %v774 = vrot.slane %v772, 7
        %v775 = vshll.u32 %v527, 16
        %v777 = vor.u32 %v774, %v775
        %v778 = vrot.slane %v774, 4
        %v780 = vshrl.u32 %v528, 16
        %v782 = vrot.slane %v780, 7
        %v783 = vshll.u32 %v528, 16
        %v785 = vor.u32 %v782, %v783
        %v786 = vsel %vm532, %v778, %v785
        %v787 = vrot.slane %v782, 4
        %v789 = vshrl.u32 %v529, 16
        %v791 = vrot.slane %v789, 7
        %v792 = vshll.u32 %v529, 16
        %v794 = vor.u32 %v791, %v792
        %v795 = vrot.slane %v791, 4
        %v797 = vshrl.u32 %v530, 16
        %v799 = vrot.slane %v797, 7
        %v800 = vshll.u32 %v530, 16
        %v802 = vor.u32 %v799, %v800
        %v803 = vsel %vm532, %v795, %v802
        %v804 = vrot.slane %v799, 4
        %s853 = scalar_lea.vmem [#allocation2], 12
        %vm854 = vcmask 27648
        %vm855 = vmand %vm854, %vm296
        %v856 = vld [vmem:[%s853] sm:$0xf]
        %v857 = vsel %vm855, %v539, %v856
        %858 = vst [vmem:[%s853] sm:$0xf] %v857
        %859 = vst.msk [vmem:[%s853 + $0x4] sm:$0xf] %vm230, %v548
        %v860 = vld [vmem:[%s853 + $0x8] sm:$0x1]
        %v861 = vsel %vm241, %v549, %v860
        %862 = vst [vmem:[%s853 + $0x8] sm:$0x1] %v861
        %v863 = vld [vmem:[%s853 + $0xc] sm:$0xf]
        %v864 = vsel %vm855, %v556, %v863
        %865 = vst [vmem:[%s853 + $0xc] sm:$0xf] %v864
        %866 = vst.msk [vmem:[%s853 + $0x10] sm:$0xf] %vm230, %v565
        %v867 = vld [vmem:[%s853 + $0x14] sm:$0x1]
        %v868 = vsel %vm241, %v566, %v867
        %869 = vst [vmem:[%s853 + $0x14] sm:$0x1] %v868
        %v870 = vld [vmem:[%s853 + $0x18] sm:$0xf]
        %v871 = vsel %vm855, %v573, %v870
        %872 = vst [vmem:[%s853 + $0x18] sm:$0xf] %v871
        %873 = vst.msk [vmem:[%s853 + $0x1c] sm:$0xf] %vm230, %v582
        %v874 = vld [vmem:[%s853 + $0x20] sm:$0x1]
        %v875 = vsel %vm241, %v583, %v874
        %876 = vst [vmem:[%s853 + $0x20] sm:$0x1] %v875
        %v877 = vld [vmem:[%s853 + $0x24] sm:$0xf]
        %v878 = vsel %vm855, %v590, %v877
        %879 = vst [vmem:[%s853 + $0x24] sm:$0xf] %v878
        %880 = vst.msk [vmem:[%s853 + $0x28] sm:$0xf] %vm230, %v599
        %v881 = vld [vmem:[%s853 + $0x2c] sm:$0x1]
        %v882 = vsel %vm241, %v600, %v881
        %883 = vst [vmem:[%s853 + $0x2c] sm:$0x1] %v882
        %v884 = vld [vmem:[%s853 + $0x30] sm:$0xf]
        %v885 = vsel %vm855, %v607, %v884
        %886 = vst [vmem:[%s853 + $0x30] sm:$0xf] %v885
        %887 = vst.msk [vmem:[%s853 + $0x34] sm:$0xf] %vm230, %v616
        %v888 = vld [vmem:[%s853 + $0x38] sm:$0x1]
        %v889 = vsel %vm241, %v617, %v888
        %890 = vst [vmem:[%s853 + $0x38] sm:$0x1] %v889
        %v891 = vld [vmem:[%s853 + $0x3c] sm:$0xf]
        %v892 = vsel %vm855, %v624, %v891
        %893 = vst [vmem:[%s853 + $0x3c] sm:$0xf] %v892
        %894 = vst.msk [vmem:[%s853 + $0x40] sm:$0xf] %vm230, %v633
        %v895 = vld [vmem:[%s853 + $0x44] sm:$0x1]
        %v896 = vsel %vm241, %v634, %v895
        %897 = vst [vmem:[%s853 + $0x44] sm:$0x1] %v896
        %v898 = vld [vmem:[%s853 + $0x48] sm:$0xf]
        %v899 = vsel %vm855, %v641, %v898
        %900 = vst [vmem:[%s853 + $0x48] sm:$0xf] %v899
        %901 = vst.msk [vmem:[%s853 + $0x4c] sm:$0xf] %vm230, %v650
        %v902 = vld [vmem:[%s853 + $0x50] sm:$0x1]
        %v903 = vsel %vm241, %v651, %v902
        %904 = vst [vmem:[%s853 + $0x50] sm:$0x1] %v903
        %v905 = vld [vmem:[%s853 + $0x54] sm:$0xf]
        %v906 = vsel %vm855, %v658, %v905
        %907 = vst [vmem:[%s853 + $0x54] sm:$0xf] %v906
        %908 = vst.msk [vmem:[%s853 + $0x58] sm:$0xf] %vm230, %v667
        %v909 = vld [vmem:[%s853 + $0x5c] sm:$0x1]
        %v910 = vsel %vm241, %v668, %v909
        %911 = vst [vmem:[%s853 + $0x5c] sm:$0x1] %v910
        %v912 = vld [vmem:[%s853 + $0x60] sm:$0xf]
        %v913 = vsel %vm855, %v675, %v912
        %914 = vst [vmem:[%s853 + $0x60] sm:$0xf] %v913
        %915 = vst.msk [vmem:[%s853 + $0x64] sm:$0xf] %vm230, %v684
        %v916 = vld [vmem:[%s853 + $0x68] sm:$0x1]
        %v917 = vsel %vm241, %v685, %v916
        %918 = vst [vmem:[%s853 + $0x68] sm:$0x1] %v917
        %v919 = vld [vmem:[%s853 + $0x6c] sm:$0xf]
        %v920 = vsel %vm855, %v692, %v919
        %921 = vst [vmem:[%s853 + $0x6c] sm:$0xf] %v920
        %922 = vst.msk [vmem:[%s853 + $0x70] sm:$0xf] %vm230, %v701
        %v923 = vld [vmem:[%s853 + $0x74] sm:$0x1]
        %v924 = vsel %vm241, %v702, %v923
        %925 = vst [vmem:[%s853 + $0x74] sm:$0x1] %v924
        %v926 = vld [vmem:[%s853 + $0x78] sm:$0xf]
        %v927 = vsel %vm855, %v709, %v926
        %928 = vst [vmem:[%s853 + $0x78] sm:$0xf] %v927
        %929 = vst.msk [vmem:[%s853 + $0x7c] sm:$0xf] %vm230, %v718
        %v930 = vld [vmem:[%s853 + $0x80] sm:$0x1]
        %v931 = vsel %vm241, %v719, %v930
        %932 = vst [vmem:[%s853 + $0x80] sm:$0x1] %v931
        %v933 = vld [vmem:[%s853 + $0x84] sm:$0xf]
        %v934 = vsel %vm855, %v726, %v933
        %935 = vst [vmem:[%s853 + $0x84] sm:$0xf] %v934
        %936 = vst.msk [vmem:[%s853 + $0x88] sm:$0xf] %vm230, %v735
        %v937 = vld [vmem:[%s853 + $0x8c] sm:$0x1]
        %v938 = vsel %vm241, %v736, %v937
        %939 = vst [vmem:[%s853 + $0x8c] sm:$0x1] %v938
        %v940 = vld [vmem:[%s853 + $0x90] sm:$0xf]
        %v941 = vsel %vm855, %v743, %v940
        %942 = vst [vmem:[%s853 + $0x90] sm:$0xf] %v941
        %943 = vst.msk [vmem:[%s853 + $0x94] sm:$0xf] %vm230, %v752
        %v944 = vld [vmem:[%s853 + $0x98] sm:$0x1]
        %v945 = vsel %vm241, %v753, %v944
        %946 = vst [vmem:[%s853 + $0x98] sm:$0x1] %v945
        %v947 = vld [vmem:[%s853 + $0x9c] sm:$0xf]
        %v948 = vsel %vm855, %v760, %v947
        %949 = vst [vmem:[%s853 + $0x9c] sm:$0xf] %v948
        %950 = vst.msk [vmem:[%s853 + $0xa0] sm:$0xf] %vm230, %v769
        %v951 = vld [vmem:[%s853 + $0xa4] sm:$0x1]
        %v952 = vsel %vm241, %v770, %v951
        %953 = vst [vmem:[%s853 + $0xa4] sm:$0x1] %v952
        %v954 = vld [vmem:[%s853 + $0xa8] sm:$0xf]
        %v955 = vsel %vm855, %v777, %v954
        %956 = vst [vmem:[%s853 + $0xa8] sm:$0xf] %v955
        %957 = vst.msk [vmem:[%s853 + $0xac] sm:$0xf] %vm230, %v786
        %v958 = vld [vmem:[%s853 + $0xb0] sm:$0x1]
        %v959 = vsel %vm241, %v787, %v958
        %960 = vst [vmem:[%s853 + $0xb0] sm:$0x1] %v959
        %v961 = vld [vmem:[%s853 + $0xb4] sm:$0xf]
        %v962 = vsel %vm855, %v794, %v961
        %963 = vst [vmem:[%s853 + $0xb4] sm:$0xf] %v962
        %964 = vst.msk [vmem:[%s853 + $0xb8] sm:$0xf] %vm230, %v803
        %v965 = vld [vmem:[%s853 + $0xbc] sm:$0x1]
        %v966 = vsel %vm241, %v804, %v965
        %967 = vst [vmem:[%s853 + $0xbc] sm:$0x1] %v966
        %v968 = vld [vmem:[%s218] sm:$0xf]
        %v969 = vld [vmem:[%s218 + $0x4] sm:$0xf]
        %v970 = vld [vmem:[%s218 + $0x8] sm:$0xf]
        %v971 = vld [vmem:[%s218 + $0xc] sm:$0xf]
        %v972 = vld [vmem:[%s218 + $0x10] sm:$0xf]
        %v973 = vld [vmem:[%s218 + $0x14] sm:$0xf]
        %v974 = vld [vmem:[%s218 + $0x18] sm:$0xf]
        %v975 = vld [vmem:[%s218 + $0x1c] sm:$0xf]
        %v976 = vld [vmem:[%s218 + $0x20] sm:$0xf]
        %v977 = vld [vmem:[%s218 + $0x24] sm:$0xf]
        %v978 = vld [vmem:[%s218 + $0x28] sm:$0xf]
        %v979 = vld [vmem:[%s218 + $0x2c] sm:$0xf]
        %v980 = vld [vmem:[%s218 + $0x30] sm:$0xf]
        %v981 = vld [vmem:[%s218 + $0x34] sm:$0xf]
        %v982 = vld [vmem:[%s218 + $0x38] sm:$0xf]
        %v983 = vld [vmem:[%s218 + $0x3c] sm:$0xf]
        %v984 = vunpack.c.l.bf16 %v968
        %v985 = vunpack.c.l.bf16 %v969
        %v986 = vunpack.c.l.bf16 %v970
        %v987 = vunpack.c.l.bf16 %v971
        %v988 = vunpack.c.l.bf16 %v972
        %v989 = vunpack.c.l.bf16 %v973
        %v990 = vunpack.c.l.bf16 %v974
        %v991 = vunpack.c.l.bf16 %v975
        %v992 = vunpack.c.l.bf16 %v976
        %v993 = vunpack.c.l.bf16 %v977
        %v994 = vunpack.c.l.bf16 %v978
        %v995 = vunpack.c.l.bf16 %v979
        %v996 = vunpack.c.l.bf16 %v980
        %v997 = vunpack.c.l.bf16 %v981
        %v998 = vunpack.c.l.bf16 %v982
        %v999 = vunpack.c.l.bf16 %v983
        %v1000 = vpack.c.bf16 %v984, %v984
        %v1001 = vpack.c.bf16 %v985, %v985
        %v1003 = vshrl.u32 %v1000, 16
        %v1005 = vrot.slane %v1003, 7
        %v1006 = vshll.u32 %v1000, 16
        %v1008 = vor.u32 %v1005, %v1006
        %v1009 = vrot.slane %v1005, 4
        %v1011 = vshrl.u32 %v1001, 16
        %v1013 = vrot.slane %v1011, 7
        %v1014 = vshll.u32 %v1001, 16
        %v1016 = vor.u32 %v1013, %v1014
        %v1017 = vsel %vm532, %v1009, %v1016
        %v1018 = vrot.slane %v1013, 4
        %s1022 = scalar_lea.vmem [#allocation3], 12
        %v1023 = vld [vmem:[%s1022] sm:$0xf]
        %v1024 = vsel %vm855, %v1008, %v1023
        %1025 = vst [vmem:[%s1022] sm:$0xf] %v1024
        %1026 = vst.msk [vmem:[%s1022 + $0x4] sm:$0xf] %vm230, %v1017
        %v1027 = vld [vmem:[%s1022 + $0x8] sm:$0x1]
        %v1028 = vsel %vm241, %v1018, %v1027
        %1029 = vst [vmem:[%s1022 + $0x8] sm:$0x1] %v1028
        %v1030 = vsub.f32 %v986, %v984
        %v1031 = vsub.f32 %v987, %v985
        %v1032 = vmul.f32 %v1030, 0.46666667
        %v1033 = vmul.f32 %v1031, 0.46666667
        %v1034 = vadd.f32 %v984, %v1032
        %v1035 = vadd.f32 %v985, %v1033
        %v1036 = vpack.c.bf16 %v1034, %v1034
        %v1037 = vpack.c.bf16 %v1035, %v1035
        %v1039 = vshrl.u32 %v1036, 16
        %v1041 = vrot.slane %v1039, 7
        %v1042 = vshll.u32 %v1036, 16
        %v1044 = vor.u32 %v1041, %v1042
        %v1045 = vrot.slane %v1041, 4
        %v1047 = vshrl.u32 %v1037, 16
        %v1049 = vrot.slane %v1047, 7
        %v1050 = vshll.u32 %v1037, 16
        %v1052 = vor.u32 %v1049, %v1050
        %v1053 = vsel %vm532, %v1045, %v1052
        %v1054 = vrot.slane %v1049, 4
        %s1058 = scalar_lea.vmem [#allocation3], 24
        %v1059 = vld [vmem:[%s1058] sm:$0xf]
        %v1060 = vsel %vm855, %v1044, %v1059
        %1061 = vst [vmem:[%s1058] sm:$0xf] %v1060
        %1062 = vst.msk [vmem:[%s1058 + $0x4] sm:$0xf] %vm230, %v1053
        %v1063 = vld [vmem:[%s1058 + $0x8] sm:$0x1]
        %v1064 = vsel %vm241, %v1054, %v1063
        %1065 = vst [vmem:[%s1058 + $0x8] sm:$0x1] %v1064
        %v1066 = vmul.f32 %v1030, 0.93333334
        %v1067 = vmul.f32 %v1031, 0.93333334
        %v1068 = vadd.f32 %v984, %v1066
        %v1069 = vadd.f32 %v985, %v1067
        %v1070 = vpack.c.bf16 %v1068, %v1068
        %v1071 = vpack.c.bf16 %v1069, %v1069
        %v1073 = vshrl.u32 %v1070, 16
        %v1075 = vrot.slane %v1073, 7
        %v1076 = vshll.u32 %v1070, 16
        %v1078 = vor.u32 %v1075, %v1076
        %v1079 = vrot.slane %v1075, 4
        %v1081 = vshrl.u32 %v1071, 16
        %v1083 = vrot.slane %v1081, 7
        %v1084 = vshll.u32 %v1071, 16
        %v1086 = vor.u32 %v1083, %v1084
        %v1087 = vsel %vm532, %v1079, %v1086
        %v1088 = vrot.slane %v1083, 4
        %s1092 = scalar_lea.vmem [#allocation3], 36
        %v1093 = vld [vmem:[%s1092] sm:$0xf]
        %v1094 = vsel %vm855, %v1078, %v1093
        %1095 = vst [vmem:[%s1092] sm:$0xf] %v1094
        %1096 = vst.msk [vmem:[%s1092 + $0x4] sm:$0xf] %vm230, %v1087
        %v1097 = vld [vmem:[%s1092 + $0x8] sm:$0x1]
        %v1098 = vsel %vm241, %v1088, %v1097
        %1099 = vst [vmem:[%s1092 + $0x8] sm:$0x1] %v1098
        %v1100 = vsub.f32 %v988, %v986
        %v1101 = vsub.f32 %v989, %v987
        %v1102 = vmul.f32 %v1100, 0.4
        %v1103 = vmul.f32 %v1101, 0.4
        %v1104 = vadd.f32 %v986, %v1102
        %v1105 = vadd.f32 %v987, %v1103
        %v1106 = vpack.c.bf16 %v1104, %v1104
        %v1107 = vpack.c.bf16 %v1105, %v1105
        %v1109 = vshrl.u32 %v1106, 16
        %v1111 = vrot.slane %v1109, 7
        %v1112 = vshll.u32 %v1106, 16
        %v1114 = vor.u32 %v1111, %v1112
        %v1115 = vrot.slane %v1111, 4
        %v1117 = vshrl.u32 %v1107, 16
        %v1119 = vrot.slane %v1117, 7
        %v1120 = vshll.u32 %v1107, 16
        %v1122 = vor.u32 %v1119, %v1120
        %v1123 = vsel %vm532, %v1115, %v1122
        %v1124 = vrot.slane %v1119, 4
        %s1128 = scalar_lea.vmem [#allocation3], 48
        %v1129 = vld [vmem:[%s1128] sm:$0xf]
        %v1130 = vsel %vm855, %v1114, %v1129
        %1131 = vst [vmem:[%s1128] sm:$0xf] %v1130
        %1132 = vst.msk [vmem:[%s1128 + $0x4] sm:$0xf] %vm230, %v1123
        %v1133 = vld [vmem:[%s1128 + $0x8] sm:$0x1]
        %v1134 = vsel %vm241, %v1124, %v1133
        %1135 = vst [vmem:[%s1128 + $0x8] sm:$0x1] %v1134
        %v1136 = vmul.f32 %v1100, 0.8666667
        %v1137 = vmul.f32 %v1101, 0.8666667
        %v1138 = vadd.f32 %v986, %v1136
        %v1139 = vadd.f32 %v987, %v1137
        %v1140 = vpack.c.bf16 %v1138, %v1138
        %v1141 = vpack.c.bf16 %v1139, %v1139
        %v1143 = vshrl.u32 %v1140, 16
        %v1145 = vrot.slane %v1143, 7
        %v1146 = vshll.u32 %v1140, 16
        %v1148 = vor.u32 %v1145, %v1146
        %v1149 = vrot.slane %v1145, 4
        %v1151 = vshrl.u32 %v1141, 16
        %v1153 = vrot.slane %v1151, 7
        %v1154 = vshll.u32 %v1141, 16
        %v1156 = vor.u32 %v1153, %v1154
        %v1157 = vsel %vm532, %v1149, %v1156
        %v1158 = vrot.slane %v1153, 4
        %s1162 = scalar_lea.vmem [#allocation3], 60
        %v1163 = vld [vmem:[%s1162] sm:$0xf]
        %v1164 = vsel %vm855, %v1148, %v1163
        %1165 = vst [vmem:[%s1162] sm:$0xf] %v1164
        %1166 = vst.msk [vmem:[%s1162 + $0x4] sm:$0xf] %vm230, %v1157
        %v1167 = vld [vmem:[%s1162 + $0x8] sm:$0x1]
        %v1168 = vsel %vm241, %v1158, %v1167
        %1169 = vst [vmem:[%s1162 + $0x8] sm:$0x1] %v1168
        %v1170 = vsub.f32 %v990, %v988
        %v1171 = vsub.f32 %v991, %v989
        %v1172 = vmul.f32 %v1170, 0.33333334
        %v1173 = vmul.f32 %v1171, 0.33333334
        %v1174 = vadd.f32 %v988, %v1172
        %v1175 = vadd.f32 %v989, %v1173
        %v1176 = vpack.c.bf16 %v1174, %v1174
        %v1177 = vpack.c.bf16 %v1175, %v1175
        %v1179 = vshrl.u32 %v1176, 16
        %v1181 = vrot.slane %v1179, 7
        %v1182 = vshll.u32 %v1176, 16
        %v1184 = vor.u32 %v1181, %v1182
        %v1185 = vrot.slane %v1181, 4
        %v1187 = vshrl.u32 %v1177, 16
        %v1189 = vrot.slane %v1187, 7
        %v1190 = vshll.u32 %v1177, 16
        %v1192 = vor.u32 %v1189, %v1190
        %v1193 = vsel %vm532, %v1185, %v1192
        %v1194 = vrot.slane %v1189, 4
        %s1198 = scalar_lea.vmem [#allocation3], 72
        %v1199 = vld [vmem:[%s1198] sm:$0xf]
        %v1200 = vsel %vm855, %v1184, %v1199
        %1201 = vst [vmem:[%s1198] sm:$0xf] %v1200
        %1202 = vst.msk [vmem:[%s1198 + $0x4] sm:$0xf] %vm230, %v1193
        %v1203 = vld [vmem:[%s1198 + $0x8] sm:$0x1]
        %v1204 = vsel %vm241, %v1194, %v1203
        %1205 = vst [vmem:[%s1198 + $0x8] sm:$0x1] %v1204
        %v1206 = vmul.f32 %v1170, 0.8
        %v1207 = vmul.f32 %v1171, 0.8
        %v1208 = vadd.f32 %v988, %v1206
        %v1209 = vadd.f32 %v989, %v1207
        %v1210 = vpack.c.bf16 %v1208, %v1208
        %v1211 = vpack.c.bf16 %v1209, %v1209
        %v1213 = vshrl.u32 %v1210, 16
        %v1215 = vrot.slane %v1213, 7
        %v1216 = vshll.u32 %v1210, 16
        %v1218 = vor.u32 %v1215, %v1216
        %v1219 = vrot.slane %v1215, 4
        %v1221 = vshrl.u32 %v1211, 16
        %v1223 = vrot.slane %v1221, 7
        %v1224 = vshll.u32 %v1211, 16
        %v1226 = vor.u32 %v1223, %v1224
        %v1227 = vsel %vm532, %v1219, %v1226
        %v1228 = vrot.slane %v1223, 4
        %s1232 = scalar_lea.vmem [#allocation3], 84
        %v1233 = vld [vmem:[%s1232] sm:$0xf]
        %v1234 = vsel %vm855, %v1218, %v1233
        %1235 = vst [vmem:[%s1232] sm:$0xf] %v1234
        %1236 = vst.msk [vmem:[%s1232 + $0x4] sm:$0xf] %vm230, %v1227
        %v1237 = vld [vmem:[%s1232 + $0x8] sm:$0x1]
        %v1238 = vsel %vm241, %v1228, %v1237
        %1239 = vst [vmem:[%s1232 + $0x8] sm:$0x1] %v1238
        %v1240 = vsub.f32 %v992, %v990
        %v1241 = vsub.f32 %v993, %v991
        %v1242 = vmul.f32 %v1240, 0.26666668
        %v1243 = vmul.f32 %v1241, 0.26666668
        %v1244 = vadd.f32 %v990, %v1242
        %v1245 = vadd.f32 %v991, %v1243
        %v1246 = vpack.c.bf16 %v1244, %v1244
        %v1247 = vpack.c.bf16 %v1245, %v1245
        %v1249 = vshrl.u32 %v1246, 16
        %v1251 = vrot.slane %v1249, 7
        %v1252 = vshll.u32 %v1246, 16
        %v1254 = vor.u32 %v1251, %v1252
        %v1255 = vrot.slane %v1251, 4
        %v1257 = vshrl.u32 %v1247, 16
        %v1259 = vrot.slane %v1257, 7
        %v1260 = vshll.u32 %v1247, 16
        %v1262 = vor.u32 %v1259, %v1260
        %v1263 = vsel %vm532, %v1255, %v1262
        %v1264 = vrot.slane %v1259, 4
        %s1268 = scalar_lea.vmem [#allocation3], 96
        %v1269 = vld [vmem:[%s1268] sm:$0xf]
        %v1270 = vsel %vm855, %v1254, %v1269
        %1271 = vst [vmem:[%s1268] sm:$0xf] %v1270
        %1272 = vst.msk [vmem:[%s1268 + $0x4] sm:$0xf] %vm230, %v1263
        %v1273 = vld [vmem:[%s1268 + $0x8] sm:$0x1]
        %v1274 = vsel %vm241, %v1264, %v1273
        %1275 = vst [vmem:[%s1268 + $0x8] sm:$0x1] %v1274
        %v1276 = vmul.f32 %v1240, 0.73333335
        %v1277 = vmul.f32 %v1241, 0.73333335
        %v1278 = vadd.f32 %v990, %v1276
        %v1279 = vadd.f32 %v991, %v1277
        %v1280 = vpack.c.bf16 %v1278, %v1278
        %v1281 = vpack.c.bf16 %v1279, %v1279
        %v1283 = vshrl.u32 %v1280, 16
        %v1285 = vrot.slane %v1283, 7
        %v1286 = vshll.u32 %v1280, 16
        %v1288 = vor.u32 %v1285, %v1286
        %v1289 = vrot.slane %v1285, 4
        %v1291 = vshrl.u32 %v1281, 16
        %v1293 = vrot.slane %v1291, 7
        %v1294 = vshll.u32 %v1281, 16
        %v1296 = vor.u32 %v1293, %v1294
        %v1297 = vsel %vm532, %v1289, %v1296
        %v1298 = vrot.slane %v1293, 4
        %s1302 = scalar_lea.vmem [#allocation3], 108
        %v1303 = vld [vmem:[%s1302] sm:$0xf]
        %v1304 = vsel %vm855, %v1288, %v1303
        %1305 = vst [vmem:[%s1302] sm:$0xf] %v1304
        %1306 = vst.msk [vmem:[%s1302 + $0x4] sm:$0xf] %vm230, %v1297
        %v1307 = vld [vmem:[%s1302 + $0x8] sm:$0x1]
        %v1308 = vsel %vm241, %v1298, %v1307
        %1309 = vst [vmem:[%s1302 + $0x8] sm:$0x1] %v1308
        %v1310 = vsub.f32 %v994, %v992
        %v1311 = vsub.f32 %v995, %v993
        %v1312 = vmul.f32 %v1310, 0.2
        %v1313 = vmul.f32 %v1311, 0.2
        %v1314 = vadd.f32 %v992, %v1312
        %v1315 = vadd.f32 %v993, %v1313
        %v1316 = vpack.c.bf16 %v1314, %v1314
        %v1317 = vpack.c.bf16 %v1315, %v1315
        %v1319 = vshrl.u32 %v1316, 16
        %v1321 = vrot.slane %v1319, 7
        %v1322 = vshll.u32 %v1316, 16
        %v1324 = vor.u32 %v1321, %v1322
        %v1325 = vrot.slane %v1321, 4
        %v1327 = vshrl.u32 %v1317, 16
        %v1329 = vrot.slane %v1327, 7
        %v1330 = vshll.u32 %v1317, 16
        %v1332 = vor.u32 %v1329, %v1330
        %v1333 = vsel %vm532, %v1325, %v1332
        %v1334 = vrot.slane %v1329, 4
        %s1338 = scalar_lea.vmem [#allocation3], 120
        %v1339 = vld [vmem:[%s1338] sm:$0xf]
        %v1340 = vsel %vm855, %v1324, %v1339
        %1341 = vst [vmem:[%s1338] sm:$0xf] %v1340
        %1342 = vst.msk [vmem:[%s1338 + $0x4] sm:$0xf] %vm230, %v1333
        %v1343 = vld [vmem:[%s1338 + $0x8] sm:$0x1]
        %v1344 = vsel %vm241, %v1334, %v1343
        %1345 = vst [vmem:[%s1338 + $0x8] sm:$0x1] %v1344
        %v1346 = vmul.f32 %v1310, 0.6666667
        %v1347 = vmul.f32 %v1311, 0.6666667
        %v1348 = vadd.f32 %v992, %v1346
        %v1349 = vadd.f32 %v993, %v1347
        %v1350 = vpack.c.bf16 %v1348, %v1348
        %v1351 = vpack.c.bf16 %v1349, %v1349
        %v1353 = vshrl.u32 %v1350, 16
        %v1355 = vrot.slane %v1353, 7
        %v1356 = vshll.u32 %v1350, 16
        %v1358 = vor.u32 %v1355, %v1356
        %v1359 = vrot.slane %v1355, 4
        %v1361 = vshrl.u32 %v1351, 16
        %v1363 = vrot.slane %v1361, 7
        %v1364 = vshll.u32 %v1351, 16
        %v1366 = vor.u32 %v1363, %v1364
        %v1367 = vsel %vm532, %v1359, %v1366
        %v1368 = vrot.slane %v1363, 4
        %s1372 = scalar_lea.vmem [#allocation3], 132
        %v1373 = vld [vmem:[%s1372] sm:$0xf]
        %v1374 = vsel %vm855, %v1358, %v1373
        %1375 = vst [vmem:[%s1372] sm:$0xf] %v1374
        %1376 = vst.msk [vmem:[%s1372 + $0x4] sm:$0xf] %vm230, %v1367
        %v1377 = vld [vmem:[%s1372 + $0x8] sm:$0x1]
        %v1378 = vsel %vm241, %v1368, %v1377
        %1379 = vst [vmem:[%s1372 + $0x8] sm:$0x1] %v1378
        %v1380 = vsub.f32 %v996, %v994
        %v1381 = vsub.f32 %v997, %v995
        %v1382 = vmul.f32 %v1380, 0.13333334
        %v1383 = vmul.f32 %v1381, 0.13333334
        %v1384 = vadd.f32 %v994, %v1382
        %v1385 = vadd.f32 %v995, %v1383
        %v1386 = vpack.c.bf16 %v1384, %v1384
        %v1387 = vpack.c.bf16 %v1385, %v1385
        %v1389 = vshrl.u32 %v1386, 16
        %v1391 = vrot.slane %v1389, 7
        %v1392 = vshll.u32 %v1386, 16
        %v1394 = vor.u32 %v1391, %v1392
        %v1395 = vrot.slane %v1391, 4
        %v1397 = vshrl.u32 %v1387, 16
        %v1399 = vrot.slane %v1397, 7
        %v1400 = vshll.u32 %v1387, 16
        %v1402 = vor.u32 %v1399, %v1400
        %v1403 = vsel %vm532, %v1395, %v1402
        %v1404 = vrot.slane %v1399, 4
        %s1408 = scalar_lea.vmem [#allocation3], 144
        %v1409 = vld [vmem:[%s1408] sm:$0xf]
        %v1410 = vsel %vm855, %v1394, %v1409
        %1411 = vst [vmem:[%s1408] sm:$0xf] %v1410
        %1412 = vst.msk [vmem:[%s1408 + $0x4] sm:$0xf] %vm230, %v1403
        %v1413 = vld [vmem:[%s1408 + $0x8] sm:$0x1]
        %v1414 = vsel %vm241, %v1404, %v1413
        %1415 = vst [vmem:[%s1408 + $0x8] sm:$0x1] %v1414
        %v1416 = vmul.f32 %v1380, 0.6
        %v1417 = vmul.f32 %v1381, 0.6
        %v1418 = vadd.f32 %v994, %v1416
        %v1419 = vadd.f32 %v995, %v1417
        %v1420 = vpack.c.bf16 %v1418, %v1418
        %v1421 = vpack.c.bf16 %v1419, %v1419
        %v1423 = vshrl.u32 %v1420, 16
        %v1425 = vrot.slane %v1423, 7
        %v1426 = vshll.u32 %v1420, 16
        %v1428 = vor.u32 %v1425, %v1426
        %v1429 = vrot.slane %v1425, 4
        %v1431 = vshrl.u32 %v1421, 16
        %v1433 = vrot.slane %v1431, 7
        %v1434 = vshll.u32 %v1421, 16
        %v1436 = vor.u32 %v1433, %v1434
        %v1437 = vsel %vm532, %v1429, %v1436
        %v1438 = vrot.slane %v1433, 4
        %s1442 = scalar_lea.vmem [#allocation3], 156
        %v1443 = vld [vmem:[%s1442] sm:$0xf]
        %v1444 = vsel %vm855, %v1428, %v1443
        %1445 = vst [vmem:[%s1442] sm:$0xf] %v1444
        %1446 = vst.msk [vmem:[%s1442 + $0x4] sm:$0xf] %vm230, %v1437
        %v1447 = vld [vmem:[%s1442 + $0x8] sm:$0x1]
        %v1448 = vsel %vm241, %v1438, %v1447
        %1449 = vst [vmem:[%s1442 + $0x8] sm:$0x1] %v1448
        %v1450 = vsub.f32 %v998, %v996
        %v1451 = vsub.f32 %v999, %v997
        %v1452 = vmul.f32 %v1450, 0.06666667
        %v1453 = vmul.f32 %v1451, 0.06666667
        %v1454 = vadd.f32 %v996, %v1452
        %v1455 = vadd.f32 %v997, %v1453
        %v1456 = vpack.c.bf16 %v1454, %v1454
        %v1457 = vpack.c.bf16 %v1455, %v1455
        %v1459 = vshrl.u32 %v1456, 16
        %v1461 = vrot.slane %v1459, 7
        %v1462 = vshll.u32 %v1456, 16
        %v1464 = vor.u32 %v1461, %v1462
        %v1465 = vrot.slane %v1461, 4
        %v1467 = vshrl.u32 %v1457, 16
        %v1469 = vrot.slane %v1467, 7
        %v1470 = vshll.u32 %v1457, 16
        %v1472 = vor.u32 %v1469, %v1470
        %v1473 = vsel %vm532, %v1465, %v1472
        %v1474 = vrot.slane %v1469, 4
        %s1478 = scalar_lea.vmem [#allocation3], 168
        %v1479 = vld [vmem:[%s1478] sm:$0xf]
        %v1480 = vsel %vm855, %v1464, %v1479
        %1481 = vst [vmem:[%s1478] sm:$0xf] %v1480
        %1482 = vst.msk [vmem:[%s1478 + $0x4] sm:$0xf] %vm230, %v1473
        %v1483 = vld [vmem:[%s1478 + $0x8] sm:$0x1]
        %v1484 = vsel %vm241, %v1474, %v1483
        %1485 = vst [vmem:[%s1478 + $0x8] sm:$0x1] %v1484
        %v1486 = vmul.f32 %v1450, 0.53333336
        %v1487 = vmul.f32 %v1451, 0.53333336
        %v1488 = vadd.f32 %v996, %v1486
        %v1489 = vadd.f32 %v997, %v1487
        %v1490 = vpack.c.bf16 %v1488, %v1488
        %v1491 = vpack.c.bf16 %v1489, %v1489
        %v1493 = vshrl.u32 %v1490, 16
        %v1495 = vrot.slane %v1493, 7
        %v1496 = vshll.u32 %v1490, 16
        %v1498 = vor.u32 %v1495, %v1496
        %v1499 = vrot.slane %v1495, 4
        %v1501 = vshrl.u32 %v1491, 16
        %v1503 = vrot.slane %v1501, 7
        %v1504 = vshll.u32 %v1491, 16
        %v1506 = vor.u32 %v1503, %v1504
        %v1507 = vsel %vm532, %v1499, %v1506
        %v1508 = vrot.slane %v1503, 4
        %s1512 = scalar_lea.vmem [#allocation3], 180
        %v1513 = vld [vmem:[%s1512] sm:$0xf]
        %v1514 = vsel %vm855, %v1498, %v1513
        %1515 = vst [vmem:[%s1512] sm:$0xf] %v1514
        %1516 = vst.msk [vmem:[%s1512 + $0x4] sm:$0xf] %vm230, %v1507
        %v1517 = vld [vmem:[%s1512 + $0x8] sm:$0x1]
        %v1518 = vsel %vm241, %v1508, %v1517
        %1519 = vst [vmem:[%s1512 + $0x8] sm:$0x1] %v1518
        %v1520 = vadd.f32 %v996, %v1450
        %v1521 = vadd.f32 %v997, %v1451
        %v1522 = vpack.c.bf16 %v1520, %v1520
        %v1523 = vpack.c.bf16 %v1521, %v1521
        %v1525 = vshrl.u32 %v1522, 16
        %v1527 = vrot.slane %v1525, 7
        %v1528 = vshll.u32 %v1522, 16
        %v1530 = vor.u32 %v1527, %v1528
        %v1531 = vrot.slane %v1527, 4
        %v1533 = vshrl.u32 %v1523, 16
        %v1535 = vrot.slane %v1533, 7
        %v1536 = vshll.u32 %v1523, 16
        %v1538 = vor.u32 %v1535, %v1536
        %v1539 = vsel %vm532, %v1531, %v1538
        %v1540 = vrot.slane %v1535, 4
        %s1544 = scalar_lea.vmem [#allocation3], 192
        %v1545 = vld [vmem:[%s1544] sm:$0xf]
        %v1546 = vsel %vm855, %v1530, %v1545
        %1547 = vst [vmem:[%s1544] sm:$0xf] %v1546
        %1548 = vst.msk [vmem:[%s1544 + $0x4] sm:$0xf] %vm230, %v1539
        %v1549 = vld [vmem:[%s1544 + $0x8] sm:$0x1]
        %v1550 = vsel %vm241, %v1540, %v1549
        %1551 = vst [vmem:[%s1544 + $0x8] sm:$0x1] %v1550
        %v1552 = vld [vmem:[#allocation2] sm:$0xf]
        %v1553 = vld [vmem:[#allocation2 + $0x4] sm:$0xf]
        %v1554 = vld [vmem:[#allocation2 + $0xc] sm:$0xf]
        %v1555 = vld [vmem:[#allocation2 + $0x10] sm:$0xf]
        %v1556 = vld [vmem:[#allocation2 + $0x18] sm:$0xf]
        %v1557 = vld [vmem:[#allocation2 + $0x1c] sm:$0xf]
        %v1558 = vld [vmem:[#allocation2 + $0x24] sm:$0xf]
        %v1559 = vld [vmem:[#allocation2 + $0x28] sm:$0xf]
        %v1560 = vld [vmem:[#allocation2 + $0x30] sm:$0xf]
        %v1561 = vld [vmem:[#allocation2 + $0x34] sm:$0xf]
        %v1562 = vld [vmem:[#allocation2 + $0x3c] sm:$0xf]
        %v1563 = vld [vmem:[#allocation2 + $0x40] sm:$0xf]
        %v1564 = vld [vmem:[#allocation2 + $0x48] sm:$0xf]
        %v1565 = vld [vmem:[#allocation2 + $0x4c] sm:$0xf]
        %v1566 = vld [vmem:[#allocation2 + $0x54] sm:$0xf]
        %v1567 = vld [vmem:[#allocation2 + $0x58] sm:$0xf]
        %v1568 = vld [vmem:[#allocation2 + $0x60] sm:$0xf]
        %v1569 = vld [vmem:[#allocation2 + $0x64] sm:$0xf]
        %v1570 = vld [vmem:[#allocation2 + $0x6c] sm:$0xf]
        %v1571 = vld [vmem:[#allocation2 + $0x70] sm:$0xf]
        %v1572 = vld [vmem:[#allocation2 + $0x78] sm:$0xf]
        %v1573 = vld [vmem:[#allocation2 + $0x7c] sm:$0xf]
        %v1574 = vld [vmem:[#allocation2 + $0x84] sm:$0xf]
        %v1575 = vld [vmem:[#allocation2 + $0x88] sm:$0xf]
        %v1576 = vld [vmem:[#allocation2 + $0x90] sm:$0xf]
        %v1577 = vld [vmem:[#allocation2 + $0x94] sm:$0xf]
        %v1578 = vld [vmem:[#allocation2 + $0x9c] sm:$0xf]
        %v1579 = vld [vmem:[#allocation2 + $0xa0] sm:$0xf]
        %v1580 = vld [vmem:[#allocation2 + $0xa8] sm:$0xf]
        %v1581 = vld [vmem:[#allocation2 + $0xac] sm:$0xf]
        %v1582 = vld [vmem:[#allocation2 + $0xb4] sm:$0xf]
        %v1583 = vld [vmem:[#allocation2 + $0xb8] sm:$0xf]
        %v1584 = vld [vmem:[#allocation3] sm:$0xf]
        %v1585 = vld [vmem:[#allocation3 + $0x4] sm:$0xf]
        %v1586 = vld [vmem:[#allocation3 + $0xc] sm:$0xf]
        %v1587 = vld [vmem:[#allocation3 + $0x10] sm:$0xf]
        %v1588 = vld [vmem:[#allocation3 + $0x18] sm:$0xf]
        %v1589 = vld [vmem:[#allocation3 + $0x1c] sm:$0xf]
        %v1590 = vld [vmem:[#allocation3 + $0x24] sm:$0xf]
        %v1591 = vld [vmem:[#allocation3 + $0x28] sm:$0xf]
        %v1592 = vld [vmem:[#allocation3 + $0x30] sm:$0xf]
        %v1593 = vld [vmem:[#allocation3 + $0x34] sm:$0xf]
        %v1594 = vld [vmem:[#allocation3 + $0x3c] sm:$0xf]
        %v1595 = vld [vmem:[#allocation3 + $0x40] sm:$0xf]
        %v1596 = vld [vmem:[#allocation3 + $0x48] sm:$0xf]
        %v1597 = vld [vmem:[#allocation3 + $0x4c] sm:$0xf]
        %v1598 = vld [vmem:[#allocation3 + $0x54] sm:$0xf]
        %v1599 = vld [vmem:[#allocation3 + $0x58] sm:$0xf]
        %v1600 = vld [vmem:[#allocation3 + $0x60] sm:$0xf]
        %v1601 = vld [vmem:[#allocation3 + $0x64] sm:$0xf]
        %v1602 = vld [vmem:[#allocation3 + $0x6c] sm:$0xf]
        %v1603 = vld [vmem:[#allocation3 + $0x70] sm:$0xf]
        %v1604 = vld [vmem:[#allocation3 + $0x78] sm:$0xf]
        %v1605 = vld [vmem:[#allocation3 + $0x7c] sm:$0xf]
        %v1606 = vld [vmem:[#allocation3 + $0x84] sm:$0xf]
        %v1607 = vld [vmem:[#allocation3 + $0x88] sm:$0xf]
        %v1608 = vld [vmem:[#allocation3 + $0x90] sm:$0xf]
        %v1609 = vld [vmem:[#allocation3 + $0x94] sm:$0xf]
        %v1610 = vld [vmem:[#allocation3 + $0x9c] sm:$0xf]
        %v1611 = vld [vmem:[#allocation3 + $0xa0] sm:$0xf]
        %v1612 = vld [vmem:[#allocation3 + $0xa8] sm:$0xf]
        %v1613 = vld [vmem:[#allocation3 + $0xac] sm:$0xf]
        %v1614 = vld [vmem:[#allocation3 + $0xb4] sm:$0xf]
        %v1615 = vld [vmem:[#allocation3 + $0xb8] sm:$0xf]
        %v1648 = vunpack.c.l.b16 %v1552
        %v1649 = vunpack.c.l.b16 %v1553
        %v1650 = vunpack.c.l.b16 %v1554
        %v1651 = vunpack.c.l.b16 %v1555
        %v1652 = vunpack.c.l.b16 %v1556
        %v1653 = vunpack.c.l.b16 %v1557
        %v1654 = vunpack.c.l.b16 %v1558
        %v1655 = vunpack.c.l.b16 %v1559
        %v1656 = vunpack.c.l.b16 %v1560
        %v1657 = vunpack.c.l.b16 %v1561
        %v1658 = vunpack.c.l.b16 %v1562
        %v1659 = vunpack.c.l.b16 %v1563
        %v1660 = vunpack.c.l.b16 %v1564
        %v1661 = vunpack.c.l.b16 %v1565
        %v1662 = vunpack.c.l.b16 %v1566
        %v1663 = vunpack.c.l.b16 %v1567
        %v1664 = vunpack.c.l.b16 %v1568
        %v1665 = vunpack.c.l.b16 %v1569
        %v1666 = vunpack.c.l.b16 %v1570
        %v1667 = vunpack.c.l.b16 %v1571
        %v1668 = vunpack.c.l.b16 %v1572
        %v1669 = vunpack.c.l.b16 %v1573
        %v1670 = vunpack.c.l.b16 %v1574
        %v1671 = vunpack.c.l.b16 %v1575
        %v1672 = vunpack.c.l.b16 %v1576
        %v1673 = vunpack.c.l.b16 %v1577
        %v1674 = vunpack.c.l.b16 %v1578
        %v1675 = vunpack.c.l.b16 %v1579
        %v1676 = vunpack.c.l.b16 %v1580
        %v1677 = vunpack.c.l.b16 %v1581
        %v1678 = vunpack.c.l.b16 %v1582
        %v1679 = vunpack.c.l.b16 %v1583
        %v1680 = vpack.c.b16 %v1649, %v1648
        %v1681 = vpack.c.b16 %v1651, %v1650
        %v1682 = vpack.c.b16 %v1653, %v1652
        %v1683 = vpack.c.b16 %v1655, %v1654
        %v1684 = vpack.c.b16 %v1657, %v1656
        %v1685 = vpack.c.b16 %v1659, %v1658
        %v1686 = vpack.c.b16 %v1661, %v1660
        %v1687 = vpack.c.b16 %v1663, %v1662
        %v1688 = vpack.c.b16 %v1665, %v1664
        %v1689 = vpack.c.b16 %v1667, %v1666
        %v1690 = vpack.c.b16 %v1669, %v1668
        %v1691 = vpack.c.b16 %v1671, %v1670
        %v1692 = vpack.c.b16 %v1673, %v1672
        %v1693 = vpack.c.b16 %v1675, %v1674
        %v1694 = vpack.c.b16 %v1677, %v1676
        %v1695 = vpack.c.b16 %v1679, %v1678
        %v1728 = vunpack.c.l.b16 %v1584
        %v1729 = vunpack.c.l.b16 %v1585
        %v1730 = vunpack.c.l.b16 %v1586
        %v1731 = vunpack.c.l.b16 %v1587
        %v1732 = vunpack.c.l.b16 %v1588
        %v1733 = vunpack.c.l.b16 %v1589
        %v1734 = vunpack.c.l.b16 %v1590
        %v1735 = vunpack.c.l.b16 %v1591
        %v1736 = vunpack.c.l.b16 %v1592
        %v1737 = vunpack.c.l.b16 %v1593
        %v1738 = vunpack.c.l.b16 %v1594
        %v1739 = vunpack.c.l.b16 %v1595
        %v1740 = vunpack.c.l.b16 %v1596
        %v1741 = vunpack.c.l.b16 %v1597
        %v1742 = vunpack.c.l.b16 %v1598
        %v1743 = vunpack.c.l.b16 %v1599
        %v1744 = vunpack.c.l.b16 %v1600
        %v1745 = vunpack.c.l.b16 %v1601
        %v1746 = vunpack.c.l.b16 %v1602
        %v1747 = vunpack.c.l.b16 %v1603
        %v1748 = vunpack.c.l.b16 %v1604
        %v1749 = vunpack.c.l.b16 %v1605
        %v1750 = vunpack.c.l.b16 %v1606
        %v1751 = vunpack.c.l.b16 %v1607
        %v1752 = vunpack.c.l.b16 %v1608
        %v1753 = vunpack.c.l.b16 %v1609
        %v1754 = vunpack.c.l.b16 %v1610
        %v1755 = vunpack.c.l.b16 %v1611
        %v1756 = vunpack.c.l.b16 %v1612
        %v1757 = vunpack.c.l.b16 %v1613
        %v1758 = vunpack.c.l.b16 %v1614
        %v1759 = vunpack.c.l.b16 %v1615
        %v1760 = vpack.c.b16 %v1729, %v1728
        %v1761 = vpack.c.b16 %v1731, %v1730
        %v1762 = vpack.c.b16 %v1733, %v1732
        %v1763 = vpack.c.b16 %v1735, %v1734
        %v1764 = vpack.c.b16 %v1737, %v1736
        %v1765 = vpack.c.b16 %v1739, %v1738
        %v1766 = vpack.c.b16 %v1741, %v1740
        %v1767 = vpack.c.b16 %v1743, %v1742
        %v1768 = vpack.c.b16 %v1745, %v1744
        %v1769 = vpack.c.b16 %v1747, %v1746
        %v1770 = vpack.c.b16 %v1749, %v1748
        %v1771 = vpack.c.b16 %v1751, %v1750
        %v1772 = vpack.c.b16 %v1753, %v1752
        %v1773 = vpack.c.b16 %v1755, %v1754
        %v1774 = vpack.c.b16 %v1757, %v1756
        %v1775 = vpack.c.b16 %v1759, %v1758
        %1776 = vrot.lane.b32.xlu0 %v1760, 4
        %v1777 = vpop.permute.xlu0 %1776
        %1778 = vrot.lane.b32.xlu0 %v1761, 4
        %v1779 = vpop.permute.xlu0 %1778
        %1780 = vrot.lane.b32.xlu0 %v1762, 4
        %v1781 = vpop.permute.xlu0 %1780
        %1782 = vrot.lane.b32.xlu0 %v1763, 4
        %v1783 = vpop.permute.xlu0 %1782
        %1784 = vrot.lane.b32.xlu0 %v1764, 4
        %v1785 = vpop.permute.xlu0 %1784
        %1786 = vrot.lane.b32.xlu0 %v1765, 4
        %v1787 = vpop.permute.xlu0 %1786
        %1788 = vrot.lane.b32.xlu0 %v1766, 4
        %v1789 = vpop.permute.xlu0 %1788
        %1790 = vrot.lane.b32.xlu0 %v1767, 4
        %v1791 = vpop.permute.xlu0 %1790
        %1792 = vrot.lane.b32.xlu0 %v1768, 4
        %v1793 = vpop.permute.xlu0 %1792
        %1794 = vrot.lane.b32.xlu0 %v1769, 4
        %v1795 = vpop.permute.xlu0 %1794
        %1796 = vrot.lane.b32.xlu0 %v1770, 4
        %v1797 = vpop.permute.xlu0 %1796
        %1798 = vrot.lane.b32.xlu0 %v1771, 4
        %v1799 = vpop.permute.xlu0 %1798
        %1800 = vrot.lane.b32.xlu0 %v1772, 4
        %v1801 = vpop.permute.xlu0 %1800
        %1802 = vrot.lane.b32.xlu0 %v1773, 4
        %v1803 = vpop.permute.xlu0 %1802
        %1804 = vrot.lane.b32.xlu0 %v1774, 4
        %v1805 = vpop.permute.xlu0 %1804
        %1806 = vrot.lane.b32.xlu0 %v1775, 4
        %v1807 = vpop.permute.xlu0 %1806
        %vm1808 = vcmask 31744
        %v1811 = vsel %vm1808, %v1680, %v1777
        %v1814 = vsel %vm1808, %v1681, %v1779
        %v1817 = vsel %vm1808, %v1682, %v1781
        %v1820 = vsel %vm1808, %v1683, %v1783
        %v1823 = vsel %vm1808, %v1684, %v1785
        %v1826 = vsel %vm1808, %v1685, %v1787
        %v1829 = vsel %vm1808, %v1686, %v1789
        %v1832 = vsel %vm1808, %v1687, %v1791
        %v1835 = vsel %vm1808, %v1688, %v1793
        %v1838 = vsel %vm1808, %v1689, %v1795
        %v1841 = vsel %vm1808, %v1690, %v1797
        %v1844 = vsel %vm1808, %v1691, %v1799
        %v1847 = vsel %vm1808, %v1692, %v1801
        %v1850 = vsel %vm1808, %v1693, %v1803
        %v1853 = vsel %vm1808, %v1694, %v1805
        %v1856 = vsel %vm1808, %v1695, %v1807
        %v1857 = vld [vmem:[%s2] sm:$0xf]
        %v1858 = vld [vmem:[#allocation2 + $0x8] sm:$0x1]
        %v1859 = vld [vmem:[#allocation2 + $0x14] sm:$0x1]
        %v1860 = vld [vmem:[#allocation2 + $0x20] sm:$0x1]
        %v1861 = vld [vmem:[#allocation2 + $0x2c] sm:$0x1]
        %v1862 = vld [vmem:[#allocation2 + $0x38] sm:$0x1]
        %v1863 = vld [vmem:[#allocation2 + $0x44] sm:$0x1]
        %v1864 = vld [vmem:[#allocation2 + $0x50] sm:$0x1]
        %v1865 = vld [vmem:[#allocation2 + $0x5c] sm:$0x1]
        %v1866 = vld [vmem:[#allocation2 + $0x68] sm:$0x1]
        %v1867 = vld [vmem:[#allocation2 + $0x74] sm:$0x1]
        %v1868 = vld [vmem:[#allocation2 + $0x80] sm:$0x1]
        %v1869 = vld [vmem:[#allocation2 + $0x8c] sm:$0x1]
        %v1870 = vld [vmem:[#allocation2 + $0x98] sm:$0x1]
        %v1871 = vld [vmem:[#allocation2 + $0xa4] sm:$0x1]
        %v1872 = vld [vmem:[#allocation2 + $0xb0] sm:$0x1]
        %v1873 = vld [vmem:[#allocation2 + $0xbc] sm:$0x1]
        %vm1874 = vsmask.f32 3328
        %vm1875 = vsmask.f32 7440
        %vm1876 = vmor %vm1874, %vm1875
        %v1878 = vshrl.u32 %v1552, 16
        %v1880 = vrot.slane %v1878, 4
        %v1881 = vshll.u32 %v1552, 16
        %v1883 = vrot.slane %v1881, 5
        %v1884 = vor.u32 %v1880, %v1883
        %v1885 = vrot.slane %v1884, 4
        %v1887 = vshll.u32 %v1553, 16
        %v1889 = vrot.slane %v1887, 5
        %v1890 = vsel %vm1876, %v1885, %v1889
        %v1891 = vshrl.u32 %v1553, 16
        %v1893 = vrot.slane %v1891, 4
        %v1894 = vor.u32 %v1893, %v1889
        %v1895 = vrot.slane %v1894, 4
        %v1897 = vshll.u32 %v1858, 16
        %v1899 = vrot.slane %v1897, 5
        %v1900 = vsel %vm1876, %v1895, %v1899
        %v1902 = vshrl.u32 %v1554, 16
        %v1904 = vrot.slane %v1902, 4
        %v1905 = vshll.u32 %v1554, 16
        %v1907 = vrot.slane %v1905, 5
        %v1908 = vor.u32 %v1904, %v1907
        %v1909 = vrot.slane %v1908, 4
        %v1911 = vshll.u32 %v1555, 16
        %v1913 = vrot.slane %v1911, 5
        %v1914 = vsel %vm1876, %v1909, %v1913
        %v1915 = vshrl.u32 %v1555, 16
        %v1917 = vrot.slane %v1915, 4
        %v1918 = vor.u32 %v1917, %v1913
        %v1919 = vrot.slane %v1918, 4
        %v1921 = vshll.u32 %v1859, 16
        %v1923 = vrot.slane %v1921, 5
        %v1924 = vsel %vm1876, %v1919, %v1923
        %v1926 = vshrl.u32 %v1556, 16
        %v1928 = vrot.slane %v1926, 4
        %v1929 = vshll.u32 %v1556, 16
        %v1931 = vrot.slane %v1929, 5
        %v1932 = vor.u32 %v1928, %v1931
        %v1933 = vrot.slane %v1932, 4
        %v1935 = vshll.u32 %v1557, 16
        %v1937 = vrot.slane %v1935, 5
        %v1938 = vsel %vm1876, %v1933, %v1937
        %v1939 = vshrl.u32 %v1557, 16
        %v1941 = vrot.slane %v1939, 4
        %v1942 = vor.u32 %v1941, %v1937
        %v1943 = vrot.slane %v1942, 4
        %v1945 = vshll.u32 %v1860, 16
        %v1947 = vrot.slane %v1945, 5
        %v1948 = vsel %vm1876, %v1943, %v1947
        %v1950 = vshrl.u32 %v1558, 16
        %v1952 = vrot.slane %v1950, 4
        %v1953 = vshll.u32 %v1558, 16
        %v1955 = vrot.slane %v1953, 5
        %v1956 = vor.u32 %v1952, %v1955
        %v1957 = vrot.slane %v1956, 4
        %v1959 = vshll.u32 %v1559, 16
        %v1961 = vrot.slane %v1959, 5
        %v1962 = vsel %vm1876, %v1957, %v1961
        %v1963 = vshrl.u32 %v1559, 16
        %v1965 = vrot.slane %v1963, 4
        %v1966 = vor.u32 %v1965, %v1961
        %v1967 = vrot.slane %v1966, 4
        %v1969 = vshll.u32 %v1861, 16
        %v1971 = vrot.slane %v1969, 5
        %v1972 = vsel %vm1876, %v1967, %v1971
        %v1974 = vshrl.u32 %v1560, 16
        %v1976 = vrot.slane %v1974, 4
        %v1977 = vshll.u32 %v1560, 16
        %v1979 = vrot.slane %v1977, 5
        %v1980 = vor.u32 %v1976, %v1979
        %v1981 = vrot.slane %v1980, 4
        %v1983 = vshll.u32 %v1561, 16
        %v1985 = vrot.slane %v1983, 5
        %v1986 = vsel %vm1876, %v1981, %v1985
        %v1987 = vshrl.u32 %v1561, 16
        %v1989 = vrot.slane %v1987, 4
        %v1990 = vor.u32 %v1989, %v1985
        %v1991 = vrot.slane %v1990, 4
        %v1993 = vshll.u32 %v1862, 16
        %v1995 = vrot.slane %v1993, 5
        %v1996 = vsel %vm1876, %v1991, %v1995
        %v1998 = vshrl.u32 %v1562, 16
        %v2000 = vrot.slane %v1998, 4
        %v2001 = vshll.u32 %v1562, 16
        %v2003 = vrot.slane %v2001, 5
        %v2004 = vor.u32 %v2000, %v2003
        %v2005 = vrot.slane %v2004, 4
        %v2007 = vshll.u32 %v1563, 16
        %v2009 = vrot.slane %v2007, 5
        %v2010 = vsel %vm1876, %v2005, %v2009
        %v2011 = vshrl.u32 %v1563, 16
        %v2013 = vrot.slane %v2011, 4
        %v2014 = vor.u32 %v2013, %v2009
        %v2015 = vrot.slane %v2014, 4
        %v2017 = vshll.u32 %v1863, 16
        %v2019 = vrot.slane %v2017, 5
        %v2020 = vsel %vm1876, %v2015, %v2019
        %v2022 = vshrl.u32 %v1564, 16
        %v2024 = vrot.slane %v2022, 4
        %v2025 = vshll.u32 %v1564, 16
        %v2027 = vrot.slane %v2025, 5
        %v2028 = vor.u32 %v2024, %v2027
        %v2029 = vrot.slane %v2028, 4
        %v2031 = vshll.u32 %v1565, 16
        %v2033 = vrot.slane %v2031, 5
        %v2034 = vsel %vm1876, %v2029, %v2033
        %v2035 = vshrl.u32 %v1565, 16
        %v2037 = vrot.slane %v2035, 4
        %v2038 = vor.u32 %v2037, %v2033
        %v2039 = vrot.slane %v2038, 4
        %v2041 = vshll.u32 %v1864, 16
        %v2043 = vrot.slane %v2041, 5
        %v2044 = vsel %vm1876, %v2039, %v2043
        %v2046 = vshrl.u32 %v1566, 16
        %v2048 = vrot.slane %v2046, 4
        %v2049 = vshll.u32 %v1566, 16
        %v2051 = vrot.slane %v2049, 5
        %v2052 = vor.u32 %v2048, %v2051
        %v2053 = vrot.slane %v2052, 4
        %v2055 = vshll.u32 %v1567, 16
        %v2057 = vrot.slane %v2055, 5
        %v2058 = vsel %vm1876, %v2053, %v2057
        %v2059 = vshrl.u32 %v1567, 16
        %v2061 = vrot.slane %v2059, 4
        %v2062 = vor.u32 %v2061, %v2057
        %v2063 = vrot.slane %v2062, 4
        %v2065 = vshll.u32 %v1865, 16
        %v2067 = vrot.slane %v2065, 5
        %v2068 = vsel %vm1876, %v2063, %v2067
        %v2070 = vshrl.u32 %v1568, 16
        %v2072 = vrot.slane %v2070, 4
        %v2073 = vshll.u32 %v1568, 16
        %v2075 = vrot.slane %v2073, 5
        %v2076 = vor.u32 %v2072, %v2075
        %v2077 = vrot.slane %v2076, 4
        %v2079 = vshll.u32 %v1569, 16
        %v2081 = vrot.slane %v2079, 5
        %v2082 = vsel %vm1876, %v2077, %v2081
        %v2083 = vshrl.u32 %v1569, 16
        %v2085 = vrot.slane %v2083, 4
        %v2086 = vor.u32 %v2085, %v2081
        %v2087 = vrot.slane %v2086, 4
        %v2089 = vshll.u32 %v1866, 16
        %v2091 = vrot.slane %v2089, 5
        %v2092 = vsel %vm1876, %v2087, %v2091
        %v2094 = vshrl.u32 %v1570, 16
        %v2096 = vrot.slane %v2094, 4
        %v2097 = vshll.u32 %v1570, 16
        %v2099 = vrot.slane %v2097, 5
        %v2100 = vor.u32 %v2096, %v2099
        %v2101 = vrot.slane %v2100, 4
        %v2103 = vshll.u32 %v1571, 16
        %v2105 = vrot.slane %v2103, 5
        %v2106 = vsel %vm1876, %v2101, %v2105
        %v2107 = vshrl.u32 %v1571, 16
        %v2109 = vrot.slane %v2107, 4
        %v2110 = vor.u32 %v2109, %v2105
        %v2111 = vrot.slane %v2110, 4
        %v2113 = vshll.u32 %v1867, 16
        %v2115 = vrot.slane %v2113, 5
        %v2116 = vsel %vm1876, %v2111, %v2115
        %v2118 = vshrl.u32 %v1572, 16
        %v2120 = vrot.slane %v2118, 4
        %v2121 = vshll.u32 %v1572, 16
        %v2123 = vrot.slane %v2121, 5
        %v2124 = vor.u32 %v2120, %v2123
        %v2125 = vrot.slane %v2124, 4
        %v2127 = vshll.u32 %v1573, 16
        %v2129 = vrot.slane %v2127, 5
        %v2130 = vsel %vm1876, %v2125, %v2129
        %v2131 = vshrl.u32 %v1573, 16
        %v2133 = vrot.slane %v2131, 4
        %v2134 = vor.u32 %v2133, %v2129
        %v2135 = vrot.slane %v2134, 4
        %v2137 = vshll.u32 %v1868, 16
        %v2139 = vrot.slane %v2137, 5
        %v2140 = vsel %vm1876, %v2135, %v2139
        %v2142 = vshrl.u32 %v1574, 16
        %v2144 = vrot.slane %v2142, 4
        %v2145 = vshll.u32 %v1574, 16
        %v2147 = vrot.slane %v2145, 5
        %v2148 = vor.u32 %v2144, %v2147
        %v2149 = vrot.slane %v2148, 4
        %v2151 = vshll.u32 %v1575, 16
        %v2153 = vrot.slane %v2151, 5
        %v2154 = vsel %vm1876, %v2149, %v2153
        %v2155 = vshrl.u32 %v1575, 16
        %v2157 = vrot.slane %v2155, 4
        %v2158 = vor.u32 %v2157, %v2153
        %v2159 = vrot.slane %v2158, 4
        %v2161 = vshll.u32 %v1869, 16
        %v2163 = vrot.slane %v2161, 5
        %v2164 = vsel %vm1876, %v2159, %v2163
        %v2166 = vshrl.u32 %v1576, 16
        %v2168 = vrot.slane %v2166, 4
        %v2169 = vshll.u32 %v1576, 16
        %v2171 = vrot.slane %v2169, 5
        %v2172 = vor.u32 %v2168, %v2171
        %v2173 = vrot.slane %v2172, 4
        %v2175 = vshll.u32 %v1577, 16
        %v2177 = vrot.slane %v2175, 5
        %v2178 = vsel %vm1876, %v2173, %v2177
        %v2179 = vshrl.u32 %v1577, 16
        %v2181 = vrot.slane %v2179, 4
        %v2182 = vor.u32 %v2181, %v2177
        %v2183 = vrot.slane %v2182, 4
        %v2185 = vshll.u32 %v1870, 16
        %v2187 = vrot.slane %v2185, 5
        %v2188 = vsel %vm1876, %v2183, %v2187
        %v2190 = vshrl.u32 %v1578, 16
        %v2192 = vrot.slane %v2190, 4
        %v2193 = vshll.u32 %v1578, 16
        %v2195 = vrot.slane %v2193, 5
        %v2196 = vor.u32 %v2192, %v2195
        %v2197 = vrot.slane %v2196, 4
        %v2199 = vshll.u32 %v1579, 16
        %v2201 = vrot.slane %v2199, 5
        %v2202 = vsel %vm1876, %v2197, %v2201
        %v2203 = vshrl.u32 %v1579, 16
        %v2205 = vrot.slane %v2203, 4
        %v2206 = vor.u32 %v2205, %v2201
        %v2207 = vrot.slane %v2206, 4
        %v2209 = vshll.u32 %v1871, 16
        %v2211 = vrot.slane %v2209, 5
        %v2212 = vsel %vm1876, %v2207, %v2211
        %v2214 = vshrl.u32 %v1580, 16
        %v2216 = vrot.slane %v2214, 4
        %v2217 = vshll.u32 %v1580, 16
        %v2219 = vrot.slane %v2217, 5
        %v2220 = vor.u32 %v2216, %v2219
        %v2221 = vrot.slane %v2220, 4
        %v2223 = vshll.u32 %v1581, 16
        %v2225 = vrot.slane %v2223, 5
        %v2226 = vsel %vm1876, %v2221, %v2225
        %v2227 = vshrl.u32 %v1581, 16
        %v2229 = vrot.slane %v2227, 4
        %v2230 = vor.u32 %v2229, %v2225
        %v2231 = vrot.slane %v2230, 4
        %v2233 = vshll.u32 %v1872, 16
        %v2235 = vrot.slane %v2233, 5
        %v2236 = vsel %vm1876, %v2231, %v2235
        %v2238 = vshrl.u32 %v1582, 16
        %v2240 = vrot.slane %v2238, 4
        %v2241 = vshll.u32 %v1582, 16
        %v2243 = vrot.slane %v2241, 5
        %v2244 = vor.u32 %v2240, %v2243
        %v2245 = vrot.slane %v2244, 4
        %v2247 = vshll.u32 %v1583, 16
        %v2249 = vrot.slane %v2247, 5
        %v2250 = vsel %vm1876, %v2245, %v2249
        %v2251 = vshrl.u32 %v1583, 16
        %v2253 = vrot.slane %v2251, 4
        %v2254 = vor.u32 %v2253, %v2249
        %v2255 = vrot.slane %v2254, 4
        %v2257 = vshll.u32 %v1873, 16
        %v2259 = vrot.slane %v2257, 5
        %v2260 = vsel %vm1876, %v2255, %v2259
        %v2261 = vld [vmem:[#allocation3 + $0x8] sm:$0x1]
        %v2262 = vld [vmem:[#allocation3 + $0x14] sm:$0x1]
        %v2263 = vld [vmem:[#allocation3 + $0x20] sm:$0x1]
        %v2264 = vld [vmem:[#allocation3 + $0x2c] sm:$0x1]
        %v2265 = vld [vmem:[#allocation3 + $0x38] sm:$0x1]
        %v2266 = vld [vmem:[#allocation3 + $0x44] sm:$0x1]
        %v2267 = vld [vmem:[#allocation3 + $0x50] sm:$0x1]
        %v2268 = vld [vmem:[#allocation3 + $0x5c] sm:$0x1]
        %v2269 = vld [vmem:[#allocation3 + $0x68] sm:$0x1]
        %v2270 = vld [vmem:[#allocation3 + $0x74] sm:$0x1]
        %v2271 = vld [vmem:[#allocation3 + $0x80] sm:$0x1]
        %v2272 = vld [vmem:[#allocation3 + $0x8c] sm:$0x1]
        %v2273 = vld [vmem:[#allocation3 + $0x98] sm:$0x1]
        %v2274 = vld [vmem:[#allocation3 + $0xa4] sm:$0x1]
        %v2275 = vld [vmem:[#allocation3 + $0xb0] sm:$0x1]
        %v2276 = vld [vmem:[#allocation3 + $0xbc] sm:$0x1]
        %v2278 = vshrl.u32 %v1584, 16
        %v2280 = vrot.slane %v2278, 4
        %v2281 = vshll.u32 %v1584, 16
        %v2283 = vrot.slane %v2281, 5
        %v2284 = vor.u32 %v2280, %v2283
        %v2285 = vrot.slane %v2284, 4
        %v2287 = vshll.u32 %v1585, 16
        %v2289 = vrot.slane %v2287, 5
        %v2290 = vsel %vm1876, %v2285, %v2289
        %v2291 = vshrl.u32 %v1585, 16
        %v2293 = vrot.slane %v2291, 4
        %v2294 = vor.u32 %v2293, %v2289
        %v2295 = vrot.slane %v2294, 4
        %v2297 = vshll.u32 %v2261, 16
        %v2299 = vrot.slane %v2297, 5
        %v2300 = vsel %vm1876, %v2295, %v2299
        %v2302 = vshrl.u32 %v1586, 16
        %v2304 = vrot.slane %v2302, 4
        %v2305 = vshll.u32 %v1586, 16
        %v2307 = vrot.slane %v2305, 5
        %v2308 = vor.u32 %v2304, %v2307
        %v2309 = vrot.slane %v2308, 4
        %v2311 = vshll.u32 %v1587, 16
        %v2313 = vrot.slane %v2311, 5
        %v2314 = vsel %vm1876, %v2309, %v2313
        %v2315 = vshrl.u32 %v1587, 16
        %v2317 = vrot.slane %v2315, 4
        %v2318 = vor.u32 %v2317, %v2313
        %v2319 = vrot.slane %v2318, 4
        %v2321 = vshll.u32 %v2262, 16
        %v2323 = vrot.slane %v2321, 5
        %v2324 = vsel %vm1876, %v2319, %v2323
        %v2326 = vshrl.u32 %v1588, 16
        %v2328 = vrot.slane %v2326, 4
        %v2329 = vshll.u32 %v1588, 16
        %v2331 = vrot.slane %v2329, 5
        %v2332 = vor.u32 %v2328, %v2331
        %v2333 = vrot.slane %v2332, 4
        %v2335 = vshll.u32 %v1589, 16
        %v2337 = vrot.slane %v2335, 5
        %v2338 = vsel %vm1876, %v2333, %v2337
        %v2339 = vshrl.u32 %v1589, 16
        %v2341 = vrot.slane %v2339, 4
        %v2342 = vor.u32 %v2341, %v2337
        %v2343 = vrot.slane %v2342, 4
        %v2345 = vshll.u32 %v2263, 16
        %v2347 = vrot.slane %v2345, 5
        %v2348 = vsel %vm1876, %v2343, %v2347
        %v2350 = vshrl.u32 %v1590, 16
        %v2352 = vrot.slane %v2350, 4
        %v2353 = vshll.u32 %v1590, 16
        %v2355 = vrot.slane %v2353, 5
        %v2356 = vor.u32 %v2352, %v2355
        %v2357 = vrot.slane %v2356, 4
        %v2359 = vshll.u32 %v1591, 16
        %v2361 = vrot.slane %v2359, 5
        %v2362 = vsel %vm1876, %v2357, %v2361
        %v2363 = vshrl.u32 %v1591, 16
        %v2365 = vrot.slane %v2363, 4
        %v2366 = vor.u32 %v2365, %v2361
        %v2367 = vrot.slane %v2366, 4
        %v2369 = vshll.u32 %v2264, 16
        %v2371 = vrot.slane %v2369, 5
        %v2372 = vsel %vm1876, %v2367, %v2371
        %v2374 = vshrl.u32 %v1592, 16
        %v2376 = vrot.slane %v2374, 4
        %v2377 = vshll.u32 %v1592, 16
        %v2379 = vrot.slane %v2377, 5
        %v2380 = vor.u32 %v2376, %v2379
        %v2381 = vrot.slane %v2380, 4
        %v2383 = vshll.u32 %v1593, 16
        %v2385 = vrot.slane %v2383, 5
        %v2386 = vsel %vm1876, %v2381, %v2385
        %v2387 = vshrl.u32 %v1593, 16
        %v2389 = vrot.slane %v2387, 4
        %v2390 = vor.u32 %v2389, %v2385
        %v2391 = vrot.slane %v2390, 4
        %v2393 = vshll.u32 %v2265, 16
        %v2395 = vrot.slane %v2393, 5
        %v2396 = vsel %vm1876, %v2391, %v2395
        %v2398 = vshrl.u32 %v1594, 16
        %v2400 = vrot.slane %v2398, 4
        %v2401 = vshll.u32 %v1594, 16
        %v2403 = vrot.slane %v2401, 5
        %v2404 = vor.u32 %v2400, %v2403
        %v2405 = vrot.slane %v2404, 4
        %v2407 = vshll.u32 %v1595, 16
        %v2409 = vrot.slane %v2407, 5
        %v2410 = vsel %vm1876, %v2405, %v2409
        %v2411 = vshrl.u32 %v1595, 16
        %v2413 = vrot.slane %v2411, 4
        %v2414 = vor.u32 %v2413, %v2409
        %v2415 = vrot.slane %v2414, 4
        %v2417 = vshll.u32 %v2266, 16
        %v2419 = vrot.slane %v2417, 5
        %v2420 = vsel %vm1876, %v2415, %v2419
        %v2422 = vshrl.u32 %v1596, 16
        %v2424 = vrot.slane %v2422, 4
        %v2425 = vshll.u32 %v1596, 16
        %v2427 = vrot.slane %v2425, 5
        %v2428 = vor.u32 %v2424, %v2427
        %v2429 = vrot.slane %v2428, 4
        %v2431 = vshll.u32 %v1597, 16
        %v2433 = vrot.slane %v2431, 5
        %v2434 = vsel %vm1876, %v2429, %v2433
        %v2435 = vshrl.u32 %v1597, 16
        %v2437 = vrot.slane %v2435, 4
        %v2438 = vor.u32 %v2437, %v2433
        %v2439 = vrot.slane %v2438, 4
        %v2441 = vshll.u32 %v2267, 16
        %v2443 = vrot.slane %v2441, 5
        %v2444 = vsel %vm1876, %v2439, %v2443
        %v2446 = vshrl.u32 %v1598, 16
        %v2448 = vrot.slane %v2446, 4
        %v2449 = vshll.u32 %v1598, 16
        %v2451 = vrot.slane %v2449, 5
        %v2452 = vor.u32 %v2448, %v2451
        %v2453 = vrot.slane %v2452, 4
        %v2455 = vshll.u32 %v1599, 16
        %v2457 = vrot.slane %v2455, 5
        %v2458 = vsel %vm1876, %v2453, %v2457
        %v2459 = vshrl.u32 %v1599, 16
        %v2461 = vrot.slane %v2459, 4
        %v2462 = vor.u32 %v2461, %v2457
        %v2463 = vrot.slane %v2462, 4
        %v2465 = vshll.u32 %v2268, 16
        %v2467 = vrot.slane %v2465, 5
        %v2468 = vsel %vm1876, %v2463, %v2467
        %v2470 = vshrl.u32 %v1600, 16
        %v2472 = vrot.slane %v2470, 4
        %v2473 = vshll.u32 %v1600, 16
        %v2475 = vrot.slane %v2473, 5
        %v2476 = vor.u32 %v2472, %v2475
        %v2477 = vrot.slane %v2476, 4
        %v2479 = vshll.u32 %v1601, 16
        %v2481 = vrot.slane %v2479, 5
        %v2482 = vsel %vm1876, %v2477, %v2481
        %v2483 = vshrl.u32 %v1601, 16
        %v2485 = vrot.slane %v2483, 4
        %v2486 = vor.u32 %v2485, %v2481
        %v2487 = vrot.slane %v2486, 4
        %v2489 = vshll.u32 %v2269, 16
        %v2491 = vrot.slane %v2489, 5
        %v2492 = vsel %vm1876, %v2487, %v2491
        %v2494 = vshrl.u32 %v1602, 16
        %v2496 = vrot.slane %v2494, 4
        %v2497 = vshll.u32 %v1602, 16
        %v2499 = vrot.slane %v2497, 5
        %v2500 = vor.u32 %v2496, %v2499
        %v2501 = vrot.slane %v2500, 4
        %v2503 = vshll.u32 %v1603, 16
        %v2505 = vrot.slane %v2503, 5
        %v2506 = vsel %vm1876, %v2501, %v2505
        %v2507 = vshrl.u32 %v1603, 16
        %v2509 = vrot.slane %v2507, 4
        %v2510 = vor.u32 %v2509, %v2505
        %v2511 = vrot.slane %v2510, 4
        %v2513 = vshll.u32 %v2270, 16
        %v2515 = vrot.slane %v2513, 5
        %v2516 = vsel %vm1876, %v2511, %v2515
        %v2518 = vshrl.u32 %v1604, 16
        %v2520 = vrot.slane %v2518, 4
        %v2521 = vshll.u32 %v1604, 16
        %v2523 = vrot.slane %v2521, 5
        %v2524 = vor.u32 %v2520, %v2523
        %v2525 = vrot.slane %v2524, 4
        %v2527 = vshll.u32 %v1605, 16
        %v2529 = vrot.slane %v2527, 5
        %v2530 = vsel %vm1876, %v2525, %v2529
        %v2531 = vshrl.u32 %v1605, 16
        %v2533 = vrot.slane %v2531, 4
        %v2534 = vor.u32 %v2533, %v2529
        %v2535 = vrot.slane %v2534, 4
        %v2537 = vshll.u32 %v2271, 16
        %v2539 = vrot.slane %v2537, 5
        %v2540 = vsel %vm1876, %v2535, %v2539
        %v2542 = vshrl.u32 %v1606, 16
        %v2544 = vrot.slane %v2542, 4
        %v2545 = vshll.u32 %v1606, 16
        %v2547 = vrot.slane %v2545, 5
        %v2548 = vor.u32 %v2544, %v2547
        %v2549 = vrot.slane %v2548, 4
        %v2551 = vshll.u32 %v1607, 16
        %v2553 = vrot.slane %v2551, 5
        %v2554 = vsel %vm1876, %v2549, %v2553
        %v2555 = vshrl.u32 %v1607, 16
        %v2557 = vrot.slane %v2555, 4
        %v2558 = vor.u32 %v2557, %v2553
        %v2559 = vrot.slane %v2558, 4
        %v2561 = vshll.u32 %v2272, 16
        %v2563 = vrot.slane %v2561, 5
        %v2564 = vsel %vm1876, %v2559, %v2563
        %v2566 = vshrl.u32 %v1608, 16
        %v2568 = vrot.slane %v2566, 4
        %v2569 = vshll.u32 %v1608, 16
        %v2571 = vrot.slane %v2569, 5
        %v2572 = vor.u32 %v2568, %v2571
        %v2573 = vrot.slane %v2572, 4
        %v2575 = vshll.u32 %v1609, 16
        %v2577 = vrot.slane %v2575, 5
        %v2578 = vsel %vm1876, %v2573, %v2577
        %v2579 = vshrl.u32 %v1609, 16
        %v2581 = vrot.slane %v2579, 4
        %v2582 = vor.u32 %v2581, %v2577
        %v2583 = vrot.slane %v2582, 4
        %v2585 = vshll.u32 %v2273, 16
        %v2587 = vrot.slane %v2585, 5
        %v2588 = vsel %vm1876, %v2583, %v2587
        %v2590 = vshrl.u32 %v1610, 16
        %v2592 = vrot.slane %v2590, 4
        %v2593 = vshll.u32 %v1610, 16
        %v2595 = vrot.slane %v2593, 5
        %v2596 = vor.u32 %v2592, %v2595
        %v2597 = vrot.slane %v2596, 4
        %v2599 = vshll.u32 %v1611, 16
        %v2601 = vrot.slane %v2599, 5
        %v2602 = vsel %vm1876, %v2597, %v2601
        %v2603 = vshrl.u32 %v1611, 16
        %v2605 = vrot.slane %v2603, 4
        %v2606 = vor.u32 %v2605, %v2601
        %v2607 = vrot.slane %v2606, 4
        %v2609 = vshll.u32 %v2274, 16
        %v2611 = vrot.slane %v2609, 5
        %v2612 = vsel %vm1876, %v2607, %v2611
        %v2614 = vshrl.u32 %v1612, 16
        %v2616 = vrot.slane %v2614, 4
        %v2617 = vshll.u32 %v1612, 16
        %v2619 = vrot.slane %v2617, 5
        %v2620 = vor.u32 %v2616, %v2619
        %v2621 = vrot.slane %v2620, 4
        %v2623 = vshll.u32 %v1613, 16
        %v2625 = vrot.slane %v2623, 5
        %v2626 = vsel %vm1876, %v2621, %v2625
        %v2627 = vshrl.u32 %v1613, 16
        %v2629 = vrot.slane %v2627, 4
        %v2630 = vor.u32 %v2629, %v2625
        %v2631 = vrot.slane %v2630, 4
        %v2633 = vshll.u32 %v2275, 16
        %v2635 = vrot.slane %v2633, 5
        %v2636 = vsel %vm1876, %v2631, %v2635
        %v2638 = vshrl.u32 %v1614, 16
        %v2640 = vrot.slane %v2638, 4
        %v2641 = vshll.u32 %v1614, 16
        %v2643 = vrot.slane %v2641, 5
        %v2644 = vor.u32 %v2640, %v2643
        %v2645 = vrot.slane %v2644, 4
        %v2647 = vshll.u32 %v1615, 16
        %v2649 = vrot.slane %v2647, 5
        %v2650 = vsel %vm1876, %v2645, %v2649
        %v2651 = vshrl.u32 %v1615, 16
        %v2653 = vrot.slane %v2651, 4
        %v2654 = vor.u32 %v2653, %v2649
        %v2655 = vrot.slane %v2654, 4
        %v2657 = vshll.u32 %v2276, 16
        %v2659 = vrot.slane %v2657, 5
        %v2660 = vsel %vm1876, %v2655, %v2659
        %v2661 = vunpack.c.l.b16 %v1890
        %v2662 = vunpack.c.l.b16 %v1900
        %v2663 = vunpack.c.l.b16 %v1914
        %v2664 = vunpack.c.l.b16 %v1924
        %v2665 = vunpack.c.l.b16 %v1938
        %v2666 = vunpack.c.l.b16 %v1948
        %v2667 = vunpack.c.l.b16 %v1962
        %v2668 = vunpack.c.l.b16 %v1972
        %v2669 = vunpack.c.l.b16 %v1986
        %v2670 = vunpack.c.l.b16 %v1996
        %v2671 = vunpack.c.l.b16 %v2010
        %v2672 = vunpack.c.l.b16 %v2020
        %v2673 = vunpack.c.l.b16 %v2034
        %v2674 = vunpack.c.l.b16 %v2044
        %v2675 = vunpack.c.l.b16 %v2058
        %v2676 = vunpack.c.l.b16 %v2068
        %v2677 = vunpack.c.l.b16 %v2082
        %v2678 = vunpack.c.l.b16 %v2092
        %v2679 = vunpack.c.l.b16 %v2106
        %v2680 = vunpack.c.l.b16 %v2116
        %v2681 = vunpack.c.l.b16 %v2130
        %v2682 = vunpack.c.l.b16 %v2140
        %v2683 = vunpack.c.l.b16 %v2154
        %v2684 = vunpack.c.l.b16 %v2164
        %v2685 = vunpack.c.l.b16 %v2178
        %v2686 = vunpack.c.l.b16 %v2188
        %v2687 = vunpack.c.l.b16 %v2202
        %v2688 = vunpack.c.l.b16 %v2212
        %v2689 = vunpack.c.l.b16 %v2226
        %v2690 = vunpack.c.l.b16 %v2236
        %v2691 = vunpack.c.l.b16 %v2250
        %v2692 = vunpack.c.l.b16 %v2260
        %v2693 = vpack.c.b16 %v2662, %v2661
        %v2694 = vpack.c.b16 %v2664, %v2663
        %v2695 = vpack.c.b16 %v2666, %v2665
        %v2696 = vpack.c.b16 %v2668, %v2667
        %v2697 = vpack.c.b16 %v2670, %v2669
        %v2698 = vpack.c.b16 %v2672, %v2671
        %v2699 = vpack.c.b16 %v2674, %v2673
        %v2700 = vpack.c.b16 %v2676, %v2675
        %v2701 = vpack.c.b16 %v2678, %v2677
        %v2702 = vpack.c.b16 %v2680, %v2679
        %v2703 = vpack.c.b16 %v2682, %v2681
        %v2704 = vpack.c.b16 %v2684, %v2683
        %v2705 = vpack.c.b16 %v2686, %v2685
        %v2706 = vpack.c.b16 %v2688, %v2687
        %v2707 = vpack.c.b16 %v2690, %v2689
        %v2708 = vpack.c.b16 %v2692, %v2691
        %v2709 = vunpack.c.l.b16 %v2290
        %v2710 = vunpack.c.l.b16 %v2300
        %v2711 = vunpack.c.l.b16 %v2314
        %v2712 = vunpack.c.l.b16 %v2324
        %v2713 = vunpack.c.l.b16 %v2338
        %v2714 = vunpack.c.l.b16 %v2348
        %v2715 = vunpack.c.l.b16 %v2362
        %v2716 = vunpack.c.l.b16 %v2372
        %v2717 = vunpack.c.l.b16 %v2386
        %v2718 = vunpack.c.l.b16 %v2396
        %v2719 = vunpack.c.l.b16 %v2410
        %v2720 = vunpack.c.l.b16 %v2420
        %v2721 = vunpack.c.l.b16 %v2434
        %v2722 = vunpack.c.l.b16 %v2444
        %v2723 = vunpack.c.l.b16 %v2458
        %v2724 = vunpack.c.l.b16 %v2468
        %v2725 = vunpack.c.l.b16 %v2482
        %v2726 = vunpack.c.l.b16 %v2492
        %v2727 = vunpack.c.l.b16 %v2506
        %v2728 = vunpack.c.l.b16 %v2516
        %v2729 = vunpack.c.l.b16 %v2530
        %v2730 = vunpack.c.l.b16 %v2540
        %v2731 = vunpack.c.l.b16 %v2554
        %v2732 = vunpack.c.l.b16 %v2564
        %v2733 = vunpack.c.l.b16 %v2578
        %v2734 = vunpack.c.l.b16 %v2588
        %v2735 = vunpack.c.l.b16 %v2602
        %v2736 = vunpack.c.l.b16 %v2612
        %v2737 = vunpack.c.l.b16 %v2626
        %v2738 = vunpack.c.l.b16 %v2636
        %v2739 = vunpack.c.l.b16 %v2650
        %v2740 = vunpack.c.l.b16 %v2660
        %v2741 = vpack.c.b16 %v2710, %v2709
        %v2742 = vpack.c.b16 %v2712, %v2711
        %v2743 = vpack.c.b16 %v2714, %v2713
        %v2744 = vpack.c.b16 %v2716, %v2715
        %v2745 = vpack.c.b16 %v2718, %v2717
        %v2746 = vpack.c.b16 %v2720, %v2719
        %v2747 = vpack.c.b16 %v2722, %v2721
        %v2748 = vpack.c.b16 %v2724, %v2723
        %v2749 = vpack.c.b16 %v2726, %v2725
        %v2750 = vpack.c.b16 %v2728, %v2727
        %v2751 = vpack.c.b16 %v2730, %v2729
        %v2752 = vpack.c.b16 %v2732, %v2731
        %v2753 = vpack.c.b16 %v2734, %v2733
        %v2754 = vpack.c.b16 %v2736, %v2735
        %v2755 = vpack.c.b16 %v2738, %v2737
        %v2756 = vpack.c.b16 %v2740, %v2739
        %2757 = vrot.lane.b32.xlu0 %v2741, 4
        %v2758 = vpop.permute.xlu0 %2757
        %2759 = vrot.lane.b32.xlu0 %v2742, 4
        %v2760 = vpop.permute.xlu0 %2759
        %2761 = vrot.lane.b32.xlu0 %v2743, 4
        %v2762 = vpop.permute.xlu0 %2761
        %2763 = vrot.lane.b32.xlu0 %v2744, 4
        %v2764 = vpop.permute.xlu0 %2763
        %2765 = vrot.lane.b32.xlu0 %v2745, 4
        %v2766 = vpop.permute.xlu0 %2765
        %2767 = vrot.lane.b32.xlu0 %v2746, 4
        %v2768 = vpop.permute.xlu0 %2767
        %2769 = vrot.lane.b32.xlu0 %v2747, 4
        %v2770 = vpop.permute.xlu0 %2769
        %2771 = vrot.lane.b32.xlu0 %v2748, 4
        %v2772 = vpop.permute.xlu0 %2771
        %2773 = vrot.lane.b32.xlu0 %v2749, 4
        %v2774 = vpop.permute.xlu0 %2773
        %2775 = vrot.lane.b32.xlu0 %v2750, 4
        %v2776 = vpop.permute.xlu0 %2775
        %2777 = vrot.lane.b32.xlu0 %v2751, 4
        %v2778 = vpop.permute.xlu0 %2777
        %2779 = vrot.lane.b32.xlu0 %v2752, 4
        %v2780 = vpop.permute.xlu0 %2779
        %2781 = vrot.lane.b32.xlu0 %v2753, 4
        %v2782 = vpop.permute.xlu0 %2781
        %2783 = vrot.lane.b32.xlu0 %v2754, 4
        %v2784 = vpop.permute.xlu0 %2783
        %2785 = vrot.lane.b32.xlu0 %v2755, 4
        %v2786 = vpop.permute.xlu0 %2785
        %2787 = vrot.lane.b32.xlu0 %v2756, 4
        %v2788 = vpop.permute.xlu0 %2787
        %v2791 = vsel %vm1808, %v2693, %v2758
        %v2794 = vsel %vm1808, %v2694, %v2760
        %v2797 = vsel %vm1808, %v2695, %v2762
        %v2800 = vsel %vm1808, %v2696, %v2764
        %v2803 = vsel %vm1808, %v2697, %v2766
        %v2806 = vsel %vm1808, %v2698, %v2768
        %v2809 = vsel %vm1808, %v2699, %v2770
        %v2812 = vsel %vm1808, %v2700, %v2772
        %v2815 = vsel %vm1808, %v2701, %v2774
        %v2818 = vsel %vm1808, %v2702, %v2776
        %v2821 = vsel %vm1808, %v2703, %v2778
        %v2824 = vsel %vm1808, %v2704, %v2780
        %v2827 = vsel %vm1808, %v2705, %v2782
        %v2830 = vsel %vm1808, %v2706, %v2784
        %v2833 = vsel %vm1808, %v2707, %v2786
        %v2836 = vsel %vm1808, %v2708, %v2788
        %s2837 = scalar_lea.vmem %s2, 4
        %v2838 = vld [vmem:[%s2837] sm:$0xf]
        %vm2839 = vcmask 64512
        %v2840 = vsel %vm2839, %v2791, 0
        %v2842 = vsel %vm2839, %v2794, 0
        %v2844 = vsel %vm2839, %v2797, 0
        %v2846 = vsel %vm2839, %v2800, 0
        %v2848 = vsel %vm2839, %v2803, 0
        %v2850 = vsel %vm2839, %v2806, 0
        %v2852 = vsel %vm2839, %v2809, 0
        %v2854 = vsel %vm2839, %v2812, 0
        %v2856 = vsel %vm2839, %v2815, 0
        %v2858 = vsel %vm2839, %v2818, 0
        %v2860 = vsel %vm2839, %v2821, 0
        %v2862 = vsel %vm2839, %v2824, 0
        %v2864 = vsel %vm2839, %v2827, 0
        %v2866 = vsel %vm2839, %v2830, 0
        %v2868 = vsel %vm2839, %v2833, 0
        %v2870 = vsel %vm2839, %v2836, 0
        %vm2872 = vcmask 1043456
        %v2874 = vsel %vm2872, %v2838, 0
        %2876 = vmatpush.bf16.msra.mxu0 0
        %2877 = vmatpush.bf16.msra.mxu0 0
        %2878 = vmatpush.bf16.msra.mxu0 0
        %2879 = vmatpush.bf16.msra.mxu0 0
        %2880 = vmatpush.bf16.msra.mxu0 0
        %2881 = vmatpush.bf16.msra.mxu0 0
        %2882 = vmatpush.bf16.msra.mxu0 0
        %2883 = vmatpush.bf16.msra.mxu0 %v2874
        %2884 = vmatmul.bf16.gmra.mxu0 %v2840
        %v2885 = vpop.f32.mrf.mxu0
        %v2886 = vadd.f32 0.0, %v2885
        %v2887 = vpop.f32.mrf.mxu0
        %v2888 = vadd.f32 0.0, %v2887
        %2889 = vmatmul.bf16.gmra.mxu0 %v2842
        %v2890 = vpop.f32.mrf.mxu0
        %v2891 = vadd.f32 0.0, %v2890
        %v2892 = vpop.f32.mrf.mxu0
        %v2893 = vadd.f32 0.0, %v2892
        %2894 = vmatmul.bf16.gmra.mxu0 %v2844
        %v2895 = vpop.f32.mrf.mxu0
        %v2896 = vadd.f32 0.0, %v2895
        %v2897 = vpop.f32.mrf.mxu0
        %v2898 = vadd.f32 0.0, %v2897
        %2899 = vmatmul.bf16.gmra.mxu0 %v2846
        %v2900 = vpop.f32.mrf.mxu0
        %v2901 = vadd.f32 0.0, %v2900
        %v2902 = vpop.f32.mrf.mxu0
        %v2903 = vadd.f32 0.0, %v2902
        %2904 = vmatmul.bf16.gmra.mxu0 %v2848
        %v2905 = vpop.f32.mrf.mxu0
        %v2906 = vadd.f32 0.0, %v2905
        %v2907 = vpop.f32.mrf.mxu0
        %v2908 = vadd.f32 0.0, %v2907
        %2909 = vmatmul.bf16.gmra.mxu0 %v2850
        %v2910 = vpop.f32.mrf.mxu0
        %v2911 = vadd.f32 0.0, %v2910
        %v2912 = vpop.f32.mrf.mxu0
        %v2913 = vadd.f32 0.0, %v2912
        %2914 = vmatmul.bf16.gmra.mxu0 %v2852
        %v2915 = vpop.f32.mrf.mxu0
        %v2916 = vadd.f32 0.0, %v2915
        %v2917 = vpop.f32.mrf.mxu0
        %v2918 = vadd.f32 0.0, %v2917
        %2919 = vmatmul.bf16.gmra.mxu0 %v2854
        %v2920 = vpop.f32.mrf.mxu0
        %v2921 = vadd.f32 0.0, %v2920
        %v2922 = vpop.f32.mrf.mxu0
        %v2923 = vadd.f32 0.0, %v2922
        %2924 = vmatmul.bf16.gmra.mxu0 %v2856
        %v2925 = vpop.f32.mrf.mxu0
        %v2926 = vadd.f32 0.0, %v2925
        %v2927 = vpop.f32.mrf.mxu0
        %v2928 = vadd.f32 0.0, %v2927
        %2929 = vmatmul.bf16.gmra.mxu0 %v2858
        %v2930 = vpop.f32.mrf.mxu0
        %v2931 = vadd.f32 0.0, %v2930
        %v2932 = vpop.f32.mrf.mxu0
        %v2933 = vadd.f32 0.0, %v2932
        %2934 = vmatmul.bf16.gmra.mxu0 %v2860
        %v2935 = vpop.f32.mrf.mxu0
        %v2936 = vadd.f32 0.0, %v2935
        %v2937 = vpop.f32.mrf.mxu0
        %v2938 = vadd.f32 0.0, %v2937
        %2939 = vmatmul.bf16.gmra.mxu0 %v2862
        %v2940 = vpop.f32.mrf.mxu0
        %v2941 = vadd.f32 0.0, %v2940
        %v2942 = vpop.f32.mrf.mxu0
        %v2943 = vadd.f32 0.0, %v2942
        %2944 = vmatmul.bf16.gmra.mxu0 %v2864
        %v2945 = vpop.f32.mrf.mxu0
        %v2946 = vadd.f32 0.0, %v2945
        %v2947 = vpop.f32.mrf.mxu0
        %v2948 = vadd.f32 0.0, %v2947
        %2949 = vmatmul.bf16.gmra.mxu0 %v2866
        %v2950 = vpop.f32.mrf.mxu0
        %v2951 = vadd.f32 0.0, %v2950
        %v2952 = vpop.f32.mrf.mxu0
        %v2953 = vadd.f32 0.0, %v2952
        %2954 = vmatmul.bf16.gmra.mxu0 %v2868
        %v2955 = vpop.f32.mrf.mxu0
        %v2956 = vadd.f32 0.0, %v2955
        %v2957 = vpop.f32.mrf.mxu0
        %v2958 = vadd.f32 0.0, %v2957
        %2959 = vmatmul.bf16.gmra.mxu0 %v2870
        %v2960 = vpop.f32.mrf.mxu0
        %v2961 = vadd.f32 0.0, %v2960
        %v2962 = vpop.f32.mrf.mxu0
        %v2963 = vadd.f32 0.0, %v2962
        %2964 = vdwg.mxu0
        %v2965 = vsel %vm2839, %v1811, 0
        %v2967 = vsel %vm2839, %v1814, 0
        %v2969 = vsel %vm2839, %v1817, 0
        %v2971 = vsel %vm2839, %v1820, 0
        %v2973 = vsel %vm2839, %v1823, 0
        %v2975 = vsel %vm2839, %v1826, 0
        %v2977 = vsel %vm2839, %v1829, 0
        %v2979 = vsel %vm2839, %v1832, 0
        %v2981 = vsel %vm2839, %v1835, 0
        %v2983 = vsel %vm2839, %v1838, 0
        %v2985 = vsel %vm2839, %v1841, 0
        %v2987 = vsel %vm2839, %v1844, 0
        %v2989 = vsel %vm2839, %v1847, 0
        %v2991 = vsel %vm2839, %v1850, 0
        %v2993 = vsel %vm2839, %v1853, 0
        %v2995 = vsel %vm2839, %v1856, 0
        %v2998 = vsel %vm2872, %v1857, 0
        %3000 = vmatpush.bf16.msra.mxu0 0
        %3001 = vmatpush.bf16.msra.mxu0 0
        %3002 = vmatpush.bf16.msra.mxu0 0
        %3003 = vmatpush.bf16.msra.mxu0 0
        %3004 = vmatpush.bf16.msra.mxu0 0
        %3005 = vmatpush.bf16.msra.mxu0 0
        %3006 = vmatpush.bf16.msra.mxu0 0
        %3007 = vmatpush.bf16.msra.mxu0 %v2998
        %3008 = vmatmul.bf16.gmra.mxu0 %v2965
        %v3009 = vpop.f32.mrf.mxu0
        %v3010 = vadd.f32 %v2886, %v3009
        %v3011 = vpop.f32.mrf.mxu0
        %v3012 = vadd.f32 %v2888, %v3011
        %3013 = vmatmul.bf16.gmra.mxu0 %v2967
        %v3014 = vpop.f32.mrf.mxu0
        %v3015 = vadd.f32 %v2891, %v3014
        %v3016 = vpop.f32.mrf.mxu0
        %v3017 = vadd.f32 %v2893, %v3016
        %3018 = vmatmul.bf16.gmra.mxu0 %v2969
        %v3019 = vpop.f32.mrf.mxu0
        %v3020 = vadd.f32 %v2896, %v3019
        %v3021 = vpop.f32.mrf.mxu0
        %v3022 = vadd.f32 %v2898, %v3021
        %3023 = vmatmul.bf16.gmra.mxu0 %v2971
        %v3024 = vpop.f32.mrf.mxu0
        %v3025 = vadd.f32 %v2901, %v3024
        %v3026 = vpop.f32.mrf.mxu0
        %v3027 = vadd.f32 %v2903, %v3026
        %3028 = vmatmul.bf16.gmra.mxu0 %v2973
        %v3029 = vpop.f32.mrf.mxu0
        %v3030 = vadd.f32 %v2906, %v3029
        %v3031 = vpop.f32.mrf.mxu0
        %v3032 = vadd.f32 %v2908, %v3031
        %3033 = vmatmul.bf16.gmra.mxu0 %v2975
        %v3034 = vpop.f32.mrf.mxu0
        %v3035 = vadd.f32 %v2911, %v3034
        %v3036 = vpop.f32.mrf.mxu0
        %v3037 = vadd.f32 %v2913, %v3036
        %3038 = vmatmul.bf16.gmra.mxu0 %v2977
        %v3039 = vpop.f32.mrf.mxu0
        %v3040 = vadd.f32 %v2916, %v3039
        %v3041 = vpop.f32.mrf.mxu0
        %v3042 = vadd.f32 %v2918, %v3041
        %3043 = vmatmul.bf16.gmra.mxu0 %v2979
        %v3044 = vpop.f32.mrf.mxu0
        %v3045 = vadd.f32 %v2921, %v3044
        %v3046 = vpop.f32.mrf.mxu0
        %v3047 = vadd.f32 %v2923, %v3046
        %3048 = vmatmul.bf16.gmra.mxu0 %v2981
        %v3049 = vpop.f32.mrf.mxu0
        %v3050 = vadd.f32 %v2926, %v3049
        %v3051 = vpop.f32.mrf.mxu0
        %v3052 = vadd.f32 %v2928, %v3051
        %3053 = vmatmul.bf16.gmra.mxu0 %v2983
        %v3054 = vpop.f32.mrf.mxu0
        %v3055 = vadd.f32 %v2931, %v3054
        %v3056 = vpop.f32.mrf.mxu0
        %v3057 = vadd.f32 %v2933, %v3056
        %3058 = vmatmul.bf16.gmra.mxu0 %v2985
        %v3059 = vpop.f32.mrf.mxu0
        %v3060 = vadd.f32 %v2936, %v3059
        %v3061 = vpop.f32.mrf.mxu0
        %v3062 = vadd.f32 %v2938, %v3061
        %3063 = vmatmul.bf16.gmra.mxu0 %v2987
        %v3064 = vpop.f32.mrf.mxu0
        %v3065 = vadd.f32 %v2941, %v3064
        %v3066 = vpop.f32.mrf.mxu0
        %v3067 = vadd.f32 %v2943, %v3066
        %3068 = vmatmul.bf16.gmra.mxu0 %v2989
        %v3069 = vpop.f32.mrf.mxu0
        %v3070 = vadd.f32 %v2946, %v3069
        %v3071 = vpop.f32.mrf.mxu0
        %v3072 = vadd.f32 %v2948, %v3071
        %3073 = vmatmul.bf16.gmra.mxu0 %v2991
        %v3074 = vpop.f32.mrf.mxu0
        %v3075 = vadd.f32 %v2951, %v3074
        %v3076 = vpop.f32.mrf.mxu0
        %v3077 = vadd.f32 %v2953, %v3076
        %3078 = vmatmul.bf16.gmra.mxu0 %v2993
        %v3079 = vpop.f32.mrf.mxu0
        %v3080 = vadd.f32 %v2956, %v3079
        %v3081 = vpop.f32.mrf.mxu0
        %v3082 = vadd.f32 %v2958, %v3081
        %3083 = vmatmul.bf16.gmra.mxu0 %v2995
        %v3084 = vpop.f32.mrf.mxu0
        %v3085 = vadd.f32 %v2961, %v3084
        %v3086 = vpop.f32.mrf.mxu0
        %v3087 = vadd.f32 %v2963, %v3086
        %3088 = vdwg.mxu0
        %v3089 = vld [vmem:[#allocation2] sm:$0xe]
        %v3090 = vld [vmem:[#allocation2 + $0xc] sm:$0xe]
        %v3091 = vld [vmem:[#allocation2 + $0x18] sm:$0xe]
        %v3092 = vld [vmem:[#allocation2 + $0x24] sm:$0xe]
        %v3093 = vld [vmem:[#allocation2 + $0x30] sm:$0xe]
        %v3094 = vld [vmem:[#allocation2 + $0x3c] sm:$0xe]
        %v3095 = vld [vmem:[#allocation2 + $0x48] sm:$0xe]
        %v3096 = vld [vmem:[#allocation2 + $0x54] sm:$0xe]
        %v3097 = vld [vmem:[#allocation2 + $0x60] sm:$0xe]
        %v3098 = vld [vmem:[#allocation2 + $0x6c] sm:$0xe]
        %v3099 = vld [vmem:[#allocation2 + $0x78] sm:$0xe]
        %v3100 = vld [vmem:[#allocation2 + $0x84] sm:$0xe]
        %v3101 = vld [vmem:[#allocation2 + $0x90] sm:$0xe]
        %v3102 = vld [vmem:[#allocation2 + $0x9c] sm:$0xe]
        %v3103 = vld [vmem:[#allocation2 + $0xa8] sm:$0xe]
        %v3104 = vld [vmem:[#allocation2 + $0xb4] sm:$0xe]
        %vm3137 = vcmask 1042432
        %vm3138 = vcmask 1046532
        %vm3139 = vmor %vm3137, %vm3138
        %v3140 = vrot.slane %v3089, 5
        %v3141 = vrot.slane %v3140, 4
        %v3142 = vrot.slane %v1553, 5
        %v3143 = vsel %vm3139, %v3141, %v3142
        %v3144 = vrot.slane %v3142, 4
        %v3145 = vrot.slane %v1858, 5
        %v3146 = vsel %vm3139, %v3144, %v3145
        %v3147 = vrot.slane %v3090, 5
        %v3148 = vrot.slane %v3147, 4
        %v3149 = vrot.slane %v1555, 5
        %v3150 = vsel %vm3139, %v3148, %v3149
        %v3151 = vrot.slane %v3149, 4
        %v3152 = vrot.slane %v1859, 5
        %v3153 = vsel %vm3139, %v3151, %v3152
        %v3154 = vrot.slane %v3091, 5
        %v3155 = vrot.slane %v3154, 4
        %v3156 = vrot.slane %v1557, 5
        %v3157 = vsel %vm3139, %v3155, %v3156
        %v3158 = vrot.slane %v3156, 4
        %v3159 = vrot.slane %v1860, 5
        %v3160 = vsel %vm3139, %v3158, %v3159
        %v3161 = vrot.slane %v3092, 5
        %v3162 = vrot.slane %v3161, 4
        %v3163 = vrot.slane %v1559, 5
        %v3164 = vsel %vm3139, %v3162, %v3163
        %v3165 = vrot.slane %v3163, 4
        %v3166 = vrot.slane %v1861, 5
        %v3167 = vsel %vm3139, %v3165, %v3166
        %v3168 = vrot.slane %v3093, 5
        %v3169 = vrot.slane %v3168, 4
        %v3170 = vrot.slane %v1561, 5
        %v3171 = vsel %vm3139, %v3169, %v3170
        %v3172 = vrot.slane %v3170, 4
        %v3173 = vrot.slane %v1862, 5
        %v3174 = vsel %vm3139, %v3172, %v3173
        %v3175 = vrot.slane %v3094, 5
        %v3176 = vrot.slane %v3175, 4
        %v3177 = vrot.slane %v1563, 5
        %v3178 = vsel %vm3139, %v3176, %v3177
        %v3179 = vrot.slane %v3177, 4
        %v3180 = vrot.slane %v1863, 5
        %v3181 = vsel %vm3139, %v3179, %v3180
        %v3182 = vrot.slane %v3095, 5
        %v3183 = vrot.slane %v3182, 4
        %v3184 = vrot.slane %v1565, 5
        %v3185 = vsel %vm3139, %v3183, %v3184
        %v3186 = vrot.slane %v3184, 4
        %v3187 = vrot.slane %v1864, 5
        %v3188 = vsel %vm3139, %v3186, %v3187
        %v3189 = vrot.slane %v3096, 5
        %v3190 = vrot.slane %v3189, 4
        %v3191 = vrot.slane %v1567, 5
        %v3192 = vsel %vm3139, %v3190, %v3191
        %v3193 = vrot.slane %v3191, 4
        %v3194 = vrot.slane %v1865, 5
        %v3195 = vsel %vm3139, %v3193, %v3194
        %v3196 = vrot.slane %v3097, 5
        %v3197 = vrot.slane %v3196, 4
        %v3198 = vrot.slane %v1569, 5
        %v3199 = vsel %vm3139, %v3197, %v3198
        %v3200 = vrot.slane %v3198, 4
        %v3201 = vrot.slane %v1866, 5
        %v3202 = vsel %vm3139, %v3200, %v3201
        %v3203 = vrot.slane %v3098, 5
        %v3204 = vrot.slane %v3203, 4
        %v3205 = vrot.slane %v1571, 5
        %v3206 = vsel %vm3139, %v3204, %v3205
        %v3207 = vrot.slane %v3205, 4
        %v3208 = vrot.slane %v1867, 5
        %v3209 = vsel %vm3139, %v3207, %v3208
        %v3210 = vrot.slane %v3099, 5
        %v3211 = vrot.slane %v3210, 4
        %v3212 = vrot.slane %v1573, 5
        %v3213 = vsel %vm3139, %v3211, %v3212
        %v3214 = vrot.slane %v3212, 4
        %v3215 = vrot.slane %v1868, 5
        %v3216 = vsel %vm3139, %v3214, %v3215
        %v3217 = vrot.slane %v3100, 5
        %v3218 = vrot.slane %v3217, 4
        %v3219 = vrot.slane %v1575, 5
        %v3220 = vsel %vm3139, %v3218, %v3219
        %v3221 = vrot.slane %v3219, 4
        %v3222 = vrot.slane %v1869, 5
        %v3223 = vsel %vm3139, %v3221, %v3222
        %v3224 = vrot.slane %v3101, 5
        %v3225 = vrot.slane %v3224, 4
        %v3226 = vrot.slane %v1577, 5
        %v3227 = vsel %vm3139, %v3225, %v3226
        %v3228 = vrot.slane %v3226, 4
        %v3229 = vrot.slane %v1870, 5
        %v3230 = vsel %vm3139, %v3228, %v3229
        %v3231 = vrot.slane %v3102, 5
        %v3232 = vrot.slane %v3231, 4
        %v3233 = vrot.slane %v1579, 5
        %v3234 = vsel %vm3139, %v3232, %v3233
        %v3235 = vrot.slane %v3233, 4
        %v3236 = vrot.slane %v1871, 5
        %v3237 = vsel %vm3139, %v3235, %v3236
        %v3238 = vrot.slane %v3103, 5
        %v3239 = vrot.slane %v3238, 4
        %v3240 = vrot.slane %v1581, 5
        %v3241 = vsel %vm3139, %v3239, %v3240
        %v3242 = vrot.slane %v3240, 4
        %v3243 = vrot.slane %v1872, 5
        %v3244 = vsel %vm3139, %v3242, %v3243
        %v3245 = vrot.slane %v3104, 5
        %v3246 = vrot.slane %v3245, 4
        %v3247 = vrot.slane %v1583, 5
        %v3248 = vsel %vm3139, %v3246, %v3247
        %v3249 = vrot.slane %v3247, 4
        %v3250 = vrot.slane %v1873, 5
        %v3251 = vsel %vm3139, %v3249, %v3250
        %v3252 = vld [vmem:[#allocation3] sm:$0xe]
        %v3253 = vld [vmem:[#allocation3 + $0xc] sm:$0xe]
        %v3254 = vld [vmem:[#allocation3 + $0x18] sm:$0xe]
        %v3255 = vld [vmem:[#allocation3 + $0x24] sm:$0xe]
        %v3256 = vld [vmem:[#allocation3 + $0x30] sm:$0xe]
        %v3257 = vld [vmem:[#allocation3 + $0x3c] sm:$0xe]
        %v3258 = vld [vmem:[#allocation3 + $0x48] sm:$0xe]
        %v3259 = vld [vmem:[#allocation3 + $0x54] sm:$0xe]
        %v3260 = vld [vmem:[#allocation3 + $0x60] sm:$0xe]
        %v3261 = vld [vmem:[#allocation3 + $0x6c] sm:$0xe]
        %v3262 = vld [vmem:[#allocation3 + $0x78] sm:$0xe]
        %v3263 = vld [vmem:[#allocation3 + $0x84] sm:$0xe]
        %v3264 = vld [vmem:[#allocation3 + $0x90] sm:$0xe]
        %v3265 = vld [vmem:[#allocation3 + $0x9c] sm:$0xe]
        %v3266 = vld [vmem:[#allocation3 + $0xa8] sm:$0xe]
        %v3267 = vld [vmem:[#allocation3 + $0xb4] sm:$0xe]
        %v3300 = vrot.slane %v3252, 5
        %v3301 = vrot.slane %v3300, 4
        %v3302 = vrot.slane %v1585, 5
        %v3303 = vsel %vm3139, %v3301, %v3302
        %v3304 = vrot.slane %v3302, 4
        %v3305 = vrot.slane %v2261, 5
        %v3306 = vsel %vm3139, %v3304, %v3305
        %v3307 = vrot.slane %v3253, 5
        %v3308 = vrot.slane %v3307, 4
        %v3309 = vrot.slane %v1587, 5
        %v3310 = vsel %vm3139, %v3308, %v3309
        %v3311 = vrot.slane %v3309, 4
        %v3312 = vrot.slane %v2262, 5
        %v3313 = vsel %vm3139, %v3311, %v3312
        %v3314 = vrot.slane %v3254, 5
        %v3315 = vrot.slane %v3314, 4
        %v3316 = vrot.slane %v1589, 5
        %v3317 = vsel %vm3139, %v3315, %v3316
        %v3318 = vrot.slane %v3316, 4
        %v3319 = vrot.slane %v2263, 5
        %v3320 = vsel %vm3139, %v3318, %v3319
        %v3321 = vrot.slane %v3255, 5
        %v3322 = vrot.slane %v3321, 4
        %v3323 = vrot.slane %v1591, 5
        %v3324 = vsel %vm3139, %v3322, %v3323
        %v3325 = vrot.slane %v3323, 4
        %v3326 = vrot.slane %v2264, 5
        %v3327 = vsel %vm3139, %v3325, %v3326
        %v3328 = vrot.slane %v3256, 5
        %v3329 = vrot.slane %v3328, 4
        %v3330 = vrot.slane %v1593, 5
        %v3331 = vsel %vm3139, %v3329, %v3330
        %v3332 = vrot.slane %v3330, 4
        %v3333 = vrot.slane %v2265, 5
        %v3334 = vsel %vm3139, %v3332, %v3333
        %v3335 = vrot.slane %v3257, 5
        %v3336 = vrot.slane %v3335, 4
        %v3337 = vrot.slane %v1595, 5
        %v3338 = vsel %vm3139, %v3336, %v3337
        %v3339 = vrot.slane %v3337, 4
        %v3340 = vrot.slane %v2266, 5
        %v3341 = vsel %vm3139, %v3339, %v3340
        %v3342 = vrot.slane %v3258, 5
        %v3343 = vrot.slane %v3342, 4
        %v3344 = vrot.slane %v1597, 5
        %v3345 = vsel %vm3139, %v3343, %v3344
        %v3346 = vrot.slane %v3344, 4
        %v3347 = vrot.slane %v2267, 5
        %v3348 = vsel %vm3139, %v3346, %v3347
        %v3349 = vrot.slane %v3259, 5
        %v3350 = vrot.slane %v3349, 4
        %v3351 = vrot.slane %v1599, 5
        %v3352 = vsel %vm3139, %v3350, %v3351
        %v3353 = vrot.slane %v3351, 4
        %v3354 = vrot.slane %v2268, 5
        %v3355 = vsel %vm3139, %v3353, %v3354
        %v3356 = vrot.slane %v3260, 5
        %v3357 = vrot.slane %v3356, 4
        %v3358 = vrot.slane %v1601, 5
        %v3359 = vsel %vm3139, %v3357, %v3358
        %v3360 = vrot.slane %v3358, 4
        %v3361 = vrot.slane %v2269, 5
        %v3362 = vsel %vm3139, %v3360, %v3361
        %v3363 = vrot.slane %v3261, 5
        %v3364 = vrot.slane %v3363, 4
        %v3365 = vrot.slane %v1603, 5
        %v3366 = vsel %vm3139, %v3364, %v3365
        %v3367 = vrot.slane %v3365, 4
        %v3368 = vrot.slane %v2270, 5
        %v3369 = vsel %vm3139, %v3367, %v3368
        %v3370 = vrot.slane %v3262, 5
        %v3371 = vrot.slane %v3370, 4
        %v3372 = vrot.slane %v1605, 5
        %v3373 = vsel %vm3139, %v3371, %v3372
        %v3374 = vrot.slane %v3372, 4
        %v3375 = vrot.slane %v2271, 5
        %v3376 = vsel %vm3139, %v3374, %v3375
        %v3377 = vrot.slane %v3263, 5
        %v3378 = vrot.slane %v3377, 4
        %v3379 = vrot.slane %v1607, 5
        %v3380 = vsel %vm3139, %v3378, %v3379
        %v3381 = vrot.slane %v3379, 4
        %v3382 = vrot.slane %v2272, 5
        %v3383 = vsel %vm3139, %v3381, %v3382
        %v3384 = vrot.slane %v3264, 5
        %v3385 = vrot.slane %v3384, 4
        %v3386 = vrot.slane %v1609, 5
        %v3387 = vsel %vm3139, %v3385, %v3386
        %v3388 = vrot.slane %v3386, 4
        %v3389 = vrot.slane %v2273, 5
        %v3390 = vsel %vm3139, %v3388, %v3389
        %v3391 = vrot.slane %v3265, 5
        %v3392 = vrot.slane %v3391, 4
        %v3393 = vrot.slane %v1611, 5
        %v3394 = vsel %vm3139, %v3392, %v3393
        %v3395 = vrot.slane %v3393, 4
        %v3396 = vrot.slane %v2274, 5
        %v3397 = vsel %vm3139, %v3395, %v3396
        %v3398 = vrot.slane %v3266, 5
        %v3399 = vrot.slane %v3398, 4
        %v3400 = vrot.slane %v1613, 5
        %v3401 = vsel %vm3139, %v3399, %v3400
        %v3402 = vrot.slane %v3400, 4
        %v3403 = vrot.slane %v2275, 5
        %v3404 = vsel %vm3139, %v3402, %v3403
        %v3405 = vrot.slane %v3267, 5
        %v3406 = vrot.slane %v3405, 4
        %v3407 = vrot.slane %v1615, 5
        %v3408 = vsel %vm3139, %v3406, %v3407
        %v3409 = vrot.slane %v3407, 4
        %v3410 = vrot.slane %v2276, 5
        %v3411 = vsel %vm3139, %v3409, %v3410
        %v3412 = vunpack.c.l.b16 %v3143
        %v3413 = vunpack.c.l.b16 %v3146
        %v3414 = vunpack.c.l.b16 %v3150
        %v3415 = vunpack.c.l.b16 %v3153
        %v3416 = vunpack.c.l.b16 %v3157
        %v3417 = vunpack.c.l.b16 %v3160
        %v3418 = vunpack.c.l.b16 %v3164
        %v3419 = vunpack.c.l.b16 %v3167
        %v3420 = vunpack.c.l.b16 %v3171
        %v3421 = vunpack.c.l.b16 %v3174
        %v3422 = vunpack.c.l.b16 %v3178
        %v3423 = vunpack.c.l.b16 %v3181
        %v3424 = vunpack.c.l.b16 %v3185
        %v3425 = vunpack.c.l.b16 %v3188
        %v3426 = vunpack.c.l.b16 %v3192
        %v3427 = vunpack.c.l.b16 %v3195
        %v3428 = vunpack.c.l.b16 %v3199
        %v3429 = vunpack.c.l.b16 %v3202
        %v3430 = vunpack.c.l.b16 %v3206
        %v3431 = vunpack.c.l.b16 %v3209
        %v3432 = vunpack.c.l.b16 %v3213
        %v3433 = vunpack.c.l.b16 %v3216
        %v3434 = vunpack.c.l.b16 %v3220
        %v3435 = vunpack.c.l.b16 %v3223
        %v3436 = vunpack.c.l.b16 %v3227
        %v3437 = vunpack.c.l.b16 %v3230
        %v3438 = vunpack.c.l.b16 %v3234
        %v3439 = vunpack.c.l.b16 %v3237
        %v3440 = vunpack.c.l.b16 %v3241
        %v3441 = vunpack.c.l.b16 %v3244
        %v3442 = vunpack.c.l.b16 %v3248
        %v3443 = vunpack.c.l.b16 %v3251
        %v3444 = vpack.c.b16 %v3413, %v3412
        %v3445 = vpack.c.b16 %v3415, %v3414
        %v3446 = vpack.c.b16 %v3417, %v3416
        %v3447 = vpack.c.b16 %v3419, %v3418
        %v3448 = vpack.c.b16 %v3421, %v3420
        %v3449 = vpack.c.b16 %v3423, %v3422
        %v3450 = vpack.c.b16 %v3425, %v3424
        %v3451 = vpack.c.b16 %v3427, %v3426
        %v3452 = vpack.c.b16 %v3429, %v3428
        %v3453 = vpack.c.b16 %v3431, %v3430
        %v3454 = vpack.c.b16 %v3433, %v3432
        %v3455 = vpack.c.b16 %v3435, %v3434
        %v3456 = vpack.c.b16 %v3437, %v3436
        %v3457 = vpack.c.b16 %v3439, %v3438
        %v3458 = vpack.c.b16 %v3441, %v3440
        %v3459 = vpack.c.b16 %v3443, %v3442
        %v3460 = vunpack.c.l.b16 %v3303
        %v3461 = vunpack.c.l.b16 %v3306
        %v3462 = vunpack.c.l.b16 %v3310
        %v3463 = vunpack.c.l.b16 %v3313
        %v3464 = vunpack.c.l.b16 %v3317
        %v3465 = vunpack.c.l.b16 %v3320
        %v3466 = vunpack.c.l.b16 %v3324
        %v3467 = vunpack.c.l.b16 %v3327
        %v3468 = vunpack.c.l.b16 %v3331
        %v3469 = vunpack.c.l.b16 %v3334
        %v3470 = vunpack.c.l.b16 %v3338
        %v3471 = vunpack.c.l.b16 %v3341
        %v3472 = vunpack.c.l.b16 %v3345
        %v3473 = vunpack.c.l.b16 %v3348
        %v3474 = vunpack.c.l.b16 %v3352
        %v3475 = vunpack.c.l.b16 %v3355
        %v3476 = vunpack.c.l.b16 %v3359
        %v3477 = vunpack.c.l.b16 %v3362
        %v3478 = vunpack.c.l.b16 %v3366
        %v3479 = vunpack.c.l.b16 %v3369
        %v3480 = vunpack.c.l.b16 %v3373
        %v3481 = vunpack.c.l.b16 %v3376
        %v3482 = vunpack.c.l.b16 %v3380
        %v3483 = vunpack.c.l.b16 %v3383
        %v3484 = vunpack.c.l.b16 %v3387
        %v3485 = vunpack.c.l.b16 %v3390
        %v3486 = vunpack.c.l.b16 %v3394
        %v3487 = vunpack.c.l.b16 %v3397
        %v3488 = vunpack.c.l.b16 %v3401
        %v3489 = vunpack.c.l.b16 %v3404
        %v3490 = vunpack.c.l.b16 %v3408
        %v3491 = vunpack.c.l.b16 %v3411
        %v3492 = vpack.c.b16 %v3461, %v3460
        %v3493 = vpack.c.b16 %v3463, %v3462
        %v3494 = vpack.c.b16 %v3465, %v3464
        %v3495 = vpack.c.b16 %v3467, %v3466
        %v3496 = vpack.c.b16 %v3469, %v3468
        %v3497 = vpack.c.b16 %v3471, %v3470
        %v3498 = vpack.c.b16 %v3473, %v3472
        %v3499 = vpack.c.b16 %v3475, %v3474
        %v3500 = vpack.c.b16 %v3477, %v3476
        %v3501 = vpack.c.b16 %v3479, %v3478
        %v3502 = vpack.c.b16 %v3481, %v3480
        %v3503 = vpack.c.b16 %v3483, %v3482
        %v3504 = vpack.c.b16 %v3485, %v3484
        %v3505 = vpack.c.b16 %v3487, %v3486
        %v3506 = vpack.c.b16 %v3489, %v3488
        %v3507 = vpack.c.b16 %v3491, %v3490
        %3508 = vrot.lane.b32.xlu0 %v3492, 4
        %v3509 = vpop.permute.xlu0 %3508
        %3510 = vrot.lane.b32.xlu0 %v3493, 4
        %v3511 = vpop.permute.xlu0 %3510
        %3512 = vrot.lane.b32.xlu0 %v3494, 4
        %v3513 = vpop.permute.xlu0 %3512
        %3514 = vrot.lane.b32.xlu0 %v3495, 4
        %v3515 = vpop.permute.xlu0 %3514
        %3516 = vrot.lane.b32.xlu0 %v3496, 4
        %v3517 = vpop.permute.xlu0 %3516
        %3518 = vrot.lane.b32.xlu0 %v3497, 4
        %v3519 = vpop.permute.xlu0 %3518
        %3520 = vrot.lane.b32.xlu0 %v3498, 4
        %v3521 = vpop.permute.xlu0 %3520
        %3522 = vrot.lane.b32.xlu0 %v3499, 4
        %v3523 = vpop.permute.xlu0 %3522
        %3524 = vrot.lane.b32.xlu0 %v3500, 4
        %v3525 = vpop.permute.xlu0 %3524
        %3526 = vrot.lane.b32.xlu0 %v3501, 4
        %v3527 = vpop.permute.xlu0 %3526
        %3528 = vrot.lane.b32.xlu0 %v3502, 4
        %v3529 = vpop.permute.xlu0 %3528
        %3530 = vrot.lane.b32.xlu0 %v3503, 4
        %v3531 = vpop.permute.xlu0 %3530
        %3532 = vrot.lane.b32.xlu0 %v3504, 4
        %v3533 = vpop.permute.xlu0 %3532
        %3534 = vrot.lane.b32.xlu0 %v3505, 4
        %v3535 = vpop.permute.xlu0 %3534
        %3536 = vrot.lane.b32.xlu0 %v3506, 4
        %v3537 = vpop.permute.xlu0 %3536
        %3538 = vrot.lane.b32.xlu0 %v3507, 4
        %v3539 = vpop.permute.xlu0 %3538
        %v3542 = vsel %vm1808, %v3444, %v3509
        %v3545 = vsel %vm1808, %v3445, %v3511
        %v3548 = vsel %vm1808, %v3446, %v3513
        %v3551 = vsel %vm1808, %v3447, %v3515
        %v3554 = vsel %vm1808, %v3448, %v3517
        %v3557 = vsel %vm1808, %v3449, %v3519
        %v3560 = vsel %vm1808, %v3450, %v3521
        %v3563 = vsel %vm1808, %v3451, %v3523
        %v3566 = vsel %vm1808, %v3452, %v3525
        %v3569 = vsel %vm1808, %v3453, %v3527
        %v3572 = vsel %vm1808, %v3454, %v3529
        %v3575 = vsel %vm1808, %v3455, %v3531
        %v3578 = vsel %vm1808, %v3456, %v3533
        %v3581 = vsel %vm1808, %v3457, %v3535
        %v3584 = vsel %vm1808, %v3458, %v3537
        %v3587 = vsel %vm1808, %v3459, %v3539
        %s3588 = scalar_lea.vmem %s2, 8
        %v3589 = vld [vmem:[%s3588] sm:$0xf]
        %v3590 = vsel %vm2839, %v3542, 0
        %v3592 = vsel %vm2839, %v3545, 0
        %v3594 = vsel %vm2839, %v3548, 0
        %v3596 = vsel %vm2839, %v3551, 0
        %v3598 = vsel %vm2839, %v3554, 0
        %v3600 = vsel %vm2839, %v3557, 0
        %v3602 = vsel %vm2839, %v3560, 0
        %v3604 = vsel %vm2839, %v3563, 0
        %v3606 = vsel %vm2839, %v3566, 0
        %v3608 = vsel %vm2839, %v3569, 0
        %v3610 = vsel %vm2839, %v3572, 0
        %v3612 = vsel %vm2839, %v3575, 0
        %v3614 = vsel %vm2839, %v3578, 0
        %v3616 = vsel %vm2839, %v3581, 0
        %v3618 = vsel %vm2839, %v3584, 0
        %v3620 = vsel %vm2839, %v3587, 0
        %v3623 = vsel %vm2872, %v3589, 0
        %3625 = vmatpush.bf16.msra.mxu0 0
        %3626 = vmatpush.bf16.msra.mxu0 0
        %3627 = vmatpush.bf16.msra.mxu0 0
        %3628 = vmatpush.bf16.msra.mxu0 0
        %3629 = vmatpush.bf16.msra.mxu0 0
        %3630 = vmatpush.bf16.msra.mxu0 0
        %3631 = vmatpush.bf16.msra.mxu0 0
        %3632 = vmatpush.bf16.msra.mxu0 %v3623
        %3633 = vmatmul.bf16.gmra.mxu0 %v3590
        %v3634 = vpop.f32.mrf.mxu0
        %v3635 = vadd.f32 0.0, %v3634
        %v3636 = vpop.f32.mrf.mxu0
        %v3637 = vadd.f32 0.0, %v3636
        %3638 = vmatmul.bf16.gmra.mxu0 %v3592
        %v3639 = vpop.f32.mrf.mxu0
        %v3640 = vadd.f32 0.0, %v3639
        %v3641 = vpop.f32.mrf.mxu0
        %v3642 = vadd.f32 0.0, %v3641
        %3643 = vmatmul.bf16.gmra.mxu0 %v3594
        %v3644 = vpop.f32.mrf.mxu0
        %v3645 = vadd.f32 0.0, %v3644
        %v3646 = vpop.f32.mrf.mxu0
        %v3647 = vadd.f32 0.0, %v3646
        %3648 = vmatmul.bf16.gmra.mxu0 %v3596
        %v3649 = vpop.f32.mrf.mxu0
        %v3650 = vadd.f32 0.0, %v3649
        %v3651 = vpop.f32.mrf.mxu0
        %v3652 = vadd.f32 0.0, %v3651
        %3653 = vmatmul.bf16.gmra.mxu0 %v3598
        %v3654 = vpop.f32.mrf.mxu0
        %v3655 = vadd.f32 0.0, %v3654
        %v3656 = vpop.f32.mrf.mxu0
        %v3657 = vadd.f32 0.0, %v3656
        %3658 = vmatmul.bf16.gmra.mxu0 %v3600
        %v3659 = vpop.f32.mrf.mxu0
        %v3660 = vadd.f32 0.0, %v3659
        %v3661 = vpop.f32.mrf.mxu0
        %v3662 = vadd.f32 0.0, %v3661
        %3663 = vmatmul.bf16.gmra.mxu0 %v3602
        %v3664 = vpop.f32.mrf.mxu0
        %v3665 = vadd.f32 0.0, %v3664
        %v3666 = vpop.f32.mrf.mxu0
        %v3667 = vadd.f32 0.0, %v3666
        %3668 = vmatmul.bf16.gmra.mxu0 %v3604
        %v3669 = vpop.f32.mrf.mxu0
        %v3670 = vadd.f32 0.0, %v3669
        %v3671 = vpop.f32.mrf.mxu0
        %v3672 = vadd.f32 0.0, %v3671
        %3673 = vmatmul.bf16.gmra.mxu0 %v3606
        %v3674 = vpop.f32.mrf.mxu0
        %v3675 = vadd.f32 0.0, %v3674
        %v3676 = vpop.f32.mrf.mxu0
        %v3677 = vadd.f32 0.0, %v3676
        %3678 = vmatmul.bf16.gmra.mxu0 %v3608
        %v3679 = vpop.f32.mrf.mxu0
        %v3680 = vadd.f32 0.0, %v3679
        %v3681 = vpop.f32.mrf.mxu0
        %v3682 = vadd.f32 0.0, %v3681
        %3683 = vmatmul.bf16.gmra.mxu0 %v3610
        %v3684 = vpop.f32.mrf.mxu0
        %v3685 = vadd.f32 0.0, %v3684
        %v3686 = vpop.f32.mrf.mxu0
        %v3687 = vadd.f32 0.0, %v3686
        %3688 = vmatmul.bf16.gmra.mxu0 %v3612
        %v3689 = vpop.f32.mrf.mxu0
        %v3690 = vadd.f32 0.0, %v3689
        %v3691 = vpop.f32.mrf.mxu0
        %v3692 = vadd.f32 0.0, %v3691
        %3693 = vmatmul.bf16.gmra.mxu0 %v3614
        %v3694 = vpop.f32.mrf.mxu0
        %v3695 = vadd.f32 0.0, %v3694
        %v3696 = vpop.f32.mrf.mxu0
        %v3697 = vadd.f32 0.0, %v3696
        %3698 = vmatmul.bf16.gmra.mxu0 %v3616
        %v3699 = vpop.f32.mrf.mxu0
        %v3700 = vadd.f32 0.0, %v3699
        %v3701 = vpop.f32.mrf.mxu0
        %v3702 = vadd.f32 0.0, %v3701
        %3703 = vmatmul.bf16.gmra.mxu0 %v3618
        %v3704 = vpop.f32.mrf.mxu0
        %v3705 = vadd.f32 0.0, %v3704
        %v3706 = vpop.f32.mrf.mxu0
        %v3707 = vadd.f32 0.0, %v3706
        %3708 = vmatmul.bf16.gmra.mxu0 %v3620
        %v3709 = vpop.f32.mrf.mxu0
        %v3710 = vadd.f32 0.0, %v3709
        %v3711 = vpop.f32.mrf.mxu0
        %v3712 = vadd.f32 0.0, %v3711
        %3713 = vdwg.mxu0
        %v3714 = vadd.f32 %v3010, %v3635
        %v3715 = vadd.f32 %v3012, %v3637
        %v3716 = vadd.f32 %v3015, %v3640
        %v3717 = vadd.f32 %v3017, %v3642
        %v3718 = vadd.f32 %v3020, %v3645
        %v3719 = vadd.f32 %v3022, %v3647
        %v3720 = vadd.f32 %v3025, %v3650
        %v3721 = vadd.f32 %v3027, %v3652
        %v3722 = vadd.f32 %v3030, %v3655
        %v3723 = vadd.f32 %v3032, %v3657
        %v3724 = vadd.f32 %v3035, %v3660
        %v3725 = vadd.f32 %v3037, %v3662
        %v3726 = vadd.f32 %v3040, %v3665
        %v3727 = vadd.f32 %v3042, %v3667
        %v3728 = vadd.f32 %v3045, %v3670
        %v3729 = vadd.f32 %v3047, %v3672
        %v3730 = vadd.f32 %v3050, %v3675
        %v3731 = vadd.f32 %v3052, %v3677
        %v3732 = vadd.f32 %v3055, %v3680
        %v3733 = vadd.f32 %v3057, %v3682
        %v3734 = vadd.f32 %v3060, %v3685
        %v3735 = vadd.f32 %v3062, %v3687
        %v3736 = vadd.f32 %v3065, %v3690
        %v3737 = vadd.f32 %v3067, %v3692
        %v3738 = vadd.f32 %v3070, %v3695
        %v3739 = vadd.f32 %v3072, %v3697
        %v3740 = vadd.f32 %v3075, %v3700
        %v3741 = vadd.f32 %v3077, %v3702
        %v3742 = vadd.f32 %v3080, %v3705
        %v3743 = vadd.f32 %v3082, %v3707
        %v3744 = vadd.f32 %v3085, %v3710
        %v3745 = vadd.f32 %v3087, %v3712
        %v3746 = vld [vmem:[%s853] sm:$0xf]
        %v3747 = vld [vmem:[%s853 + $0x4] sm:$0xf]
        %v3748 = vld [vmem:[%s853 + $0xc] sm:$0xf]
        %v3749 = vld [vmem:[%s853 + $0x10] sm:$0xf]
        %v3750 = vld [vmem:[%s853 + $0x18] sm:$0xf]
        %v3751 = vld [vmem:[%s853 + $0x1c] sm:$0xf]
        %v3752 = vld [vmem:[%s853 + $0x24] sm:$0xf]
        %v3753 = vld [vmem:[%s853 + $0x28] sm:$0xf]
        %v3754 = vld [vmem:[%s853 + $0x30] sm:$0xf]
        %v3755 = vld [vmem:[%s853 + $0x34] sm:$0xf]
        %v3756 = vld [vmem:[%s853 + $0x3c] sm:$0xf]
        %v3757 = vld [vmem:[%s853 + $0x40] sm:$0xf]
        %v3758 = vld [vmem:[%s853 + $0x48] sm:$0xf]
        %v3759 = vld [vmem:[%s853 + $0x4c] sm:$0xf]
        %v3760 = vld [vmem:[%s853 + $0x54] sm:$0xf]
        %v3761 = vld [vmem:[%s853 + $0x58] sm:$0xf]
        %v3762 = vld [vmem:[%s853 + $0x60] sm:$0xf]
        %v3763 = vld [vmem:[%s853 + $0x64] sm:$0xf]
        %v3764 = vld [vmem:[%s853 + $0x6c] sm:$0xf]
        %v3765 = vld [vmem:[%s853 + $0x70] sm:$0xf]
        %v3766 = vld [vmem:[%s853 + $0x78] sm:$0xf]
        %v3767 = vld [vmem:[%s853 + $0x7c] sm:$0xf]
        %v3768 = vld [vmem:[%s853 + $0x84] sm:$0xf]
        %v3769 = vld [vmem:[%s853 + $0x88] sm:$0xf]
        %v3770 = vld [vmem:[%s853 + $0x90] sm:$0xf]
        %v3771 = vld [vmem:[%s853 + $0x94] sm:$0xf]
        %v3772 = vld [vmem:[%s853 + $0x9c] sm:$0xf]
        %v3773 = vld [vmem:[%s853 + $0xa0] sm:$0xf]
        %v3774 = vld [vmem:[%s853 + $0xa8] sm:$0xf]
        %v3775 = vld [vmem:[%s853 + $0xac] sm:$0xf]
        %v3776 = vld [vmem:[%s853 + $0xb4] sm:$0xf]
        %v3777 = vld [vmem:[%s853 + $0xb8] sm:$0xf]
        %v3778 = vld [vmem:[%s1022] sm:$0xf]
        %v3779 = vld [vmem:[%s1022 + $0x4] sm:$0xf]
        %v3780 = vld [vmem:[%s1022 + $0xc] sm:$0xf]
        %v3781 = vld [vmem:[%s1022 + $0x10] sm:$0xf]
        %v3782 = vld [vmem:[%s1022 + $0x18] sm:$0xf]
        %v3783 = vld [vmem:[%s1022 + $0x1c] sm:$0xf]
        %v3784 = vld [vmem:[%s1022 + $0x24] sm:$0xf]
        %v3785 = vld [vmem:[%s1022 + $0x28] sm:$0xf]
        %v3786 = vld [vmem:[%s1022 + $0x30] sm:$0xf]
        %v3787 = vld [vmem:[%s1022 + $0x34] sm:$0xf]
        %v3788 = vld [vmem:[%s1022 + $0x3c] sm:$0xf]
        %v3789 = vld [vmem:[%s1022 + $0x40] sm:$0xf]
        %v3790 = vld [vmem:[%s1022 + $0x48] sm:$0xf]
        %v3791 = vld [vmem:[%s1022 + $0x4c] sm:$0xf]
        %v3792 = vld [vmem:[%s1022 + $0x54] sm:$0xf]
        %v3793 = vld [vmem:[%s1022 + $0x58] sm:$0xf]
        %v3794 = vld [vmem:[%s1022 + $0x60] sm:$0xf]
        %v3795 = vld [vmem:[%s1022 + $0x64] sm:$0xf]
        %v3796 = vld [vmem:[%s1022 + $0x6c] sm:$0xf]
        %v3797 = vld [vmem:[%s1022 + $0x70] sm:$0xf]
        %v3798 = vld [vmem:[%s1022 + $0x78] sm:$0xf]
        %v3799 = vld [vmem:[%s1022 + $0x7c] sm:$0xf]
        %v3800 = vld [vmem:[%s1022 + $0x84] sm:$0xf]
        %v3801 = vld [vmem:[%s1022 + $0x88] sm:$0xf]
        %v3802 = vld [vmem:[%s1022 + $0x90] sm:$0xf]
        %v3803 = vld [vmem:[%s1022 + $0x94] sm:$0xf]
        %v3804 = vld [vmem:[%s1022 + $0x9c] sm:$0xf]
        %v3805 = vld [vmem:[%s1022 + $0xa0] sm:$0xf]
        %v3806 = vld [vmem:[%s1022 + $0xa8] sm:$0xf]
        %v3807 = vld [vmem:[%s1022 + $0xac] sm:$0xf]
        %v3808 = vld [vmem:[%s1022 + $0xb4] sm:$0xf]
        %v3809 = vld [vmem:[%s1022 + $0xb8] sm:$0xf]
        %v3842 = vunpack.c.l.b16 %v3746
        %v3843 = vunpack.c.l.b16 %v3747
        %v3844 = vunpack.c.l.b16 %v3748
        %v3845 = vunpack.c.l.b16 %v3749
        %v3846 = vunpack.c.l.b16 %v3750
        %v3847 = vunpack.c.l.b16 %v3751
        %v3848 = vunpack.c.l.b16 %v3752
        %v3849 = vunpack.c.l.b16 %v3753
        %v3850 = vunpack.c.l.b16 %v3754
        %v3851 = vunpack.c.l.b16 %v3755
        %v3852 = vunpack.c.l.b16 %v3756
        %v3853 = vunpack.c.l.b16 %v3757
        %v3854 = vunpack.c.l.b16 %v3758
        %v3855 = vunpack.c.l.b16 %v3759
        %v3856 = vunpack.c.l.b16 %v3760
        %v3857 = vunpack.c.l.b16 %v3761
        %v3858 = vunpack.c.l.b16 %v3762
        %v3859 = vunpack.c.l.b16 %v3763
        %v3860 = vunpack.c.l.b16 %v3764
        %v3861 = vunpack.c.l.b16 %v3765
        %v3862 = vunpack.c.l.b16 %v3766
        %v3863 = vunpack.c.l.b16 %v3767
        %v3864 = vunpack.c.l.b16 %v3768
        %v3865 = vunpack.c.l.b16 %v3769
        %v3866 = vunpack.c.l.b16 %v3770
        %v3867 = vunpack.c.l.b16 %v3771
        %v3868 = vunpack.c.l.b16 %v3772
        %v3869 = vunpack.c.l.b16 %v3773
        %v3870 = vunpack.c.l.b16 %v3774
        %v3871 = vunpack.c.l.b16 %v3775
        %v3872 = vunpack.c.l.b16 %v3776
        %v3873 = vunpack.c.l.b16 %v3777
        %v3874 = vpack.c.b16 %v3843, %v3842
        %v3875 = vpack.c.b16 %v3845, %v3844
        %v3876 = vpack.c.b16 %v3847, %v3846
        %v3877 = vpack.c.b16 %v3849, %v3848
        %v3878 = vpack.c.b16 %v3851, %v3850
        %v3879 = vpack.c.b16 %v3853, %v3852
        %v3880 = vpack.c.b16 %v3855, %v3854
        %v3881 = vpack.c.b16 %v3857, %v3856
        %v3882 = vpack.c.b16 %v3859, %v3858
        %v3883 = vpack.c.b16 %v3861, %v3860
        %v3884 = vpack.c.b16 %v3863, %v3862
        %v3885 = vpack.c.b16 %v3865, %v3864
        %v3886 = vpack.c.b16 %v3867, %v3866
        %v3887 = vpack.c.b16 %v3869, %v3868
        %v3888 = vpack.c.b16 %v3871, %v3870
        %v3889 = vpack.c.b16 %v3873, %v3872
        %v3922 = vunpack.c.l.b16 %v3778
        %v3923 = vunpack.c.l.b16 %v3779
        %v3924 = vunpack.c.l.b16 %v3780
        %v3925 = vunpack.c.l.b16 %v3781
        %v3926 = vunpack.c.l.b16 %v3782
        %v3927 = vunpack.c.l.b16 %v3783
        %v3928 = vunpack.c.l.b16 %v3784
        %v3929 = vunpack.c.l.b16 %v3785
        %v3930 = vunpack.c.l.b16 %v3786
        %v3931 = vunpack.c.l.b16 %v3787
        %v3932 = vunpack.c.l.b16 %v3788
        %v3933 = vunpack.c.l.b16 %v3789
        %v3934 = vunpack.c.l.b16 %v3790
        %v3935 = vunpack.c.l.b16 %v3791
        %v3936 = vunpack.c.l.b16 %v3792
        %v3937 = vunpack.c.l.b16 %v3793
        %v3938 = vunpack.c.l.b16 %v3794
        %v3939 = vunpack.c.l.b16 %v3795
        %v3940 = vunpack.c.l.b16 %v3796
        %v3941 = vunpack.c.l.b16 %v3797
        %v3942 = vunpack.c.l.b16 %v3798
        %v3943 = vunpack.c.l.b16 %v3799
        %v3944 = vunpack.c.l.b16 %v3800
        %v3945 = vunpack.c.l.b16 %v3801
        %v3946 = vunpack.c.l.b16 %v3802
        %v3947 = vunpack.c.l.b16 %v3803
        %v3948 = vunpack.c.l.b16 %v3804
        %v3949 = vunpack.c.l.b16 %v3805
        %v3950 = vunpack.c.l.b16 %v3806
        %v3951 = vunpack.c.l.b16 %v3807
        %v3952 = vunpack.c.l.b16 %v3808
        %v3953 = vunpack.c.l.b16 %v3809
        %v3954 = vpack.c.b16 %v3923, %v3922
        %v3955 = vpack.c.b16 %v3925, %v3924
        %v3956 = vpack.c.b16 %v3927, %v3926
        %v3957 = vpack.c.b16 %v3929, %v3928
        %v3958 = vpack.c.b16 %v3931, %v3930
        %v3959 = vpack.c.b16 %v3933, %v3932
        %v3960 = vpack.c.b16 %v3935, %v3934
        %v3961 = vpack.c.b16 %v3937, %v3936
        %v3962 = vpack.c.b16 %v3939, %v3938
        %v3963 = vpack.c.b16 %v3941, %v3940
        %v3964 = vpack.c.b16 %v3943, %v3942
        %v3965 = vpack.c.b16 %v3945, %v3944
        %v3966 = vpack.c.b16 %v3947, %v3946
        %v3967 = vpack.c.b16 %v3949, %v3948
        %v3968 = vpack.c.b16 %v3951, %v3950
        %v3969 = vpack.c.b16 %v3953, %v3952
        %3970 = vrot.lane.b32.xlu0 %v3954, 4
        %v3971 = vpop.permute.xlu0 %3970
        %3972 = vrot.lane.b32.xlu0 %v3955, 4
        %v3973 = vpop.permute.xlu0 %3972
        %3974 = vrot.lane.b32.xlu0 %v3956, 4
        %v3975 = vpop.permute.xlu0 %3974
        %3976 = vrot.lane.b32.xlu0 %v3957, 4
        %v3977 = vpop.permute.xlu0 %3976
        %3978 = vrot.lane.b32.xlu0 %v3958, 4
        %v3979 = vpop.permute.xlu0 %3978
        %3980 = vrot.lane.b32.xlu0 %v3959, 4
        %v3981 = vpop.permute.xlu0 %3980
        %3982 = vrot.lane.b32.xlu0 %v3960, 4
        %v3983 = vpop.permute.xlu0 %3982
        %3984 = vrot.lane.b32.xlu0 %v3961, 4
        %v3985 = vpop.permute.xlu0 %3984
        %3986 = vrot.lane.b32.xlu0 %v3962, 4
        %v3987 = vpop.permute.xlu0 %3986
        %3988 = vrot.lane.b32.xlu0 %v3963, 4
        %v3989 = vpop.permute.xlu0 %3988
        %3990 = vrot.lane.b32.xlu0 %v3964, 4
        %v3991 = vpop.permute.xlu0 %3990
        %3992 = vrot.lane.b32.xlu0 %v3965, 4
        %v3993 = vpop.permute.xlu0 %3992
        %3994 = vrot.lane.b32.xlu0 %v3966, 4
        %v3995 = vpop.permute.xlu0 %3994
        %3996 = vrot.lane.b32.xlu0 %v3967, 4
        %v3997 = vpop.permute.xlu0 %3996
        %3998 = vrot.lane.b32.xlu0 %v3968, 4
        %v3999 = vpop.permute.xlu0 %3998
        %4000 = vrot.lane.b32.xlu0 %v3969, 4
        %v4001 = vpop.permute.xlu0 %4000
        %v4004 = vsel %vm1808, %v3874, %v3971
        %v4007 = vsel %vm1808, %v3875, %v3973
        %v4010 = vsel %vm1808, %v3876, %v3975
        %v4013 = vsel %vm1808, %v3877, %v3977
        %v4016 = vsel %vm1808, %v3878, %v3979
        %v4019 = vsel %vm1808, %v3879, %v3981
        %v4022 = vsel %vm1808, %v3880, %v3983
        %v4025 = vsel %vm1808, %v3881, %v3985
        %v4028 = vsel %vm1808, %v3882, %v3987
        %v4031 = vsel %vm1808, %v3883, %v3989
        %v4034 = vsel %vm1808, %v3884, %v3991
        %v4037 = vsel %vm1808, %v3885, %v3993
        %v4040 = vsel %vm1808, %v3886, %v3995
        %v4043 = vsel %vm1808, %v3887, %v3997
        %v4046 = vsel %vm1808, %v3888, %v3999
        %v4049 = vsel %vm1808, %v3889, %v4001
        %s4050 = scalar_lea.vmem %s2, 12
        %v4051 = vld [vmem:[%s4050] sm:$0xf]
        %v4052 = vsel %vm2839, %v4004, 0
        %v4054 = vsel %vm2839, %v4007, 0
        %v4056 = vsel %vm2839, %v4010, 0
        %v4058 = vsel %vm2839, %v4013, 0
        %v4060 = vsel %vm2839, %v4016, 0
        %v4062 = vsel %vm2839, %v4019, 0
        %v4064 = vsel %vm2839, %v4022, 0
        %v4066 = vsel %vm2839, %v4025, 0
        %v4068 = vsel %vm2839, %v4028, 0
        %v4070 = vsel %vm2839, %v4031, 0
        %v4072 = vsel %vm2839, %v4034, 0
        %v4074 = vsel %vm2839, %v4037, 0
        %v4076 = vsel %vm2839, %v4040, 0
        %v4078 = vsel %vm2839, %v4043, 0
        %v4080 = vsel %vm2839, %v4046, 0
        %v4082 = vsel %vm2839, %v4049, 0
        %v4085 = vsel %vm2872, %v4051, 0
        %4087 = vmatpush.bf16.msra.mxu0 0
        %4088 = vmatpush.bf16.msra.mxu0 0
        %4089 = vmatpush.bf16.msra.mxu0 0
        %4090 = vmatpush.bf16.msra.mxu0 0
        %4091 = vmatpush.bf16.msra.mxu0 0
        %4092 = vmatpush.bf16.msra.mxu0 0
        %4093 = vmatpush.bf16.msra.mxu0 0
        %4094 = vmatpush.bf16.msra.mxu0 %v4085
        %4095 = vmatmul.bf16.gmra.mxu0 %v4052
        %v4096 = vpop.f32.mrf.mxu0
        %v4097 = vadd.f32 0.0, %v4096
        %v4098 = vpop.f32.mrf.mxu0
        %v4099 = vadd.f32 0.0, %v4098
        %4100 = vmatmul.bf16.gmra.mxu0 %v4054
        %v4101 = vpop.f32.mrf.mxu0
        %v4102 = vadd.f32 0.0, %v4101
        %v4103 = vpop.f32.mrf.mxu0
        %v4104 = vadd.f32 0.0, %v4103
        %4105 = vmatmul.bf16.gmra.mxu0 %v4056
        %v4106 = vpop.f32.mrf.mxu0
        %v4107 = vadd.f32 0.0, %v4106
        %v4108 = vpop.f32.mrf.mxu0
        %v4109 = vadd.f32 0.0, %v4108
        %4110 = vmatmul.bf16.gmra.mxu0 %v4058
        %v4111 = vpop.f32.mrf.mxu0
        %v4112 = vadd.f32 0.0, %v4111
        %v4113 = vpop.f32.mrf.mxu0
        %v4114 = vadd.f32 0.0, %v4113
        %4115 = vmatmul.bf16.gmra.mxu0 %v4060
        %v4116 = vpop.f32.mrf.mxu0
        %v4117 = vadd.f32 0.0, %v4116
        %v4118 = vpop.f32.mrf.mxu0
        %v4119 = vadd.f32 0.0, %v4118
        %4120 = vmatmul.bf16.gmra.mxu0 %v4062
        %v4121 = vpop.f32.mrf.mxu0
        %v4122 = vadd.f32 0.0, %v4121
        %v4123 = vpop.f32.mrf.mxu0
        %v4124 = vadd.f32 0.0, %v4123
        %4125 = vmatmul.bf16.gmra.mxu0 %v4064
        %v4126 = vpop.f32.mrf.mxu0
        %v4127 = vadd.f32 0.0, %v4126
        %v4128 = vpop.f32.mrf.mxu0
        %v4129 = vadd.f32 0.0, %v4128
        %4130 = vmatmul.bf16.gmra.mxu0 %v4066
        %v4131 = vpop.f32.mrf.mxu0
        %v4132 = vadd.f32 0.0, %v4131
        %v4133 = vpop.f32.mrf.mxu0
        %v4134 = vadd.f32 0.0, %v4133
        %4135 = vmatmul.bf16.gmra.mxu0 %v4068
        %v4136 = vpop.f32.mrf.mxu0
        %v4137 = vadd.f32 0.0, %v4136
        %v4138 = vpop.f32.mrf.mxu0
        %v4139 = vadd.f32 0.0, %v4138
        %4140 = vmatmul.bf16.gmra.mxu0 %v4070
        %v4141 = vpop.f32.mrf.mxu0
        %v4142 = vadd.f32 0.0, %v4141
        %v4143 = vpop.f32.mrf.mxu0
        %v4144 = vadd.f32 0.0, %v4143
        %4145 = vmatmul.bf16.gmra.mxu0 %v4072
        %v4146 = vpop.f32.mrf.mxu0
        %v4147 = vadd.f32 0.0, %v4146
        %v4148 = vpop.f32.mrf.mxu0
        %v4149 = vadd.f32 0.0, %v4148
        %4150 = vmatmul.bf16.gmra.mxu0 %v4074
        %v4151 = vpop.f32.mrf.mxu0
        %v4152 = vadd.f32 0.0, %v4151
        %v4153 = vpop.f32.mrf.mxu0
        %v4154 = vadd.f32 0.0, %v4153
        %4155 = vmatmul.bf16.gmra.mxu0 %v4076
        %v4156 = vpop.f32.mrf.mxu0
        %v4157 = vadd.f32 0.0, %v4156
        %v4158 = vpop.f32.mrf.mxu0
        %v4159 = vadd.f32 0.0, %v4158
        %4160 = vmatmul.bf16.gmra.mxu0 %v4078
        %v4161 = vpop.f32.mrf.mxu0
        %v4162 = vadd.f32 0.0, %v4161
        %v4163 = vpop.f32.mrf.mxu0
        %v4164 = vadd.f32 0.0, %v4163
        %4165 = vmatmul.bf16.gmra.mxu0 %v4080
        %v4166 = vpop.f32.mrf.mxu0
        %v4167 = vadd.f32 0.0, %v4166
        %v4168 = vpop.f32.mrf.mxu0
        %v4169 = vadd.f32 0.0, %v4168
        %4170 = vmatmul.bf16.gmra.mxu0 %v4082
        %v4171 = vpop.f32.mrf.mxu0
        %v4172 = vadd.f32 0.0, %v4171
        %v4173 = vpop.f32.mrf.mxu0
        %v4174 = vadd.f32 0.0, %v4173
        %4175 = vdwg.mxu0
        %v4176 = vadd.f32 %v3714, %v4097
        %v4177 = vadd.f32 %v3715, %v4099
        %v4178 = vadd.f32 %v3716, %v4102
        %v4179 = vadd.f32 %v3717, %v4104
        %v4180 = vadd.f32 %v3718, %v4107
        %v4181 = vadd.f32 %v3719, %v4109
        %v4182 = vadd.f32 %v3720, %v4112
        %v4183 = vadd.f32 %v3721, %v4114
        %v4184 = vadd.f32 %v3722, %v4117
        %v4185 = vadd.f32 %v3723, %v4119
        %v4186 = vadd.f32 %v3724, %v4122
        %v4187 = vadd.f32 %v3725, %v4124
        %v4188 = vadd.f32 %v3726, %v4127
        %v4189 = vadd.f32 %v3727, %v4129
        %v4190 = vadd.f32 %v3728, %v4132
        %v4191 = vadd.f32 %v3729, %v4134
        %v4192 = vadd.f32 %v3730, %v4137
        %v4193 = vadd.f32 %v3731, %v4139
        %v4194 = vadd.f32 %v3732, %v4142
        %v4195 = vadd.f32 %v3733, %v4144
        %v4196 = vadd.f32 %v3734, %v4147
        %v4197 = vadd.f32 %v3735, %v4149
        %v4198 = vadd.f32 %v3736, %v4152
        %v4199 = vadd.f32 %v3737, %v4154
        %v4200 = vadd.f32 %v3738, %v4157
        %v4201 = vadd.f32 %v3739, %v4159
        %v4202 = vadd.f32 %v3740, %v4162
        %v4203 = vadd.f32 %v3741, %v4164
        %v4204 = vadd.f32 %v3742, %v4167
        %v4205 = vadd.f32 %v3743, %v4169
        %v4206 = vadd.f32 %v3744, %v4172
        %v4207 = vadd.f32 %v3745, %v4174
        %v4208 = vld [vmem:[%s853] sm:$0xf]
        %v4209 = vld [vmem:[%s853 + $0x4] sm:$0xf]
        %v4210 = vld [vmem:[%s853 + $0x8] sm:$0x1]
        %v4211 = vld [vmem:[%s853 + $0xc] sm:$0xf]
        %v4212 = vld [vmem:[%s853 + $0x10] sm:$0xf]
        %v4213 = vld [vmem:[%s853 + $0x14] sm:$0x1]
        %v4214 = vld [vmem:[%s853 + $0x18] sm:$0xf]
        %v4215 = vld [vmem:[%s853 + $0x1c] sm:$0xf]
        %v4216 = vld [vmem:[%s853 + $0x20] sm:$0x1]
        %v4217 = vld [vmem:[%s853 + $0x24] sm:$0xf]
        %v4218 = vld [vmem:[%s853 + $0x28] sm:$0xf]
        %v4219 = vld [vmem:[%s853 + $0x2c] sm:$0x1]
        %v4220 = vld [vmem:[%s853 + $0x30] sm:$0xf]
        %v4221 = vld [vmem:[%s853 + $0x34] sm:$0xf]
        %v4222 = vld [vmem:[%s853 + $0x38] sm:$0x1]
        %v4223 = vld [vmem:[%s853 + $0x3c] sm:$0xf]
        %v4224 = vld [vmem:[%s853 + $0x40] sm:$0xf]
        %v4225 = vld [vmem:[%s853 + $0x44] sm:$0x1]
        %v4226 = vld [vmem:[%s853 + $0x48] sm:$0xf]
        %v4227 = vld [vmem:[%s853 + $0x4c] sm:$0xf]
        %v4228 = vld [vmem:[%s853 + $0x50] sm:$0x1]
        %v4229 = vld [vmem:[%s853 + $0x54] sm:$0xf]
        %v4230 = vld [vmem:[%s853 + $0x58] sm:$0xf]
        %v4231 = vld [vmem:[%s853 + $0x5c] sm:$0x1]
        %v4232 = vld [vmem:[%s853 + $0x60] sm:$0xf]
        %v4233 = vld [vmem:[%s853 + $0x64] sm:$0xf]
        %v4234 = vld [vmem:[%s853 + $0x68] sm:$0x1]
        %v4235 = vld [vmem:[%s853 + $0x6c] sm:$0xf]
        %v4236 = vld [vmem:[%s853 + $0x70] sm:$0xf]
        %v4237 = vld [vmem:[%s853 + $0x74] sm:$0x1]
        %v4238 = vld [vmem:[%s853 + $0x78] sm:$0xf]
        %v4239 = vld [vmem:[%s853 + $0x7c] sm:$0xf]
        %v4240 = vld [vmem:[%s853 + $0x80] sm:$0x1]
        %v4241 = vld [vmem:[%s853 + $0x84] sm:$0xf]
        %v4242 = vld [vmem:[%s853 + $0x88] sm:$0xf]
        %v4243 = vld [vmem:[%s853 + $0x8c] sm:$0x1]
        %v4244 = vld [vmem:[%s853 + $0x90] sm:$0xf]
        %v4245 = vld [vmem:[%s853 + $0x94] sm:$0xf]
        %v4246 = vld [vmem:[%s853 + $0x98] sm:$0x1]
        %v4247 = vld [vmem:[%s853 + $0x9c] sm:$0xf]
        %v4248 = vld [vmem:[%s853 + $0xa0] sm:$0xf]
        %v4249 = vld [vmem:[%s853 + $0xa4] sm:$0x1]
        %v4250 = vld [vmem:[%s853 + $0xa8] sm:$0xf]
        %v4251 = vld [vmem:[%s853 + $0xac] sm:$0xf]
        %v4252 = vld [vmem:[%s853 + $0xb0] sm:$0x1]
        %v4253 = vld [vmem:[%s853 + $0xb4] sm:$0xf]
        %v4254 = vld [vmem:[%s853 + $0xb8] sm:$0xf]
        %v4255 = vld [vmem:[%s853 + $0xbc] sm:$0x1]
        %v4257 = vshrl.u32 %v4208, 16
        %v4259 = vrot.slane %v4257, 4
        %v4260 = vshll.u32 %v4208, 16
        %v4262 = vrot.slane %v4260, 5
        %v4263 = vor.u32 %v4259, %v4262
        %v4264 = vrot.slane %v4263, 4
        %v4266 = vshll.u32 %v4209, 16
        %v4268 = vrot.slane %v4266, 5
        %v4269 = vsel %vm1876, %v4264, %v4268
        %v4270 = vshrl.u32 %v4209, 16
        %v4272 = vrot.slane %v4270, 4
        %v4273 = vor.u32 %v4272, %v4268
        %v4274 = vrot.slane %v4273, 4
        %v4276 = vshll.u32 %v4210, 16
        %v4278 = vrot.slane %v4276, 5
        %v4279 = vsel %vm1876, %v4274, %v4278
        %v4281 = vshrl.u32 %v4211, 16
        %v4283 = vrot.slane %v4281, 4
        %v4284 = vshll.u32 %v4211, 16
        %v4286 = vrot.slane %v4284, 5
        %v4287 = vor.u32 %v4283, %v4286
        %v4288 = vrot.slane %v4287, 4
        %v4290 = vshll.u32 %v4212, 16
        %v4292 = vrot.slane %v4290, 5
        %v4293 = vsel %vm1876, %v4288, %v4292
        %v4294 = vshrl.u32 %v4212, 16
        %v4296 = vrot.slane %v4294, 4
        %v4297 = vor.u32 %v4296, %v4292
        %v4298 = vrot.slane %v4297, 4
        %v4300 = vshll.u32 %v4213, 16
        %v4302 = vrot.slane %v4300, 5
        %v4303 = vsel %vm1876, %v4298, %v4302
        %v4305 = vshrl.u32 %v4214, 16
        %v4307 = vrot.slane %v4305, 4
        %v4308 = vshll.u32 %v4214, 16
        %v4310 = vrot.slane %v4308, 5
        %v4311 = vor.u32 %v4307, %v4310
        %v4312 = vrot.slane %v4311, 4
        %v4314 = vshll.u32 %v4215, 16
        %v4316 = vrot.slane %v4314, 5
        %v4317 = vsel %vm1876, %v4312, %v4316
        %v4318 = vshrl.u32 %v4215, 16
        %v4320 = vrot.slane %v4318, 4
        %v4321 = vor.u32 %v4320, %v4316
        %v4322 = vrot.slane %v4321, 4
        %v4324 = vshll.u32 %v4216, 16
        %v4326 = vrot.slane %v4324, 5
        %v4327 = vsel %vm1876, %v4322, %v4326
        %v4329 = vshrl.u32 %v4217, 16
        %v4331 = vrot.slane %v4329, 4
        %v4332 = vshll.u32 %v4217, 16
        %v4334 = vrot.slane %v4332, 5
        %v4335 = vor.u32 %v4331, %v4334
        %v4336 = vrot.slane %v4335, 4
        %v4338 = vshll.u32 %v4218, 16
        %v4340 = vrot.slane %v4338, 5
        %v4341 = vsel %vm1876, %v4336, %v4340
        %v4342 = vshrl.u32 %v4218, 16
        %v4344 = vrot.slane %v4342, 4
        %v4345 = vor.u32 %v4344, %v4340
        %v4346 = vrot.slane %v4345, 4
        %v4348 = vshll.u32 %v4219, 16
        %v4350 = vrot.slane %v4348, 5
        %v4351 = vsel %vm1876, %v4346, %v4350
        %v4353 = vshrl.u32 %v4220, 16
        %v4355 = vrot.slane %v4353, 4
        %v4356 = vshll.u32 %v4220, 16
        %v4358 = vrot.slane %v4356, 5
        %v4359 = vor.u32 %v4355, %v4358
        %v4360 = vrot.slane %v4359, 4
        %v4362 = vshll.u32 %v4221, 16
        %v4364 = vrot.slane %v4362, 5
        %v4365 = vsel %vm1876, %v4360, %v4364
        %v4366 = vshrl.u32 %v4221, 16
        %v4368 = vrot.slane %v4366, 4
        %v4369 = vor.u32 %v4368, %v4364
        %v4370 = vrot.slane %v4369, 4
        %v4372 = vshll.u32 %v4222, 16
        %v4374 = vrot.slane %v4372, 5
        %v4375 = vsel %vm1876, %v4370, %v4374
        %v4377 = vshrl.u32 %v4223, 16
        %v4379 = vrot.slane %v4377, 4
        %v4380 = vshll.u32 %v4223, 16
        %v4382 = vrot.slane %v4380, 5
        %v4383 = vor.u32 %v4379, %v4382
        %v4384 = vrot.slane %v4383, 4
        %v4386 = vshll.u32 %v4224, 16
        %v4388 = vrot.slane %v4386, 5
        %v4389 = vsel %vm1876, %v4384, %v4388
        %v4390 = vshrl.u32 %v4224, 16
        %v4392 = vrot.slane %v4390, 4
        %v4393 = vor.u32 %v4392, %v4388
        %v4394 = vrot.slane %v4393, 4
        %v4396 = vshll.u32 %v4225, 16
        %v4398 = vrot.slane %v4396, 5
        %v4399 = vsel %vm1876, %v4394, %v4398
        %v4401 = vshrl.u32 %v4226, 16
        %v4403 = vrot.slane %v4401, 4
        %v4404 = vshll.u32 %v4226, 16
        %v4406 = vrot.slane %v4404, 5
        %v4407 = vor.u32 %v4403, %v4406
        %v4408 = vrot.slane %v4407, 4
        %v4410 = vshll.u32 %v4227, 16
        %v4412 = vrot.slane %v4410, 5
        %v4413 = vsel %vm1876, %v4408, %v4412
        %v4414 = vshrl.u32 %v4227, 16
        %v4416 = vrot.slane %v4414, 4
        %v4417 = vor.u32 %v4416, %v4412
        %v4418 = vrot.slane %v4417, 4
        %v4420 = vshll.u32 %v4228, 16
        %v4422 = vrot.slane %v4420, 5
        %v4423 = vsel %vm1876, %v4418, %v4422
        %v4425 = vshrl.u32 %v4229, 16
        %v4427 = vrot.slane %v4425, 4
        %v4428 = vshll.u32 %v4229, 16
        %v4430 = vrot.slane %v4428, 5
        %v4431 = vor.u32 %v4427, %v4430
        %v4432 = vrot.slane %v4431, 4
        %v4434 = vshll.u32 %v4230, 16
        %v4436 = vrot.slane %v4434, 5
        %v4437 = vsel %vm1876, %v4432, %v4436
        %v4438 = vshrl.u32 %v4230, 16
        %v4440 = vrot.slane %v4438, 4
        %v4441 = vor.u32 %v4440, %v4436
        %v4442 = vrot.slane %v4441, 4
        %v4444 = vshll.u32 %v4231, 16
        %v4446 = vrot.slane %v4444, 5
        %v4447 = vsel %vm1876, %v4442, %v4446
        %v4449 = vshrl.u32 %v4232, 16
        %v4451 = vrot.slane %v4449, 4
        %v4452 = vshll.u32 %v4232, 16
        %v4454 = vrot.slane %v4452, 5
        %v4455 = vor.u32 %v4451, %v4454
        %v4456 = vrot.slane %v4455, 4
        %v4458 = vshll.u32 %v4233, 16
        %v4460 = vrot.slane %v4458, 5
        %v4461 = vsel %vm1876, %v4456, %v4460
        %v4462 = vshrl.u32 %v4233, 16
        %v4464 = vrot.slane %v4462, 4
        %v4465 = vor.u32 %v4464, %v4460
        %v4466 = vrot.slane %v4465, 4
        %v4468 = vshll.u32 %v4234, 16
        %v4470 = vrot.slane %v4468, 5
        %v4471 = vsel %vm1876, %v4466, %v4470
        %v4473 = vshrl.u32 %v4235, 16
        %v4475 = vrot.slane %v4473, 4
        %v4476 = vshll.u32 %v4235, 16
        %v4478 = vrot.slane %v4476, 5
        %v4479 = vor.u32 %v4475, %v4478
        %v4480 = vrot.slane %v4479, 4
        %v4482 = vshll.u32 %v4236, 16
        %v4484 = vrot.slane %v4482, 5
        %v4485 = vsel %vm1876, %v4480, %v4484
        %v4486 = vshrl.u32 %v4236, 16
        %v4488 = vrot.slane %v4486, 4
        %v4489 = vor.u32 %v4488, %v4484
        %v4490 = vrot.slane %v4489, 4
        %v4492 = vshll.u32 %v4237, 16
        %v4494 = vrot.slane %v4492, 5
        %v4495 = vsel %vm1876, %v4490, %v4494
        %v4497 = vshrl.u32 %v4238, 16
        %v4499 = vrot.slane %v4497, 4
        %v4500 = vshll.u32 %v4238, 16
        %v4502 = vrot.slane %v4500, 5
        %v4503 = vor.u32 %v4499, %v4502
        %v4504 = vrot.slane %v4503, 4
        %v4506 = vshll.u32 %v4239, 16
        %v4508 = vrot.slane %v4506, 5
        %v4509 = vsel %vm1876, %v4504, %v4508
        %v4510 = vshrl.u32 %v4239, 16
        %v4512 = vrot.slane %v4510, 4
        %v4513 = vor.u32 %v4512, %v4508
        %v4514 = vrot.slane %v4513, 4
        %v4516 = vshll.u32 %v4240, 16
        %v4518 = vrot.slane %v4516, 5
        %v4519 = vsel %vm1876, %v4514, %v4518
        %v4521 = vshrl.u32 %v4241, 16
        %v4523 = vrot.slane %v4521, 4
        %v4524 = vshll.u32 %v4241, 16
        %v4526 = vrot.slane %v4524, 5
        %v4527 = vor.u32 %v4523, %v4526
        %v4528 = vrot.slane %v4527, 4
        %v4530 = vshll.u32 %v4242, 16
        %v4532 = vrot.slane %v4530, 5
        %v4533 = vsel %vm1876, %v4528, %v4532
        %v4534 = vshrl.u32 %v4242, 16
        %v4536 = vrot.slane %v4534, 4
        %v4537 = vor.u32 %v4536, %v4532
        %v4538 = vrot.slane %v4537, 4
        %v4540 = vshll.u32 %v4243, 16
        %v4542 = vrot.slane %v4540, 5
        %v4543 = vsel %vm1876, %v4538, %v4542
        %v4545 = vshrl.u32 %v4244, 16
        %v4547 = vrot.slane %v4545, 4
        %v4548 = vshll.u32 %v4244, 16
        %v4550 = vrot.slane %v4548, 5
        %v4551 = vor.u32 %v4547, %v4550
        %v4552 = vrot.slane %v4551, 4
        %v4554 = vshll.u32 %v4245, 16
        %v4556 = vrot.slane %v4554, 5
        %v4557 = vsel %vm1876, %v4552, %v4556
        %v4558 = vshrl.u32 %v4245, 16
        %v4560 = vrot.slane %v4558, 4
        %v4561 = vor.u32 %v4560, %v4556
        %v4562 = vrot.slane %v4561, 4
        %v4564 = vshll.u32 %v4246, 16
        %v4566 = vrot.slane %v4564, 5
        %v4567 = vsel %vm1876, %v4562, %v4566
        %v4569 = vshrl.u32 %v4247, 16
        %v4571 = vrot.slane %v4569, 4
        %v4572 = vshll.u32 %v4247, 16
        %v4574 = vrot.slane %v4572, 5
        %v4575 = vor.u32 %v4571, %v4574
        %v4576 = vrot.slane %v4575, 4
        %v4578 = vshll.u32 %v4248, 16
        %v4580 = vrot.slane %v4578, 5
        %v4581 = vsel %vm1876, %v4576, %v4580
        %v4582 = vshrl.u32 %v4248, 16
        %v4584 = vrot.slane %v4582, 4
        %v4585 = vor.u32 %v4584, %v4580
        %v4586 = vrot.slane %v4585, 4
        %v4588 = vshll.u32 %v4249, 16
        %v4590 = vrot.slane %v4588, 5
        %v4591 = vsel %vm1876, %v4586, %v4590
        %v4593 = vshrl.u32 %v4250, 16
        %v4595 = vrot.slane %v4593, 4
        %v4596 = vshll.u32 %v4250, 16
        %v4598 = vrot.slane %v4596, 5
        %v4599 = vor.u32 %v4595, %v4598
        %v4600 = vrot.slane %v4599, 4
        %v4602 = vshll.u32 %v4251, 16
        %v4604 = vrot.slane %v4602, 5
        %v4605 = vsel %vm1876, %v4600, %v4604
        %v4606 = vshrl.u32 %v4251, 16
        %v4608 = vrot.slane %v4606, 4
        %v4609 = vor.u32 %v4608, %v4604
        %v4610 = vrot.slane %v4609, 4
        %v4612 = vshll.u32 %v4252, 16
        %v4614 = vrot.slane %v4612, 5
        %v4615 = vsel %vm1876, %v4610, %v4614
        %v4617 = vshrl.u32 %v4253, 16
        %v4619 = vrot.slane %v4617, 4
        %v4620 = vshll.u32 %v4253, 16
        %v4622 = vrot.slane %v4620, 5
        %v4623 = vor.u32 %v4619, %v4622
        %v4624 = vrot.slane %v4623, 4
        %v4626 = vshll.u32 %v4254, 16
        %v4628 = vrot.slane %v4626, 5
        %v4629 = vsel %vm1876, %v4624, %v4628
        %v4630 = vshrl.u32 %v4254, 16
        %v4632 = vrot.slane %v4630, 4
        %v4633 = vor.u32 %v4632, %v4628
        %v4634 = vrot.slane %v4633, 4
        %v4636 = vshll.u32 %v4255, 16
        %v4638 = vrot.slane %v4636, 5
        %v4639 = vsel %vm1876, %v4634, %v4638
        %v4640 = vld [vmem:[%s1022] sm:$0xf]
        %v4641 = vld [vmem:[%s1022 + $0x4] sm:$0xf]
        %v4642 = vld [vmem:[%s1022 + $0x8] sm:$0x1]
        %v4643 = vld [vmem:[%s1022 + $0xc] sm:$0xf]
        %v4644 = vld [vmem:[%s1022 + $0x10] sm:$0xf]
        %v4645 = vld [vmem:[%s1022 + $0x14] sm:$0x1]
        %v4646 = vld [vmem:[%s1022 + $0x18] sm:$0xf]
        %v4647 = vld [vmem:[%s1022 + $0x1c] sm:$0xf]
        %v4648 = vld [vmem:[%s1022 + $0x20] sm:$0x1]
        %v4649 = vld [vmem:[%s1022 + $0x24] sm:$0xf]
        %v4650 = vld [vmem:[%s1022 + $0x28] sm:$0xf]
        %v4651 = vld [vmem:[%s1022 + $0x2c] sm:$0x1]
        %v4652 = vld [vmem:[%s1022 + $0x30] sm:$0xf]
        %v4653 = vld [vmem:[%s1022 + $0x34] sm:$0xf]
        %v4654 = vld [vmem:[%s1022 + $0x38] sm:$0x1]
        %v4655 = vld [vmem:[%s1022 + $0x3c] sm:$0xf]
        %v4656 = vld [vmem:[%s1022 + $0x40] sm:$0xf]
        %v4657 = vld [vmem:[%s1022 + $0x44] sm:$0x1]
        %v4658 = vld [vmem:[%s1022 + $0x48] sm:$0xf]
        %v4659 = vld [vmem:[%s1022 + $0x4c] sm:$0xf]
        %v4660 = vld [vmem:[%s1022 + $0x50] sm:$0x1]
        %v4661 = vld [vmem:[%s1022 + $0x54] sm:$0xf]
        %v4662 = vld [vmem:[%s1022 + $0x58] sm:$0xf]
        %v4663 = vld [vmem:[%s1022 + $0x5c] sm:$0x1]
        %v4664 = vld [vmem:[%s1022 + $0x60] sm:$0xf]
        %v4665 = vld [vmem:[%s1022 + $0x64] sm:$0xf]
        %v4666 = vld [vmem:[%s1022 + $0x68] sm:$0x1]
        %v4667 = vld [vmem:[%s1022 + $0x6c] sm:$0xf]
        %v4668 = vld [vmem:[%s1022 + $0x70] sm:$0xf]
        %v4669 = vld [vmem:[%s1022 + $0x74] sm:$0x1]
        %v4670 = vld [vmem:[%s1022 + $0x78] sm:$0xf]
        %v4671 = vld [vmem:[%s1022 + $0x7c] sm:$0xf]
        %v4672 = vld [vmem:[%s1022 + $0x80] sm:$0x1]
        %v4673 = vld [vmem:[%s1022 + $0x84] sm:$0xf]
        %v4674 = vld [vmem:[%s1022 + $0x88] sm:$0xf]
        %v4675 = vld [vmem:[%s1022 + $0x8c] sm:$0x1]
        %v4676 = vld [vmem:[%s1022 + $0x90] sm:$0xf]
        %v4677 = vld [vmem:[%s1022 + $0x94] sm:$0xf]
        %v4678 = vld [vmem:[%s1022 + $0x98] sm:$0x1]
        %v4679 = vld [vmem:[%s1022 + $0x9c] sm:$0xf]
        %v4680 = vld [vmem:[%s1022 + $0xa0] sm:$0xf]
        %v4681 = vld [vmem:[%s1022 + $0xa4] sm:$0x1]
        %v4682 = vld [vmem:[%s1022 + $0xa8] sm:$0xf]
        %v4683 = vld [vmem:[%s1022 + $0xac] sm:$0xf]
        %v4684 = vld [vmem:[%s1022 + $0xb0] sm:$0x1]
        %v4685 = vld [vmem:[%s1022 + $0xb4] sm:$0xf]
        %v4686 = vld [vmem:[%s1022 + $0xb8] sm:$0xf]
        %v4687 = vld [vmem:[%s1022 + $0xbc] sm:$0x1]
        %v4689 = vshrl.u32 %v4640, 16
        %v4691 = vrot.slane %v4689, 4
        %v4692 = vshll.u32 %v4640, 16
        %v4694 = vrot.slane %v4692, 5
        %v4695 = vor.u32 %v4691, %v4694
        %v4696 = vrot.slane %v4695, 4
        %v4698 = vshll.u32 %v4641, 16
        %v4700 = vrot.slane %v4698, 5
        %v4701 = vsel %vm1876, %v4696, %v4700
        %v4702 = vshrl.u32 %v4641, 16
        %v4704 = vrot.slane %v4702, 4
        %v4705 = vor.u32 %v4704, %v4700
        %v4706 = vrot.slane %v4705, 4
        %v4708 = vshll.u32 %v4642, 16
        %v4710 = vrot.slane %v4708, 5
        %v4711 = vsel %vm1876, %v4706, %v4710
        %v4713 = vshrl.u32 %v4643, 16
        %v4715 = vrot.slane %v4713, 4
        %v4716 = vshll.u32 %v4643, 16
        %v4718 = vrot.slane %v4716, 5
        %v4719 = vor.u32 %v4715, %v4718
        %v4720 = vrot.slane %v4719, 4
        %v4722 = vshll.u32 %v4644, 16
        %v4724 = vrot.slane %v4722, 5
        %v4725 = vsel %vm1876, %v4720, %v4724
        %v4726 = vshrl.u32 %v4644, 16
        %v4728 = vrot.slane %v4726, 4
        %v4729 = vor.u32 %v4728, %v4724
        %v4730 = vrot.slane %v4729, 4
        %v4732 = vshll.u32 %v4645, 16
        %v4734 = vrot.slane %v4732, 5
        %v4735 = vsel %vm1876, %v4730, %v4734
        %v4737 = vshrl.u32 %v4646, 16
        %v4739 = vrot.slane %v4737, 4
        %v4740 = vshll.u32 %v4646, 16
        %v4742 = vrot.slane %v4740, 5
        %v4743 = vor.u32 %v4739, %v4742
        %v4744 = vrot.slane %v4743, 4
        %v4746 = vshll.u32 %v4647, 16
        %v4748 = vrot.slane %v4746, 5
        %v4749 = vsel %vm1876, %v4744, %v4748
        %v4750 = vshrl.u32 %v4647, 16
        %v4752 = vrot.slane %v4750, 4
        %v4753 = vor.u32 %v4752, %v4748
        %v4754 = vrot.slane %v4753, 4
        %v4756 = vshll.u32 %v4648, 16
        %v4758 = vrot.slane %v4756, 5
        %v4759 = vsel %vm1876, %v4754, %v4758
        %v4761 = vshrl.u32 %v4649, 16
        %v4763 = vrot.slane %v4761, 4
        %v4764 = vshll.u32 %v4649, 16
        %v4766 = vrot.slane %v4764, 5
        %v4767 = vor.u32 %v4763, %v4766
        %v4768 = vrot.slane %v4767, 4
        %v4770 = vshll.u32 %v4650, 16
        %v4772 = vrot.slane %v4770, 5
        %v4773 = vsel %vm1876, %v4768, %v4772
        %v4774 = vshrl.u32 %v4650, 16
        %v4776 = vrot.slane %v4774, 4
        %v4777 = vor.u32 %v4776, %v4772
        %v4778 = vrot.slane %v4777, 4
        %v4780 = vshll.u32 %v4651, 16
        %v4782 = vrot.slane %v4780, 5
        %v4783 = vsel %vm1876, %v4778, %v4782
        %v4785 = vshrl.u32 %v4652, 16
        %v4787 = vrot.slane %v4785, 4
        %v4788 = vshll.u32 %v4652, 16
        %v4790 = vrot.slane %v4788, 5
        %v4791 = vor.u32 %v4787, %v4790
        %v4792 = vrot.slane %v4791, 4
        %v4794 = vshll.u32 %v4653, 16
        %v4796 = vrot.slane %v4794, 5
        %v4797 = vsel %vm1876, %v4792, %v4796
        %v4798 = vshrl.u32 %v4653, 16
        %v4800 = vrot.slane %v4798, 4
        %v4801 = vor.u32 %v4800, %v4796
        %v4802 = vrot.slane %v4801, 4
        %v4804 = vshll.u32 %v4654, 16
        %v4806 = vrot.slane %v4804, 5
        %v4807 = vsel %vm1876, %v4802, %v4806
        %v4809 = vshrl.u32 %v4655, 16
        %v4811 = vrot.slane %v4809, 4
        %v4812 = vshll.u32 %v4655, 16
        %v4814 = vrot.slane %v4812, 5
        %v4815 = vor.u32 %v4811, %v4814
        %v4816 = vrot.slane %v4815, 4
        %v4818 = vshll.u32 %v4656, 16
        %v4820 = vrot.slane %v4818, 5
        %v4821 = vsel %vm1876, %v4816, %v4820
        %v4822 = vshrl.u32 %v4656, 16
        %v4824 = vrot.slane %v4822, 4
        %v4825 = vor.u32 %v4824, %v4820
        %v4826 = vrot.slane %v4825, 4
        %v4828 = vshll.u32 %v4657, 16
        %v4830 = vrot.slane %v4828, 5
        %v4831 = vsel %vm1876, %v4826, %v4830
        %v4833 = vshrl.u32 %v4658, 16
        %v4835 = vrot.slane %v4833, 4
        %v4836 = vshll.u32 %v4658, 16
        %v4838 = vrot.slane %v4836, 5
        %v4839 = vor.u32 %v4835, %v4838
        %v4840 = vrot.slane %v4839, 4
        %v4842 = vshll.u32 %v4659, 16
        %v4844 = vrot.slane %v4842, 5
        %v4845 = vsel %vm1876, %v4840, %v4844
        %v4846 = vshrl.u32 %v4659, 16
        %v4848 = vrot.slane %v4846, 4
        %v4849 = vor.u32 %v4848, %v4844
        %v4850 = vrot.slane %v4849, 4
        %v4852 = vshll.u32 %v4660, 16
        %v4854 = vrot.slane %v4852, 5
        %v4855 = vsel %vm1876, %v4850, %v4854
        %v4857 = vshrl.u32 %v4661, 16
        %v4859 = vrot.slane %v4857, 4
        %v4860 = vshll.u32 %v4661, 16
        %v4862 = vrot.slane %v4860, 5
        %v4863 = vor.u32 %v4859, %v4862
        %v4864 = vrot.slane %v4863, 4
        %v4866 = vshll.u32 %v4662, 16
        %v4868 = vrot.slane %v4866, 5
        %v4869 = vsel %vm1876, %v4864, %v4868
        %v4870 = vshrl.u32 %v4662, 16
        %v4872 = vrot.slane %v4870, 4
        %v4873 = vor.u32 %v4872, %v4868
        %v4874 = vrot.slane %v4873, 4
        %v4876 = vshll.u32 %v4663, 16
        %v4878 = vrot.slane %v4876, 5
        %v4879 = vsel %vm1876, %v4874, %v4878
        %v4881 = vshrl.u32 %v4664, 16
        %v4883 = vrot.slane %v4881, 4
        %v4884 = vshll.u32 %v4664, 16
        %v4886 = vrot.slane %v4884, 5
        %v4887 = vor.u32 %v4883, %v4886
        %v4888 = vrot.slane %v4887, 4
        %v4890 = vshll.u32 %v4665, 16
        %v4892 = vrot.slane %v4890, 5
        %v4893 = vsel %vm1876, %v4888, %v4892
        %v4894 = vshrl.u32 %v4665, 16
        %v4896 = vrot.slane %v4894, 4
        %v4897 = vor.u32 %v4896, %v4892
        %v4898 = vrot.slane %v4897, 4
        %v4900 = vshll.u32 %v4666, 16
        %v4902 = vrot.slane %v4900, 5
        %v4903 = vsel %vm1876, %v4898, %v4902
        %v4905 = vshrl.u32 %v4667, 16
        %v4907 = vrot.slane %v4905, 4
        %v4908 = vshll.u32 %v4667, 16
        %v4910 = vrot.slane %v4908, 5
        %v4911 = vor.u32 %v4907, %v4910
        %v4912 = vrot.slane %v4911, 4
        %v4914 = vshll.u32 %v4668, 16
        %v4916 = vrot.slane %v4914, 5
        %v4917 = vsel %vm1876, %v4912, %v4916
        %v4918 = vshrl.u32 %v4668, 16
        %v4920 = vrot.slane %v4918, 4
        %v4921 = vor.u32 %v4920, %v4916
        %v4922 = vrot.slane %v4921, 4
        %v4924 = vshll.u32 %v4669, 16
        %v4926 = vrot.slane %v4924, 5
        %v4927 = vsel %vm1876, %v4922, %v4926
        %v4929 = vshrl.u32 %v4670, 16
        %v4931 = vrot.slane %v4929, 4
        %v4932 = vshll.u32 %v4670, 16
        %v4934 = vrot.slane %v4932, 5
        %v4935 = vor.u32 %v4931, %v4934
        %v4936 = vrot.slane %v4935, 4
        %v4938 = vshll.u32 %v4671, 16
        %v4940 = vrot.slane %v4938, 5
        %v4941 = vsel %vm1876, %v4936, %v4940
        %v4942 = vshrl.u32 %v4671, 16
        %v4944 = vrot.slane %v4942, 4
        %v4945 = vor.u32 %v4944, %v4940
        %v4946 = vrot.slane %v4945, 4
        %v4948 = vshll.u32 %v4672, 16
        %v4950 = vrot.slane %v4948, 5
        %v4951 = vsel %vm1876, %v4946, %v4950
        %v4953 = vshrl.u32 %v4673, 16
        %v4955 = vrot.slane %v4953, 4
        %v4956 = vshll.u32 %v4673, 16
        %v4958 = vrot.slane %v4956, 5
        %v4959 = vor.u32 %v4955, %v4958
        %v4960 = vrot.slane %v4959, 4
        %v4962 = vshll.u32 %v4674, 16
        %v4964 = vrot.slane %v4962, 5
        %v4965 = vsel %vm1876, %v4960, %v4964
        %v4966 = vshrl.u32 %v4674, 16
        %v4968 = vrot.slane %v4966, 4
        %v4969 = vor.u32 %v4968, %v4964
        %v4970 = vrot.slane %v4969, 4
        %v4972 = vshll.u32 %v4675, 16
        %v4974 = vrot.slane %v4972, 5
        %v4975 = vsel %vm1876, %v4970, %v4974
        %v4977 = vshrl.u32 %v4676, 16
        %v4979 = vrot.slane %v4977, 4
        %v4980 = vshll.u32 %v4676, 16
        %v4982 = vrot.slane %v4980, 5
        %v4983 = vor.u32 %v4979, %v4982
        %v4984 = vrot.slane %v4983, 4
        %v4986 = vshll.u32 %v4677, 16
        %v4988 = vrot.slane %v4986, 5
        %v4989 = vsel %vm1876, %v4984, %v4988
        %v4990 = vshrl.u32 %v4677, 16
        %v4992 = vrot.slane %v4990, 4
        %v4993 = vor.u32 %v4992, %v4988
        %v4994 = vrot.slane %v4993, 4
        %v4996 = vshll.u32 %v4678, 16
        %v4998 = vrot.slane %v4996, 5
        %v4999 = vsel %vm1876, %v4994, %v4998
        %v5001 = vshrl.u32 %v4679, 16
        %v5003 = vrot.slane %v5001, 4
        %v5004 = vshll.u32 %v4679, 16
        %v5006 = vrot.slane %v5004, 5
        %v5007 = vor.u32 %v5003, %v5006
        %v5008 = vrot.slane %v5007, 4
        %v5010 = vshll.u32 %v4680, 16
        %v5012 = vrot.slane %v5010, 5
        %v5013 = vsel %vm1876, %v5008, %v5012
        %v5014 = vshrl.u32 %v4680, 16
        %v5016 = vrot.slane %v5014, 4
        %v5017 = vor.u32 %v5016, %v5012
        %v5018 = vrot.slane %v5017, 4
        %v5020 = vshll.u32 %v4681, 16
        %v5022 = vrot.slane %v5020, 5
        %v5023 = vsel %vm1876, %v5018, %v5022
        %v5025 = vshrl.u32 %v4682, 16
        %v5027 = vrot.slane %v5025, 4
        %v5028 = vshll.u32 %v4682, 16
        %v5030 = vrot.slane %v5028, 5
        %v5031 = vor.u32 %v5027, %v5030
        %v5032 = vrot.slane %v5031, 4
        %v5034 = vshll.u32 %v4683, 16
        %v5036 = vrot.slane %v5034, 5
        %v5037 = vsel %vm1876, %v5032, %v5036
        %v5038 = vshrl.u32 %v4683, 16
        %v5040 = vrot.slane %v5038, 4
        %v5041 = vor.u32 %v5040, %v5036
        %v5042 = vrot.slane %v5041, 4
        %v5044 = vshll.u32 %v4684, 16
        %v5046 = vrot.slane %v5044, 5
        %v5047 = vsel %vm1876, %v5042, %v5046
        %v5049 = vshrl.u32 %v4685, 16
        %v5051 = vrot.slane %v5049, 4
        %v5052 = vshll.u32 %v4685, 16
        %v5054 = vrot.slane %v5052, 5
        %v5055 = vor.u32 %v5051, %v5054
        %v5056 = vrot.slane %v5055, 4
        %v5058 = vshll.u32 %v4686, 16
        %v5060 = vrot.slane %v5058, 5
        %v5061 = vsel %vm1876, %v5056, %v5060
        %v5062 = vshrl.u32 %v4686, 16
        %v5064 = vrot.slane %v5062, 4
        %v5065 = vor.u32 %v5064, %v5060
        %v5066 = vrot.slane %v5065, 4
        %v5068 = vshll.u32 %v4687, 16
        %v5070 = vrot.slane %v5068, 5
        %v5071 = vsel %vm1876, %v5066, %v5070
        %v5072 = vunpack.c.l.b16 %v4269
        %v5073 = vunpack.c.l.b16 %v4279
        %v5074 = vunpack.c.l.b16 %v4293
        %v5075 = vunpack.c.l.b16 %v4303
        %v5076 = vunpack.c.l.b16 %v4317
        %v5077 = vunpack.c.l.b16 %v4327
        %v5078 = vunpack.c.l.b16 %v4341
        %v5079 = vunpack.c.l.b16 %v4351
        %v5080 = vunpack.c.l.b16 %v4365
        %v5081 = vunpack.c.l.b16 %v4375
        %v5082 = vunpack.c.l.b16 %v4389
        %v5083 = vunpack.c.l.b16 %v4399
        %v5084 = vunpack.c.l.b16 %v4413
        %v5085 = vunpack.c.l.b16 %v4423
        %v5086 = vunpack.c.l.b16 %v4437
        %v5087 = vunpack.c.l.b16 %v4447
        %v5088 = vunpack.c.l.b16 %v4461
        %v5089 = vunpack.c.l.b16 %v4471
        %v5090 = vunpack.c.l.b16 %v4485
        %v5091 = vunpack.c.l.b16 %v4495
        %v5092 = vunpack.c.l.b16 %v4509
        %v5093 = vunpack.c.l.b16 %v4519
        %v5094 = vunpack.c.l.b16 %v4533
        %v5095 = vunpack.c.l.b16 %v4543
        %v5096 = vunpack.c.l.b16 %v4557
        %v5097 = vunpack.c.l.b16 %v4567
        %v5098 = vunpack.c.l.b16 %v4581
        %v5099 = vunpack.c.l.b16 %v4591
        %v5100 = vunpack.c.l.b16 %v4605
        %v5101 = vunpack.c.l.b16 %v4615
        %v5102 = vunpack.c.l.b16 %v4629
        %v5103 = vunpack.c.l.b16 %v4639
        %v5104 = vpack.c.b16 %v5073, %v5072
        %v5105 = vpack.c.b16 %v5075, %v5074
        %v5106 = vpack.c.b16 %v5077, %v5076
        %v5107 = vpack.c.b16 %v5079, %v5078
        %v5108 = vpack.c.b16 %v5081, %v5080
        %v5109 = vpack.c.b16 %v5083, %v5082
        %v5110 = vpack.c.b16 %v5085, %v5084
        %v5111 = vpack.c.b16 %v5087, %v5086
        %v5112 = vpack.c.b16 %v5089, %v5088
        %v5113 = vpack.c.b16 %v5091, %v5090
        %v5114 = vpack.c.b16 %v5093, %v5092
        %v5115 = vpack.c.b16 %v5095, %v5094
        %v5116 = vpack.c.b16 %v5097, %v5096
        %v5117 = vpack.c.b16 %v5099, %v5098
        %v5118 = vpack.c.b16 %v5101, %v5100
        %v5119 = vpack.c.b16 %v5103, %v5102
        %v5120 = vunpack.c.l.b16 %v4701
        %v5121 = vunpack.c.l.b16 %v4711
        %v5122 = vunpack.c.l.b16 %v4725
        %v5123 = vunpack.c.l.b16 %v4735
        %v5124 = vunpack.c.l.b16 %v4749
        %v5125 = vunpack.c.l.b16 %v4759
        %v5126 = vunpack.c.l.b16 %v4773
        %v5127 = vunpack.c.l.b16 %v4783
        %v5128 = vunpack.c.l.b16 %v4797
        %v5129 = vunpack.c.l.b16 %v4807
        %v5130 = vunpack.c.l.b16 %v4821
        %v5131 = vunpack.c.l.b16 %v4831
        %v5132 = vunpack.c.l.b16 %v4845
        %v5133 = vunpack.c.l.b16 %v4855
        %v5134 = vunpack.c.l.b16 %v4869
        %v5135 = vunpack.c.l.b16 %v4879
        %v5136 = vunpack.c.l.b16 %v4893
        %v5137 = vunpack.c.l.b16 %v4903
        %v5138 = vunpack.c.l.b16 %v4917
        %v5139 = vunpack.c.l.b16 %v4927
        %v5140 = vunpack.c.l.b16 %v4941
        %v5141 = vunpack.c.l.b16 %v4951
        %v5142 = vunpack.c.l.b16 %v4965
        %v5143 = vunpack.c.l.b16 %v4975
        %v5144 = vunpack.c.l.b16 %v4989
        %v5145 = vunpack.c.l.b16 %v4999
        %v5146 = vunpack.c.l.b16 %v5013
        %v5147 = vunpack.c.l.b16 %v5023
        %v5148 = vunpack.c.l.b16 %v5037
        %v5149 = vunpack.c.l.b16 %v5047
        %v5150 = vunpack.c.l.b16 %v5061
        %v5151 = vunpack.c.l.b16 %v5071
        %v5152 = vpack.c.b16 %v5121, %v5120
        %v5153 = vpack.c.b16 %v5123, %v5122
        %v5154 = vpack.c.b16 %v5125, %v5124
        %v5155 = vpack.c.b16 %v5127, %v5126
        %v5156 = vpack.c.b16 %v5129, %v5128
        %v5157 = vpack.c.b16 %v5131, %v5130
        %v5158 = vpack.c.b16 %v5133, %v5132
        %v5159 = vpack.c.b16 %v5135, %v5134
        %v5160 = vpack.c.b16 %v5137, %v5136
        %v5161 = vpack.c.b16 %v5139, %v5138
        %v5162 = vpack.c.b16 %v5141, %v5140
        %v5163 = vpack.c.b16 %v5143, %v5142
        %v5164 = vpack.c.b16 %v5145, %v5144
        %v5165 = vpack.c.b16 %v5147, %v5146
        %v5166 = vpack.c.b16 %v5149, %v5148
        %v5167 = vpack.c.b16 %v5151, %v5150
        %5168 = vrot.lane.b32.xlu0 %v5152, 4
        %v5169 = vpop.permute.xlu0 %5168
        %5170 = vrot.lane.b32.xlu0 %v5153, 4
        %v5171 = vpop.permute.xlu0 %5170
        %5172 = vrot.lane.b32.xlu0 %v5154, 4
        %v5173 = vpop.permute.xlu0 %5172
        %5174 = vrot.lane.b32.xlu0 %v5155, 4
        %v5175 = vpop.permute.xlu0 %5174
        %5176 = vrot.lane.b32.xlu0 %v5156, 4
        %v5177 = vpop.permute.xlu0 %5176
        %5178 = vrot.lane.b32.xlu0 %v5157, 4
        %v5179 = vpop.permute.xlu0 %5178
        %5180 = vrot.lane.b32.xlu0 %v5158, 4
        %v5181 = vpop.permute.xlu0 %5180
        %5182 = vrot.lane.b32.xlu0 %v5159, 4
        %v5183 = vpop.permute.xlu0 %5182
        %5184 = vrot.lane.b32.xlu0 %v5160, 4
        %v5185 = vpop.permute.xlu0 %5184
        %5186 = vrot.lane.b32.xlu0 %v5161, 4
        %v5187 = vpop.permute.xlu0 %5186
        %5188 = vrot.lane.b32.xlu0 %v5162, 4
        %v5189 = vpop.permute.xlu0 %5188
        %5190 = vrot.lane.b32.xlu0 %v5163, 4
        %v5191 = vpop.permute.xlu0 %5190
        %5192 = vrot.lane.b32.xlu0 %v5164, 4
        %v5193 = vpop.permute.xlu0 %5192
        %5194 = vrot.lane.b32.xlu0 %v5165, 4
        %v5195 = vpop.permute.xlu0 %5194
        %5196 = vrot.lane.b32.xlu0 %v5166, 4
        %v5197 = vpop.permute.xlu0 %5196
        %5198 = vrot.lane.b32.xlu0 %v5167, 4
        %v5199 = vpop.permute.xlu0 %5198
        %v5202 = vsel %vm1808, %v5104, %v5169
        %v5205 = vsel %vm1808, %v5105, %v5171
        %v5208 = vsel %vm1808, %v5106, %v5173
        %v5211 = vsel %vm1808, %v5107, %v5175
        %v5214 = vsel %vm1808, %v5108, %v5177
        %v5217 = vsel %vm1808, %v5109, %v5179
        %v5220 = vsel %vm1808, %v5110, %v5181
        %v5223 = vsel %vm1808, %v5111, %v5183
        %v5226 = vsel %vm1808, %v5112, %v5185
        %v5229 = vsel %vm1808, %v5113, %v5187
        %v5232 = vsel %vm1808, %v5114, %v5189
        %v5235 = vsel %vm1808, %v5115, %v5191
        %v5238 = vsel %vm1808, %v5116, %v5193
        %v5241 = vsel %vm1808, %v5117, %v5195
        %v5244 = vsel %vm1808, %v5118, %v5197
        %v5247 = vsel %vm1808, %v5119, %v5199
        %s5248 = scalar_lea.vmem %s2, 16
        %v5249 = vld [vmem:[%s5248] sm:$0xf]
        %v5250 = vsel %vm2839, %v5202, 0
        %v5252 = vsel %vm2839, %v5205, 0
        %v5254 = vsel %vm2839, %v5208, 0
        %v5256 = vsel %vm2839, %v5211, 0
        %v5258 = vsel %vm2839, %v5214, 0
        %v5260 = vsel %vm2839, %v5217, 0
        %v5262 = vsel %vm2839, %v5220, 0
        %v5264 = vsel %vm2839, %v5223, 0
        %v5266 = vsel %vm2839, %v5226, 0
        %v5268 = vsel %vm2839, %v5229, 0
        %v5270 = vsel %vm2839, %v5232, 0
        %v5272 = vsel %vm2839, %v5235, 0
        %v5274 = vsel %vm2839, %v5238, 0
        %v5276 = vsel %vm2839, %v5241, 0
        %v5278 = vsel %vm2839, %v5244, 0
        %v5280 = vsel %vm2839, %v5247, 0
        %v5283 = vsel %vm2872, %v5249, 0
        %5285 = vmatpush.bf16.msra.mxu0 0
        %5286 = vmatpush.bf16.msra.mxu0 0
        %5287 = vmatpush.bf16.msra.mxu0 0
        %5288 = vmatpush.bf16.msra.mxu0 0
        %5289 = vmatpush.bf16.msra.mxu0 0
        %5290 = vmatpush.bf16.msra.mxu0 0
        %5291 = vmatpush.bf16.msra.mxu0 0
        %5292 = vmatpush.bf16.msra.mxu0 %v5283
        %5293 = vmatmul.bf16.gmra.mxu0 %v5250
        %v5294 = vpop.f32.mrf.mxu0
        %v5295 = vadd.f32 0.0, %v5294
        %v5296 = vpop.f32.mrf.mxu0
        %v5297 = vadd.f32 0.0, %v5296
        %5298 = vmatmul.bf16.gmra.mxu0 %v5252
        %v5299 = vpop.f32.mrf.mxu0
        %v5300 = vadd.f32 0.0, %v5299
        %v5301 = vpop.f32.mrf.mxu0
        %v5302 = vadd.f32 0.0, %v5301
        %5303 = vmatmul.bf16.gmra.mxu0 %v5254
        %v5304 = vpop.f32.mrf.mxu0
        %v5305 = vadd.f32 0.0, %v5304
        %v5306 = vpop.f32.mrf.mxu0
        %v5307 = vadd.f32 0.0, %v5306
        %5308 = vmatmul.bf16.gmra.mxu0 %v5256
        %v5309 = vpop.f32.mrf.mxu0
        %v5310 = vadd.f32 0.0, %v5309
        %v5311 = vpop.f32.mrf.mxu0
        %v5312 = vadd.f32 0.0, %v5311
        %5313 = vmatmul.bf16.gmra.mxu0 %v5258
        %v5314 = vpop.f32.mrf.mxu0
        %v5315 = vadd.f32 0.0, %v5314
        %v5316 = vpop.f32.mrf.mxu0
        %v5317 = vadd.f32 0.0, %v5316
        %5318 = vmatmul.bf16.gmra.mxu0 %v5260
        %v5319 = vpop.f32.mrf.mxu0
        %v5320 = vadd.f32 0.0, %v5319
        %v5321 = vpop.f32.mrf.mxu0
        %v5322 = vadd.f32 0.0, %v5321
        %5323 = vmatmul.bf16.gmra.mxu0 %v5262
        %v5324 = vpop.f32.mrf.mxu0
        %v5325 = vadd.f32 0.0, %v5324
        %v5326 = vpop.f32.mrf.mxu0
        %v5327 = vadd.f32 0.0, %v5326
        %5328 = vmatmul.bf16.gmra.mxu0 %v5264
        %v5329 = vpop.f32.mrf.mxu0
        %v5330 = vadd.f32 0.0, %v5329
        %v5331 = vpop.f32.mrf.mxu0
        %v5332 = vadd.f32 0.0, %v5331
        %5333 = vmatmul.bf16.gmra.mxu0 %v5266
        %v5334 = vpop.f32.mrf.mxu0
        %v5335 = vadd.f32 0.0, %v5334
        %v5336 = vpop.f32.mrf.mxu0
        %v5337 = vadd.f32 0.0, %v5336
        %5338 = vmatmul.bf16.gmra.mxu0 %v5268
        %v5339 = vpop.f32.mrf.mxu0
        %v5340 = vadd.f32 0.0, %v5339
        %v5341 = vpop.f32.mrf.mxu0
        %v5342 = vadd.f32 0.0, %v5341
        %5343 = vmatmul.bf16.gmra.mxu0 %v5270
        %v5344 = vpop.f32.mrf.mxu0
        %v5345 = vadd.f32 0.0, %v5344
        %v5346 = vpop.f32.mrf.mxu0
        %v5347 = vadd.f32 0.0, %v5346
        %5348 = vmatmul.bf16.gmra.mxu0 %v5272
        %v5349 = vpop.f32.mrf.mxu0
        %v5350 = vadd.f32 0.0, %v5349
        %v5351 = vpop.f32.mrf.mxu0
        %v5352 = vadd.f32 0.0, %v5351
        %5353 = vmatmul.bf16.gmra.mxu0 %v5274
        %v5354 = vpop.f32.mrf.mxu0
        %v5355 = vadd.f32 0.0, %v5354
        %v5356 = vpop.f32.mrf.mxu0
        %v5357 = vadd.f32 0.0, %v5356
        %5358 = vmatmul.bf16.gmra.mxu0 %v5276
        %v5359 = vpop.f32.mrf.mxu0
        %v5360 = vadd.f32 0.0, %v5359
        %v5361 = vpop.f32.mrf.mxu0
        %v5362 = vadd.f32 0.0, %v5361
        %5363 = vmatmul.bf16.gmra.mxu0 %v5278
        %v5364 = vpop.f32.mrf.mxu0
        %v5365 = vadd.f32 0.0, %v5364
        %v5366 = vpop.f32.mrf.mxu0
        %v5367 = vadd.f32 0.0, %v5366
        %5368 = vmatmul.bf16.gmra.mxu0 %v5280
        %v5369 = vpop.f32.mrf.mxu0
        %v5370 = vadd.f32 0.0, %v5369
        %v5371 = vpop.f32.mrf.mxu0
        %v5372 = vadd.f32 0.0, %v5371
        %5373 = vdwg.mxu0
        %v5374 = vadd.f32 %v4176, %v5295
        %v5375 = vadd.f32 %v4177, %v5297
        %v5376 = vadd.f32 %v4178, %v5300
        %v5377 = vadd.f32 %v4179, %v5302
        %v5378 = vadd.f32 %v4180, %v5305
        %v5379 = vadd.f32 %v4181, %v5307
        %v5380 = vadd.f32 %v4182, %v5310
        %v5381 = vadd.f32 %v4183, %v5312
        %v5382 = vadd.f32 %v4184, %v5315
        %v5383 = vadd.f32 %v4185, %v5317
        %v5384 = vadd.f32 %v4186, %v5320
        %v5385 = vadd.f32 %v4187, %v5322
        %v5386 = vadd.f32 %v4188, %v5325
        %v5387 = vadd.f32 %v4189, %v5327
        %v5388 = vadd.f32 %v4190, %v5330
        %v5389 = vadd.f32 %v4191, %v5332
        %v5390 = vadd.f32 %v4192, %v5335
        %v5391 = vadd.f32 %v4193, %v5337
        %v5392 = vadd.f32 %v4194, %v5340
        %v5393 = vadd.f32 %v4195, %v5342
        %v5394 = vadd.f32 %v4196, %v5345
        %v5395 = vadd.f32 %v4197, %v5347
        %v5396 = vadd.f32 %v4198, %v5350
        %v5397 = vadd.f32 %v4199, %v5352
        %v5398 = vadd.f32 %v4200, %v5355
        %v5399 = vadd.f32 %v4201, %v5357
        %v5400 = vadd.f32 %v4202, %v5360
        %v5401 = vadd.f32 %v4203, %v5362
        %v5402 = vadd.f32 %v4204, %v5365
        %v5403 = vadd.f32 %v4205, %v5367
        %v5404 = vadd.f32 %v4206, %v5370
        %v5405 = vadd.f32 %v4207, %v5372
        %v5406 = vld [vmem:[%s853] sm:$0xe]
        %v5407 = vld [vmem:[%s853 + $0xc] sm:$0xe]
        %v5408 = vld [vmem:[%s853 + $0x18] sm:$0xe]
        %v5409 = vld [vmem:[%s853 + $0x24] sm:$0xe]
        %v5410 = vld [vmem:[%s853 + $0x30] sm:$0xe]
        %v5411 = vld [vmem:[%s853 + $0x3c] sm:$0xe]
        %v5412 = vld [vmem:[%s853 + $0x48] sm:$0xe]
        %v5413 = vld [vmem:[%s853 + $0x54] sm:$0xe]
        %v5414 = vld [vmem:[%s853 + $0x60] sm:$0xe]
        %v5415 = vld [vmem:[%s853 + $0x6c] sm:$0xe]
        %v5416 = vld [vmem:[%s853 + $0x78] sm:$0xe]
        %v5417 = vld [vmem:[%s853 + $0x84] sm:$0xe]
        %v5418 = vld [vmem:[%s853 + $0x90] sm:$0xe]
        %v5419 = vld [vmem:[%s853 + $0x9c] sm:$0xe]
        %v5420 = vld [vmem:[%s853 + $0xa8] sm:$0xe]
        %v5421 = vld [vmem:[%s853 + $0xb4] sm:$0xe]
        %v5470 = vrot.slane %v5406, 5
        %v5471 = vrot.slane %v5470, 4
        %v5472 = vrot.slane %v4209, 5
        %v5473 = vsel %vm3139, %v5471, %v5472
        %v5474 = vrot.slane %v5472, 4
        %v5475 = vrot.slane %v4210, 5
        %v5476 = vsel %vm3139, %v5474, %v5475
        %v5477 = vrot.slane %v5407, 5
        %v5478 = vrot.slane %v5477, 4
        %v5479 = vrot.slane %v4212, 5
        %v5480 = vsel %vm3139, %v5478, %v5479
        %v5481 = vrot.slane %v5479, 4
        %v5482 = vrot.slane %v4213, 5
        %v5483 = vsel %vm3139, %v5481, %v5482
        %v5484 = vrot.slane %v5408, 5
        %v5485 = vrot.slane %v5484, 4
        %v5486 = vrot.slane %v4215, 5
        %v5487 = vsel %vm3139, %v5485, %v5486
        %v5488 = vrot.slane %v5486, 4
        %v5489 = vrot.slane %v4216, 5
        %v5490 = vsel %vm3139, %v5488, %v5489
        %v5491 = vrot.slane %v5409, 5
        %v5492 = vrot.slane %v5491, 4
        %v5493 = vrot.slane %v4218, 5
        %v5494 = vsel %vm3139, %v5492, %v5493
        %v5495 = vrot.slane %v5493, 4
        %v5496 = vrot.slane %v4219, 5
        %v5497 = vsel %vm3139, %v5495, %v5496
        %v5498 = vrot.slane %v5410, 5
        %v5499 = vrot.slane %v5498, 4
        %v5500 = vrot.slane %v4221, 5
        %v5501 = vsel %vm3139, %v5499, %v5500
        %v5502 = vrot.slane %v5500, 4
        %v5503 = vrot.slane %v4222, 5
        %v5504 = vsel %vm3139, %v5502, %v5503
        %v5505 = vrot.slane %v5411, 5
        %v5506 = vrot.slane %v5505, 4
        %v5507 = vrot.slane %v4224, 5
        %v5508 = vsel %vm3139, %v5506, %v5507
        %v5509 = vrot.slane %v5507, 4
        %v5510 = vrot.slane %v4225, 5
        %v5511 = vsel %vm3139, %v5509, %v5510
        %v5512 = vrot.slane %v5412, 5
        %v5513 = vrot.slane %v5512, 4
        %v5514 = vrot.slane %v4227, 5
        %v5515 = vsel %vm3139, %v5513, %v5514
        %v5516 = vrot.slane %v5514, 4
        %v5517 = vrot.slane %v4228, 5
        %v5518 = vsel %vm3139, %v5516, %v5517
        %v5519 = vrot.slane %v5413, 5
        %v5520 = vrot.slane %v5519, 4
        %v5521 = vrot.slane %v4230, 5
        %v5522 = vsel %vm3139, %v5520, %v5521
        %v5523 = vrot.slane %v5521, 4
        %v5524 = vrot.slane %v4231, 5
        %v5525 = vsel %vm3139, %v5523, %v5524
        %v5526 = vrot.slane %v5414, 5
        %v5527 = vrot.slane %v5526, 4
        %v5528 = vrot.slane %v4233, 5
        %v5529 = vsel %vm3139, %v5527, %v5528
        %v5530 = vrot.slane %v5528, 4
        %v5531 = vrot.slane %v4234, 5
        %v5532 = vsel %vm3139, %v5530, %v5531
        %v5533 = vrot.slane %v5415, 5
        %v5534 = vrot.slane %v5533, 4
        %v5535 = vrot.slane %v4236, 5
        %v5536 = vsel %vm3139, %v5534, %v5535
        %v5537 = vrot.slane %v5535, 4
        %v5538 = vrot.slane %v4237, 5
        %v5539 = vsel %vm3139, %v5537, %v5538
        %v5540 = vrot.slane %v5416, 5
        %v5541 = vrot.slane %v5540, 4
        %v5542 = vrot.slane %v4239, 5
        %v5543 = vsel %vm3139, %v5541, %v5542
        %v5544 = vrot.slane %v5542, 4
        %v5545 = vrot.slane %v4240, 5
        %v5546 = vsel %vm3139, %v5544, %v5545
        %v5547 = vrot.slane %v5417, 5
        %v5548 = vrot.slane %v5547, 4
        %v5549 = vrot.slane %v4242, 5
        %v5550 = vsel %vm3139, %v5548, %v5549
        %v5551 = vrot.slane %v5549, 4
        %v5552 = vrot.slane %v4243, 5
        %v5553 = vsel %vm3139, %v5551, %v5552
        %v5554 = vrot.slane %v5418, 5
        %v5555 = vrot.slane %v5554, 4
        %v5556 = vrot.slane %v4245, 5
        %v5557 = vsel %vm3139, %v5555, %v5556
        %v5558 = vrot.slane %v5556, 4
        %v5559 = vrot.slane %v4246, 5
        %v5560 = vsel %vm3139, %v5558, %v5559
        %v5561 = vrot.slane %v5419, 5
        %v5562 = vrot.slane %v5561, 4
        %v5563 = vrot.slane %v4248, 5
        %v5564 = vsel %vm3139, %v5562, %v5563
        %v5565 = vrot.slane %v5563, 4
        %v5566 = vrot.slane %v4249, 5
        %v5567 = vsel %vm3139, %v5565, %v5566
        %v5568 = vrot.slane %v5420, 5
        %v5569 = vrot.slane %v5568, 4
        %v5570 = vrot.slane %v4251, 5
        %v5571 = vsel %vm3139, %v5569, %v5570
        %v5572 = vrot.slane %v5570, 4
        %v5573 = vrot.slane %v4252, 5
        %v5574 = vsel %vm3139, %v5572, %v5573
        %v5575 = vrot.slane %v5421, 5
        %v5576 = vrot.slane %v5575, 4
        %v5577 = vrot.slane %v4254, 5
        %v5578 = vsel %vm3139, %v5576, %v5577
        %v5579 = vrot.slane %v5577, 4
        %v5580 = vrot.slane %v4255, 5
        %v5581 = vsel %vm3139, %v5579, %v5580
        %v5582 = vld [vmem:[%s1022] sm:$0xe]
        %v5583 = vld [vmem:[%s1022 + $0xc] sm:$0xe]
        %v5584 = vld [vmem:[%s1022 + $0x18] sm:$0xe]
        %v5585 = vld [vmem:[%s1022 + $0x24] sm:$0xe]
        %v5586 = vld [vmem:[%s1022 + $0x30] sm:$0xe]
        %v5587 = vld [vmem:[%s1022 + $0x3c] sm:$0xe]
        %v5588 = vld [vmem:[%s1022 + $0x48] sm:$0xe]
        %v5589 = vld [vmem:[%s1022 + $0x54] sm:$0xe]
        %v5590 = vld [vmem:[%s1022 + $0x60] sm:$0xe]
        %v5591 = vld [vmem:[%s1022 + $0x6c] sm:$0xe]
        %v5592 = vld [vmem:[%s1022 + $0x78] sm:$0xe]
        %v5593 = vld [vmem:[%s1022 + $0x84] sm:$0xe]
        %v5594 = vld [vmem:[%s1022 + $0x90] sm:$0xe]
        %v5595 = vld [vmem:[%s1022 + $0x9c] sm:$0xe]
        %v5596 = vld [vmem:[%s1022 + $0xa8] sm:$0xe]
        %v5597 = vld [vmem:[%s1022 + $0xb4] sm:$0xe]
        %v5646 = vrot.slane %v5582, 5
        %v5647 = vrot.slane %v5646, 4
        %v5648 = vrot.slane %v4641, 5
        %v5649 = vsel %vm3139, %v5647, %v5648
        %v5650 = vrot.slane %v5648, 4
        %v5651 = vrot.slane %v4642, 5
        %v5652 = vsel %vm3139, %v5650, %v5651
        %v5653 = vrot.slane %v5583, 5
        %v5654 = vrot.slane %v5653, 4
        %v5655 = vrot.slane %v4644, 5
        %v5656 = vsel %vm3139, %v5654, %v5655
        %v5657 = vrot.slane %v5655, 4
        %v5658 = vrot.slane %v4645, 5
        %v5659 = vsel %vm3139, %v5657, %v5658
        %v5660 = vrot.slane %v5584, 5
        %v5661 = vrot.slane %v5660, 4
        %v5662 = vrot.slane %v4647, 5
        %v5663 = vsel %vm3139, %v5661, %v5662
        %v5664 = vrot.slane %v5662, 4
        %v5665 = vrot.slane %v4648, 5
        %v5666 = vsel %vm3139, %v5664, %v5665
        %v5667 = vrot.slane %v5585, 5
        %v5668 = vrot.slane %v5667, 4
        %v5669 = vrot.slane %v4650, 5
        %v5670 = vsel %vm3139, %v5668, %v5669
        %v5671 = vrot.slane %v5669, 4
        %v5672 = vrot.slane %v4651, 5
        %v5673 = vsel %vm3139, %v5671, %v5672
        %v5674 = vrot.slane %v5586, 5
        %v5675 = vrot.slane %v5674, 4
        %v5676 = vrot.slane %v4653, 5
        %v5677 = vsel %vm3139, %v5675, %v5676
        %v5678 = vrot.slane %v5676, 4
        %v5679 = vrot.slane %v4654, 5
        %v5680 = vsel %vm3139, %v5678, %v5679
        %v5681 = vrot.slane %v5587, 5
        %v5682 = vrot.slane %v5681, 4
        %v5683 = vrot.slane %v4656, 5
        %v5684 = vsel %vm3139, %v5682, %v5683
        %v5685 = vrot.slane %v5683, 4
        %v5686 = vrot.slane %v4657, 5
        %v5687 = vsel %vm3139, %v5685, %v5686
        %v5688 = vrot.slane %v5588, 5
        %v5689 = vrot.slane %v5688, 4
        %v5690 = vrot.slane %v4659, 5
        %v5691 = vsel %vm3139, %v5689, %v5690
        %v5692 = vrot.slane %v5690, 4
        %v5693 = vrot.slane %v4660, 5
        %v5694 = vsel %vm3139, %v5692, %v5693
        %v5695 = vrot.slane %v5589, 5
        %v5696 = vrot.slane %v5695, 4
        %v5697 = vrot.slane %v4662, 5
        %v5698 = vsel %vm3139, %v5696, %v5697
        %v5699 = vrot.slane %v5697, 4
        %v5700 = vrot.slane %v4663, 5
        %v5701 = vsel %vm3139, %v5699, %v5700
        %v5702 = vrot.slane %v5590, 5
        %v5703 = vrot.slane %v5702, 4
        %v5704 = vrot.slane %v4665, 5
        %v5705 = vsel %vm3139, %v5703, %v5704
        %v5706 = vrot.slane %v5704, 4
        %v5707 = vrot.slane %v4666, 5
        %v5708 = vsel %vm3139, %v5706, %v5707
        %v5709 = vrot.slane %v5591, 5
        %v5710 = vrot.slane %v5709, 4
        %v5711 = vrot.slane %v4668, 5
        %v5712 = vsel %vm3139, %v5710, %v5711
        %v5713 = vrot.slane %v5711, 4
        %v5714 = vrot.slane %v4669, 5
        %v5715 = vsel %vm3139, %v5713, %v5714
        %v5716 = vrot.slane %v5592, 5
        %v5717 = vrot.slane %v5716, 4
        %v5718 = vrot.slane %v4671, 5
        %v5719 = vsel %vm3139, %v5717, %v5718
        %v5720 = vrot.slane %v5718, 4
        %v5721 = vrot.slane %v4672, 5
        %v5722 = vsel %vm3139, %v5720, %v5721
        %v5723 = vrot.slane %v5593, 5
        %v5724 = vrot.slane %v5723, 4
        %v5725 = vrot.slane %v4674, 5
        %v5726 = vsel %vm3139, %v5724, %v5725
        %v5727 = vrot.slane %v5725, 4
        %v5728 = vrot.slane %v4675, 5
        %v5729 = vsel %vm3139, %v5727, %v5728
        %v5730 = vrot.slane %v5594, 5
        %v5731 = vrot.slane %v5730, 4
        %v5732 = vrot.slane %v4677, 5
        %v5733 = vsel %vm3139, %v5731, %v5732
        %v5734 = vrot.slane %v5732, 4
        %v5735 = vrot.slane %v4678, 5
        %v5736 = vsel %vm3139, %v5734, %v5735
        %v5737 = vrot.slane %v5595, 5
        %v5738 = vrot.slane %v5737, 4
        %v5739 = vrot.slane %v4680, 5
        %v5740 = vsel %vm3139, %v5738, %v5739
        %v5741 = vrot.slane %v5739, 4
        %v5742 = vrot.slane %v4681, 5
        %v5743 = vsel %vm3139, %v5741, %v5742
        %v5744 = vrot.slane %v5596, 5
        %v5745 = vrot.slane %v5744, 4
        %v5746 = vrot.slane %v4683, 5
        %v5747 = vsel %vm3139, %v5745, %v5746
        %v5748 = vrot.slane %v5746, 4
        %v5749 = vrot.slane %v4684, 5
        %v5750 = vsel %vm3139, %v5748, %v5749
        %v5751 = vrot.slane %v5597, 5
        %v5752 = vrot.slane %v5751, 4
        %v5753 = vrot.slane %v4686, 5
        %v5754 = vsel %vm3139, %v5752, %v5753
        %v5755 = vrot.slane %v5753, 4
        %v5756 = vrot.slane %v4687, 5
        %v5757 = vsel %vm3139, %v5755, %v5756
        %v5758 = vunpack.c.l.b16 %v5473
        %v5759 = vunpack.c.l.b16 %v5476
        %v5760 = vunpack.c.l.b16 %v5480
        %v5761 = vunpack.c.l.b16 %v5483
        %v5762 = vunpack.c.l.b16 %v5487
        %v5763 = vunpack.c.l.b16 %v5490
        %v5764 = vunpack.c.l.b16 %v5494
        %v5765 = vunpack.c.l.b16 %v5497
        %v5766 = vunpack.c.l.b16 %v5501
        %v5767 = vunpack.c.l.b16 %v5504
        %v5768 = vunpack.c.l.b16 %v5508
        %v5769 = vunpack.c.l.b16 %v5511
        %v5770 = vunpack.c.l.b16 %v5515
        %v5771 = vunpack.c.l.b16 %v5518
        %v5772 = vunpack.c.l.b16 %v5522
        %v5773 = vunpack.c.l.b16 %v5525
        %v5774 = vunpack.c.l.b16 %v5529
        %v5775 = vunpack.c.l.b16 %v5532
        %v5776 = vunpack.c.l.b16 %v5536
        %v5777 = vunpack.c.l.b16 %v5539
        %v5778 = vunpack.c.l.b16 %v5543
        %v5779 = vunpack.c.l.b16 %v5546
        %v5780 = vunpack.c.l.b16 %v5550
        %v5781 = vunpack.c.l.b16 %v5553
        %v5782 = vunpack.c.l.b16 %v5557
        %v5783 = vunpack.c.l.b16 %v5560
        %v5784 = vunpack.c.l.b16 %v5564
        %v5785 = vunpack.c.l.b16 %v5567
        %v5786 = vunpack.c.l.b16 %v5571
        %v5787 = vunpack.c.l.b16 %v5574
        %v5788 = vunpack.c.l.b16 %v5578
        %v5789 = vunpack.c.l.b16 %v5581
        %v5790 = vpack.c.b16 %v5759, %v5758
        %v5791 = vpack.c.b16 %v5761, %v5760
        %v5792 = vpack.c.b16 %v5763, %v5762
        %v5793 = vpack.c.b16 %v5765, %v5764
        %v5794 = vpack.c.b16 %v5767, %v5766
        %v5795 = vpack.c.b16 %v5769, %v5768
        %v5796 = vpack.c.b16 %v5771, %v5770
        %v5797 = vpack.c.b16 %v5773, %v5772
        %v5798 = vpack.c.b16 %v5775, %v5774
        %v5799 = vpack.c.b16 %v5777, %v5776
        %v5800 = vpack.c.b16 %v5779, %v5778
        %v5801 = vpack.c.b16 %v5781, %v5780
        %v5802 = vpack.c.b16 %v5783, %v5782
        %v5803 = vpack.c.b16 %v5785, %v5784
        %v5804 = vpack.c.b16 %v5787, %v5786
        %v5805 = vpack.c.b16 %v5789, %v5788
        %v5806 = vunpack.c.l.b16 %v5649
        %v5807 = vunpack.c.l.b16 %v5652
        %v5808 = vunpack.c.l.b16 %v5656
        %v5809 = vunpack.c.l.b16 %v5659
        %v5810 = vunpack.c.l.b16 %v5663
        %v5811 = vunpack.c.l.b16 %v5666
        %v5812 = vunpack.c.l.b16 %v5670
        %v5813 = vunpack.c.l.b16 %v5673
        %v5814 = vunpack.c.l.b16 %v5677
        %v5815 = vunpack.c.l.b16 %v5680
        %v5816 = vunpack.c.l.b16 %v5684
        %v5817 = vunpack.c.l.b16 %v5687
        %v5818 = vunpack.c.l.b16 %v5691
        %v5819 = vunpack.c.l.b16 %v5694
        %v5820 = vunpack.c.l.b16 %v5698
        %v5821 = vunpack.c.l.b16 %v5701
        %v5822 = vunpack.c.l.b16 %v5705
        %v5823 = vunpack.c.l.b16 %v5708
        %v5824 = vunpack.c.l.b16 %v5712
        %v5825 = vunpack.c.l.b16 %v5715
        %v5826 = vunpack.c.l.b16 %v5719
        %v5827 = vunpack.c.l.b16 %v5722
        %v5828 = vunpack.c.l.b16 %v5726
        %v5829 = vunpack.c.l.b16 %v5729
        %v5830 = vunpack.c.l.b16 %v5733
        %v5831 = vunpack.c.l.b16 %v5736
        %v5832 = vunpack.c.l.b16 %v5740
        %v5833 = vunpack.c.l.b16 %v5743
        %v5834 = vunpack.c.l.b16 %v5747
        %v5835 = vunpack.c.l.b16 %v5750
        %v5836 = vunpack.c.l.b16 %v5754
        %v5837 = vunpack.c.l.b16 %v5757
        %v5838 = vpack.c.b16 %v5807, %v5806
        %v5839 = vpack.c.b16 %v5809, %v5808
        %v5840 = vpack.c.b16 %v5811, %v5810
        %v5841 = vpack.c.b16 %v5813, %v5812
        %v5842 = vpack.c.b16 %v5815, %v5814
        %v5843 = vpack.c.b16 %v5817, %v5816
        %v5844 = vpack.c.b16 %v5819, %v5818
        %v5845 = vpack.c.b16 %v5821, %v5820
        %v5846 = vpack.c.b16 %v5823, %v5822
        %v5847 = vpack.c.b16 %v5825, %v5824
        %v5848 = vpack.c.b16 %v5827, %v5826
        %v5849 = vpack.c.b16 %v5829, %v5828
        %v5850 = vpack.c.b16 %v5831, %v5830
        %v5851 = vpack.c.b16 %v5833, %v5832
        %v5852 = vpack.c.b16 %v5835, %v5834
        %v5853 = vpack.c.b16 %v5837, %v5836
        %5854 = vrot.lane.b32.xlu0 %v5838, 4
        %v5855 = vpop.permute.xlu0 %5854
        %5856 = vrot.lane.b32.xlu0 %v5839, 4
        %v5857 = vpop.permute.xlu0 %5856
        %5858 = vrot.lane.b32.xlu0 %v5840, 4
        %v5859 = vpop.permute.xlu0 %5858
        %5860 = vrot.lane.b32.xlu0 %v5841, 4
        %v5861 = vpop.permute.xlu0 %5860
        %5862 = vrot.lane.b32.xlu0 %v5842, 4
        %v5863 = vpop.permute.xlu0 %5862
        %5864 = vrot.lane.b32.xlu0 %v5843, 4
        %v5865 = vpop.permute.xlu0 %5864
        %5866 = vrot.lane.b32.xlu0 %v5844, 4
        %v5867 = vpop.permute.xlu0 %5866
        %5868 = vrot.lane.b32.xlu0 %v5845, 4
        %v5869 = vpop.permute.xlu0 %5868
        %5870 = vrot.lane.b32.xlu0 %v5846, 4
        %v5871 = vpop.permute.xlu0 %5870
        %5872 = vrot.lane.b32.xlu0 %v5847, 4
        %v5873 = vpop.permute.xlu0 %5872
        %5874 = vrot.lane.b32.xlu0 %v5848, 4
        %v5875 = vpop.permute.xlu0 %5874
        %5876 = vrot.lane.b32.xlu0 %v5849, 4
        %v5877 = vpop.permute.xlu0 %5876
        %5878 = vrot.lane.b32.xlu0 %v5850, 4
        %v5879 = vpop.permute.xlu0 %5878
        %5880 = vrot.lane.b32.xlu0 %v5851, 4
        %v5881 = vpop.permute.xlu0 %5880
        %5882 = vrot.lane.b32.xlu0 %v5852, 4
        %v5883 = vpop.permute.xlu0 %5882
        %5884 = vrot.lane.b32.xlu0 %v5853, 4
        %v5885 = vpop.permute.xlu0 %5884
        %v5888 = vsel %vm1808, %v5790, %v5855
        %v5891 = vsel %vm1808, %v5791, %v5857
        %v5894 = vsel %vm1808, %v5792, %v5859
        %v5897 = vsel %vm1808, %v5793, %v5861
        %v5900 = vsel %vm1808, %v5794, %v5863
        %v5903 = vsel %vm1808, %v5795, %v5865
        %v5906 = vsel %vm1808, %v5796, %v5867
        %v5909 = vsel %vm1808, %v5797, %v5869
        %v5912 = vsel %vm1808, %v5798, %v5871
        %v5915 = vsel %vm1808, %v5799, %v5873
        %v5918 = vsel %vm1808, %v5800, %v5875
        %v5921 = vsel %vm1808, %v5801, %v5877
        %v5924 = vsel %vm1808, %v5802, %v5879
        %v5927 = vsel %vm1808, %v5803, %v5881
        %v5930 = vsel %vm1808, %v5804, %v5883
        %v5933 = vsel %vm1808, %v5805, %v5885
        %s5934 = scalar_lea.vmem %s2, 20
        %v5935 = vld [vmem:[%s5934] sm:$0xf]
        %v5936 = vsel %vm2839, %v5888, 0
        %v5938 = vsel %vm2839, %v5891, 0
        %v5940 = vsel %vm2839, %v5894, 0
        %v5942 = vsel %vm2839, %v5897, 0
        %v5944 = vsel %vm2839, %v5900, 0
        %v5946 = vsel %vm2839, %v5903, 0
        %v5948 = vsel %vm2839, %v5906, 0
        %v5950 = vsel %vm2839, %v5909, 0
        %v5952 = vsel %vm2839, %v5912, 0
        %v5954 = vsel %vm2839, %v5915, 0
        %v5956 = vsel %vm2839, %v5918, 0
        %v5958 = vsel %vm2839, %v5921, 0
        %v5960 = vsel %vm2839, %v5924, 0
        %v5962 = vsel %vm2839, %v5927, 0
        %v5964 = vsel %vm2839, %v5930, 0
        %v5966 = vsel %vm2839, %v5933, 0
        %v5969 = vsel %vm2872, %v5935, 0
        %5971 = vmatpush.bf16.msra.mxu0 0
        %5972 = vmatpush.bf16.msra.mxu0 0
        %5973 = vmatpush.bf16.msra.mxu0 0
        %5974 = vmatpush.bf16.msra.mxu0 0
        %5975 = vmatpush.bf16.msra.mxu0 0
        %5976 = vmatpush.bf16.msra.mxu0 0
        %5977 = vmatpush.bf16.msra.mxu0 0
        %5978 = vmatpush.bf16.msra.mxu0 %v5969
        %5979 = vmatmul.bf16.gmra.mxu0 %v5936
        %v5980 = vpop.f32.mrf.mxu0
        %v5981 = vadd.f32 0.0, %v5980
        %v5982 = vpop.f32.mrf.mxu0
        %v5983 = vadd.f32 0.0, %v5982
        %5984 = vmatmul.bf16.gmra.mxu0 %v5938
        %v5985 = vpop.f32.mrf.mxu0
        %v5986 = vadd.f32 0.0, %v5985
        %v5987 = vpop.f32.mrf.mxu0
        %v5988 = vadd.f32 0.0, %v5987
        %5989 = vmatmul.bf16.gmra.mxu0 %v5940
        %v5990 = vpop.f32.mrf.mxu0
        %v5991 = vadd.f32 0.0, %v5990
        %v5992 = vpop.f32.mrf.mxu0
        %v5993 = vadd.f32 0.0, %v5992
        %5994 = vmatmul.bf16.gmra.mxu0 %v5942
        %v5995 = vpop.f32.mrf.mxu0
        %v5996 = vadd.f32 0.0, %v5995
        %v5997 = vpop.f32.mrf.mxu0
        %v5998 = vadd.f32 0.0, %v5997
        %5999 = vmatmul.bf16.gmra.mxu0 %v5944
        %v6000 = vpop.f32.mrf.mxu0
        %v6001 = vadd.f32 0.0, %v6000
        %v6002 = vpop.f32.mrf.mxu0
        %v6003 = vadd.f32 0.0, %v6002
        %6004 = vmatmul.bf16.gmra.mxu0 %v5946
        %v6005 = vpop.f32.mrf.mxu0
        %v6006 = vadd.f32 0.0, %v6005
        %v6007 = vpop.f32.mrf.mxu0
        %v6008 = vadd.f32 0.0, %v6007
        %6009 = vmatmul.bf16.gmra.mxu0 %v5948
        %v6010 = vpop.f32.mrf.mxu0
        %v6011 = vadd.f32 0.0, %v6010
        %v6012 = vpop.f32.mrf.mxu0
        %v6013 = vadd.f32 0.0, %v6012
        %6014 = vmatmul.bf16.gmra.mxu0 %v5950
        %v6015 = vpop.f32.mrf.mxu0
        %v6016 = vadd.f32 0.0, %v6015
        %v6017 = vpop.f32.mrf.mxu0
        %v6018 = vadd.f32 0.0, %v6017
        %6019 = vmatmul.bf16.gmra.mxu0 %v5952
        %v6020 = vpop.f32.mrf.mxu0
        %v6021 = vadd.f32 0.0, %v6020
        %v6022 = vpop.f32.mrf.mxu0
        %v6023 = vadd.f32 0.0, %v6022
        %6024 = vmatmul.bf16.gmra.mxu0 %v5954
        %v6025 = vpop.f32.mrf.mxu0
        %v6026 = vadd.f32 0.0, %v6025
        %v6027 = vpop.f32.mrf.mxu0
        %v6028 = vadd.f32 0.0, %v6027
        %6029 = vmatmul.bf16.gmra.mxu0 %v5956
        %v6030 = vpop.f32.mrf.mxu0
        %v6031 = vadd.f32 0.0, %v6030
        %v6032 = vpop.f32.mrf.mxu0
        %v6033 = vadd.f32 0.0, %v6032
        %6034 = vmatmul.bf16.gmra.mxu0 %v5958
        %v6035 = vpop.f32.mrf.mxu0
        %v6036 = vadd.f32 0.0, %v6035
        %v6037 = vpop.f32.mrf.mxu0
        %v6038 = vadd.f32 0.0, %v6037
        %6039 = vmatmul.bf16.gmra.mxu0 %v5960
        %v6040 = vpop.f32.mrf.mxu0
        %v6041 = vadd.f32 0.0, %v6040
        %v6042 = vpop.f32.mrf.mxu0
        %v6043 = vadd.f32 0.0, %v6042
        %6044 = vmatmul.bf16.gmra.mxu0 %v5962
        %v6045 = vpop.f32.mrf.mxu0
        %v6046 = vadd.f32 0.0, %v6045
        %v6047 = vpop.f32.mrf.mxu0
        %v6048 = vadd.f32 0.0, %v6047
        %6049 = vmatmul.bf16.gmra.mxu0 %v5964
        %v6050 = vpop.f32.mrf.mxu0
        %v6051 = vadd.f32 0.0, %v6050
        %v6052 = vpop.f32.mrf.mxu0
        %v6053 = vadd.f32 0.0, %v6052
        %6054 = vmatmul.bf16.gmra.mxu0 %v5966
        %v6055 = vpop.f32.mrf.mxu0
        %v6056 = vadd.f32 0.0, %v6055
        %v6057 = vpop.f32.mrf.mxu0
        %v6058 = vadd.f32 0.0, %v6057
        %6059 = vdwg.mxu0
        %v6060 = vadd.f32 %v5374, %v5981
        %v6061 = vadd.f32 %v5375, %v5983
        %v6062 = vadd.f32 %v5376, %v5986
        %v6063 = vadd.f32 %v5377, %v5988
        %v6064 = vadd.f32 %v5378, %v5991
        %v6065 = vadd.f32 %v5379, %v5993
        %v6066 = vadd.f32 %v5380, %v5996
        %v6067 = vadd.f32 %v5381, %v5998
        %v6068 = vadd.f32 %v5382, %v6001
        %v6069 = vadd.f32 %v5383, %v6003
        %v6070 = vadd.f32 %v5384, %v6006
        %v6071 = vadd.f32 %v5385, %v6008
        %v6072 = vadd.f32 %v5386, %v6011
        %v6073 = vadd.f32 %v5387, %v6013
        %v6074 = vadd.f32 %v5388, %v6016
        %v6075 = vadd.f32 %v5389, %v6018
        %v6076 = vadd.f32 %v5390, %v6021
        %v6077 = vadd.f32 %v5391, %v6023
        %v6078 = vadd.f32 %v5392, %v6026
        %v6079 = vadd.f32 %v5393, %v6028
        %v6080 = vadd.f32 %v5394, %v6031
        %v6081 = vadd.f32 %v5395, %v6033
        %v6082 = vadd.f32 %v5396, %v6036
        %v6083 = vadd.f32 %v5397, %v6038
        %v6084 = vadd.f32 %v5398, %v6041
        %v6085 = vadd.f32 %v5399, %v6043
        %v6086 = vadd.f32 %v5400, %v6046
        %v6087 = vadd.f32 %v5401, %v6048
        %v6088 = vadd.f32 %v5402, %v6051
        %v6089 = vadd.f32 %v5403, %v6053
        %v6090 = vadd.f32 %v5404, %v6056
        %v6091 = vadd.f32 %v5405, %v6058
        %s6092 = scalar_lea.vmem [#allocation2], 24
        %v6093 = vld [vmem:[%s6092] sm:$0xf]
        %v6094 = vld [vmem:[%s6092 + $0x4] sm:$0xf]
        %v6095 = vld [vmem:[%s6092 + $0xc] sm:$0xf]
        %v6096 = vld [vmem:[%s6092 + $0x10] sm:$0xf]
        %v6097 = vld [vmem:[%s6092 + $0x18] sm:$0xf]
        %v6098 = vld [vmem:[%s6092 + $0x1c] sm:$0xf]
        %v6099 = vld [vmem:[%s6092 + $0x24] sm:$0xf]
        %v6100 = vld [vmem:[%s6092 + $0x28] sm:$0xf]
        %v6101 = vld [vmem:[%s6092 + $0x30] sm:$0xf]
        %v6102 = vld [vmem:[%s6092 + $0x34] sm:$0xf]
        %v6103 = vld [vmem:[%s6092 + $0x3c] sm:$0xf]
        %v6104 = vld [vmem:[%s6092 + $0x40] sm:$0xf]
        %v6105 = vld [vmem:[%s6092 + $0x48] sm:$0xf]
        %v6106 = vld [vmem:[%s6092 + $0x4c] sm:$0xf]
        %v6107 = vld [vmem:[%s6092 + $0x54] sm:$0xf]
        %v6108 = vld [vmem:[%s6092 + $0x58] sm:$0xf]
        %v6109 = vld [vmem:[%s6092 + $0x60] sm:$0xf]
        %v6110 = vld [vmem:[%s6092 + $0x64] sm:$0xf]
        %v6111 = vld [vmem:[%s6092 + $0x6c] sm:$0xf]
        %v6112 = vld [vmem:[%s6092 + $0x70] sm:$0xf]
        %v6113 = vld [vmem:[%s6092 + $0x78] sm:$0xf]
        %v6114 = vld [vmem:[%s6092 + $0x7c] sm:$0xf]
        %v6115 = vld [vmem:[%s6092 + $0x84] sm:$0xf]
        %v6116 = vld [vmem:[%s6092 + $0x88] sm:$0xf]
        %v6117 = vld [vmem:[%s6092 + $0x90] sm:$0xf]
        %v6118 = vld [vmem:[%s6092 + $0x94] sm:$0xf]
        %v6119 = vld [vmem:[%s6092 + $0x9c] sm:$0xf]
        %v6120 = vld [vmem:[%s6092 + $0xa0] sm:$0xf]
        %v6121 = vld [vmem:[%s6092 + $0xa8] sm:$0xf]
        %v6122 = vld [vmem:[%s6092 + $0xac] sm:$0xf]
        %v6123 = vld [vmem:[%s6092 + $0xb4] sm:$0xf]
        %v6124 = vld [vmem:[%s6092 + $0xb8] sm:$0xf]
        %v6125 = vld [vmem:[%s1058] sm:$0xf]
        %v6126 = vld [vmem:[%s1058 + $0x4] sm:$0xf]
        %v6127 = vld [vmem:[%s1058 + $0xc] sm:$0xf]
        %v6128 = vld [vmem:[%s1058 + $0x10] sm:$0xf]
        %v6129 = vld [vmem:[%s1058 + $0x18] sm:$0xf]
        %v6130 = vld [vmem:[%s1058 + $0x1c] sm:$0xf]
        %v6131 = vld [vmem:[%s1058 + $0x24] sm:$0xf]
        %v6132 = vld [vmem:[%s1058 + $0x28] sm:$0xf]
        %v6133 = vld [vmem:[%s1058 + $0x30] sm:$0xf]
        %v6134 = vld [vmem:[%s1058 + $0x34] sm:$0xf]
        %v6135 = vld [vmem:[%s1058 + $0x3c] sm:$0xf]
        %v6136 = vld [vmem:[%s1058 + $0x40] sm:$0xf]
        %v6137 = vld [vmem:[%s1058 + $0x48] sm:$0xf]
        %v6138 = vld [vmem:[%s1058 + $0x4c] sm:$0xf]
        %v6139 = vld [vmem:[%s1058 + $0x54] sm:$0xf]
        %v6140 = vld [vmem:[%s1058 + $0x58] sm:$0xf]
        %v6141 = vld [vmem:[%s1058 + $0x60] sm:$0xf]
        %v6142 = vld [vmem:[%s1058 + $0x64] sm:$0xf]
        %v6143 = vld [vmem:[%s1058 + $0x6c] sm:$0xf]
        %v6144 = vld [vmem:[%s1058 + $0x70] sm:$0xf]
        %v6145 = vld [vmem:[%s1058 + $0x78] sm:$0xf]
        %v6146 = vld [vmem:[%s1058 + $0x7c] sm:$0xf]
        %v6147 = vld [vmem:[%s1058 + $0x84] sm:$0xf]
        %v6148 = vld [vmem:[%s1058 + $0x88] sm:$0xf]
        %v6149 = vld [vmem:[%s1058 + $0x90] sm:$0xf]
        %v6150 = vld [vmem:[%s1058 + $0x94] sm:$0xf]
        %v6151 = vld [vmem:[%s1058 + $0x9c] sm:$0xf]
        %v6152 = vld [vmem:[%s1058 + $0xa0] sm:$0xf]
        %v6153 = vld [vmem:[%s1058 + $0xa8] sm:$0xf]
        %v6154 = vld [vmem:[%s1058 + $0xac] sm:$0xf]
        %v6155 = vld [vmem:[%s1058 + $0xb4] sm:$0xf]
        %v6156 = vld [vmem:[%s1058 + $0xb8] sm:$0xf]
        %v6189 = vunpack.c.l.b16 %v6093
        %v6190 = vunpack.c.l.b16 %v6094
        %v6191 = vunpack.c.l.b16 %v6095
        %v6192 = vunpack.c.l.b16 %v6096
        %v6193 = vunpack.c.l.b16 %v6097
        %v6194 = vunpack.c.l.b16 %v6098
        %v6195 = vunpack.c.l.b16 %v6099
        %v6196 = vunpack.c.l.b16 %v6100
        %v6197 = vunpack.c.l.b16 %v6101
        %v6198 = vunpack.c.l.b16 %v6102
        %v6199 = vunpack.c.l.b16 %v6103
        %v6200 = vunpack.c.l.b16 %v6104
        %v6201 = vunpack.c.l.b16 %v6105
        %v6202 = vunpack.c.l.b16 %v6106
        %v6203 = vunpack.c.l.b16 %v6107
        %v6204 = vunpack.c.l.b16 %v6108
        %v6205 = vunpack.c.l.b16 %v6109
        %v6206 = vunpack.c.l.b16 %v6110
        %v6207 = vunpack.c.l.b16 %v6111
        %v6208 = vunpack.c.l.b16 %v6112
        %v6209 = vunpack.c.l.b16 %v6113
        %v6210 = vunpack.c.l.b16 %v6114
        %v6211 = vunpack.c.l.b16 %v6115
        %v6212 = vunpack.c.l.b16 %v6116
        %v6213 = vunpack.c.l.b16 %v6117
        %v6214 = vunpack.c.l.b16 %v6118
        %v6215 = vunpack.c.l.b16 %v6119
        %v6216 = vunpack.c.l.b16 %v6120
        %v6217 = vunpack.c.l.b16 %v6121
        %v6218 = vunpack.c.l.b16 %v6122
        %v6219 = vunpack.c.l.b16 %v6123
        %v6220 = vunpack.c.l.b16 %v6124
        %v6221 = vpack.c.b16 %v6190, %v6189
        %v6222 = vpack.c.b16 %v6192, %v6191
        %v6223 = vpack.c.b16 %v6194, %v6193
        %v6224 = vpack.c.b16 %v6196, %v6195
        %v6225 = vpack.c.b16 %v6198, %v6197
        %v6226 = vpack.c.b16 %v6200, %v6199
        %v6227 = vpack.c.b16 %v6202, %v6201
        %v6228 = vpack.c.b16 %v6204, %v6203
        %v6229 = vpack.c.b16 %v6206, %v6205
        %v6230 = vpack.c.b16 %v6208, %v6207
        %v6231 = vpack.c.b16 %v6210, %v6209
        %v6232 = vpack.c.b16 %v6212, %v6211
        %v6233 = vpack.c.b16 %v6214, %v6213
        %v6234 = vpack.c.b16 %v6216, %v6215
        %v6235 = vpack.c.b16 %v6218, %v6217
        %v6236 = vpack.c.b16 %v6220, %v6219
        %v6269 = vunpack.c.l.b16 %v6125
        %v6270 = vunpack.c.l.b16 %v6126
        %v6271 = vunpack.c.l.b16 %v6127
        %v6272 = vunpack.c.l.b16 %v6128
        %v6273 = vunpack.c.l.b16 %v6129
        %v6274 = vunpack.c.l.b16 %v6130
        %v6275 = vunpack.c.l.b16 %v6131
        %v6276 = vunpack.c.l.b16 %v6132
        %v6277 = vunpack.c.l.b16 %v6133
        %v6278 = vunpack.c.l.b16 %v6134
        %v6279 = vunpack.c.l.b16 %v6135
        %v6280 = vunpack.c.l.b16 %v6136
        %v6281 = vunpack.c.l.b16 %v6137
        %v6282 = vunpack.c.l.b16 %v6138
        %v6283 = vunpack.c.l.b16 %v6139
        %v6284 = vunpack.c.l.b16 %v6140
        %v6285 = vunpack.c.l.b16 %v6141
        %v6286 = vunpack.c.l.b16 %v6142
        %v6287 = vunpack.c.l.b16 %v6143
        %v6288 = vunpack.c.l.b16 %v6144
        %v6289 = vunpack.c.l.b16 %v6145
        %v6290 = vunpack.c.l.b16 %v6146
        %v6291 = vunpack.c.l.b16 %v6147
        %v6292 = vunpack.c.l.b16 %v6148
        %v6293 = vunpack.c.l.b16 %v6149
        %v6294 = vunpack.c.l.b16 %v6150
        %v6295 = vunpack.c.l.b16 %v6151
        %v6296 = vunpack.c.l.b16 %v6152
        %v6297 = vunpack.c.l.b16 %v6153
        %v6298 = vunpack.c.l.b16 %v6154
        %v6299 = vunpack.c.l.b16 %v6155
        %v6300 = vunpack.c.l.b16 %v6156
        %v6301 = vpack.c.b16 %v6270, %v6269
        %v6302 = vpack.c.b16 %v6272, %v6271
        %v6303 = vpack.c.b16 %v6274, %v6273
        %v6304 = vpack.c.b16 %v6276, %v6275
        %v6305 = vpack.c.b16 %v6278, %v6277
        %v6306 = vpack.c.b16 %v6280, %v6279
        %v6307 = vpack.c.b16 %v6282, %v6281
        %v6308 = vpack.c.b16 %v6284, %v6283
        %v6309 = vpack.c.b16 %v6286, %v6285
        %v6310 = vpack.c.b16 %v6288, %v6287
        %v6311 = vpack.c.b16 %v6290, %v6289
        %v6312 = vpack.c.b16 %v6292, %v6291
        %v6313 = vpack.c.b16 %v6294, %v6293
        %v6314 = vpack.c.b16 %v6296, %v6295
        %v6315 = vpack.c.b16 %v6298, %v6297
        %v6316 = vpack.c.b16 %v6300, %v6299
        %6317 = vrot.lane.b32.xlu0 %v6301, 4
        %v6318 = vpop.permute.xlu0 %6317
        %6319 = vrot.lane.b32.xlu0 %v6302, 4
        %v6320 = vpop.permute.xlu0 %6319
        %6321 = vrot.lane.b32.xlu0 %v6303, 4
        %v6322 = vpop.permute.xlu0 %6321
        %6323 = vrot.lane.b32.xlu0 %v6304, 4
        %v6324 = vpop.permute.xlu0 %6323
        %6325 = vrot.lane.b32.xlu0 %v6305, 4
        %v6326 = vpop.permute.xlu0 %6325
        %6327 = vrot.lane.b32.xlu0 %v6306, 4
        %v6328 = vpop.permute.xlu0 %6327
        %6329 = vrot.lane.b32.xlu0 %v6307, 4
        %v6330 = vpop.permute.xlu0 %6329
        %6331 = vrot.lane.b32.xlu0 %v6308, 4
        %v6332 = vpop.permute.xlu0 %6331
        %6333 = vrot.lane.b32.xlu0 %v6309, 4
        %v6334 = vpop.permute.xlu0 %6333
        %6335 = vrot.lane.b32.xlu0 %v6310, 4
        %v6336 = vpop.permute.xlu0 %6335
        %6337 = vrot.lane.b32.xlu0 %v6311, 4
        %v6338 = vpop.permute.xlu0 %6337
        %6339 = vrot.lane.b32.xlu0 %v6312, 4
        %v6340 = vpop.permute.xlu0 %6339
        %6341 = vrot.lane.b32.xlu0 %v6313, 4
        %v6342 = vpop.permute.xlu0 %6341
        %6343 = vrot.lane.b32.xlu0 %v6314, 4
        %v6344 = vpop.permute.xlu0 %6343
        %6345 = vrot.lane.b32.xlu0 %v6315, 4
        %v6346 = vpop.permute.xlu0 %6345
        %6347 = vrot.lane.b32.xlu0 %v6316, 4
        %v6348 = vpop.permute.xlu0 %6347
        %v6351 = vsel %vm1808, %v6221, %v6318
        %v6354 = vsel %vm1808, %v6222, %v6320
        %v6357 = vsel %vm1808, %v6223, %v6322
        %v6360 = vsel %vm1808, %v6224, %v6324
        %v6363 = vsel %vm1808, %v6225, %v6326
        %v6366 = vsel %vm1808, %v6226, %v6328
        %v6369 = vsel %vm1808, %v6227, %v6330
        %v6372 = vsel %vm1808, %v6228, %v6332
        %v6375 = vsel %vm1808, %v6229, %v6334
        %v6378 = vsel %vm1808, %v6230, %v6336
        %v6381 = vsel %vm1808, %v6231, %v6338
        %v6384 = vsel %vm1808, %v6232, %v6340
        %v6387 = vsel %vm1808, %v6233, %v6342
        %v6390 = vsel %vm1808, %v6234, %v6344
        %v6393 = vsel %vm1808, %v6235, %v6346
        %v6396 = vsel %vm1808, %v6236, %v6348
        %s6397 = scalar_lea.vmem %s2, 24
        %v6398 = vld [vmem:[%s6397] sm:$0xf]
        %v6399 = vsel %vm2839, %v6351, 0
        %v6401 = vsel %vm2839, %v6354, 0
        %v6403 = vsel %vm2839, %v6357, 0
        %v6405 = vsel %vm2839, %v6360, 0
        %v6407 = vsel %vm2839, %v6363, 0
        %v6409 = vsel %vm2839, %v6366, 0
        %v6411 = vsel %vm2839, %v6369, 0
        %v6413 = vsel %vm2839, %v6372, 0
        %v6415 = vsel %vm2839, %v6375, 0
        %v6417 = vsel %vm2839, %v6378, 0
        %v6419 = vsel %vm2839, %v6381, 0
        %v6421 = vsel %vm2839, %v6384, 0
        %v6423 = vsel %vm2839, %v6387, 0
        %v6425 = vsel %vm2839, %v6390, 0
        %v6427 = vsel %vm2839, %v6393, 0
        %v6429 = vsel %vm2839, %v6396, 0
        %v6432 = vsel %vm2872, %v6398, 0
        %6434 = vmatpush.bf16.msra.mxu0 0
        %6435 = vmatpush.bf16.msra.mxu0 0
        %6436 = vmatpush.bf16.msra.mxu0 0
        %6437 = vmatpush.bf16.msra.mxu0 0
        %6438 = vmatpush.bf16.msra.mxu0 0
        %6439 = vmatpush.bf16.msra.mxu0 0
        %6440 = vmatpush.bf16.msra.mxu0 0
        %6441 = vmatpush.bf16.msra.mxu0 %v6432
        %6442 = vmatmul.bf16.gmra.mxu0 %v6399
        %v6443 = vpop.f32.mrf.mxu0
        %v6444 = vadd.f32 0.0, %v6443
        %v6445 = vpop.f32.mrf.mxu0
        %v6446 = vadd.f32 0.0, %v6445
        %6447 = vmatmul.bf16.gmra.mxu0 %v6401
        %v6448 = vpop.f32.mrf.mxu0
        %v6449 = vadd.f32 0.0, %v6448
        %v6450 = vpop.f32.mrf.mxu0
        %v6451 = vadd.f32 0.0, %v6450
        %6452 = vmatmul.bf16.gmra.mxu0 %v6403
        %v6453 = vpop.f32.mrf.mxu0
        %v6454 = vadd.f32 0.0, %v6453
        %v6455 = vpop.f32.mrf.mxu0
        %v6456 = vadd.f32 0.0, %v6455
        %6457 = vmatmul.bf16.gmra.mxu0 %v6405
        %v6458 = vpop.f32.mrf.mxu0
        %v6459 = vadd.f32 0.0, %v6458
        %v6460 = vpop.f32.mrf.mxu0
        %v6461 = vadd.f32 0.0, %v6460
        %6462 = vmatmul.bf16.gmra.mxu0 %v6407
        %v6463 = vpop.f32.mrf.mxu0
        %v6464 = vadd.f32 0.0, %v6463
        %v6465 = vpop.f32.mrf.mxu0
        %v6466 = vadd.f32 0.0, %v6465
        %6467 = vmatmul.bf16.gmra.mxu0 %v6409
        %v6468 = vpop.f32.mrf.mxu0
        %v6469 = vadd.f32 0.0, %v6468
        %v6470 = vpop.f32.mrf.mxu0
        %v6471 = vadd.f32 0.0, %v6470
        %6472 = vmatmul.bf16.gmra.mxu0 %v6411
        %v6473 = vpop.f32.mrf.mxu0
        %v6474 = vadd.f32 0.0, %v6473
        %v6475 = vpop.f32.mrf.mxu0
        %v6476 = vadd.f32 0.0, %v6475
        %6477 = vmatmul.bf16.gmra.mxu0 %v6413
        %v6478 = vpop.f32.mrf.mxu0
        %v6479 = vadd.f32 0.0, %v6478
        %v6480 = vpop.f32.mrf.mxu0
        %v6481 = vadd.f32 0.0, %v6480
        %6482 = vmatmul.bf16.gmra.mxu0 %v6415
        %v6483 = vpop.f32.mrf.mxu0
        %v6484 = vadd.f32 0.0, %v6483
        %v6485 = vpop.f32.mrf.mxu0
        %v6486 = vadd.f32 0.0, %v6485
        %6487 = vmatmul.bf16.gmra.mxu0 %v6417
        %v6488 = vpop.f32.mrf.mxu0
        %v6489 = vadd.f32 0.0, %v6488
        %v6490 = vpop.f32.mrf.mxu0
        %v6491 = vadd.f32 0.0, %v6490
        %6492 = vmatmul.bf16.gmra.mxu0 %v6419
        %v6493 = vpop.f32.mrf.mxu0
        %v6494 = vadd.f32 0.0, %v6493
        %v6495 = vpop.f32.mrf.mxu0
        %v6496 = vadd.f32 0.0, %v6495
        %6497 = vmatmul.bf16.gmra.mxu0 %v6421
        %v6498 = vpop.f32.mrf.mxu0
        %v6499 = vadd.f32 0.0, %v6498
        %v6500 = vpop.f32.mrf.mxu0
        %v6501 = vadd.f32 0.0, %v6500
        %6502 = vmatmul.bf16.gmra.mxu0 %v6423
        %v6503 = vpop.f32.mrf.mxu0
        %v6504 = vadd.f32 0.0, %v6503
        %v6505 = vpop.f32.mrf.mxu0
        %v6506 = vadd.f32 0.0, %v6505
        %6507 = vmatmul.bf16.gmra.mxu0 %v6425
        %v6508 = vpop.f32.mrf.mxu0
        %v6509 = vadd.f32 0.0, %v6508
        %v6510 = vpop.f32.mrf.mxu0
        %v6511 = vadd.f32 0.0, %v6510
        %6512 = vmatmul.bf16.gmra.mxu0 %v6427
        %v6513 = vpop.f32.mrf.mxu0
        %v6514 = vadd.f32 0.0, %v6513
        %v6515 = vpop.f32.mrf.mxu0
        %v6516 = vadd.f32 0.0, %v6515
        %6517 = vmatmul.bf16.gmra.mxu0 %v6429
        %v6518 = vpop.f32.mrf.mxu0
        %v6519 = vadd.f32 0.0, %v6518
        %v6520 = vpop.f32.mrf.mxu0
        %v6521 = vadd.f32 0.0, %v6520
        %6522 = vdwg.mxu0
        %v6523 = vadd.f32 %v6060, %v6444
        %v6524 = vadd.f32 %v6061, %v6446
        %v6525 = vadd.f32 %v6062, %v6449
        %v6526 = vadd.f32 %v6063, %v6451
        %v6527 = vadd.f32 %v6064, %v6454
        %v6528 = vadd.f32 %v6065, %v6456
        %v6529 = vadd.f32 %v6066, %v6459
        %v6530 = vadd.f32 %v6067, %v6461
        %v6531 = vadd.f32 %v6068, %v6464
        %v6532 = vadd.f32 %v6069, %v6466
        %v6533 = vadd.f32 %v6070, %v6469
        %v6534 = vadd.f32 %v6071, %v6471
        %v6535 = vadd.f32 %v6072, %v6474
        %v6536 = vadd.f32 %v6073, %v6476
        %v6537 = vadd.f32 %v6074, %v6479
        %v6538 = vadd.f32 %v6075, %v6481
        %v6539 = vadd.f32 %v6076, %v6484
        %v6540 = vadd.f32 %v6077, %v6486
        %v6541 = vadd.f32 %v6078, %v6489
        %v6542 = vadd.f32 %v6079, %v6491
        %v6543 = vadd.f32 %v6080, %v6494
        %v6544 = vadd.f32 %v6081, %v6496
        %v6545 = vadd.f32 %v6082, %v6499
        %v6546 = vadd.f32 %v6083, %v6501
        %v6547 = vadd.f32 %v6084, %v6504
        %v6548 = vadd.f32 %v6085, %v6506
        %v6549 = vadd.f32 %v6086, %v6509
        %v6550 = vadd.f32 %v6087, %v6511
        %v6551 = vadd.f32 %v6088, %v6514
        %v6552 = vadd.f32 %v6089, %v6516
        %v6553 = vadd.f32 %v6090, %v6519
        %v6554 = vadd.f32 %v6091, %v6521
        %v6555 = vld [vmem:[%s6092] sm:$0xf]
        %v6556 = vld [vmem:[%s6092 + $0x4] sm:$0xf]
        %v6557 = vld [vmem:[%s6092 + $0x8] sm:$0x1]
        %v6558 = vld [vmem:[%s6092 + $0xc] sm:$0xf]
        %v6559 = vld [vmem:[%s6092 + $0x10] sm:$0xf]
        %v6560 = vld [vmem:[%s6092 + $0x14] sm:$0x1]
        %v6561 = vld [vmem:[%s6092 + $0x18] sm:$0xf]
        %v6562 = vld [vmem:[%s6092 + $0x1c] sm:$0xf]
        %v6563 = vld [vmem:[%s6092 + $0x20] sm:$0x1]
        %v6564 = vld [vmem:[%s6092 + $0x24] sm:$0xf]
        %v6565 = vld [vmem:[%s6092 + $0x28] sm:$0xf]
        %v6566 = vld [vmem:[%s6092 + $0x2c] sm:$0x1]
        %v6567 = vld [vmem:[%s6092 + $0x30] sm:$0xf]
        %v6568 = vld [vmem:[%s6092 + $0x34] sm:$0xf]
        %v6569 = vld [vmem:[%s6092 + $0x38] sm:$0x1]
        %v6570 = vld [vmem:[%s6092 + $0x3c] sm:$0xf]
        %v6571 = vld [vmem:[%s6092 + $0x40] sm:$0xf]
        %v6572 = vld [vmem:[%s6092 + $0x44] sm:$0x1]
        %v6573 = vld [vmem:[%s6092 + $0x48] sm:$0xf]
        %v6574 = vld [vmem:[%s6092 + $0x4c] sm:$0xf]
        %v6575 = vld [vmem:[%s6092 + $0x50] sm:$0x1]
        %v6576 = vld [vmem:[%s6092 + $0x54] sm:$0xf]
        %v6577 = vld [vmem:[%s6092 + $0x58] sm:$0xf]
        %v6578 = vld [vmem:[%s6092 + $0x5c] sm:$0x1]
        %v6579 = vld [vmem:[%s6092 + $0x60] sm:$0xf]
        %v6580 = vld [vmem:[%s6092 + $0x64] sm:$0xf]
        %v6581 = vld [vmem:[%s6092 + $0x68] sm:$0x1]
        %v6582 = vld [vmem:[%s6092 + $0x6c] sm:$0xf]
        %v6583 = vld [vmem:[%s6092 + $0x70] sm:$0xf]
        %v6584 = vld [vmem:[%s6092 + $0x74] sm:$0x1]
        %v6585 = vld [vmem:[%s6092 + $0x78] sm:$0xf]
        %v6586 = vld [vmem:[%s6092 + $0x7c] sm:$0xf]
        %v6587 = vld [vmem:[%s6092 + $0x80] sm:$0x1]
        %v6588 = vld [vmem:[%s6092 + $0x84] sm:$0xf]
        %v6589 = vld [vmem:[%s6092 + $0x88] sm:$0xf]
        %v6590 = vld [vmem:[%s6092 + $0x8c] sm:$0x1]
        %v6591 = vld [vmem:[%s6092 + $0x90] sm:$0xf]
        %v6592 = vld [vmem:[%s6092 + $0x94] sm:$0xf]
        %v6593 = vld [vmem:[%s6092 + $0x98] sm:$0x1]
        %v6594 = vld [vmem:[%s6092 + $0x9c] sm:$0xf]
        %v6595 = vld [vmem:[%s6092 + $0xa0] sm:$0xf]
        %v6596 = vld [vmem:[%s6092 + $0xa4] sm:$0x1]
        %v6597 = vld [vmem:[%s6092 + $0xa8] sm:$0xf]
        %v6598 = vld [vmem:[%s6092 + $0xac] sm:$0xf]
        %v6599 = vld [vmem:[%s6092 + $0xb0] sm:$0x1]
        %v6600 = vld [vmem:[%s6092 + $0xb4] sm:$0xf]
        %v6601 = vld [vmem:[%s6092 + $0xb8] sm:$0xf]
        %v6602 = vld [vmem:[%s6092 + $0xbc] sm:$0x1]
        %v6604 = vshrl.u32 %v6555, 16
        %v6606 = vrot.slane %v6604, 4
        %v6607 = vshll.u32 %v6555, 16
        %v6609 = vrot.slane %v6607, 5
        %v6610 = vor.u32 %v6606, %v6609
        %v6611 = vrot.slane %v6610, 4
        %v6613 = vshll.u32 %v6556, 16
        %v6615 = vrot.slane %v6613, 5
        %v6616 = vsel %vm1876, %v6611, %v6615
        %v6617 = vshrl.u32 %v6556, 16
        %v6619 = vrot.slane %v6617, 4
        %v6620 = vor.u32 %v6619, %v6615
        %v6621 = vrot.slane %v6620, 4
        %v6623 = vshll.u32 %v6557, 16
        %v6625 = vrot.slane %v6623, 5
        %v6626 = vsel %vm1876, %v6621, %v6625
        %v6628 = vshrl.u32 %v6558, 16
        %v6630 = vrot.slane %v6628, 4
        %v6631 = vshll.u32 %v6558, 16
        %v6633 = vrot.slane %v6631, 5
        %v6634 = vor.u32 %v6630, %v6633
        %v6635 = vrot.slane %v6634, 4
        %v6637 = vshll.u32 %v6559, 16
        %v6639 = vrot.slane %v6637, 5
        %v6640 = vsel %vm1876, %v6635, %v6639
        %v6641 = vshrl.u32 %v6559, 16
        %v6643 = vrot.slane %v6641, 4
        %v6644 = vor.u32 %v6643, %v6639
        %v6645 = vrot.slane %v6644, 4
        %v6647 = vshll.u32 %v6560, 16
        %v6649 = vrot.slane %v6647, 5
        %v6650 = vsel %vm1876, %v6645, %v6649
        %v6652 = vshrl.u32 %v6561, 16
        %v6654 = vrot.slane %v6652, 4
        %v6655 = vshll.u32 %v6561, 16
        %v6657 = vrot.slane %v6655, 5
        %v6658 = vor.u32 %v6654, %v6657
        %v6659 = vrot.slane %v6658, 4
        %v6661 = vshll.u32 %v6562, 16
        %v6663 = vrot.slane %v6661, 5
        %v6664 = vsel %vm1876, %v6659, %v6663
        %v6665 = vshrl.u32 %v6562, 16
        %v6667 = vrot.slane %v6665, 4
        %v6668 = vor.u32 %v6667, %v6663
        %v6669 = vrot.slane %v6668, 4
        %v6671 = vshll.u32 %v6563, 16
        %v6673 = vrot.slane %v6671, 5
        %v6674 = vsel %vm1876, %v6669, %v6673
        %v6676 = vshrl.u32 %v6564, 16
        %v6678 = vrot.slane %v6676, 4
        %v6679 = vshll.u32 %v6564, 16
        %v6681 = vrot.slane %v6679, 5
        %v6682 = vor.u32 %v6678, %v6681
        %v6683 = vrot.slane %v6682, 4
        %v6685 = vshll.u32 %v6565, 16
        %v6687 = vrot.slane %v6685, 5
        %v6688 = vsel %vm1876, %v6683, %v6687
        %v6689 = vshrl.u32 %v6565, 16
        %v6691 = vrot.slane %v6689, 4
        %v6692 = vor.u32 %v6691, %v6687
        %v6693 = vrot.slane %v6692, 4
        %v6695 = vshll.u32 %v6566, 16
        %v6697 = vrot.slane %v6695, 5
        %v6698 = vsel %vm1876, %v6693, %v6697
        %v6700 = vshrl.u32 %v6567, 16
        %v6702 = vrot.slane %v6700, 4
        %v6703 = vshll.u32 %v6567, 16
        %v6705 = vrot.slane %v6703, 5
        %v6706 = vor.u32 %v6702, %v6705
        %v6707 = vrot.slane %v6706, 4
        %v6709 = vshll.u32 %v6568, 16
        %v6711 = vrot.slane %v6709, 5
        %v6712 = vsel %vm1876, %v6707, %v6711
        %v6713 = vshrl.u32 %v6568, 16
        %v6715 = vrot.slane %v6713, 4
        %v6716 = vor.u32 %v6715, %v6711
        %v6717 = vrot.slane %v6716, 4
        %v6719 = vshll.u32 %v6569, 16
        %v6721 = vrot.slane %v6719, 5
        %v6722 = vsel %vm1876, %v6717, %v6721
        %v6724 = vshrl.u32 %v6570, 16
        %v6726 = vrot.slane %v6724, 4
        %v6727 = vshll.u32 %v6570, 16
        %v6729 = vrot.slane %v6727, 5
        %v6730 = vor.u32 %v6726, %v6729
        %v6731 = vrot.slane %v6730, 4
        %v6733 = vshll.u32 %v6571, 16
        %v6735 = vrot.slane %v6733, 5
        %v6736 = vsel %vm1876, %v6731, %v6735
        %v6737 = vshrl.u32 %v6571, 16
        %v6739 = vrot.slane %v6737, 4
        %v6740 = vor.u32 %v6739, %v6735
        %v6741 = vrot.slane %v6740, 4
        %v6743 = vshll.u32 %v6572, 16
        %v6745 = vrot.slane %v6743, 5
        %v6746 = vsel %vm1876, %v6741, %v6745
        %v6748 = vshrl.u32 %v6573, 16
        %v6750 = vrot.slane %v6748, 4
        %v6751 = vshll.u32 %v6573, 16
        %v6753 = vrot.slane %v6751, 5
        %v6754 = vor.u32 %v6750, %v6753
        %v6755 = vrot.slane %v6754, 4
        %v6757 = vshll.u32 %v6574, 16
        %v6759 = vrot.slane %v6757, 5
        %v6760 = vsel %vm1876, %v6755, %v6759
        %v6761 = vshrl.u32 %v6574, 16
        %v6763 = vrot.slane %v6761, 4
        %v6764 = vor.u32 %v6763, %v6759
        %v6765 = vrot.slane %v6764, 4
        %v6767 = vshll.u32 %v6575, 16
        %v6769 = vrot.slane %v6767, 5
        %v6770 = vsel %vm1876, %v6765, %v6769
        %v6772 = vshrl.u32 %v6576, 16
        %v6774 = vrot.slane %v6772, 4
        %v6775 = vshll.u32 %v6576, 16
        %v6777 = vrot.slane %v6775, 5
        %v6778 = vor.u32 %v6774, %v6777
        %v6779 = vrot.slane %v6778, 4
        %v6781 = vshll.u32 %v6577, 16
        %v6783 = vrot.slane %v6781, 5
        %v6784 = vsel %vm1876, %v6779, %v6783
        %v6785 = vshrl.u32 %v6577, 16
        %v6787 = vrot.slane %v6785, 4
        %v6788 = vor.u32 %v6787, %v6783
        %v6789 = vrot.slane %v6788, 4
        %v6791 = vshll.u32 %v6578, 16
        %v6793 = vrot.slane %v6791, 5
        %v6794 = vsel %vm1876, %v6789, %v6793
        %v6796 = vshrl.u32 %v6579, 16
        %v6798 = vrot.slane %v6796, 4
        %v6799 = vshll.u32 %v6579, 16
        %v6801 = vrot.slane %v6799, 5
        %v6802 = vor.u32 %v6798, %v6801
        %v6803 = vrot.slane %v6802, 4
        %v6805 = vshll.u32 %v6580, 16
        %v6807 = vrot.slane %v6805, 5
        %v6808 = vsel %vm1876, %v6803, %v6807
        %v6809 = vshrl.u32 %v6580, 16
        %v6811 = vrot.slane %v6809, 4
        %v6812 = vor.u32 %v6811, %v6807
        %v6813 = vrot.slane %v6812, 4
        %v6815 = vshll.u32 %v6581, 16
        %v6817 = vrot.slane %v6815, 5
        %v6818 = vsel %vm1876, %v6813, %v6817
        %v6820 = vshrl.u32 %v6582, 16
        %v6822 = vrot.slane %v6820, 4
        %v6823 = vshll.u32 %v6582, 16
        %v6825 = vrot.slane %v6823, 5
        %v6826 = vor.u32 %v6822, %v6825
        %v6827 = vrot.slane %v6826, 4
        %v6829 = vshll.u32 %v6583, 16
        %v6831 = vrot.slane %v6829, 5
        %v6832 = vsel %vm1876, %v6827, %v6831
        %v6833 = vshrl.u32 %v6583, 16
        %v6835 = vrot.slane %v6833, 4
        %v6836 = vor.u32 %v6835, %v6831
        %v6837 = vrot.slane %v6836, 4
        %v6839 = vshll.u32 %v6584, 16
        %v6841 = vrot.slane %v6839, 5
        %v6842 = vsel %vm1876, %v6837, %v6841
        %v6844 = vshrl.u32 %v6585, 16
        %v6846 = vrot.slane %v6844, 4
        %v6847 = vshll.u32 %v6585, 16
        %v6849 = vrot.slane %v6847, 5
        %v6850 = vor.u32 %v6846, %v6849
        %v6851 = vrot.slane %v6850, 4
        %v6853 = vshll.u32 %v6586, 16
        %v6855 = vrot.slane %v6853, 5
        %v6856 = vsel %vm1876, %v6851, %v6855
        %v6857 = vshrl.u32 %v6586, 16
        %v6859 = vrot.slane %v6857, 4
        %v6860 = vor.u32 %v6859, %v6855
        %v6861 = vrot.slane %v6860, 4
        %v6863 = vshll.u32 %v6587, 16
        %v6865 = vrot.slane %v6863, 5
        %v6866 = vsel %vm1876, %v6861, %v6865
        %v6868 = vshrl.u32 %v6588, 16
        %v6870 = vrot.slane %v6868, 4
        %v6871 = vshll.u32 %v6588, 16
        %v6873 = vrot.slane %v6871, 5
        %v6874 = vor.u32 %v6870, %v6873
        %v6875 = vrot.slane %v6874, 4
        %v6877 = vshll.u32 %v6589, 16
        %v6879 = vrot.slane %v6877, 5
        %v6880 = vsel %vm1876, %v6875, %v6879
        %v6881 = vshrl.u32 %v6589, 16
        %v6883 = vrot.slane %v6881, 4
        %v6884 = vor.u32 %v6883, %v6879
        %v6885 = vrot.slane %v6884, 4
        %v6887 = vshll.u32 %v6590, 16
        %v6889 = vrot.slane %v6887, 5
        %v6890 = vsel %vm1876, %v6885, %v6889
        %v6892 = vshrl.u32 %v6591, 16
        %v6894 = vrot.slane %v6892, 4
        %v6895 = vshll.u32 %v6591, 16
        %v6897 = vrot.slane %v6895, 5
        %v6898 = vor.u32 %v6894, %v6897
        %v6899 = vrot.slane %v6898, 4
        %v6901 = vshll.u32 %v6592, 16
        %v6903 = vrot.slane %v6901, 5
        %v6904 = vsel %vm1876, %v6899, %v6903
        %v6905 = vshrl.u32 %v6592, 16
        %v6907 = vrot.slane %v6905, 4
        %v6908 = vor.u32 %v6907, %v6903
        %v6909 = vrot.slane %v6908, 4
        %v6911 = vshll.u32 %v6593, 16
        %v6913 = vrot.slane %v6911, 5
        %v6914 = vsel %vm1876, %v6909, %v6913
        %v6916 = vshrl.u32 %v6594, 16
        %v6918 = vrot.slane %v6916, 4
        %v6919 = vshll.u32 %v6594, 16
        %v6921 = vrot.slane %v6919, 5
        %v6922 = vor.u32 %v6918, %v6921
        %v6923 = vrot.slane %v6922, 4
        %v6925 = vshll.u32 %v6595, 16
        %v6927 = vrot.slane %v6925, 5
        %v6928 = vsel %vm1876, %v6923, %v6927
        %v6929 = vshrl.u32 %v6595, 16
        %v6931 = vrot.slane %v6929, 4
        %v6932 = vor.u32 %v6931, %v6927
        %v6933 = vrot.slane %v6932, 4
        %v6935 = vshll.u32 %v6596, 16
        %v6937 = vrot.slane %v6935, 5
        %v6938 = vsel %vm1876, %v6933, %v6937
        %v6940 = vshrl.u32 %v6597, 16
        %v6942 = vrot.slane %v6940, 4
        %v6943 = vshll.u32 %v6597, 16
        %v6945 = vrot.slane %v6943, 5
        %v6946 = vor.u32 %v6942, %v6945
        %v6947 = vrot.slane %v6946, 4
        %v6949 = vshll.u32 %v6598, 16
        %v6951 = vrot.slane %v6949, 5
        %v6952 = vsel %vm1876, %v6947, %v6951
        %v6953 = vshrl.u32 %v6598, 16
        %v6955 = vrot.slane %v6953, 4
        %v6956 = vor.u32 %v6955, %v6951
        %v6957 = vrot.slane %v6956, 4
        %v6959 = vshll.u32 %v6599, 16
        %v6961 = vrot.slane %v6959, 5
        %v6962 = vsel %vm1876, %v6957, %v6961
        %v6964 = vshrl.u32 %v6600, 16
        %v6966 = vrot.slane %v6964, 4
        %v6967 = vshll.u32 %v6600, 16
        %v6969 = vrot.slane %v6967, 5
        %v6970 = vor.u32 %v6966, %v6969
        %v6971 = vrot.slane %v6970, 4
        %v6973 = vshll.u32 %v6601, 16
        %v6975 = vrot.slane %v6973, 5
        %v6976 = vsel %vm1876, %v6971, %v6975
        %v6977 = vshrl.u32 %v6601, 16
        %v6979 = vrot.slane %v6977, 4
        %v6980 = vor.u32 %v6979, %v6975
        %v6981 = vrot.slane %v6980, 4
        %v6983 = vshll.u32 %v6602, 16
        %v6985 = vrot.slane %v6983, 5
        %v6986 = vsel %vm1876, %v6981, %v6985
        %v6987 = vld [vmem:[%s1058] sm:$0xf]
        %v6988 = vld [vmem:[%s1058 + $0x4] sm:$0xf]
        %v6989 = vld [vmem:[%s1058 + $0x8] sm:$0x1]
        %v6990 = vld [vmem:[%s1058 + $0xc] sm:$0xf]
        %v6991 = vld [vmem:[%s1058 + $0x10] sm:$0xf]
        %v6992 = vld [vmem:[%s1058 + $0x14] sm:$0x1]
        %v6993 = vld [vmem:[%s1058 + $0x18] sm:$0xf]
        %v6994 = vld [vmem:[%s1058 + $0x1c] sm:$0xf]
        %v6995 = vld [vmem:[%s1058 + $0x20] sm:$0x1]
        %v6996 = vld [vmem:[%s1058 + $0x24] sm:$0xf]
        %v6997 = vld [vmem:[%s1058 + $0x28] sm:$0xf]
        %v6998 = vld [vmem:[%s1058 + $0x2c] sm:$0x1]
        %v6999 = vld [vmem:[%s1058 + $0x30] sm:$0xf]
        %v7000 = vld [vmem:[%s1058 + $0x34] sm:$0xf]
        %v7001 = vld [vmem:[%s1058 + $0x38] sm:$0x1]
        %v7002 = vld [vmem:[%s1058 + $0x3c] sm:$0xf]
        %v7003 = vld [vmem:[%s1058 + $0x40] sm:$0xf]
        %v7004 = vld [vmem:[%s1058 + $0x44] sm:$0x1]
        %v7005 = vld [vmem:[%s1058 + $0x48] sm:$0xf]
        %v7006 = vld [vmem:[%s1058 + $0x4c] sm:$0xf]
        %v7007 = vld [vmem:[%s1058 + $0x50] sm:$0x1]
        %v7008 = vld [vmem:[%s1058 + $0x54] sm:$0xf]
        %v7009 = vld [vmem:[%s1058 + $0x58] sm:$0xf]
        %v7010 = vld [vmem:[%s1058 + $0x5c] sm:$0x1]
        %v7011 = vld [vmem:[%s1058 + $0x60] sm:$0xf]
        %v7012 = vld [vmem:[%s1058 + $0x64] sm:$0xf]
        %v7013 = vld [vmem:[%s1058 + $0x68] sm:$0x1]
        %v7014 = vld [vmem:[%s1058 + $0x6c] sm:$0xf]
        %v7015 = vld [vmem:[%s1058 + $0x70] sm:$0xf]
        %v7016 = vld [vmem:[%s1058 + $0x74] sm:$0x1]
        %v7017 = vld [vmem:[%s1058 + $0x78] sm:$0xf]
        %v7018 = vld [vmem:[%s1058 + $0x7c] sm:$0xf]
        %v7019 = vld [vmem:[%s1058 + $0x80] sm:$0x1]
        %v7020 = vld [vmem:[%s1058 + $0x84] sm:$0xf]
        %v7021 = vld [vmem:[%s1058 + $0x88] sm:$0xf]
        %v7022 = vld [vmem:[%s1058 + $0x8c] sm:$0x1]
        %v7023 = vld [vmem:[%s1058 + $0x90] sm:$0xf]
        %v7024 = vld [vmem:[%s1058 + $0x94] sm:$0xf]
        %v7025 = vld [vmem:[%s1058 + $0x98] sm:$0x1]
        %v7026 = vld [vmem:[%s1058 + $0x9c] sm:$0xf]
        %v7027 = vld [vmem:[%s1058 + $0xa0] sm:$0xf]
        %v7028 = vld [vmem:[%s1058 + $0xa4] sm:$0x1]
        %v7029 = vld [vmem:[%s1058 + $0xa8] sm:$0xf]
        %v7030 = vld [vmem:[%s1058 + $0xac] sm:$0xf]
        %v7031 = vld [vmem:[%s1058 + $0xb0] sm:$0x1]
        %v7032 = vld [vmem:[%s1058 + $0xb4] sm:$0xf]
        %v7033 = vld [vmem:[%s1058 + $0xb8] sm:$0xf]
        %v7034 = vld [vmem:[%s1058 + $0xbc] sm:$0x1]
        %v7036 = vshrl.u32 %v6987, 16
        %v7038 = vrot.slane %v7036, 4
        %v7039 = vshll.u32 %v6987, 16
        %v7041 = vrot.slane %v7039, 5
        %v7042 = vor.u32 %v7038, %v7041
        %v7043 = vrot.slane %v7042, 4
        %v7045 = vshll.u32 %v6988, 16
        %v7047 = vrot.slane %v7045, 5
        %v7048 = vsel %vm1876, %v7043, %v7047
        %v7049 = vshrl.u32 %v6988, 16
        %v7051 = vrot.slane %v7049, 4
        %v7052 = vor.u32 %v7051, %v7047
        %v7053 = vrot.slane %v7052, 4
        %v7055 = vshll.u32 %v6989, 16
        %v7057 = vrot.slane %v7055, 5
        %v7058 = vsel %vm1876, %v7053, %v7057
        %v7060 = vshrl.u32 %v6990, 16
        %v7062 = vrot.slane %v7060, 4
        %v7063 = vshll.u32 %v6990, 16
        %v7065 = vrot.slane %v7063, 5
        %v7066 = vor.u32 %v7062, %v7065
        %v7067 = vrot.slane %v7066, 4
        %v7069 = vshll.u32 %v6991, 16
        %v7071 = vrot.slane %v7069, 5
        %v7072 = vsel %vm1876, %v7067, %v7071
        %v7073 = vshrl.u32 %v6991, 16
        %v7075 = vrot.slane %v7073, 4
        %v7076 = vor.u32 %v7075, %v7071
        %v7077 = vrot.slane %v7076, 4
        %v7079 = vshll.u32 %v6992, 16
        %v7081 = vrot.slane %v7079, 5
        %v7082 = vsel %vm1876, %v7077, %v7081
        %v7084 = vshrl.u32 %v6993, 16
        %v7086 = vrot.slane %v7084, 4
        %v7087 = vshll.u32 %v6993, 16
        %v7089 = vrot.slane %v7087, 5
        %v7090 = vor.u32 %v7086, %v7089
        %v7091 = vrot.slane %v7090, 4
        %v7093 = vshll.u32 %v6994, 16
        %v7095 = vrot.slane %v7093, 5
        %v7096 = vsel %vm1876, %v7091, %v7095
        %v7097 = vshrl.u32 %v6994, 16
        %v7099 = vrot.slane %v7097, 4
        %v7100 = vor.u32 %v7099, %v7095
        %v7101 = vrot.slane %v7100, 4
        %v7103 = vshll.u32 %v6995, 16
        %v7105 = vrot.slane %v7103, 5
        %v7106 = vsel %vm1876, %v7101, %v7105
        %v7108 = vshrl.u32 %v6996, 16
        %v7110 = vrot.slane %v7108, 4
        %v7111 = vshll.u32 %v6996, 16
        %v7113 = vrot.slane %v7111, 5
        %v7114 = vor.u32 %v7110, %v7113
        %v7115 = vrot.slane %v7114, 4
        %v7117 = vshll.u32 %v6997, 16
        %v7119 = vrot.slane %v7117, 5
        %v7120 = vsel %vm1876, %v7115, %v7119
        %v7121 = vshrl.u32 %v6997, 16
        %v7123 = vrot.slane %v7121, 4
        %v7124 = vor.u32 %v7123, %v7119
        %v7125 = vrot.slane %v7124, 4
        %v7127 = vshll.u32 %v6998, 16
        %v7129 = vrot.slane %v7127, 5
        %v7130 = vsel %vm1876, %v7125, %v7129
        %v7132 = vshrl.u32 %v6999, 16
        %v7134 = vrot.slane %v7132, 4
        %v7135 = vshll.u32 %v6999, 16
        %v7137 = vrot.slane %v7135, 5
        %v7138 = vor.u32 %v7134, %v7137
        %v7139 = vrot.slane %v7138, 4
        %v7141 = vshll.u32 %v7000, 16
        %v7143 = vrot.slane %v7141, 5
        %v7144 = vsel %vm1876, %v7139, %v7143
        %v7145 = vshrl.u32 %v7000, 16
        %v7147 = vrot.slane %v7145, 4
        %v7148 = vor.u32 %v7147, %v7143
        %v7149 = vrot.slane %v7148, 4
        %v7151 = vshll.u32 %v7001, 16
        %v7153 = vrot.slane %v7151, 5
        %v7154 = vsel %vm1876, %v7149, %v7153
        %v7156 = vshrl.u32 %v7002, 16
        %v7158 = vrot.slane %v7156, 4
        %v7159 = vshll.u32 %v7002, 16
        %v7161 = vrot.slane %v7159, 5
        %v7162 = vor.u32 %v7158, %v7161
        %v7163 = vrot.slane %v7162, 4
        %v7165 = vshll.u32 %v7003, 16
        %v7167 = vrot.slane %v7165, 5
        %v7168 = vsel %vm1876, %v7163, %v7167
        %v7169 = vshrl.u32 %v7003, 16
        %v7171 = vrot.slane %v7169, 4
        %v7172 = vor.u32 %v7171, %v7167
        %v7173 = vrot.slane %v7172, 4
        %v7175 = vshll.u32 %v7004, 16
        %v7177 = vrot.slane %v7175, 5
        %v7178 = vsel %vm1876, %v7173, %v7177
        %v7180 = vshrl.u32 %v7005, 16
        %v7182 = vrot.slane %v7180, 4
        %v7183 = vshll.u32 %v7005, 16
        %v7185 = vrot.slane %v7183, 5
        %v7186 = vor.u32 %v7182, %v7185
        %v7187 = vrot.slane %v7186, 4
        %v7189 = vshll.u32 %v7006, 16
        %v7191 = vrot.slane %v7189, 5
        %v7192 = vsel %vm1876, %v7187, %v7191
        %v7193 = vshrl.u32 %v7006, 16
        %v7195 = vrot.slane %v7193, 4
        %v7196 = vor.u32 %v7195, %v7191
        %v7197 = vrot.slane %v7196, 4
        %v7199 = vshll.u32 %v7007, 16
        %v7201 = vrot.slane %v7199, 5
        %v7202 = vsel %vm1876, %v7197, %v7201
        %v7204 = vshrl.u32 %v7008, 16
        %v7206 = vrot.slane %v7204, 4
        %v7207 = vshll.u32 %v7008, 16
        %v7209 = vrot.slane %v7207, 5
        %v7210 = vor.u32 %v7206, %v7209
        %v7211 = vrot.slane %v7210, 4
        %v7213 = vshll.u32 %v7009, 16
        %v7215 = vrot.slane %v7213, 5
        %v7216 = vsel %vm1876, %v7211, %v7215
        %v7217 = vshrl.u32 %v7009, 16
        %v7219 = vrot.slane %v7217, 4
        %v7220 = vor.u32 %v7219, %v7215
        %v7221 = vrot.slane %v7220, 4
        %v7223 = vshll.u32 %v7010, 16
        %v7225 = vrot.slane %v7223, 5
        %v7226 = vsel %vm1876, %v7221, %v7225
        %v7228 = vshrl.u32 %v7011, 16
        %v7230 = vrot.slane %v7228, 4
        %v7231 = vshll.u32 %v7011, 16
        %v7233 = vrot.slane %v7231, 5
        %v7234 = vor.u32 %v7230, %v7233
        %v7235 = vrot.slane %v7234, 4
        %v7237 = vshll.u32 %v7012, 16
        %v7239 = vrot.slane %v7237, 5
        %v7240 = vsel %vm1876, %v7235, %v7239
        %v7241 = vshrl.u32 %v7012, 16
        %v7243 = vrot.slane %v7241, 4
        %v7244 = vor.u32 %v7243, %v7239
        %v7245 = vrot.slane %v7244, 4
        %v7247 = vshll.u32 %v7013, 16
        %v7249 = vrot.slane %v7247, 5
        %v7250 = vsel %vm1876, %v7245, %v7249
        %v7252 = vshrl.u32 %v7014, 16
        %v7254 = vrot.slane %v7252, 4
        %v7255 = vshll.u32 %v7014, 16
        %v7257 = vrot.slane %v7255, 5
        %v7258 = vor.u32 %v7254, %v7257
        %v7259 = vrot.slane %v7258, 4
        %v7261 = vshll.u32 %v7015, 16
        %v7263 = vrot.slane %v7261, 5
        %v7264 = vsel %vm1876, %v7259, %v7263
        %v7265 = vshrl.u32 %v7015, 16
        %v7267 = vrot.slane %v7265, 4
        %v7268 = vor.u32 %v7267, %v7263
        %v7269 = vrot.slane %v7268, 4
        %v7271 = vshll.u32 %v7016, 16
        %v7273 = vrot.slane %v7271, 5
        %v7274 = vsel %vm1876, %v7269, %v7273
        %v7276 = vshrl.u32 %v7017, 16
        %v7278 = vrot.slane %v7276, 4
        %v7279 = vshll.u32 %v7017, 16
        %v7281 = vrot.slane %v7279, 5
        %v7282 = vor.u32 %v7278, %v7281
        %v7283 = vrot.slane %v7282, 4
        %v7285 = vshll.u32 %v7018, 16
        %v7287 = vrot.slane %v7285, 5
        %v7288 = vsel %vm1876, %v7283, %v7287
        %v7289 = vshrl.u32 %v7018, 16
        %v7291 = vrot.slane %v7289, 4
        %v7292 = vor.u32 %v7291, %v7287
        %v7293 = vrot.slane %v7292, 4
        %v7295 = vshll.u32 %v7019, 16
        %v7297 = vrot.slane %v7295, 5
        %v7298 = vsel %vm1876, %v7293, %v7297
        %v7300 = vshrl.u32 %v7020, 16
        %v7302 = vrot.slane %v7300, 4
        %v7303 = vshll.u32 %v7020, 16
        %v7305 = vrot.slane %v7303, 5
        %v7306 = vor.u32 %v7302, %v7305
        %v7307 = vrot.slane %v7306, 4
        %v7309 = vshll.u32 %v7021, 16
        %v7311 = vrot.slane %v7309, 5
        %v7312 = vsel %vm1876, %v7307, %v7311
        %v7313 = vshrl.u32 %v7021, 16
        %v7315 = vrot.slane %v7313, 4
        %v7316 = vor.u32 %v7315, %v7311
        %v7317 = vrot.slane %v7316, 4
        %v7319 = vshll.u32 %v7022, 16
        %v7321 = vrot.slane %v7319, 5
        %v7322 = vsel %vm1876, %v7317, %v7321
        %v7324 = vshrl.u32 %v7023, 16
        %v7326 = vrot.slane %v7324, 4
        %v7327 = vshll.u32 %v7023, 16
        %v7329 = vrot.slane %v7327, 5
        %v7330 = vor.u32 %v7326, %v7329
        %v7331 = vrot.slane %v7330, 4
        %v7333 = vshll.u32 %v7024, 16
        %v7335 = vrot.slane %v7333, 5
        %v7336 = vsel %vm1876, %v7331, %v7335
        %v7337 = vshrl.u32 %v7024, 16
        %v7339 = vrot.slane %v7337, 4
        %v7340 = vor.u32 %v7339, %v7335
        %v7341 = vrot.slane %v7340, 4
        %v7343 = vshll.u32 %v7025, 16
        %v7345 = vrot.slane %v7343, 5
        %v7346 = vsel %vm1876, %v7341, %v7345
        %v7348 = vshrl.u32 %v7026, 16
        %v7350 = vrot.slane %v7348, 4
        %v7351 = vshll.u32 %v7026, 16
        %v7353 = vrot.slane %v7351, 5
        %v7354 = vor.u32 %v7350, %v7353
        %v7355 = vrot.slane %v7354, 4
        %v7357 = vshll.u32 %v7027, 16
        %v7359 = vrot.slane %v7357, 5
        %v7360 = vsel %vm1876, %v7355, %v7359
        %v7361 = vshrl.u32 %v7027, 16
        %v7363 = vrot.slane %v7361, 4
        %v7364 = vor.u32 %v7363, %v7359
        %v7365 = vrot.slane %v7364, 4
        %v7367 = vshll.u32 %v7028, 16
        %v7369 = vrot.slane %v7367, 5
        %v7370 = vsel %vm1876, %v7365, %v7369
        %v7372 = vshrl.u32 %v7029, 16
        %v7374 = vrot.slane %v7372, 4
        %v7375 = vshll.u32 %v7029, 16
        %v7377 = vrot.slane %v7375, 5
        %v7378 = vor.u32 %v7374, %v7377
        %v7379 = vrot.slane %v7378, 4
        %v7381 = vshll.u32 %v7030, 16
        %v7383 = vrot.slane %v7381, 5
        %v7384 = vsel %vm1876, %v7379, %v7383
        %v7385 = vshrl.u32 %v7030, 16
        %v7387 = vrot.slane %v7385, 4
        %v7388 = vor.u32 %v7387, %v7383
        %v7389 = vrot.slane %v7388, 4
        %v7391 = vshll.u32 %v7031, 16
        %v7393 = vrot.slane %v7391, 5
        %v7394 = vsel %vm1876, %v7389, %v7393
        %v7396 = vshrl.u32 %v7032, 16
        %v7398 = vrot.slane %v7396, 4
        %v7399 = vshll.u32 %v7032, 16
        %v7401 = vrot.slane %v7399, 5
        %v7402 = vor.u32 %v7398, %v7401
        %v7403 = vrot.slane %v7402, 4
        %v7405 = vshll.u32 %v7033, 16
        %v7407 = vrot.slane %v7405, 5
        %v7408 = vsel %vm1876, %v7403, %v7407
        %v7409 = vshrl.u32 %v7033, 16
        %v7411 = vrot.slane %v7409, 4
        %v7412 = vor.u32 %v7411, %v7407
        %v7413 = vrot.slane %v7412, 4
        %v7415 = vshll.u32 %v7034, 16
        %v7417 = vrot.slane %v7415, 5
        %v7418 = vsel %vm1876, %v7413, %v7417
        %v7419 = vunpack.c.l.b16 %v6616
        %v7420 = vunpack.c.l.b16 %v6626
        %v7421 = vunpack.c.l.b16 %v6640
        %v7422 = vunpack.c.l.b16 %v6650
        %v7423 = vunpack.c.l.b16 %v6664
        %v7424 = vunpack.c.l.b16 %v6674
        %v7425 = vunpack.c.l.b16 %v6688
        %v7426 = vunpack.c.l.b16 %v6698
        %v7427 = vunpack.c.l.b16 %v6712
        %v7428 = vunpack.c.l.b16 %v6722
        %v7429 = vunpack.c.l.b16 %v6736
        %v7430 = vunpack.c.l.b16 %v6746
        %v7431 = vunpack.c.l.b16 %v6760
        %v7432 = vunpack.c.l.b16 %v6770
        %v7433 = vunpack.c.l.b16 %v6784
        %v7434 = vunpack.c.l.b16 %v6794
        %v7435 = vunpack.c.l.b16 %v6808
        %v7436 = vunpack.c.l.b16 %v6818
        %v7437 = vunpack.c.l.b16 %v6832
        %v7438 = vunpack.c.l.b16 %v6842
        %v7439 = vunpack.c.l.b16 %v6856
        %v7440 = vunpack.c.l.b16 %v6866
        %v7441 = vunpack.c.l.b16 %v6880
        %v7442 = vunpack.c.l.b16 %v6890
        %v7443 = vunpack.c.l.b16 %v6904
        %v7444 = vunpack.c.l.b16 %v6914
        %v7445 = vunpack.c.l.b16 %v6928
        %v7446 = vunpack.c.l.b16 %v6938
        %v7447 = vunpack.c.l.b16 %v6952
        %v7448 = vunpack.c.l.b16 %v6962
        %v7449 = vunpack.c.l.b16 %v6976
        %v7450 = vunpack.c.l.b16 %v6986
        %v7451 = vpack.c.b16 %v7420, %v7419
        %v7452 = vpack.c.b16 %v7422, %v7421
        %v7453 = vpack.c.b16 %v7424, %v7423
        %v7454 = vpack.c.b16 %v7426, %v7425
        %v7455 = vpack.c.b16 %v7428, %v7427
        %v7456 = vpack.c.b16 %v7430, %v7429
        %v7457 = vpack.c.b16 %v7432, %v7431
        %v7458 = vpack.c.b16 %v7434, %v7433
        %v7459 = vpack.c.b16 %v7436, %v7435
        %v7460 = vpack.c.b16 %v7438, %v7437
        %v7461 = vpack.c.b16 %v7440, %v7439
        %v7462 = vpack.c.b16 %v7442, %v7441
        %v7463 = vpack.c.b16 %v7444, %v7443
        %v7464 = vpack.c.b16 %v7446, %v7445
        %v7465 = vpack.c.b16 %v7448, %v7447
        %v7466 = vpack.c.b16 %v7450, %v7449
        %v7467 = vunpack.c.l.b16 %v7048
        %v7468 = vunpack.c.l.b16 %v7058
        %v7469 = vunpack.c.l.b16 %v7072
        %v7470 = vunpack.c.l.b16 %v7082
        %v7471 = vunpack.c.l.b16 %v7096
        %v7472 = vunpack.c.l.b16 %v7106
        %v7473 = vunpack.c.l.b16 %v7120
        %v7474 = vunpack.c.l.b16 %v7130
        %v7475 = vunpack.c.l.b16 %v7144
        %v7476 = vunpack.c.l.b16 %v7154
        %v7477 = vunpack.c.l.b16 %v7168
        %v7478 = vunpack.c.l.b16 %v7178
        %v7479 = vunpack.c.l.b16 %v7192
        %v7480 = vunpack.c.l.b16 %v7202
        %v7481 = vunpack.c.l.b16 %v7216
        %v7482 = vunpack.c.l.b16 %v7226
        %v7483 = vunpack.c.l.b16 %v7240
        %v7484 = vunpack.c.l.b16 %v7250
        %v7485 = vunpack.c.l.b16 %v7264
        %v7486 = vunpack.c.l.b16 %v7274
        %v7487 = vunpack.c.l.b16 %v7288
        %v7488 = vunpack.c.l.b16 %v7298
        %v7489 = vunpack.c.l.b16 %v7312
        %v7490 = vunpack.c.l.b16 %v7322
        %v7491 = vunpack.c.l.b16 %v7336
        %v7492 = vunpack.c.l.b16 %v7346
        %v7493 = vunpack.c.l.b16 %v7360
        %v7494 = vunpack.c.l.b16 %v7370
        %v7495 = vunpack.c.l.b16 %v7384
        %v7496 = vunpack.c.l.b16 %v7394
        %v7497 = vunpack.c.l.b16 %v7408
        %v7498 = vunpack.c.l.b16 %v7418
        %v7499 = vpack.c.b16 %v7468, %v7467
        %v7500 = vpack.c.b16 %v7470, %v7469
        %v7501 = vpack.c.b16 %v7472, %v7471
        %v7502 = vpack.c.b16 %v7474, %v7473
        %v7503 = vpack.c.b16 %v7476, %v7475
        %v7504 = vpack.c.b16 %v7478, %v7477
        %v7505 = vpack.c.b16 %v7480, %v7479
        %v7506 = vpack.c.b16 %v7482, %v7481
        %v7507 = vpack.c.b16 %v7484, %v7483
        %v7508 = vpack.c.b16 %v7486, %v7485
        %v7509 = vpack.c.b16 %v7488, %v7487
        %v7510 = vpack.c.b16 %v7490, %v7489
        %v7511 = vpack.c.b16 %v7492, %v7491
        %v7512 = vpack.c.b16 %v7494, %v7493
        %v7513 = vpack.c.b16 %v7496, %v7495
        %v7514 = vpack.c.b16 %v7498, %v7497
        %7515 = vrot.lane.b32.xlu0 %v7499, 4
        %v7516 = vpop.permute.xlu0 %7515
        %7517 = vrot.lane.b32.xlu0 %v7500, 4
        %v7518 = vpop.permute.xlu0 %7517
        %7519 = vrot.lane.b32.xlu0 %v7501, 4
        %v7520 = vpop.permute.xlu0 %7519
        %7521 = vrot.lane.b32.xlu0 %v7502, 4
        %v7522 = vpop.permute.xlu0 %7521
        %7523 = vrot.lane.b32.xlu0 %v7503, 4
        %v7524 = vpop.permute.xlu0 %7523
        %7525 = vrot.lane.b32.xlu0 %v7504, 4
        %v7526 = vpop.permute.xlu0 %7525
        %7527 = vrot.lane.b32.xlu0 %v7505, 4
        %v7528 = vpop.permute.xlu0 %7527
        %7529 = vrot.lane.b32.xlu0 %v7506, 4
        %v7530 = vpop.permute.xlu0 %7529
        %7531 = vrot.lane.b32.xlu0 %v7507, 4
        %v7532 = vpop.permute.xlu0 %7531
        %7533 = vrot.lane.b32.xlu0 %v7508, 4
        %v7534 = vpop.permute.xlu0 %7533
        %7535 = vrot.lane.b32.xlu0 %v7509, 4
        %v7536 = vpop.permute.xlu0 %7535
        %7537 = vrot.lane.b32.xlu0 %v7510, 4
        %v7538 = vpop.permute.xlu0 %7537
        %7539 = vrot.lane.b32.xlu0 %v7511, 4
        %v7540 = vpop.permute.xlu0 %7539
        %7541 = vrot.lane.b32.xlu0 %v7512, 4
        %v7542 = vpop.permute.xlu0 %7541
        %7543 = vrot.lane.b32.xlu0 %v7513, 4
        %v7544 = vpop.permute.xlu0 %7543
        %7545 = vrot.lane.b32.xlu0 %v7514, 4
        %v7546 = vpop.permute.xlu0 %7545
        %v7549 = vsel %vm1808, %v7451, %v7516
        %v7552 = vsel %vm1808, %v7452, %v7518
        %v7555 = vsel %vm1808, %v7453, %v7520
        %v7558 = vsel %vm1808, %v7454, %v7522
        %v7561 = vsel %vm1808, %v7455, %v7524
        %v7564 = vsel %vm1808, %v7456, %v7526
        %v7567 = vsel %vm1808, %v7457, %v7528
        %v7570 = vsel %vm1808, %v7458, %v7530
        %v7573 = vsel %vm1808, %v7459, %v7532
        %v7576 = vsel %vm1808, %v7460, %v7534
        %v7579 = vsel %vm1808, %v7461, %v7536
        %v7582 = vsel %vm1808, %v7462, %v7538
        %v7585 = vsel %vm1808, %v7463, %v7540
        %v7588 = vsel %vm1808, %v7464, %v7542
        %v7591 = vsel %vm1808, %v7465, %v7544
        %v7594 = vsel %vm1808, %v7466, %v7546
        %s7595 = scalar_lea.vmem %s2, 28
        %v7596 = vld [vmem:[%s7595] sm:$0xf]
        %v7597 = vsel %vm2839, %v7549, 0
        %v7599 = vsel %vm2839, %v7552, 0
        %v7601 = vsel %vm2839, %v7555, 0
        %v7603 = vsel %vm2839, %v7558, 0
        %v7605 = vsel %vm2839, %v7561, 0
        %v7607 = vsel %vm2839, %v7564, 0
        %v7609 = vsel %vm2839, %v7567, 0
        %v7611 = vsel %vm2839, %v7570, 0
        %v7613 = vsel %vm2839, %v7573, 0
        %v7615 = vsel %vm2839, %v7576, 0
        %v7617 = vsel %vm2839, %v7579, 0
        %v7619 = vsel %vm2839, %v7582, 0
        %v7621 = vsel %vm2839, %v7585, 0
        %v7623 = vsel %vm2839, %v7588, 0
        %v7625 = vsel %vm2839, %v7591, 0
        %v7627 = vsel %vm2839, %v7594, 0
        %v7630 = vsel %vm2872, %v7596, 0
        %7632 = vmatpush.bf16.msra.mxu0 0
        %7633 = vmatpush.bf16.msra.mxu0 0
        %7634 = vmatpush.bf16.msra.mxu0 0
        %7635 = vmatpush.bf16.msra.mxu0 0
        %7636 = vmatpush.bf16.msra.mxu0 0
        %7637 = vmatpush.bf16.msra.mxu0 0
        %7638 = vmatpush.bf16.msra.mxu0 0
        %7639 = vmatpush.bf16.msra.mxu0 %v7630
        %7640 = vmatmul.bf16.gmra.mxu0 %v7597
        %v7641 = vpop.f32.mrf.mxu0
        %v7642 = vadd.f32 0.0, %v7641
        %v7643 = vpop.f32.mrf.mxu0
        %v7644 = vadd.f32 0.0, %v7643
        %7645 = vmatmul.bf16.gmra.mxu0 %v7599
        %v7646 = vpop.f32.mrf.mxu0
        %v7647 = vadd.f32 0.0, %v7646
        %v7648 = vpop.f32.mrf.mxu0
        %v7649 = vadd.f32 0.0, %v7648
        %7650 = vmatmul.bf16.gmra.mxu0 %v7601
        %v7651 = vpop.f32.mrf.mxu0
        %v7652 = vadd.f32 0.0, %v7651
        %v7653 = vpop.f32.mrf.mxu0
        %v7654 = vadd.f32 0.0, %v7653
        %7655 = vmatmul.bf16.gmra.mxu0 %v7603
        %v7656 = vpop.f32.mrf.mxu0
        %v7657 = vadd.f32 0.0, %v7656
        %v7658 = vpop.f32.mrf.mxu0
        %v7659 = vadd.f32 0.0, %v7658
        %7660 = vmatmul.bf16.gmra.mxu0 %v7605
        %v7661 = vpop.f32.mrf.mxu0
        %v7662 = vadd.f32 0.0, %v7661
        %v7663 = vpop.f32.mrf.mxu0
        %v7664 = vadd.f32 0.0, %v7663
        %7665 = vmatmul.bf16.gmra.mxu0 %v7607
        %v7666 = vpop.f32.mrf.mxu0
        %v7667 = vadd.f32 0.0, %v7666
        %v7668 = vpop.f32.mrf.mxu0
        %v7669 = vadd.f32 0.0, %v7668
        %7670 = vmatmul.bf16.gmra.mxu0 %v7609
        %v7671 = vpop.f32.mrf.mxu0
        %v7672 = vadd.f32 0.0, %v7671
        %v7673 = vpop.f32.mrf.mxu0
        %v7674 = vadd.f32 0.0, %v7673
        %7675 = vmatmul.bf16.gmra.mxu0 %v7611
        %v7676 = vpop.f32.mrf.mxu0
        %v7677 = vadd.f32 0.0, %v7676
        %v7678 = vpop.f32.mrf.mxu0
        %v7679 = vadd.f32 0.0, %v7678
        %7680 = vmatmul.bf16.gmra.mxu0 %v7613
        %v7681 = vpop.f32.mrf.mxu0
        %v7682 = vadd.f32 0.0, %v7681
        %v7683 = vpop.f32.mrf.mxu0
        %v7684 = vadd.f32 0.0, %v7683
        %7685 = vmatmul.bf16.gmra.mxu0 %v7615
        %v7686 = vpop.f32.mrf.mxu0
        %v7687 = vadd.f32 0.0, %v7686
        %v7688 = vpop.f32.mrf.mxu0
        %v7689 = vadd.f32 0.0, %v7688
        %7690 = vmatmul.bf16.gmra.mxu0 %v7617
        %v7691 = vpop.f32.mrf.mxu0
        %v7692 = vadd.f32 0.0, %v7691
        %v7693 = vpop.f32.mrf.mxu0
        %v7694 = vadd.f32 0.0, %v7693
        %7695 = vmatmul.bf16.gmra.mxu0 %v7619
        %v7696 = vpop.f32.mrf.mxu0
        %v7697 = vadd.f32 0.0, %v7696
        %v7698 = vpop.f32.mrf.mxu0
        %v7699 = vadd.f32 0.0, %v7698
        %7700 = vmatmul.bf16.gmra.mxu0 %v7621
        %v7701 = vpop.f32.mrf.mxu0
        %v7702 = vadd.f32 0.0, %v7701
        %v7703 = vpop.f32.mrf.mxu0
        %v7704 = vadd.f32 0.0, %v7703
        %7705 = vmatmul.bf16.gmra.mxu0 %v7623
        %v7706 = vpop.f32.mrf.mxu0
        %v7707 = vadd.f32 0.0, %v7706
        %v7708 = vpop.f32.mrf.mxu0
        %v7709 = vadd.f32 0.0, %v7708
        %7710 = vmatmul.bf16.gmra.mxu0 %v7625
        %v7711 = vpop.f32.mrf.mxu0
        %v7712 = vadd.f32 0.0, %v7711
        %v7713 = vpop.f32.mrf.mxu0
        %v7714 = vadd.f32 0.0, %v7713
        %7715 = vmatmul.bf16.gmra.mxu0 %v7627
        %v7716 = vpop.f32.mrf.mxu0
        %v7717 = vadd.f32 0.0, %v7716
        %v7718 = vpop.f32.mrf.mxu0
        %v7719 = vadd.f32 0.0, %v7718
        %7720 = vdwg.mxu0
        %v7721 = vadd.f32 %v6523, %v7642
        %v7722 = vadd.f32 %v6524, %v7644
        %v7723 = vadd.f32 %v6525, %v7647
        %v7724 = vadd.f32 %v6526, %v7649
        %v7725 = vadd.f32 %v6527, %v7652
        %v7726 = vadd.f32 %v6528, %v7654
        %v7727 = vadd.f32 %v6529, %v7657
        %v7728 = vadd.f32 %v6530, %v7659
        %v7729 = vadd.f32 %v6531, %v7662
        %v7730 = vadd.f32 %v6532, %v7664
        %v7731 = vadd.f32 %v6533, %v7667
        %v7732 = vadd.f32 %v6534, %v7669
        %v7733 = vadd.f32 %v6535, %v7672
        %v7734 = vadd.f32 %v6536, %v7674
        %v7735 = vadd.f32 %v6537, %v7677
        %v7736 = vadd.f32 %v6538, %v7679
        %v7737 = vadd.f32 %v6539, %v7682
        %v7738 = vadd.f32 %v6540, %v7684
        %v7739 = vadd.f32 %v6541, %v7687
        %v7740 = vadd.f32 %v6542, %v7689
        %v7741 = vadd.f32 %v6543, %v7692
        %v7742 = vadd.f32 %v6544, %v7694
        %v7743 = vadd.f32 %v6545, %v7697
        %v7744 = vadd.f32 %v6546, %v7699
        %v7745 = vadd.f32 %v6547, %v7702
        %v7746 = vadd.f32 %v6548, %v7704
        %v7747 = vadd.f32 %v6549, %v7707
        %v7748 = vadd.f32 %v6550, %v7709
        %v7749 = vadd.f32 %v6551, %v7712
        %v7750 = vadd.f32 %v6552, %v7714
        %v7751 = vadd.f32 %v6553, %v7717
        %v7752 = vadd.f32 %v6554, %v7719
        %v7753 = vld [vmem:[%s6092] sm:$0xe]
        %v7754 = vld [vmem:[%s6092 + $0xc] sm:$0xe]
        %v7755 = vld [vmem:[%s6092 + $0x18] sm:$0xe]
        %v7756 = vld [vmem:[%s6092 + $0x24] sm:$0xe]
        %v7757 = vld [vmem:[%s6092 + $0x30] sm:$0xe]
        %v7758 = vld [vmem:[%s6092 + $0x3c] sm:$0xe]
        %v7759 = vld [vmem:[%s6092 + $0x48] sm:$0xe]
        %v7760 = vld [vmem:[%s6092 + $0x54] sm:$0xe]
        %v7761 = vld [vmem:[%s6092 + $0x60] sm:$0xe]
        %v7762 = vld [vmem:[%s6092 + $0x6c] sm:$0xe]
        %v7763 = vld [vmem:[%s6092 + $0x78] sm:$0xe]
        %v7764 = vld [vmem:[%s6092 + $0x84] sm:$0xe]
        %v7765 = vld [vmem:[%s6092 + $0x90] sm:$0xe]
        %v7766 = vld [vmem:[%s6092 + $0x9c] sm:$0xe]
        %v7767 = vld [vmem:[%s6092 + $0xa8] sm:$0xe]
        %v7768 = vld [vmem:[%s6092 + $0xb4] sm:$0xe]
        %v7817 = vrot.slane %v7753, 5
        %v7818 = vrot.slane %v7817, 4
        %v7819 = vrot.slane %v6556, 5
        %v7820 = vsel %vm3139, %v7818, %v7819
        %v7821 = vrot.slane %v7819, 4
        %v7822 = vrot.slane %v6557, 5
        %v7823 = vsel %vm3139, %v7821, %v7822
        %v7824 = vrot.slane %v7754, 5
        %v7825 = vrot.slane %v7824, 4
        %v7826 = vrot.slane %v6559, 5
        %v7827 = vsel %vm3139, %v7825, %v7826
        %v7828 = vrot.slane %v7826, 4
        %v7829 = vrot.slane %v6560, 5
        %v7830 = vsel %vm3139, %v7828, %v7829
        %v7831 = vrot.slane %v7755, 5
        %v7832 = vrot.slane %v7831, 4
        %v7833 = vrot.slane %v6562, 5
        %v7834 = vsel %vm3139, %v7832, %v7833
        %v7835 = vrot.slane %v7833, 4
        %v7836 = vrot.slane %v6563, 5
        %v7837 = vsel %vm3139, %v7835, %v7836
        %v7838 = vrot.slane %v7756, 5
        %v7839 = vrot.slane %v7838, 4
        %v7840 = vrot.slane %v6565, 5
        %v7841 = vsel %vm3139, %v7839, %v7840
        %v7842 = vrot.slane %v7840, 4
        %v7843 = vrot.slane %v6566, 5
        %v7844 = vsel %vm3139, %v7842, %v7843
        %v7845 = vrot.slane %v7757, 5
        %v7846 = vrot.slane %v7845, 4
        %v7847 = vrot.slane %v6568, 5
        %v7848 = vsel %vm3139, %v7846, %v7847
        %v7849 = vrot.slane %v7847, 4
        %v7850 = vrot.slane %v6569, 5
        %v7851 = vsel %vm3139, %v7849, %v7850
        %v7852 = vrot.slane %v7758, 5
        %v7853 = vrot.slane %v7852, 4
        %v7854 = vrot.slane %v6571, 5
        %v7855 = vsel %vm3139, %v7853, %v7854
        %v7856 = vrot.slane %v7854, 4
        %v7857 = vrot.slane %v6572, 5
        %v7858 = vsel %vm3139, %v7856, %v7857
        %v7859 = vrot.slane %v7759, 5
        %v7860 = vrot.slane %v7859, 4
        %v7861 = vrot.slane %v6574, 5
        %v7862 = vsel %vm3139, %v7860, %v7861
        %v7863 = vrot.slane %v7861, 4
        %v7864 = vrot.slane %v6575, 5
        %v7865 = vsel %vm3139, %v7863, %v7864
        %v7866 = vrot.slane %v7760, 5
        %v7867 = vrot.slane %v7866, 4
        %v7868 = vrot.slane %v6577, 5
        %v7869 = vsel %vm3139, %v7867, %v7868
        %v7870 = vrot.slane %v7868, 4
        %v7871 = vrot.slane %v6578, 5
        %v7872 = vsel %vm3139, %v7870, %v7871
        %v7873 = vrot.slane %v7761, 5
        %v7874 = vrot.slane %v7873, 4
        %v7875 = vrot.slane %v6580, 5
        %v7876 = vsel %vm3139, %v7874, %v7875
        %v7877 = vrot.slane %v7875, 4
        %v7878 = vrot.slane %v6581, 5
        %v7879 = vsel %vm3139, %v7877, %v7878
        %v7880 = vrot.slane %v7762, 5
        %v7881 = vrot.slane %v7880, 4
        %v7882 = vrot.slane %v6583, 5
        %v7883 = vsel %vm3139, %v7881, %v7882
        %v7884 = vrot.slane %v7882, 4
        %v7885 = vrot.slane %v6584, 5
        %v7886 = vsel %vm3139, %v7884, %v7885
        %v7887 = vrot.slane %v7763, 5
        %v7888 = vrot.slane %v7887, 4
        %v7889 = vrot.slane %v6586, 5
        %v7890 = vsel %vm3139, %v7888, %v7889
        %v7891 = vrot.slane %v7889, 4
        %v7892 = vrot.slane %v6587, 5
        %v7893 = vsel %vm3139, %v7891, %v7892
        %v7894 = vrot.slane %v7764, 5
        %v7895 = vrot.slane %v7894, 4
        %v7896 = vrot.slane %v6589, 5
        %v7897 = vsel %vm3139, %v7895, %v7896
        %v7898 = vrot.slane %v7896, 4
        %v7899 = vrot.slane %v6590, 5
        %v7900 = vsel %vm3139, %v7898, %v7899
        %v7901 = vrot.slane %v7765, 5
        %v7902 = vrot.slane %v7901, 4
        %v7903 = vrot.slane %v6592, 5
        %v7904 = vsel %vm3139, %v7902, %v7903
        %v7905 = vrot.slane %v7903, 4
        %v7906 = vrot.slane %v6593, 5
        %v7907 = vsel %vm3139, %v7905, %v7906
        %v7908 = vrot.slane %v7766, 5
        %v7909 = vrot.slane %v7908, 4
        %v7910 = vrot.slane %v6595, 5
        %v7911 = vsel %vm3139, %v7909, %v7910
        %v7912 = vrot.slane %v7910, 4
        %v7913 = vrot.slane %v6596, 5
        %v7914 = vsel %vm3139, %v7912, %v7913
        %v7915 = vrot.slane %v7767, 5
        %v7916 = vrot.slane %v7915, 4
        %v7917 = vrot.slane %v6598, 5
        %v7918 = vsel %vm3139, %v7916, %v7917
        %v7919 = vrot.slane %v7917, 4
        %v7920 = vrot.slane %v6599, 5
        %v7921 = vsel %vm3139, %v7919, %v7920
        %v7922 = vrot.slane %v7768, 5
        %v7923 = vrot.slane %v7922, 4
        %v7924 = vrot.slane %v6601, 5
        %v7925 = vsel %vm3139, %v7923, %v7924
        %v7926 = vrot.slane %v7924, 4
        %v7927 = vrot.slane %v6602, 5
        %v7928 = vsel %vm3139, %v7926, %v7927
        %v7929 = vld [vmem:[%s1058] sm:$0xe]
        %v7930 = vld [vmem:[%s1058 + $0xc] sm:$0xe]
        %v7931 = vld [vmem:[%s1058 + $0x18] sm:$0xe]
        %v7932 = vld [vmem:[%s1058 + $0x24] sm:$0xe]
        %v7933 = vld [vmem:[%s1058 + $0x30] sm:$0xe]
        %v7934 = vld [vmem:[%s1058 + $0x3c] sm:$0xe]
        %v7935 = vld [vmem:[%s1058 + $0x48] sm:$0xe]
        %v7936 = vld [vmem:[%s1058 + $0x54] sm:$0xe]
        %v7937 = vld [vmem:[%s1058 + $0x60] sm:$0xe]
        %v7938 = vld [vmem:[%s1058 + $0x6c] sm:$0xe]
        %v7939 = vld [vmem:[%s1058 + $0x78] sm:$0xe]
        %v7940 = vld [vmem:[%s1058 + $0x84] sm:$0xe]
        %v7941 = vld [vmem:[%s1058 + $0x90] sm:$0xe]
        %v7942 = vld [vmem:[%s1058 + $0x9c] sm:$0xe]
        %v7943 = vld [vmem:[%s1058 + $0xa8] sm:$0xe]
        %v7944 = vld [vmem:[%s1058 + $0xb4] sm:$0xe]
        %v7993 = vrot.slane %v7929, 5
        %v7994 = vrot.slane %v7993, 4
        %v7995 = vrot.slane %v6988, 5
        %v7996 = vsel %vm3139, %v7994, %v7995
        %v7997 = vrot.slane %v7995, 4
        %v7998 = vrot.slane %v6989, 5
        %v7999 = vsel %vm3139, %v7997, %v7998
        %v8000 = vrot.slane %v7930, 5
        %v8001 = vrot.slane %v8000, 4
        %v8002 = vrot.slane %v6991, 5
        %v8003 = vsel %vm3139, %v8001, %v8002
        %v8004 = vrot.slane %v8002, 4
        %v8005 = vrot.slane %v6992, 5
        %v8006 = vsel %vm3139, %v8004, %v8005
        %v8007 = vrot.slane %v7931, 5
        %v8008 = vrot.slane %v8007, 4
        %v8009 = vrot.slane %v6994, 5
        %v8010 = vsel %vm3139, %v8008, %v8009
        %v8011 = vrot.slane %v8009, 4
        %v8012 = vrot.slane %v6995, 5
        %v8013 = vsel %vm3139, %v8011, %v8012
        %v8014 = vrot.slane %v7932, 5
        %v8015 = vrot.slane %v8014, 4
        %v8016 = vrot.slane %v6997, 5
        %v8017 = vsel %vm3139, %v8015, %v8016
        %v8018 = vrot.slane %v8016, 4
        %v8019 = vrot.slane %v6998, 5
        %v8020 = vsel %vm3139, %v8018, %v8019
        %v8021 = vrot.slane %v7933, 5
        %v8022 = vrot.slane %v8021, 4
        %v8023 = vrot.slane %v7000, 5
        %v8024 = vsel %vm3139, %v8022, %v8023
        %v8025 = vrot.slane %v8023, 4
        %v8026 = vrot.slane %v7001, 5
        %v8027 = vsel %vm3139, %v8025, %v8026
        %v8028 = vrot.slane %v7934, 5
        %v8029 = vrot.slane %v8028, 4
        %v8030 = vrot.slane %v7003, 5
        %v8031 = vsel %vm3139, %v8029, %v8030
        %v8032 = vrot.slane %v8030, 4
        %v8033 = vrot.slane %v7004, 5
        %v8034 = vsel %vm3139, %v8032, %v8033
        %v8035 = vrot.slane %v7935, 5
        %v8036 = vrot.slane %v8035, 4
        %v8037 = vrot.slane %v7006, 5
        %v8038 = vsel %vm3139, %v8036, %v8037
        %v8039 = vrot.slane %v8037, 4
        %v8040 = vrot.slane %v7007, 5
        %v8041 = vsel %vm3139, %v8039, %v8040
        %v8042 = vrot.slane %v7936, 5
        %v8043 = vrot.slane %v8042, 4
        %v8044 = vrot.slane %v7009, 5
        %v8045 = vsel %vm3139, %v8043, %v8044
        %v8046 = vrot.slane %v8044, 4
        %v8047 = vrot.slane %v7010, 5
        %v8048 = vsel %vm3139, %v8046, %v8047
        %v8049 = vrot.slane %v7937, 5
        %v8050 = vrot.slane %v8049, 4
        %v8051 = vrot.slane %v7012, 5
        %v8052 = vsel %vm3139, %v8050, %v8051
        %v8053 = vrot.slane %v8051, 4
        %v8054 = vrot.slane %v7013, 5
        %v8055 = vsel %vm3139, %v8053, %v8054
        %v8056 = vrot.slane %v7938, 5
        %v8057 = vrot.slane %v8056, 4
        %v8058 = vrot.slane %v7015, 5
        %v8059 = vsel %vm3139, %v8057, %v8058
        %v8060 = vrot.slane %v8058, 4
        %v8061 = vrot.slane %v7016, 5
        %v8062 = vsel %vm3139, %v8060, %v8061
        %v8063 = vrot.slane %v7939, 5
        %v8064 = vrot.slane %v8063, 4
        %v8065 = vrot.slane %v7018, 5
        %v8066 = vsel %vm3139, %v8064, %v8065
        %v8067 = vrot.slane %v8065, 4
        %v8068 = vrot.slane %v7019, 5
        %v8069 = vsel %vm3139, %v8067, %v8068
        %v8070 = vrot.slane %v7940, 5
        %v8071 = vrot.slane %v8070, 4
        %v8072 = vrot.slane %v7021, 5
        %v8073 = vsel %vm3139, %v8071, %v8072
        %v8074 = vrot.slane %v8072, 4
        %v8075 = vrot.slane %v7022, 5
        %v8076 = vsel %vm3139, %v8074, %v8075
        %v8077 = vrot.slane %v7941, 5
        %v8078 = vrot.slane %v8077, 4
        %v8079 = vrot.slane %v7024, 5
        %v8080 = vsel %vm3139, %v8078, %v8079
        %v8081 = vrot.slane %v8079, 4
        %v8082 = vrot.slane %v7025, 5
        %v8083 = vsel %vm3139, %v8081, %v8082
        %v8084 = vrot.slane %v7942, 5
        %v8085 = vrot.slane %v8084, 4
        %v8086 = vrot.slane %v7027, 5
        %v8087 = vsel %vm3139, %v8085, %v8086
        %v8088 = vrot.slane %v8086, 4
        %v8089 = vrot.slane %v7028, 5
        %v8090 = vsel %vm3139, %v8088, %v8089
        %v8091 = vrot.slane %v7943, 5
        %v8092 = vrot.slane %v8091, 4
        %v8093 = vrot.slane %v7030, 5
        %v8094 = vsel %vm3139, %v8092, %v8093
        %v8095 = vrot.slane %v8093, 4
        %v8096 = vrot.slane %v7031, 5
        %v8097 = vsel %vm3139, %v8095, %v8096
        %v8098 = vrot.slane %v7944, 5
        %v8099 = vrot.slane %v8098, 4
        %v8100 = vrot.slane %v7033, 5
        %v8101 = vsel %vm3139, %v8099, %v8100
        %v8102 = vrot.slane %v8100, 4
        %v8103 = vrot.slane %v7034, 5
        %v8104 = vsel %vm3139, %v8102, %v8103
        %v8105 = vunpack.c.l.b16 %v7820
        %v8106 = vunpack.c.l.b16 %v7823
        %v8107 = vunpack.c.l.b16 %v7827
        %v8108 = vunpack.c.l.b16 %v7830
        %v8109 = vunpack.c.l.b16 %v7834
        %v8110 = vunpack.c.l.b16 %v7837
        %v8111 = vunpack.c.l.b16 %v7841
        %v8112 = vunpack.c.l.b16 %v7844
        %v8113 = vunpack.c.l.b16 %v7848
        %v8114 = vunpack.c.l.b16 %v7851
        %v8115 = vunpack.c.l.b16 %v7855
        %v8116 = vunpack.c.l.b16 %v7858
        %v8117 = vunpack.c.l.b16 %v7862
        %v8118 = vunpack.c.l.b16 %v7865
        %v8119 = vunpack.c.l.b16 %v7869
        %v8120 = vunpack.c.l.b16 %v7872
        %v8121 = vunpack.c.l.b16 %v7876
        %v8122 = vunpack.c.l.b16 %v7879
        %v8123 = vunpack.c.l.b16 %v7883
        %v8124 = vunpack.c.l.b16 %v7886
        %v8125 = vunpack.c.l.b16 %v7890
        %v8126 = vunpack.c.l.b16 %v7893
        %v8127 = vunpack.c.l.b16 %v7897
        %v8128 = vunpack.c.l.b16 %v7900
        %v8129 = vunpack.c.l.b16 %v7904
        %v8130 = vunpack.c.l.b16 %v7907
        %v8131 = vunpack.c.l.b16 %v7911
        %v8132 = vunpack.c.l.b16 %v7914
        %v8133 = vunpack.c.l.b16 %v7918
        %v8134 = vunpack.c.l.b16 %v7921
        %v8135 = vunpack.c.l.b16 %v7925
        %v8136 = vunpack.c.l.b16 %v7928
        %v8137 = vpack.c.b16 %v8106, %v8105
        %v8138 = vpack.c.b16 %v8108, %v8107
        %v8139 = vpack.c.b16 %v8110, %v8109
        %v8140 = vpack.c.b16 %v8112, %v8111
        %v8141 = vpack.c.b16 %v8114, %v8113
        %v8142 = vpack.c.b16 %v8116, %v8115
        %v8143 = vpack.c.b16 %v8118, %v8117
        %v8144 = vpack.c.b16 %v8120, %v8119
        %v8145 = vpack.c.b16 %v8122, %v8121
        %v8146 = vpack.c.b16 %v8124, %v8123
        %v8147 = vpack.c.b16 %v8126, %v8125
        %v8148 = vpack.c.b16 %v8128, %v8127
        %v8149 = vpack.c.b16 %v8130, %v8129
        %v8150 = vpack.c.b16 %v8132, %v8131
        %v8151 = vpack.c.b16 %v8134, %v8133
        %v8152 = vpack.c.b16 %v8136, %v8135
        %v8153 = vunpack.c.l.b16 %v7996
        %v8154 = vunpack.c.l.b16 %v7999
        %v8155 = vunpack.c.l.b16 %v8003
        %v8156 = vunpack.c.l.b16 %v8006
        %v8157 = vunpack.c.l.b16 %v8010
        %v8158 = vunpack.c.l.b16 %v8013
        %v8159 = vunpack.c.l.b16 %v8017
        %v8160 = vunpack.c.l.b16 %v8020
        %v8161 = vunpack.c.l.b16 %v8024
        %v8162 = vunpack.c.l.b16 %v8027
        %v8163 = vunpack.c.l.b16 %v8031
        %v8164 = vunpack.c.l.b16 %v8034
        %v8165 = vunpack.c.l.b16 %v8038
        %v8166 = vunpack.c.l.b16 %v8041
        %v8167 = vunpack.c.l.b16 %v8045
        %v8168 = vunpack.c.l.b16 %v8048
        %v8169 = vunpack.c.l.b16 %v8052
        %v8170 = vunpack.c.l.b16 %v8055
        %v8171 = vunpack.c.l.b16 %v8059
        %v8172 = vunpack.c.l.b16 %v8062
        %v8173 = vunpack.c.l.b16 %v8066
        %v8174 = vunpack.c.l.b16 %v8069
        %v8175 = vunpack.c.l.b16 %v8073
        %v8176 = vunpack.c.l.b16 %v8076
        %v8177 = vunpack.c.l.b16 %v8080
        %v8178 = vunpack.c.l.b16 %v8083
        %v8179 = vunpack.c.l.b16 %v8087
        %v8180 = vunpack.c.l.b16 %v8090
        %v8181 = vunpack.c.l.b16 %v8094
        %v8182 = vunpack.c.l.b16 %v8097
        %v8183 = vunpack.c.l.b16 %v8101
        %v8184 = vunpack.c.l.b16 %v8104
        %v8185 = vpack.c.b16 %v8154, %v8153
        %v8186 = vpack.c.b16 %v8156, %v8155
        %v8187 = vpack.c.b16 %v8158, %v8157
        %v8188 = vpack.c.b16 %v8160, %v8159
        %v8189 = vpack.c.b16 %v8162, %v8161
        %v8190 = vpack.c.b16 %v8164, %v8163
        %v8191 = vpack.c.b16 %v8166, %v8165
        %v8192 = vpack.c.b16 %v8168, %v8167
        %v8193 = vpack.c.b16 %v8170, %v8169
        %v8194 = vpack.c.b16 %v8172, %v8171
        %v8195 = vpack.c.b16 %v8174, %v8173
        %v8196 = vpack.c.b16 %v8176, %v8175
        %v8197 = vpack.c.b16 %v8178, %v8177
        %v8198 = vpack.c.b16 %v8180, %v8179
        %v8199 = vpack.c.b16 %v8182, %v8181
        %v8200 = vpack.c.b16 %v8184, %v8183
        %8201 = vrot.lane.b32.xlu0 %v8185, 4
        %v8202 = vpop.permute.xlu0 %8201
        %8203 = vrot.lane.b32.xlu0 %v8186, 4
        %v8204 = vpop.permute.xlu0 %8203
        %8205 = vrot.lane.b32.xlu0 %v8187, 4
        %v8206 = vpop.permute.xlu0 %8205
        %8207 = vrot.lane.b32.xlu0 %v8188, 4
        %v8208 = vpop.permute.xlu0 %8207
        %8209 = vrot.lane.b32.xlu0 %v8189, 4
        %v8210 = vpop.permute.xlu0 %8209
        %8211 = vrot.lane.b32.xlu0 %v8190, 4
        %v8212 = vpop.permute.xlu0 %8211
        %8213 = vrot.lane.b32.xlu0 %v8191, 4
        %v8214 = vpop.permute.xlu0 %8213
        %8215 = vrot.lane.b32.xlu0 %v8192, 4
        %v8216 = vpop.permute.xlu0 %8215
        %8217 = vrot.lane.b32.xlu0 %v8193, 4
        %v8218 = vpop.permute.xlu0 %8217
        %8219 = vrot.lane.b32.xlu0 %v8194, 4
        %v8220 = vpop.permute.xlu0 %8219
        %8221 = vrot.lane.b32.xlu0 %v8195, 4
        %v8222 = vpop.permute.xlu0 %8221
        %8223 = vrot.lane.b32.xlu0 %v8196, 4
        %v8224 = vpop.permute.xlu0 %8223
        %8225 = vrot.lane.b32.xlu0 %v8197, 4
        %v8226 = vpop.permute.xlu0 %8225
        %8227 = vrot.lane.b32.xlu0 %v8198, 4
        %v8228 = vpop.permute.xlu0 %8227
        %8229 = vrot.lane.b32.xlu0 %v8199, 4
        %v8230 = vpop.permute.xlu0 %8229
        %8231 = vrot.lane.b32.xlu0 %v8200, 4
        %v8232 = vpop.permute.xlu0 %8231
        %v8235 = vsel %vm1808, %v8137, %v8202
        %v8238 = vsel %vm1808, %v8138, %v8204
        %v8241 = vsel %vm1808, %v8139, %v8206
        %v8244 = vsel %vm1808, %v8140, %v8208
        %v8247 = vsel %vm1808, %v8141, %v8210
        %v8250 = vsel %vm1808, %v8142, %v8212
        %v8253 = vsel %vm1808, %v8143, %v8214
        %v8256 = vsel %vm1808, %v8144, %v8216
        %v8259 = vsel %vm1808, %v8145, %v8218
        %v8262 = vsel %vm1808, %v8146, %v8220
        %v8265 = vsel %vm1808, %v8147, %v8222
        %v8268 = vsel %vm1808, %v8148, %v8224
        %v8271 = vsel %vm1808, %v8149, %v8226
        %v8274 = vsel %vm1808, %v8150, %v8228
        %v8277 = vsel %vm1808, %v8151, %v8230
        %v8280 = vsel %vm1808, %v8152, %v8232
        %s8281 = scalar_lea.vmem %s2, 32
        %v8282 = vld [vmem:[%s8281] sm:$0xf]
        %v8283 = vsel %vm2839, %v8235, 0
        %v8285 = vsel %vm2839, %v8238, 0
        %v8287 = vsel %vm2839, %v8241, 0
        %v8289 = vsel %vm2839, %v8244, 0
        %v8291 = vsel %vm2839, %v8247, 0
        %v8293 = vsel %vm2839, %v8250, 0
        %v8295 = vsel %vm2839, %v8253, 0
        %v8297 = vsel %vm2839, %v8256, 0
        %v8299 = vsel %vm2839, %v8259, 0
        %v8301 = vsel %vm2839, %v8262, 0
        %v8303 = vsel %vm2839, %v8265, 0
        %v8305 = vsel %vm2839, %v8268, 0
        %v8307 = vsel %vm2839, %v8271, 0
        %v8309 = vsel %vm2839, %v8274, 0
        %v8311 = vsel %vm2839, %v8277, 0
        %v8313 = vsel %vm2839, %v8280, 0
        %v8316 = vsel %vm2872, %v8282, 0
        %8318 = vmatpush.bf16.msra.mxu0 0
        %8319 = vmatpush.bf16.msra.mxu0 0
        %8320 = vmatpush.bf16.msra.mxu0 0
        %8321 = vmatpush.bf16.msra.mxu0 0
        %8322 = vmatpush.bf16.msra.mxu0 0
        %8323 = vmatpush.bf16.msra.mxu0 0
        %8324 = vmatpush.bf16.msra.mxu0 0
        %8325 = vmatpush.bf16.msra.mxu0 %v8316
        %8326 = vmatmul.bf16.gmra.mxu0 %v8283
        %v8327 = vpop.f32.mrf.mxu0
        %v8328 = vadd.f32 0.0, %v8327
        %v8329 = vpop.f32.mrf.mxu0
        %v8330 = vadd.f32 0.0, %v8329
        %8331 = vmatmul.bf16.gmra.mxu0 %v8285
        %v8332 = vpop.f32.mrf.mxu0
        %v8333 = vadd.f32 0.0, %v8332
        %v8334 = vpop.f32.mrf.mxu0
        %v8335 = vadd.f32 0.0, %v8334
        %8336 = vmatmul.bf16.gmra.mxu0 %v8287
        %v8337 = vpop.f32.mrf.mxu0
        %v8338 = vadd.f32 0.0, %v8337
        %v8339 = vpop.f32.mrf.mxu0
        %v8340 = vadd.f32 0.0, %v8339
        %8341 = vmatmul.bf16.gmra.mxu0 %v8289
        %v8342 = vpop.f32.mrf.mxu0
        %v8343 = vadd.f32 0.0, %v8342
        %v8344 = vpop.f32.mrf.mxu0
        %v8345 = vadd.f32 0.0, %v8344
        %8346 = vmatmul.bf16.gmra.mxu0 %v8291
        %v8347 = vpop.f32.mrf.mxu0
        %v8348 = vadd.f32 0.0, %v8347
        %v8349 = vpop.f32.mrf.mxu0
        %v8350 = vadd.f32 0.0, %v8349
        %8351 = vmatmul.bf16.gmra.mxu0 %v8293
        %v8352 = vpop.f32.mrf.mxu0
        %v8353 = vadd.f32 0.0, %v8352
        %v8354 = vpop.f32.mrf.mxu0
        %v8355 = vadd.f32 0.0, %v8354
        %8356 = vmatmul.bf16.gmra.mxu0 %v8295
        %v8357 = vpop.f32.mrf.mxu0
        %v8358 = vadd.f32 0.0, %v8357
        %v8359 = vpop.f32.mrf.mxu0
        %v8360 = vadd.f32 0.0, %v8359
        %8361 = vmatmul.bf16.gmra.mxu0 %v8297
        %v8362 = vpop.f32.mrf.mxu0
        %v8363 = vadd.f32 0.0, %v8362
        %v8364 = vpop.f32.mrf.mxu0
        %v8365 = vadd.f32 0.0, %v8364
        %8366 = vmatmul.bf16.gmra.mxu0 %v8299
        %v8367 = vpop.f32.mrf.mxu0
        %v8368 = vadd.f32 0.0, %v8367
        %v8369 = vpop.f32.mrf.mxu0
        %v8370 = vadd.f32 0.0, %v8369
        %8371 = vmatmul.bf16.gmra.mxu0 %v8301
        %v8372 = vpop.f32.mrf.mxu0
        %v8373 = vadd.f32 0.0, %v8372
        %v8374 = vpop.f32.mrf.mxu0
        %v8375 = vadd.f32 0.0, %v8374
        %8376 = vmatmul.bf16.gmra.mxu0 %v8303
        %v8377 = vpop.f32.mrf.mxu0
        %v8378 = vadd.f32 0.0, %v8377
        %v8379 = vpop.f32.mrf.mxu0
        %v8380 = vadd.f32 0.0, %v8379
        %8381 = vmatmul.bf16.gmra.mxu0 %v8305
        %v8382 = vpop.f32.mrf.mxu0
        %v8383 = vadd.f32 0.0, %v8382
        %v8384 = vpop.f32.mrf.mxu0
        %v8385 = vadd.f32 0.0, %v8384
        %8386 = vmatmul.bf16.gmra.mxu0 %v8307
        %v8387 = vpop.f32.mrf.mxu0
        %v8388 = vadd.f32 0.0, %v8387
        %v8389 = vpop.f32.mrf.mxu0
        %v8390 = vadd.f32 0.0, %v8389
        %8391 = vmatmul.bf16.gmra.mxu0 %v8309
        %v8392 = vpop.f32.mrf.mxu0
        %v8393 = vadd.f32 0.0, %v8392
        %v8394 = vpop.f32.mrf.mxu0
        %v8395 = vadd.f32 0.0, %v8394
        %8396 = vmatmul.bf16.gmra.mxu0 %v8311
        %v8397 = vpop.f32.mrf.mxu0
        %v8398 = vadd.f32 0.0, %v8397
        %v8399 = vpop.f32.mrf.mxu0
        %v8400 = vadd.f32 0.0, %v8399
        %8401 = vmatmul.bf16.gmra.mxu0 %v8313
        %v8402 = vpop.f32.mrf.mxu0
        %v8403 = vadd.f32 0.0, %v8402
        %v8404 = vpop.f32.mrf.mxu0
        %v8405 = vadd.f32 0.0, %v8404
        %8406 = vdwg.mxu0
        %v8407 = vadd.f32 %v7721, %v8328
        %v8408 = vadd.f32 %v7722, %v8330
        %v8409 = vadd.f32 %v7723, %v8333
        %v8410 = vadd.f32 %v7724, %v8335
        %v8411 = vadd.f32 %v7725, %v8338
        %v8412 = vadd.f32 %v7726, %v8340
        %v8413 = vadd.f32 %v7727, %v8343
        %v8414 = vadd.f32 %v7728, %v8345
        %v8415 = vadd.f32 %v7729, %v8348
        %v8416 = vadd.f32 %v7730, %v8350
        %v8417 = vadd.f32 %v7731, %v8353
        %v8418 = vadd.f32 %v7732, %v8355
        %v8419 = vadd.f32 %v7733, %v8358
        %v8420 = vadd.f32 %v7734, %v8360
        %v8421 = vadd.f32 %v7735, %v8363
        %v8422 = vadd.f32 %v7736, %v8365
        %v8423 = vadd.f32 %v7737, %v8368
        %v8424 = vadd.f32 %v7738, %v8370
        %v8425 = vadd.f32 %v7739, %v8373
        %v8426 = vadd.f32 %v7740, %v8375
        %v8427 = vadd.f32 %v7741, %v8378
        %v8428 = vadd.f32 %v7742, %v8380
        %v8429 = vadd.f32 %v7743, %v8383
        %v8430 = vadd.f32 %v7744, %v8385
        %v8431 = vadd.f32 %v7745, %v8388
        %v8432 = vadd.f32 %v7746, %v8390
        %v8433 = vadd.f32 %v7747, %v8393
        %v8434 = vadd.f32 %v7748, %v8395
        %v8435 = vadd.f32 %v7749, %v8398
        %v8436 = vadd.f32 %v7750, %v8400
        %v8437 = vadd.f32 %v7751, %v8403
        %v8438 = vadd.f32 %v7752, %v8405
        %v8439 = vpack.c.bf16 %v8407, %v8407
        %v8440 = vpack.c.bf16 %v8408, %v8408
        %v8441 = vpack.c.bf16 %v8409, %v8409
        %v8442 = vpack.c.bf16 %v8410, %v8410
        %v8443 = vpack.c.bf16 %v8411, %v8411
        %v8444 = vpack.c.bf16 %v8412, %v8412
        %v8445 = vpack.c.bf16 %v8413, %v8413
        %v8446 = vpack.c.bf16 %v8414, %v8414
        %v8447 = vpack.c.bf16 %v8415, %v8415
        %v8448 = vpack.c.bf16 %v8416, %v8416
        %v8449 = vpack.c.bf16 %v8417, %v8417
        %v8450 = vpack.c.bf16 %v8418, %v8418
        %v8451 = vpack.c.bf16 %v8419, %v8419
        %v8452 = vpack.c.bf16 %v8420, %v8420
        %v8453 = vpack.c.bf16 %v8421, %v8421
        %v8454 = vpack.c.bf16 %v8422, %v8422
        %v8455 = vpack.c.bf16 %v8423, %v8423
        %v8456 = vpack.c.bf16 %v8424, %v8424
        %v8457 = vpack.c.bf16 %v8425, %v8425
        %v8458 = vpack.c.bf16 %v8426, %v8426
        %v8459 = vpack.c.bf16 %v8427, %v8427
        %v8460 = vpack.c.bf16 %v8428, %v8428
        %v8461 = vpack.c.bf16 %v8429, %v8429
        %v8462 = vpack.c.bf16 %v8430, %v8430
        %v8463 = vpack.c.bf16 %v8431, %v8431
        %v8464 = vpack.c.bf16 %v8432, %v8432
        %v8465 = vpack.c.bf16 %v8433, %v8433
        %v8466 = vpack.c.bf16 %v8434, %v8434
        %v8467 = vpack.c.bf16 %v8435, %v8435
        %v8468 = vpack.c.bf16 %v8436, %v8436
        %v8469 = vpack.c.bf16 %v8437, %v8437
        %v8470 = vpack.c.bf16 %v8438, %v8438
        %8471 = vst.msk [vmem:[%s228] sm:$0xf] %vm230, %v8439
        %8472 = vst.msk [vmem:[%s228 + $0x4] sm:$0xf] %vm230, %v8440
        %8473 = vst.msk [vmem:[%s228 + $0x8] sm:$0xf] %vm230, %v8441
        %8474 = vst.msk [vmem:[%s228 + $0xc] sm:$0xf] %vm230, %v8442
        %8475 = vst.msk [vmem:[%s228 + $0x10] sm:$0xf] %vm230, %v8443
        %8476 = vst.msk [vmem:[%s228 + $0x14] sm:$0xf] %vm230, %v8444
        %8477 = vst.msk [vmem:[%s228 + $0x18] sm:$0xf] %vm230, %v8445
        %8478 = vst.msk [vmem:[%s228 + $0x1c] sm:$0xf] %vm230, %v8446
        %8479 = vst.msk [vmem:[%s228 + $0x20] sm:$0xf] %vm230, %v8447
        %8480 = vst.msk [vmem:[%s228 + $0x24] sm:$0xf] %vm230, %v8448
        %8481 = vst.msk [vmem:[%s228 + $0x28] sm:$0xf] %vm230, %v8449
        %8482 = vst.msk [vmem:[%s228 + $0x2c] sm:$0xf] %vm230, %v8450
        %8483 = vst.msk [vmem:[%s228 + $0x30] sm:$0xf] %vm230, %v8451
        %8484 = vst.msk [vmem:[%s228 + $0x34] sm:$0xf] %vm230, %v8452
        %8485 = vst.msk [vmem:[%s228 + $0x38] sm:$0xf] %vm230, %v8453
        %8486 = vst.msk [vmem:[%s228 + $0x3c] sm:$0xf] %vm230, %v8454
        %8487 = vst.msk [vmem:[%s228 + $0x40] sm:$0xf] %vm230, %v8455
        %8488 = vst.msk [vmem:[%s228 + $0x44] sm:$0xf] %vm230, %v8456
        %8489 = vst.msk [vmem:[%s228 + $0x48] sm:$0xf] %vm230, %v8457
        %8490 = vst.msk [vmem:[%s228 + $0x4c] sm:$0xf] %vm230, %v8458
        %8491 = vst.msk [vmem:[%s228 + $0x50] sm:$0xf] %vm230, %v8459
        %8492 = vst.msk [vmem:[%s228 + $0x54] sm:$0xf] %vm230, %v8460
        %8493 = vst.msk [vmem:[%s228 + $0x58] sm:$0xf] %vm230, %v8461
        %8494 = vst.msk [vmem:[%s228 + $0x5c] sm:$0xf] %vm230, %v8462
        %8495 = vst.msk [vmem:[%s228 + $0x60] sm:$0xf] %vm230, %v8463
        %8496 = vst.msk [vmem:[%s228 + $0x64] sm:$0xf] %vm230, %v8464
        %8497 = vst.msk [vmem:[%s228 + $0x68] sm:$0xf] %vm230, %v8465
        %8498 = vst.msk [vmem:[%s228 + $0x6c] sm:$0xf] %vm230, %v8466
        %8499 = vst.msk [vmem:[%s228 + $0x70] sm:$0xf] %vm230, %v8467
        %8500 = vst.msk [vmem:[%s228 + $0x74] sm:$0xf] %vm230, %v8468
        %8501 = vst.msk [vmem:[%s228 + $0x78] sm:$0xf] %vm230, %v8469
        %8502 = vst.msk [vmem:[%s228 + $0x7c] sm:$0xf] %vm230, %v8470
        %v8503 = vsel %vm1808, %v8407, 0.0
        %v8504 = vsel %vm1808, %v8408, 0.0
        %v8505 = vadd.f32 %v8503, %v8504
        %v8506 = vsel %vm1808, %v8409, 0.0
        %v8507 = vadd.f32 %v8505, %v8506
        %v8508 = vsel %vm1808, %v8410, 0.0
        %v8509 = vadd.f32 %v8507, %v8508
        %v8510 = vsel %vm1808, %v8411, 0.0
        %v8511 = vadd.f32 %v8509, %v8510
        %v8512 = vsel %vm1808, %v8412, 0.0
        %v8513 = vadd.f32 %v8511, %v8512
        %v8514 = vsel %vm1808, %v8413, 0.0
        %v8515 = vadd.f32 %v8513, %v8514
        %v8516 = vsel %vm1808, %v8414, 0.0
        %v8517 = vadd.f32 %v8515, %v8516
        %v8518 = vsel %vm1808, %v8415, 0.0
        %v8519 = vadd.f32 %v8517, %v8518
        %v8520 = vsel %vm1808, %v8416, 0.0
        %v8521 = vadd.f32 %v8519, %v8520
        %v8522 = vsel %vm1808, %v8417, 0.0
        %v8523 = vadd.f32 %v8521, %v8522
        %v8524 = vsel %vm1808, %v8418, 0.0
        %v8525 = vadd.f32 %v8523, %v8524
        %v8526 = vsel %vm1808, %v8419, 0.0
        %v8527 = vadd.f32 %v8525, %v8526
        %v8528 = vsel %vm1808, %v8420, 0.0
        %v8529 = vadd.f32 %v8527, %v8528
        %v8530 = vsel %vm1808, %v8421, 0.0
        %v8531 = vadd.f32 %v8529, %v8530
        %v8532 = vsel %vm1808, %v8422, 0.0
        %v8533 = vadd.f32 %v8531, %v8532
        %v8534 = vsel %vm1808, %v8423, 0.0
        %v8535 = vadd.f32 %v8533, %v8534
        %v8536 = vsel %vm1808, %v8424, 0.0
        %v8537 = vadd.f32 %v8535, %v8536
        %v8538 = vsel %vm1808, %v8425, 0.0
        %v8539 = vadd.f32 %v8537, %v8538
        %v8540 = vsel %vm1808, %v8426, 0.0
        %v8541 = vadd.f32 %v8539, %v8540
        %v8542 = vsel %vm1808, %v8427, 0.0
        %v8543 = vadd.f32 %v8541, %v8542
        %v8544 = vsel %vm1808, %v8428, 0.0
        %v8545 = vadd.f32 %v8543, %v8544
        %v8546 = vsel %vm1808, %v8429, 0.0
        %v8547 = vadd.f32 %v8545, %v8546
        %v8548 = vsel %vm1808, %v8430, 0.0
        %v8549 = vadd.f32 %v8547, %v8548
        %v8550 = vsel %vm1808, %v8431, 0.0
        %v8551 = vadd.f32 %v8549, %v8550
        %v8552 = vsel %vm1808, %v8432, 0.0
        %v8553 = vadd.f32 %v8551, %v8552
        %v8554 = vsel %vm1808, %v8433, 0.0
        %v8555 = vadd.f32 %v8553, %v8554
        %v8556 = vsel %vm1808, %v8434, 0.0
        %v8557 = vadd.f32 %v8555, %v8556
        %v8558 = vsel %vm1808, %v8435, 0.0
        %v8559 = vadd.f32 %v8557, %v8558
        %v8560 = vsel %vm1808, %v8436, 0.0
        %v8561 = vadd.f32 %v8559, %v8560
        %v8562 = vsel %vm1808, %v8437, 0.0
        %v8563 = vadd.f32 %v8561, %v8562
        %v8564 = vsel %vm1808, %v8438, 0.0
        %v8565 = vadd.f32 %v8563, %v8564
        %v8566 = vrot.slane %v8565, 4
        %v8567 = vadd.f32 %v8565, %v8566
        %v8568 = vrot.slane %v8567, 2
        %v8569 = vadd.f32 %v8567, %v8568
        %v8570 = vrot.slane %v8569, 1
        %v8571 = vadd.f32 %v8569, %v8570
        %v8572 = vmul.f32 %v8407, %v8407
        %v8573 = vmul.f32 %v8408, %v8408
        %v8574 = vmul.f32 %v8409, %v8409
        %v8575 = vmul.f32 %v8410, %v8410
        %v8576 = vmul.f32 %v8411, %v8411
        %v8577 = vmul.f32 %v8412, %v8412
        %v8578 = vmul.f32 %v8413, %v8413
        %v8579 = vmul.f32 %v8414, %v8414
        %v8580 = vmul.f32 %v8415, %v8415
        %v8581 = vmul.f32 %v8416, %v8416
        %v8582 = vmul.f32 %v8417, %v8417
        %v8583 = vmul.f32 %v8418, %v8418
        %v8584 = vmul.f32 %v8419, %v8419
        %v8585 = vmul.f32 %v8420, %v8420
        %v8586 = vmul.f32 %v8421, %v8421
        %v8587 = vmul.f32 %v8422, %v8422
        %v8588 = vmul.f32 %v8423, %v8423
        %v8589 = vmul.f32 %v8424, %v8424
        %v8590 = vmul.f32 %v8425, %v8425
        %v8591 = vmul.f32 %v8426, %v8426
        %v8592 = vmul.f32 %v8427, %v8427
        %v8593 = vmul.f32 %v8428, %v8428
        %v8594 = vmul.f32 %v8429, %v8429
        %v8595 = vmul.f32 %v8430, %v8430
        %v8596 = vmul.f32 %v8431, %v8431
        %v8597 = vmul.f32 %v8432, %v8432
        %v8598 = vmul.f32 %v8433, %v8433
        %v8599 = vmul.f32 %v8434, %v8434
        %v8600 = vmul.f32 %v8435, %v8435
        %v8601 = vmul.f32 %v8436, %v8436
        %v8602 = vmul.f32 %v8437, %v8437
        %v8603 = vmul.f32 %v8438, %v8438
        %v8604 = vsel %vm1808, %v8572, 0.0
        %v8605 = vsel %vm1808, %v8573, 0.0
        %v8606 = vadd.f32 %v8604, %v8605
        %v8607 = vsel %vm1808, %v8574, 0.0
        %v8608 = vadd.f32 %v8606, %v8607
        %v8609 = vsel %vm1808, %v8575, 0.0
        %v8610 = vadd.f32 %v8608, %v8609
        %v8611 = vsel %vm1808, %v8576, 0.0
        %v8612 = vadd.f32 %v8610, %v8611
        %v8613 = vsel %vm1808, %v8577, 0.0
        %v8614 = vadd.f32 %v8612, %v8613
        %v8615 = vsel %vm1808, %v8578, 0.0
        %v8616 = vadd.f32 %v8614, %v8615
        %v8617 = vsel %vm1808, %v8579, 0.0
        %v8618 = vadd.f32 %v8616, %v8617
        %v8619 = vsel %vm1808, %v8580, 0.0
        %v8620 = vadd.f32 %v8618, %v8619
        %v8621 = vsel %vm1808, %v8581, 0.0
        %v8622 = vadd.f32 %v8620, %v8621
        %v8623 = vsel %vm1808, %v8582, 0.0
        %v8624 = vadd.f32 %v8622, %v8623
        %v8625 = vsel %vm1808, %v8583, 0.0
        %v8626 = vadd.f32 %v8624, %v8625
        %v8627 = vsel %vm1808, %v8584, 0.0
        %v8628 = vadd.f32 %v8626, %v8627
        %v8629 = vsel %vm1808, %v8585, 0.0
        %v8630 = vadd.f32 %v8628, %v8629
        %v8631 = vsel %vm1808, %v8586, 0.0
        %v8632 = vadd.f32 %v8630, %v8631
        %v8633 = vsel %vm1808, %v8587, 0.0
        %v8634 = vadd.f32 %v8632, %v8633
        %v8635 = vsel %vm1808, %v8588, 0.0
        %v8636 = vadd.f32 %v8634, %v8635
        %v8637 = vsel %vm1808, %v8589, 0.0
        %v8638 = vadd.f32 %v8636, %v8637
        %v8639 = vsel %vm1808, %v8590, 0.0
        %v8640 = vadd.f32 %v8638, %v8639
        %v8641 = vsel %vm1808, %v8591, 0.0
        %v8642 = vadd.f32 %v8640, %v8641
        %v8643 = vsel %vm1808, %v8592, 0.0
        %v8644 = vadd.f32 %v8642, %v8643
        %v8645 = vsel %vm1808, %v8593, 0.0
        %v8646 = vadd.f32 %v8644, %v8645
        %v8647 = vsel %vm1808, %v8594, 0.0
        %v8648 = vadd.f32 %v8646, %v8647
        %v8649 = vsel %vm1808, %v8595, 0.0
        %v8650 = vadd.f32 %v8648, %v8649
        %v8651 = vsel %vm1808, %v8596, 0.0
        %v8652 = vadd.f32 %v8650, %v8651
        %v8653 = vsel %vm1808, %v8597, 0.0
        %v8654 = vadd.f32 %v8652, %v8653
        %v8655 = vsel %vm1808, %v8598, 0.0
        %v8656 = vadd.f32 %v8654, %v8655
        %v8657 = vsel %vm1808, %v8599, 0.0
        %v8658 = vadd.f32 %v8656, %v8657
        %v8659 = vsel %vm1808, %v8600, 0.0
        %v8660 = vadd.f32 %v8658, %v8659
        %v8661 = vsel %vm1808, %v8601, 0.0
        %v8662 = vadd.f32 %v8660, %v8661
        %v8663 = vsel %vm1808, %v8602, 0.0
        %v8664 = vadd.f32 %v8662, %v8663
        %v8665 = vsel %vm1808, %v8603, 0.0
        %v8666 = vadd.f32 %v8664, %v8665
        %v8667 = vrot.slane %v8666, 4
        %v8668 = vadd.f32 %v8666, %v8667
        %v8669 = vrot.slane %v8668, 2
        %v8670 = vadd.f32 %v8668, %v8669
        %v8671 = vrot.slane %v8670, 1
        %v8672 = vadd.f32 %v8670, %v8671
        %vm8673 = vcmask 1040384
        %v8674 = vsel %vm8673, %v8571, %v8672
        %vm8675 = vcmask 25600
        %8676 = vst.msk [vmem:[%s213] sm:$0x3] %vm8675, %v8674
        %p8677 = scmp.lt.s32.totalorder %s19, 1
        %s8678 = scalar_select %p8677, %s19, 1
        %s8679 = smul.addr %s8678, 32
        %s8680 = smul.addr %s8679, 4
        %s8681 = scalar_lea.vmem %s3, %s8680
        %s8682 = sand.u32 %s126, 1
        %s8683 = scalar_lea.sflag [#allocation5], %s8682
        %s8684 = sand.u32 %s126, 1
        %s8685 = smul.addr %s8684, 2
        %s8686 = scalar_lea.vmem [#allocation4], %s8685
        // Predicated region
        $region33: #{tpu_custom_call.1} parent=31 // pred_check
          %p8687 = pneg %p110
        $region34: #{tpu_custom_call.1} parent=31 // pred_check_branch
          %8689 = sbr.rel (%p8687) target = $region36
        $region35: #{tpu_custom_call.1} parent=31 // pred_region
          _
        $region36: #{tpu_custom_call.1} parent=31 // pred_fallthru
          _
        // Predicated region
        $region37: #{tpu_custom_call.1} parent=31 // pred_check
          %p8690 = pneg %p136
        $region38: #{tpu_custom_call.1} parent=31 // pred_check_branch
          %8692 = sbr.rel (%p8690) target = $region40
        $region39: #{tpu_custom_call.1} parent=31 // pred_region
          %8694 = vsyncadd %s8683, 0
          %s8695 = smul.addr %s19, 2
          %s8696 = scalar_lea.hbm %s4, %s8695
          %s8698 = sshll.u32 %s8686, 4
          %s8699 = int_to_ptr.vmem [resolvable:$true] %s8698
          %s8700 = sshll.u32 %s8696, 4
          %s8701 = int_to_ptr.hbm [resolvable:$true] %s8700
          %8703 = dma.vmem_to_hbm [thread:$0]  %s8699, 32, %s8701, %s8683
        $region40: #{tpu_custom_call.1} parent=31 // pred_fallthru
          _
      $region32: #{tpu_custom_call.1} parent=5 // pred_fallthru
        _
      %p8704 = scmp.le.s32.totalorder 2, %s14
      // Predicated region
      $region41: #{tpu_custom_call.1} parent=5 // pred_check
        %p8705 = pneg %p8704
      $region42: #{tpu_custom_call.1} parent=5 // pred_check_branch
        %8707 = sbr.rel (%p8705) target = $region44
      $region43: #{tpu_custom_call.1} parent=5 // pred_region
        %s8708 = ssub.s32 %s14, 2
        // Predicated region
        $region45: #{tpu_custom_call.1} parent=43 // pred_check
          %p8709 = pneg %p116
        $region46: #{tpu_custom_call.1} parent=43 // pred_check_branch
          %8711 = sbr.rel (%p8709) target = $region48
        $region47: #{tpu_custom_call.1} parent=43 // pred_region
          %p8712 = scmp.lt.s32.totalorder %s20, 1
          %s8713 = scalar_select %p8712, %s20, 1
          %s8714 = smul.addr %s8713, 32
          %s8715 = smul.addr %s8714, 4
          %s8716 = scalar_lea.vmem %s3, %s8715
        $region48: #{tpu_custom_call.1} parent=43 // pred_fallthru
          _
        // Predicated region
        $region49: #{tpu_custom_call.1} parent=43 // pred_check
          %p8717 = pneg %p142
        $region50: #{tpu_custom_call.1} parent=43 // pred_check_branch
          %8719 = sbr.rel (%p8717) target = $region52
        $region51: #{tpu_custom_call.1} parent=43 // pred_region
          %s8720 = sand.u32 %s127, 1
          %s8721 = scalar_lea.sflag [#allocation5], %s8720
          %s8722 = sand.u32 %s127, 1
          %s8723 = smul.addr %s8722, 2
          %s8724 = scalar_lea.vmem [#allocation4], %s8723
          %8726 = dma.done %s8721, 32
        $region52: #{tpu_custom_call.1} parent=43 // pred_fallthru
          _
      $region44: #{tpu_custom_call.1} parent=5 // pred_fallthru
        _
    $region6: #{tpu_custom_call.1} parent=1 // loop_footer
      %s18 = sadd.s32 1, %s14
    $region7: #{tpu_custom_call.1} parent=1 // loop_footer_branch
      %13 = sbr.rel target = $region3
    $region8: #{tpu_custom_call.1} parent=1 // loop_exit
      _
    %8727 = vsyncpa [#allocation5], 1
    %s8728 = scalar_lea.sflag [#allocation5], 1
    %8729 = vsyncpa %s8728, 1

</llo_original>
